<compile_context>
chip_gen: v6e
topology: v6e:2x2x1
jax: 0.10.0
libtpu: 0.0.40
codegen_flags: <defaults>
</compile_context>

<pallas_src>
import jax
import jax.numpy as jnp
from jax import lax
from jax.experimental import pallas as pl
from jax.experimental.pallas import tpu as pltpu


# ------------------------------ fused kernel ------------------------------- #

def fused_model_kernel(x1_ref, w1_ref, b1_ref, w25_ref, b25_ref, w6_ref,
                       b6_ref, x2_ref, o_ref, pin_ref, pa_ref, pb_ref):
    # x1_ref : (1, H, W, 16)        f32   channel-padded layer-1 input
    # w1_ref : (3, 48, 64)          bf16  conv1 weights, rows = kw*Cin + ci
    # b1_ref : (1, 64)              f32
    # w25_ref: (4, 3, 192, 64)      bf16  conv2..conv5 weights
    # b25_ref: (4, 1, 64)           f32
    # w6_ref : (1, 64)              bf16  conv6 (1x1) weights
    # b6_ref : (1, 1)               f32
    # x2_ref : (1, 1, H*W)          f32   lane-dense
    # o_ref  : (1, 1, H*W)          f32   lane-dense
    # pin/pa/pb: zero-padded VMEM activation scratch
    H = x1_ref.shape[1]
    W = x1_ref.shape[2]
    C1 = x1_ref.shape[3]          # 16 (padded from 11)
    C = w25_ref.shape[3]          # 64
    HW = H * W

    # Zero padded scratch (borders must stay zero; interiors are overwritten).
    # ~200 KiB of VMEM memset per image -> negligible.
    pin_ref[...] = jnp.zeros_like(pin_ref)
    pa_ref[...] = jnp.zeros_like(pa_ref)
    pb_ref[...] = jnp.zeros_like(pb_ref)

    # Stage the layer-1 input into the zero-padded buffer.
    pin_ref[1:H + 1, 1:W + 1, :] = x1_ref[0]

    def conv3x3_relu(src_ref, w_kh, b_row, cin):
        """'same' 3x3 conv + bias + ReLU over a zero-padded VMEM activation.

        src_ref : (H+2, W+2, cin) f32 ref with zero border
        w_kh    : (3, 3*cin, C) bf16 value, rows ordered [kw*cin + ci]
        b_row   : (1, C) f32 value
        returns : (H*W, C) f32
        """
        xpad = src_ref[...]                                   # (H+2, W+2, cin)
        # Fold the 3 horizontal taps into the contraction dim: 3 shifted
        # slices total (instead of 9), K = 3*cin per matmul.
        xw = jnp.concatenate(
            [xpad[:, kw:kw + W, :] for kw in range(3)], axis=-1)  # (H+2, W, 3cin)
        acc = jnp.zeros((HW, C), jnp.float32)
        for kh in range(3):                                   # cheap leading-dim slice
            lhs = xw[kh:kh + H].reshape(HW, 3 * cin).astype(jnp.bfloat16)
            acc = acc + jnp.dot(lhs, w_kh[kh],
                                preferred_element_type=jnp.float32)
        return jnp.maximum(acc + b_row, 0.0)

    def store_padded(dst_ref, act):
        dst_ref[1:H + 1, 1:W + 1, :] = act.reshape(H, W, C)

    # conv1 .. conv5 with activations resident in VMEM (ping-pong buffers).
    a = conv3x3_relu(pin_ref, w1_ref[...], b1_ref[...], C1)
    store_padded(pa_ref, a)
    a = conv3x3_relu(pa_ref, w25_ref[0], b25_ref[0], C)
    store_padded(pb_ref, a)
    a = conv3x3_relu(pb_ref, w25_ref[1], b25_ref[1], C)
    store_padded(pa_ref, a)
    a = conv3x3_relu(pa_ref, w25_ref[2], b25_ref[2], C)
    store_padded(pb_ref, a)
    a = conv3x3_relu(pb_ref, w25_ref[3], b25_ref[3], C)       # (HW, C) f32

    # conv6 (1x1) + sigmoid + multiply by x2, emitted lane-dense as (1, H*W).
    yt = lax.dot_general(w6_ref[...], a.astype(jnp.bfloat16),
                         dimension_numbers=(((1,), (1,)), ((), ())),
                         preferred_element_type=jnp.float32)  # (1, HW)
    yt = jax.nn.sigmoid(yt + b6_ref[...])
    o_ref[0] = (yt * x2_ref[0]).astype(o_ref.dtype)


# -------------------------------- wrapper ----------------------------------- #

def custom_model_forward(params, x1_nchw, x2_nchw):
    """Fused Pallas forward. Inputs NCHW (PyTorch); returns NCHW (N,1,H,W)."""
    N, cin, H, W = x1_nchw.shape
    C = 64
    C1 = 16                       # layer-1 input channels padded 11 -> 16
    HW = H * W

    # ---- glue: layout prep (once per call, tiny HBM traffic) ----
    x1 = jnp.transpose(x1_nchw, (0, 2, 3, 1))                    # NCHW -> NHWC
    x1 = jnp.pad(x1, ((0, 0), (0, 0), (0, 0), (0, C1 - cin)))    # Cin 11 -> 16
    x2 = x2_nchw.reshape(N, 1, HW)                               # lane-dense

    def prep3x3(w, cin_pad=None):
        # HWIO (3,3,ci,co) -> (3, 3*ci, co) bf16, rows ordered kw-major/ci-minor.
        if cin_pad is not None and cin_pad != w.shape[2]:
            w = jnp.pad(w, ((0, 0), (0, 0), (0, cin_pad - w.shape[2]), (0, 0)))
        kh, kw, ci, co = w.shape
        return w.reshape(kh, kw * ci, co).astype(jnp.bfloat16)

    w1r = prep3x3(params["w1"], C1)                                    # (3,48,64)
    w25 = jnp.stack([prep3x3(params[f"w{i}"]) for i in range(2, 6)])   # (4,3,192,64)
    b1r = params["b1"].reshape(1, C)
    b25 = jnp.stack([params[f"b{i}"] for i in range(2, 6)]).reshape(4, 1, C)
    w6r = params["w6"].reshape(1, C).astype(jnp.bfloat16)              # (1,64)
    b6r = params["b6"].reshape(1, 1)

    out_flat = pl.pallas_call(
        fused_model_kernel,
        out_shape=jax.ShapeDtypeStruct((N, 1, HW), x1_nchw.dtype),
        grid=(N,),
        in_specs=[
            pl.BlockSpec((1, H, W, C1), lambda n: (n, 0, 0, 0)),     # x1
            pl.BlockSpec((3, 3 * C1, C), lambda n: (0, 0, 0)),       # w1
            pl.BlockSpec((1, C), lambda n: (0, 0)),                  # b1
            pl.BlockSpec((4, 3, 3 * C, C), lambda n: (0, 0, 0, 0)),  # w2..w5
            pl.BlockSpec((4, 1, C), lambda n: (0, 0, 0)),            # b2..b5
            pl.BlockSpec((1, C), lambda n: (0, 0)),                  # w6
            pl.BlockSpec((1, 1), lambda n: (0, 0)),                  # b6
            pl.BlockSpec((1, 1, HW), lambda n: (n, 0, 0)),           # x2
        ],
        out_specs=pl.BlockSpec((1, 1, HW), lambda n: (n, 0, 0)),
        scratch_shapes=[
            pltpu.VMEM((H + 2, W + 2, C1), jnp.float32),   # padded layer-1 input
            pltpu.VMEM((H + 2, W + 2, C), jnp.float32),    # ping
            pltpu.VMEM((H + 2, W + 2, C), jnp.float32),    # pong
        ],
        compiler_params=pltpu.CompilerParams(
            dimension_semantics=("parallel",)),    # batch shards over v7x's 2 TCs
    )(x1, w1r, b1r, w25, b25, w6r, b6r, x2)

    return out_flat.reshape(N, 1, H, W)


# --------------------------- reference (pure JAX) ---------------------------- #

def reference_forward(params, x1_nchw, x2_nchw):
    dn = ("NHWC", "HWIO", "NHWC")
    x = jnp.transpose(x1_nchw, (0, 2, 3, 1))
    x2 = jnp.transpose(x2_nchw, (0, 2, 3, 1))

    def conv(x, w, b, pad):
        y = lax.conv_general_dilated(x, w, (1, 1), pad, dimension_numbers=dn)
        return y + b[None, None, None, :]

    same = ((1, 1), (1, 1))
    for i in range(1, 6):
        x = jax.nn.relu(conv(x, params[f"w{i}"], params[f"b{i}"], same))
    x = jax.nn.sigmoid(conv(x, params["w6"], params["b6"], ((0, 0), (0, 0))))
    out = x * x2
    return jnp.transpose(out, (0, 3, 1, 2))


# ---------------------------------- main ------------------------------------- #

def make_params(key):
    """Deterministic He-style init (shapes follow the nn.Module __init__)."""
    specs = [
        ("w1", (3, 3, 11, 64)), ("b1", (64,)),
        ("w2", (3, 3, 64, 64)), ("b2", (64,)),
        ("w3", (3, 3, 64, 64)), ("b3", (64,)),
        ("w4", (3, 3, 64, 64)), ("b4", (64,)),
        ("w5", (3, 3, 64, 64)), ("b5", (64,)),
        ("w6", (1, 1, 64, 1)), ("b6", (1,)),
    ]
    params = {}
    for name, shape in specs:
        key, sub = jax.random.split(key)
        if name.startswith("w"):
            fan_in = shape[0] * shape[1] * shape[2]
            scale = (2.0 / fan_in) ** 0.5
        else:
            scale = 0.01
        params[name] = scale * jax.random.normal(sub, shape, dtype=jnp.float32)
    return params


if __name__ == "__main__":
    key = jax.random.PRNGKey(0)
    kp, k1, k2 = jax.random.split(key, 3)

    params = make_params(kp)

    N, H, W = 2, 16, 16
    x1 = jax.random.normal(k1, (N, 11, H, W), dtype=jnp.float32)   # NCHW
    x2 = jax.random.normal(k2, (N, 1, H, W), dtype=jnp.float32)    # NCHW

    out = jax.block_until_ready(jax.jit(custom_model_forward)(params, x1, x2))

    ref = reference_forward(params, x1, x2)
    assert out.shape == (N, 1, H, W)
    # Tolerance accounts for bf16 MXU inputs (accumulation is f32).
    max_err = float(jnp.max(jnp.abs(out - ref)))
    assert jnp.allclose(out, ref, atol=2e-2, rtol=2e-2), max_err

    print("KERNEL_OK")
</pallas_src>

<mosaic_0001>
module attributes {stable_mosaic.version = 11 : i64} {
  func.func @fused_model_kernel(%arg0: i32, %arg1: memref<1x16x16x16xf32, #tpu.memory_space<vmem>>, %arg2: memref<3x48x64xbf16, #tpu.memory_space<vmem>>, %arg3: memref<1x64xf32, #tpu.memory_space<vmem>>, %arg4: memref<4x3x192x64xbf16, #tpu.memory_space<vmem>>, %arg5: memref<4x1x64xf32, #tpu.memory_space<vmem>>, %arg6: memref<1x64xbf16, #tpu.memory_space<vmem>>, %arg7: memref<1x1xf32, #tpu.memory_space<vmem>>, %arg8: memref<1x1x256xf32, #tpu.memory_space<vmem>>, %arg9: memref<1x1x256xf32, #tpu.memory_space<vmem>>, %arg10: memref<18x18x16xf32, #tpu.memory_space<vmem>>, %arg11: memref<18x18x64xf32, #tpu.memory_space<vmem>>, %arg12: memref<18x18x64xf32, #tpu.memory_space<vmem>>) attributes {dimension_semantics = [#tpu.dimension_semantics<parallel>], iteration_bounds = array<i64: 2>, scalar_prefetch = 0 : i64, scratch_operands = 3 : i64, tpu.core_type = #tpu.core_type<tc>, window_params = [{transform_indices = @transform_0, window_bounds = array<i64: 1, 16, 16, 16>}, {pipeline_mode = #tpu.pipeline_mode<synchronous>, transform_indices = @transform_1, window_bounds = array<i64: 3, 48, 64>}, {pipeline_mode = #tpu.pipeline_mode<synchronous>, transform_indices = @transform_2, window_bounds = array<i64: 1, 64>}, {pipeline_mode = #tpu.pipeline_mode<synchronous>, transform_indices = @transform_3, window_bounds = array<i64: 4, 3, 192, 64>}, {pipeline_mode = #tpu.pipeline_mode<synchronous>, transform_indices = @transform_4, window_bounds = array<i64: 4, 1, 64>}, {pipeline_mode = #tpu.pipeline_mode<synchronous>, transform_indices = @transform_5, window_bounds = array<i64: 1, 64>}, {pipeline_mode = #tpu.pipeline_mode<synchronous>, transform_indices = @transform_6, window_bounds = array<i64: 1, 1>}, {transform_indices = @transform_7, window_bounds = array<i64: 1, 1, 256>}, {transform_indices = @transform_8, window_bounds = array<i64: 1, 1, 256>}]} {
    %cst = arith.constant 0.000000e+00 : f32
    %0 = vector.broadcast %cst : f32 to vector<18x18x16xf32>
    %c0 = arith.constant 0 : index
    %c0_0 = arith.constant 0 : index
    %c0_1 = arith.constant 0 : index
    %1 = vector.load %arg10[%c0, %c0_0, %c0_1] : memref<18x18x16xf32, #tpu.memory_space<vmem>>, vector<18x18x16xf32>
    tpu.vector_store %arg10[%c0, %c0_0, %c0_1], %0 {strides = array<i32>} : memref<18x18x16xf32, #tpu.memory_space<vmem>>, vector<18x18x16xf32>,
    %cst_2 = arith.constant 0.000000e+00 : f32
    %2 = vector.broadcast %cst_2 : f32 to vector<18x18x64xf32>
    %c0_3 = arith.constant 0 : index
    %c0_4 = arith.constant 0 : index
    %c0_5 = arith.constant 0 : index
    %3 = vector.load %arg11[%c0_3, %c0_4, %c0_5] : memref<18x18x64xf32, #tpu.memory_space<vmem>>, vector<18x18x64xf32>
    tpu.vector_store %arg11[%c0_3, %c0_4, %c0_5], %2 {strides = array<i32>} : memref<18x18x64xf32, #tpu.memory_space<vmem>>, vector<18x18x64xf32>,
    %cst_6 = arith.constant 0.000000e+00 : f32
    %4 = vector.broadcast %cst_6 : f32 to vector<18x18x64xf32>
    %c0_7 = arith.constant 0 : index
    %c0_8 = arith.constant 0 : index
    %c0_9 = arith.constant 0 : index
    %5 = vector.load %arg12[%c0_7, %c0_8, %c0_9] : memref<18x18x64xf32, #tpu.memory_space<vmem>>, vector<18x18x64xf32>
    tpu.vector_store %arg12[%c0_7, %c0_8, %c0_9], %4 {strides = array<i32>} : memref<18x18x64xf32, #tpu.memory_space<vmem>>, vector<18x18x64xf32>,
    %c0_10 = arith.constant 0 : index
    %c0_11 = arith.constant 0 : index
    %c0_12 = arith.constant 0 : index
    %c0_13 = arith.constant 0 : index
    %6 = vector.load %arg1[%c0_10, %c0_11, %c0_12, %c0_13] : memref<1x16x16x16xf32, #tpu.memory_space<vmem>>, vector<1x16x16x16xf32>
    %7 = vector.shape_cast %6 : vector<1x16x16x16xf32> to vector<16x16x16xf32>
    %c1 = arith.constant 1 : index
    %c1_14 = arith.constant 1 : index
    %c0_15 = arith.constant 0 : index
    %8 = vector.load %arg10[%c1, %c1_14, %c0_15] : memref<18x18x16xf32, #tpu.memory_space<vmem>>, vector<16x16x16xf32>
    tpu.vector_store %arg10[%c1, %c1_14, %c0_15], %7 {strides = array<i32>} : memref<18x18x16xf32, #tpu.memory_space<vmem>>, vector<16x16x16xf32>,
    %c0_16 = arith.constant 0 : index
    %c0_17 = arith.constant 0 : index
    %c0_18 = arith.constant 0 : index
    %9 = vector.load %arg2[%c0_16, %c0_17, %c0_18] : memref<3x48x64xbf16, #tpu.memory_space<vmem>>, vector<3x48x64xbf16>
    %c0_19 = arith.constant 0 : index
    %c0_20 = arith.constant 0 : index
    %10 = vector.load %arg3[%c0_19, %c0_20] : memref<1x64xf32, #tpu.memory_space<vmem>>, vector<1x64xf32>
    %c0_21 = arith.constant 0 : index
    %c0_22 = arith.constant 0 : index
    %c0_23 = arith.constant 0 : index
    %11 = vector.load %arg10[%c0_21, %c0_22, %c0_23] : memref<18x18x16xf32, #tpu.memory_space<vmem>>, vector<18x18x16xf32>
    %12 = vector.extract_strided_slice %11 {offsets = [0, 0, 0], sizes = [18, 16, 16], strides = [1, 1, 1]} : vector<18x18x16xf32> to vector<18x16x16xf32>
    %13 = vector.extract_strided_slice %11 {offsets = [0, 1, 0], sizes = [18, 16, 16], strides = [1, 1, 1]} : vector<18x18x16xf32> to vector<18x16x16xf32>
    %14 = vector.extract_strided_slice %11 {offsets = [0, 2, 0], sizes = [18, 16, 16], strides = [1, 1, 1]} : vector<18x18x16xf32> to vector<18x16x16xf32>
    %15 = tpu.concatenate %12, %13, %14 in 2 : vector<18x16x16xf32>, vector<18x16x16xf32>, vector<18x16x16xf32> -> vector<18x16x48xf32>
    %cst_24 = arith.constant 0.000000e+00 : f32
    %16 = vector.broadcast %cst_24 : f32 to vector<256x64xf32>
    %17 = vector.extract_strided_slice %15 {offsets = [0, 0, 0], sizes = [16, 16, 48], strides = [1, 1, 1]} : vector<18x16x48xf32> to vector<16x16x48xf32>
    %18 = vector.shape_cast %17 : vector<16x16x48xf32> to vector<256x48xf32>
    %19 = arith.truncf %18 : vector<256x48xf32> to vector<256x48xbf16>
    %20 = vector.extract_strided_slice %9 {offsets = [0, 0, 0], sizes = [1, 48, 64], strides = [1, 1, 1]} : vector<3x48x64xbf16> to vector<1x48x64xbf16>
    %21 = vector.shape_cast %20 : vector<1x48x64xbf16> to vector<48x64xbf16>
    %cst_25 = arith.constant dense<0.000000e+00> : vector<256x64xf32>
    %22 = tpu.matmul %19, %21, %cst_25 {dimension_numbers = #tpu.dot_dimension_numbers<[1], [0], [0], [1], [0, 0, 1, 1], [], []>} : vector<256x48xbf16>, vector<48x64xbf16>, vector<256x64xf32> -> vector<256x64xf32>
    %23 = arith.addf %16, %22 : vector<256x64xf32>
    %24 = vector.extract_strided_slice %15 {offsets = [1, 0, 0], sizes = [16, 16, 48], strides = [1, 1, 1]} : vector<18x16x48xf32> to vector<16x16x48xf32>
    %25 = vector.shape_cast %24 : vector<16x16x48xf32> to vector<256x48xf32>
    %26 = arith.truncf %25 : vector<256x48xf32> to vector<256x48xbf16>
    %27 = vector.extract_strided_slice %9 {offsets = [1, 0, 0], sizes = [1, 48, 64], strides = [1, 1, 1]} : vector<3x48x64xbf16> to vector<1x48x64xbf16>
    %28 = vector.shape_cast %27 : vector<1x48x64xbf16> to vector<48x64xbf16>
    %cst_26 = arith.constant dense<0.000000e+00> : vector<256x64xf32>
    %29 = tpu.matmul %26, %28, %cst_26 {dimension_numbers = #tpu.dot_dimension_numbers<[1], [0], [0], [1], [0, 0, 1, 1], [], []>} : vector<256x48xbf16>, vector<48x64xbf16>, vector<256x64xf32> -> vector<256x64xf32>
    %30 = arith.addf %23, %29 : vector<256x64xf32>
    %31 = vector.extract_strided_slice %15 {offsets = [2, 0, 0], sizes = [16, 16, 48], strides = [1, 1, 1]} : vector<18x16x48xf32> to vector<16x16x48xf32>
    %32 = vector.shape_cast %31 : vector<16x16x48xf32> to vector<256x48xf32>
    %33 = arith.truncf %32 : vector<256x48xf32> to vector<256x48xbf16>
    %34 = vector.extract_strided_slice %9 {offsets = [2, 0, 0], sizes = [1, 48, 64], strides = [1, 1, 1]} : vector<3x48x64xbf16> to vector<1x48x64xbf16>
    %35 = vector.shape_cast %34 : vector<1x48x64xbf16> to vector<48x64xbf16>
    %cst_27 = arith.constant dense<0.000000e+00> : vector<256x64xf32>
    %36 = tpu.matmul %33, %35, %cst_27 {dimension_numbers = #tpu.dot_dimension_numbers<[1], [0], [0], [1], [0, 0, 1, 1], [], []>} : vector<256x48xbf16>, vector<48x64xbf16>, vector<256x64xf32> -> vector<256x64xf32>
    %37 = arith.addf %30, %36 : vector<256x64xf32>
    %38 = vector.broadcast %10 : vector<1x64xf32> to vector<256x64xf32>
    %39 = arith.addf %37, %38 : vector<256x64xf32>
    %cst_28 = arith.constant 0.000000e+00 : f32
    %40 = vector.broadcast %cst_28 : f32 to vector<256x64xf32>
    %41 = arith.maximumf %39, %40 : vector<256x64xf32>
    %42 = vector.shape_cast %41 : vector<256x64xf32> to vector<16x16x64xf32>
    %c1_29 = arith.constant 1 : index
    %c1_30 = arith.constant 1 : index
    %c0_31 = arith.constant 0 : index
    %43 = vector.load %arg11[%c1_29, %c1_30, %c0_31] : memref<18x18x64xf32, #tpu.memory_space<vmem>>, vector<16x16x64xf32>
    tpu.vector_store %arg11[%c1_29, %c1_30, %c0_31], %42 {strides = array<i32>} : memref<18x18x64xf32, #tpu.memory_space<vmem>>, vector<16x16x64xf32>,
    %c0_32 = arith.constant 0 : index
    %c0_33 = arith.constant 0 : index
    %c0_34 = arith.constant 0 : index
    %c0_35 = arith.constant 0 : index
    %44 = vector.load %arg4[%c0_32, %c0_33, %c0_34, %c0_35] : memref<4x3x192x64xbf16, #tpu.memory_space<vmem>>, vector<1x3x192x64xbf16>
    %45 = vector.shape_cast %44 : vector<1x3x192x64xbf16> to vector<3x192x64xbf16>
    %c0_36 = arith.constant 0 : index
    %c0_37 = arith.constant 0 : index
    %c0_38 = arith.constant 0 : index
    %46 = vector.load %arg5[%c0_36, %c0_37, %c0_38] : memref<4x1x64xf32, #tpu.memory_space<vmem>>, vector<1x1x64xf32>
    %47 = vector.shape_cast %46 : vector<1x1x64xf32> to vector<1x64xf32>
    %c0_39 = arith.constant 0 : index
    %c0_40 = arith.constant 0 : index
    %c0_41 = arith.constant 0 : index
    %48 = vector.load %arg11[%c0_39, %c0_40, %c0_41] : memref<18x18x64xf32, #tpu.memory_space<vmem>>, vector<18x18x64xf32>
    %49 = vector.extract_strided_slice %48 {offsets = [0, 0, 0], sizes = [18, 16, 64], strides = [1, 1, 1]} : vector<18x18x64xf32> to vector<18x16x64xf32>
    %50 = vector.extract_strided_slice %48 {offsets = [0, 1, 0], sizes = [18, 16, 64], strides = [1, 1, 1]} : vector<18x18x64xf32> to vector<18x16x64xf32>
    %51 = vector.extract_strided_slice %48 {offsets = [0, 2, 0], sizes = [18, 16, 64], strides = [1, 1, 1]} : vector<18x18x64xf32> to vector<18x16x64xf32>
    %52 = tpu.concatenate %49, %50, %51 in 2 : vector<18x16x64xf32>, vector<18x16x64xf32>, vector<18x16x64xf32> -> vector<18x16x192xf32>
    %cst_42 = arith.constant 0.000000e+00 : f32
    %53 = vector.broadcast %cst_42 : f32 to vector<256x64xf32>
    %54 = vector.extract_strided_slice %52 {offsets = [0, 0, 0], sizes = [16, 16, 192], strides = [1, 1, 1]} : vector<18x16x192xf32> to vector<16x16x192xf32>
    %55 = vector.shape_cast %54 : vector<16x16x192xf32> to vector<256x192xf32>
    %56 = arith.truncf %55 : vector<256x192xf32> to vector<256x192xbf16>
    %57 = vector.extract_strided_slice %45 {offsets = [0, 0, 0], sizes = [1, 192, 64], strides = [1, 1, 1]} : vector<3x192x64xbf16> to vector<1x192x64xbf16>
    %58 = vector.shape_cast %57 : vector<1x192x64xbf16> to vector<192x64xbf16>
    %cst_43 = arith.constant dense<0.000000e+00> : vector<256x64xf32>
    %59 = tpu.matmul %56, %58, %cst_43 {dimension_numbers = #tpu.dot_dimension_numbers<[1], [0], [0], [1], [0, 0, 1, 1], [], []>} : vector<256x192xbf16>, vector<192x64xbf16>, vector<256x64xf32> -> vector<256x64xf32>
    %60 = arith.addf %53, %59 : vector<256x64xf32>
    %61 = vector.extract_strided_slice %52 {offsets = [1, 0, 0], sizes = [16, 16, 192], strides = [1, 1, 1]} : vector<18x16x192xf32> to vector<16x16x192xf32>
    %62 = vector.shape_cast %61 : vector<16x16x192xf32> to vector<256x192xf32>
    %63 = arith.truncf %62 : vector<256x192xf32> to vector<256x192xbf16>
    %64 = vector.extract_strided_slice %45 {offsets = [1, 0, 0], sizes = [1, 192, 64], strides = [1, 1, 1]} : vector<3x192x64xbf16> to vector<1x192x64xbf16>
    %65 = vector.shape_cast %64 : vector<1x192x64xbf16> to vector<192x64xbf16>
    %cst_44 = arith.constant dense<0.000000e+00> : vector<256x64xf32>
    %66 = tpu.matmul %63, %65, %cst_44 {dimension_numbers = #tpu.dot_dimension_numbers<[1], [0], [0], [1], [0, 0, 1, 1], [], []>} : vector<256x192xbf16>, vector<192x64xbf16>, vector<256x64xf32> -> vector<256x64xf32>
    %67 = arith.addf %60, %66 : vector<256x64xf32>
    %68 = vector.extract_strided_slice %52 {offsets = [2, 0, 0], sizes = [16, 16, 192], strides = [1, 1, 1]} : vector<18x16x192xf32> to vector<16x16x192xf32>
    %69 = vector.shape_cast %68 : vector<16x16x192xf32> to vector<256x192xf32>
    %70 = arith.truncf %69 : vector<256x192xf32> to vector<256x192xbf16>
    %71 = vector.extract_strided_slice %45 {offsets = [2, 0, 0], sizes = [1, 192, 64], strides = [1, 1, 1]} : vector<3x192x64xbf16> to vector<1x192x64xbf16>
    %72 = vector.shape_cast %71 : vector<1x192x64xbf16> to vector<192x64xbf16>
    %cst_45 = arith.constant dense<0.000000e+00> : vector<256x64xf32>
    %73 = tpu.matmul %70, %72, %cst_45 {dimension_numbers = #tpu.dot_dimension_numbers<[1], [0], [0], [1], [0, 0, 1, 1], [], []>} : vector<256x192xbf16>, vector<192x64xbf16>, vector<256x64xf32> -> vector<256x64xf32>
    %74 = arith.addf %67, %73 : vector<256x64xf32>
    %75 = vector.broadcast %47 : vector<1x64xf32> to vector<256x64xf32>
    %76 = arith.addf %74, %75 : vector<256x64xf32>
    %cst_46 = arith.constant 0.000000e+00 : f32
    %77 = vector.broadcast %cst_46 : f32 to vector<256x64xf32>
    %78 = arith.maximumf %76, %77 : vector<256x64xf32>
    %79 = vector.shape_cast %78 : vector<256x64xf32> to vector<16x16x64xf32>
    %c1_47 = arith.constant 1 : index
    %c1_48 = arith.constant 1 : index
    %c0_49 = arith.constant 0 : index
    %80 = vector.load %arg12[%c1_47, %c1_48, %c0_49] : memref<18x18x64xf32, #tpu.memory_space<vmem>>, vector<16x16x64xf32>
    tpu.vector_store %arg12[%c1_47, %c1_48, %c0_49], %79 {strides = array<i32>} : memref<18x18x64xf32, #tpu.memory_space<vmem>>, vector<16x16x64xf32>,
    %c1_50 = arith.constant 1 : index
    %c0_51 = arith.constant 0 : index
    %c0_52 = arith.constant 0 : index
    %c0_53 = arith.constant 0 : index
    %81 = vector.load %arg4[%c1_50, %c0_51, %c0_52, %c0_53] : memref<4x3x192x64xbf16, #tpu.memory_space<vmem>>, vector<1x3x192x64xbf16>
    %82 = vector.shape_cast %81 : vector<1x3x192x64xbf16> to vector<3x192x64xbf16>
    %c1_54 = arith.constant 1 : index
    %c0_55 = arith.constant 0 : index
    %c0_56 = arith.constant 0 : index
    %83 = vector.load %arg5[%c1_54, %c0_55, %c0_56] : memref<4x1x64xf32, #tpu.memory_space<vmem>>, vector<1x1x64xf32>
    %84 = vector.shape_cast %83 : vector<1x1x64xf32> to vector<1x64xf32>
    %c0_57 = arith.constant 0 : index
    %c0_58 = arith.constant 0 : index
    %c0_59 = arith.constant 0 : index
    %85 = vector.load %arg12[%c0_57, %c0_58, %c0_59] : memref<18x18x64xf32, #tpu.memory_space<vmem>>, vector<18x18x64xf32>
    %86 = vector.extract_strided_slice %85 {offsets = [0, 0, 0], sizes = [18, 16, 64], strides = [1, 1, 1]} : vector<18x18x64xf32> to vector<18x16x64xf32>
    %87 = vector.extract_strided_slice %85 {offsets = [0, 1, 0], sizes = [18, 16, 64], strides = [1, 1, 1]} : vector<18x18x64xf32> to vector<18x16x64xf32>
    %88 = vector.extract_strided_slice %85 {offsets = [0, 2, 0], sizes = [18, 16, 64], strides = [1, 1, 1]} : vector<18x18x64xf32> to vector<18x16x64xf32>
    %89 = tpu.concatenate %86, %87, %88 in 2 : vector<18x16x64xf32>, vector<18x16x64xf32>, vector<18x16x64xf32> -> vector<18x16x192xf32>
    %cst_60 = arith.constant 0.000000e+00 : f32
    %90 = vector.broadcast %cst_60 : f32 to vector<256x64xf32>
    %91 = vector.extract_strided_slice %89 {offsets = [0, 0, 0], sizes = [16, 16, 192], strides = [1, 1, 1]} : vector<18x16x192xf32> to vector<16x16x192xf32>
    %92 = vector.shape_cast %91 : vector<16x16x192xf32> to vector<256x192xf32>
    %93 = arith.truncf %92 : vector<256x192xf32> to vector<256x192xbf16>
    %94 = vector.extract_strided_slice %82 {offsets = [0, 0, 0], sizes = [1, 192, 64], strides = [1, 1, 1]} : vector<3x192x64xbf16> to vector<1x192x64xbf16>
    %95 = vector.shape_cast %94 : vector<1x192x64xbf16> to vector<192x64xbf16>
    %cst_61 = arith.constant dense<0.000000e+00> : vector<256x64xf32>
    %96 = tpu.matmul %93, %95, %cst_61 {dimension_numbers = #tpu.dot_dimension_numbers<[1], [0], [0], [1], [0, 0, 1, 1], [], []>} : vector<256x192xbf16>, vector<192x64xbf16>, vector<256x64xf32> -> vector<256x64xf32>
    %97 = arith.addf %90, %96 : vector<256x64xf32>
    %98 = vector.extract_strided_slice %89 {offsets = [1, 0, 0], sizes = [16, 16, 192], strides = [1, 1, 1]} : vector<18x16x192xf32> to vector<16x16x192xf32>
    %99 = vector.shape_cast %98 : vector<16x16x192xf32> to vector<256x192xf32>
    %100 = arith.truncf %99 : vector<256x192xf32> to vector<256x192xbf16>
    %101 = vector.extract_strided_slice %82 {offsets = [1, 0, 0], sizes = [1, 192, 64], strides = [1, 1, 1]} : vector<3x192x64xbf16> to vector<1x192x64xbf16>
    %102 = vector.shape_cast %101 : vector<1x192x64xbf16> to vector<192x64xbf16>
    %cst_62 = arith.constant dense<0.000000e+00> : vector<256x64xf32>
    %103 = tpu.matmul %100, %102, %cst_62 {dimension_numbers = #tpu.dot_dimension_numbers<[1], [0], [0], [1], [0, 0, 1, 1], [], []>} : vector<256x192xbf16>, vector<192x64xbf16>, vector<256x64xf32> -> vector<256x64xf32>
    %104 = arith.addf %97, %103 : vector<256x64xf32>
    %105 = vector.extract_strided_slice %89 {offsets = [2, 0, 0], sizes = [16, 16, 192], strides = [1, 1, 1]} : vector<18x16x192xf32> to vector<16x16x192xf32>
    %106 = vector.shape_cast %105 : vector<16x16x192xf32> to vector<256x192xf32>
    %107 = arith.truncf %106 : vector<256x192xf32> to vector<256x192xbf16>
    %108 = vector.extract_strided_slice %82 {offsets = [2, 0, 0], sizes = [1, 192, 64], strides = [1, 1, 1]} : vector<3x192x64xbf16> to vector<1x192x64xbf16>
    %109 = vector.shape_cast %108 : vector<1x192x64xbf16> to vector<192x64xbf16>
    %cst_63 = arith.constant dense<0.000000e+00> : vector<256x64xf32>
    %110 = tpu.matmul %107, %109, %cst_63 {dimension_numbers = #tpu.dot_dimension_numbers<[1], [0], [0], [1], [0, 0, 1, 1], [], []>} : vector<256x192xbf16>, vector<192x64xbf16>, vector<256x64xf32> -> vector<256x64xf32>
    %111 = arith.addf %104, %110 : vector<256x64xf32>
    %112 = vector.broadcast %84 : vector<1x64xf32> to vector<256x64xf32>
    %113 = arith.addf %111, %112 : vector<256x64xf32>
    %cst_64 = arith.constant 0.000000e+00 : f32
    %114 = vector.broadcast %cst_64 : f32 to vector<256x64xf32>
    %115 = arith.maximumf %113, %114 : vector<256x64xf32>
    %116 = vector.shape_cast %115 : vector<256x64xf32> to vector<16x16x64xf32>
    %c1_65 = arith.constant 1 : index
    %c1_66 = arith.constant 1 : index
    %c0_67 = arith.constant 0 : index
    %117 = vector.load %arg11[%c1_65, %c1_66, %c0_67] : memref<18x18x64xf32, #tpu.memory_space<vmem>>, vector<16x16x64xf32>
    tpu.vector_store %arg11[%c1_65, %c1_66, %c0_67], %116 {strides = array<i32>} : memref<18x18x64xf32, #tpu.memory_space<vmem>>, vector<16x16x64xf32>,
    %c2 = arith.constant 2 : index
    %c0_68 = arith.constant 0 : index
    %c0_69 = arith.constant 0 : index
    %c0_70 = arith.constant 0 : index
    %118 = vector.load %arg4[%c2, %c0_68, %c0_69, %c0_70] : memref<4x3x192x64xbf16, #tpu.memory_space<vmem>>, vector<1x3x192x64xbf16>
    %119 = vector.shape_cast %118 : vector<1x3x192x64xbf16> to vector<3x192x64xbf16>
    %c2_71 = arith.constant 2 : index
    %c0_72 = arith.constant 0 : index
    %c0_73 = arith.constant 0 : index
    %120 = vector.load %arg5[%c2_71, %c0_72, %c0_73] : memref<4x1x64xf32, #tpu.memory_space<vmem>>, vector<1x1x64xf32>
    %121 = vector.shape_cast %120 : vector<1x1x64xf32> to vector<1x64xf32>
    %c0_74 = arith.constant 0 : index
    %c0_75 = arith.constant 0 : index
    %c0_76 = arith.constant 0 : index
    %122 = vector.load %arg11[%c0_74, %c0_75, %c0_76] : memref<18x18x64xf32, #tpu.memory_space<vmem>>, vector<18x18x64xf32>
    %123 = vector.extract_strided_slice %122 {offsets = [0, 0, 0], sizes = [18, 16, 64], strides = [1, 1, 1]} : vector<18x18x64xf32> to vector<18x16x64xf32>
    %124 = vector.extract_strided_slice %122 {offsets = [0, 1, 0], sizes = [18, 16, 64], strides = [1, 1, 1]} : vector<18x18x64xf32> to vector<18x16x64xf32>
    %125 = vector.extract_strided_slice %122 {offsets = [0, 2, 0], sizes = [18, 16, 64], strides = [1, 1, 1]} : vector<18x18x64xf32> to vector<18x16x64xf32>
    %126 = tpu.concatenate %123, %124, %125 in 2 : vector<18x16x64xf32>, vector<18x16x64xf32>, vector<18x16x64xf32> -> vector<18x16x192xf32>
    %cst_77 = arith.constant 0.000000e+00 : f32
    %127 = vector.broadcast %cst_77 : f32 to vector<256x64xf32>
    %128 = vector.extract_strided_slice %126 {offsets = [0, 0, 0], sizes = [16, 16, 192], strides = [1, 1, 1]} : vector<18x16x192xf32> to vector<16x16x192xf32>
    %129 = vector.shape_cast %128 : vector<16x16x192xf32> to vector<256x192xf32>
    %130 = arith.truncf %129 : vector<256x192xf32> to vector<256x192xbf16>
    %131 = vector.extract_strided_slice %119 {offsets = [0, 0, 0], sizes = [1, 192, 64], strides = [1, 1, 1]} : vector<3x192x64xbf16> to vector<1x192x64xbf16>
    %132 = vector.shape_cast %131 : vector<1x192x64xbf16> to vector<192x64xbf16>
    %cst_78 = arith.constant dense<0.000000e+00> : vector<256x64xf32>
    %133 = tpu.matmul %130, %132, %cst_78 {dimension_numbers = #tpu.dot_dimension_numbers<[1], [0], [0], [1], [0, 0, 1, 1], [], []>} : vector<256x192xbf16>, vector<192x64xbf16>, vector<256x64xf32> -> vector<256x64xf32>
    %134 = arith.addf %127, %133 : vector<256x64xf32>
    %135 = vector.extract_strided_slice %126 {offsets = [1, 0, 0], sizes = [16, 16, 192], strides = [1, 1, 1]} : vector<18x16x192xf32> to vector<16x16x192xf32>
    %136 = vector.shape_cast %135 : vector<16x16x192xf32> to vector<256x192xf32>
    %137 = arith.truncf %136 : vector<256x192xf32> to vector<256x192xbf16>
    %138 = vector.extract_strided_slice %119 {offsets = [1, 0, 0], sizes = [1, 192, 64], strides = [1, 1, 1]} : vector<3x192x64xbf16> to vector<1x192x64xbf16>
    %139 = vector.shape_cast %138 : vector<1x192x64xbf16> to vector<192x64xbf16>
    %cst_79 = arith.constant dense<0.000000e+00> : vector<256x64xf32>
    %140 = tpu.matmul %137, %139, %cst_79 {dimension_numbers = #tpu.dot_dimension_numbers<[1], [0], [0], [1], [0, 0, 1, 1], [], []>} : vector<256x192xbf16>, vector<192x64xbf16>, vector<256x64xf32> -> vector<256x64xf32>
    %141 = arith.addf %134, %140 : vector<256x64xf32>
    %142 = vector.extract_strided_slice %126 {offsets = [2, 0, 0], sizes = [16, 16, 192], strides = [1, 1, 1]} : vector<18x16x192xf32> to vector<16x16x192xf32>
    %143 = vector.shape_cast %142 : vector<16x16x192xf32> to vector<256x192xf32>
    %144 = arith.truncf %143 : vector<256x192xf32> to vector<256x192xbf16>
    %145 = vector.extract_strided_slice %119 {offsets = [2, 0, 0], sizes = [1, 192, 64], strides = [1, 1, 1]} : vector<3x192x64xbf16> to vector<1x192x64xbf16>
    %146 = vector.shape_cast %145 : vector<1x192x64xbf16> to vector<192x64xbf16>
    %cst_80 = arith.constant dense<0.000000e+00> : vector<256x64xf32>
    %147 = tpu.matmul %144, %146, %cst_80 {dimension_numbers = #tpu.dot_dimension_numbers<[1], [0], [0], [1], [0, 0, 1, 1], [], []>} : vector<256x192xbf16>, vector<192x64xbf16>, vector<256x64xf32> -> vector<256x64xf32>
    %148 = arith.addf %141, %147 : vector<256x64xf32>
    %149 = vector.broadcast %121 : vector<1x64xf32> to vector<256x64xf32>
    %150 = arith.addf %148, %149 : vector<256x64xf32>
    %cst_81 = arith.constant 0.000000e+00 : f32
    %151 = vector.broadcast %cst_81 : f32 to vector<256x64xf32>
    %152 = arith.maximumf %150, %151 : vector<256x64xf32>
    %153 = vector.shape_cast %152 : vector<256x64xf32> to vector<16x16x64xf32>
    %c1_82 = arith.constant 1 : index
    %c1_83 = arith.constant 1 : index
    %c0_84 = arith.constant 0 : index
    %154 = vector.load %arg12[%c1_82, %c1_83, %c0_84] : memref<18x18x64xf32, #tpu.memory_space<vmem>>, vector<16x16x64xf32>
    tpu.vector_store %arg12[%c1_82, %c1_83, %c0_84], %153 {strides = array<i32>} : memref<18x18x64xf32, #tpu.memory_space<vmem>>, vector<16x16x64xf32>,
    %c3 = arith.constant 3 : index
    %c0_85 = arith.constant 0 : index
    %c0_86 = arith.constant 0 : index
    %c0_87 = arith.constant 0 : index
    %155 = vector.load %arg4[%c3, %c0_85, %c0_86, %c0_87] : memref<4x3x192x64xbf16, #tpu.memory_space<vmem>>, vector<1x3x192x64xbf16>
    %156 = vector.shape_cast %155 : vector<1x3x192x64xbf16> to vector<3x192x64xbf16>
    %c3_88 = arith.constant 3 : index
    %c0_89 = arith.constant 0 : index
    %c0_90 = arith.constant 0 : index
    %157 = vector.load %arg5[%c3_88, %c0_89, %c0_90] : memref<4x1x64xf32, #tpu.memory_space<vmem>>, vector<1x1x64xf32>
    %158 = vector.shape_cast %157 : vector<1x1x64xf32> to vector<1x64xf32>
    %c0_91 = arith.constant 0 : index
    %c0_92 = arith.constant 0 : index
    %c0_93 = arith.constant 0 : index
    %159 = vector.load %arg12[%c0_91, %c0_92, %c0_93] : memref<18x18x64xf32, #tpu.memory_space<vmem>>, vector<18x18x64xf32>
    %160 = vector.extract_strided_slice %159 {offsets = [0, 0, 0], sizes = [18, 16, 64], strides = [1, 1, 1]} : vector<18x18x64xf32> to vector<18x16x64xf32>
    %161 = vector.extract_strided_slice %159 {offsets = [0, 1, 0], sizes = [18, 16, 64], strides = [1, 1, 1]} : vector<18x18x64xf32> to vector<18x16x64xf32>
    %162 = vector.extract_strided_slice %159 {offsets = [0, 2, 0], sizes = [18, 16, 64], strides = [1, 1, 1]} : vector<18x18x64xf32> to vector<18x16x64xf32>
    %163 = tpu.concatenate %160, %161, %162 in 2 : vector<18x16x64xf32>, vector<18x16x64xf32>, vector<18x16x64xf32> -> vector<18x16x192xf32>
    %cst_94 = arith.constant 0.000000e+00 : f32
    %164 = vector.broadcast %cst_94 : f32 to vector<256x64xf32>
    %165 = vector.extract_strided_slice %163 {offsets = [0, 0, 0], sizes = [16, 16, 192], strides = [1, 1, 1]} : vector<18x16x192xf32> to vector<16x16x192xf32>
    %166 = vector.shape_cast %165 : vector<16x16x192xf32> to vector<256x192xf32>
    %167 = arith.truncf %166 : vector<256x192xf32> to vector<256x192xbf16>
    %168 = vector.extract_strided_slice %156 {offsets = [0, 0, 0], sizes = [1, 192, 64], strides = [1, 1, 1]} : vector<3x192x64xbf16> to vector<1x192x64xbf16>
    %169 = vector.shape_cast %168 : vector<1x192x64xbf16> to vector<192x64xbf16>
    %cst_95 = arith.constant dense<0.000000e+00> : vector<256x64xf32>
    %170 = tpu.matmul %167, %169, %cst_95 {dimension_numbers = #tpu.dot_dimension_numbers<[1], [0], [0], [1], [0, 0, 1, 1], [], []>} : vector<256x192xbf16>, vector<192x64xbf16>, vector<256x64xf32> -> vector<256x64xf32>
    %171 = arith.addf %164, %170 : vector<256x64xf32>
    %172 = vector.extract_strided_slice %163 {offsets = [1, 0, 0], sizes = [16, 16, 192], strides = [1, 1, 1]} : vector<18x16x192xf32> to vector<16x16x192xf32>
    %173 = vector.shape_cast %172 : vector<16x16x192xf32> to vector<256x192xf32>
    %174 = arith.truncf %173 : vector<256x192xf32> to vector<256x192xbf16>
    %175 = vector.extract_strided_slice %156 {offsets = [1, 0, 0], sizes = [1, 192, 64], strides = [1, 1, 1]} : vector<3x192x64xbf16> to vector<1x192x64xbf16>
    %176 = vector.shape_cast %175 : vector<1x192x64xbf16> to vector<192x64xbf16>
    %cst_96 = arith.constant dense<0.000000e+00> : vector<256x64xf32>
    %177 = tpu.matmul %174, %176, %cst_96 {dimension_numbers = #tpu.dot_dimension_numbers<[1], [0], [0], [1], [0, 0, 1, 1], [], []>} : vector<256x192xbf16>, vector<192x64xbf16>, vector<256x64xf32> -> vector<256x64xf32>
    %178 = arith.addf %171, %177 : vector<256x64xf32>
    %179 = vector.extract_strided_slice %163 {offsets = [2, 0, 0], sizes = [16, 16, 192], strides = [1, 1, 1]} : vector<18x16x192xf32> to vector<16x16x192xf32>
    %180 = vector.shape_cast %179 : vector<16x16x192xf32> to vector<256x192xf32>
    %181 = arith.truncf %180 : vector<256x192xf32> to vector<256x192xbf16>
    %182 = vector.extract_strided_slice %156 {offsets = [2, 0, 0], sizes = [1, 192, 64], strides = [1, 1, 1]} : vector<3x192x64xbf16> to vector<1x192x64xbf16>
    %183 = vector.shape_cast %182 : vector<1x192x64xbf16> to vector<192x64xbf16>
    %cst_97 = arith.constant dense<0.000000e+00> : vector<256x64xf32>
    %184 = tpu.matmul %181, %183, %cst_97 {dimension_numbers = #tpu.dot_dimension_numbers<[1], [0], [0], [1], [0, 0, 1, 1], [], []>} : vector<256x192xbf16>, vector<192x64xbf16>, vector<256x64xf32> -> vector<256x64xf32>
    %185 = arith.addf %178, %184 : vector<256x64xf32>
    %186 = vector.broadcast %158 : vector<1x64xf32> to vector<256x64xf32>
    %187 = arith.addf %185, %186 : vector<256x64xf32>
    %cst_98 = arith.constant 0.000000e+00 : f32
    %188 = vector.broadcast %cst_98 : f32 to vector<256x64xf32>
    %189 = arith.maximumf %187, %188 : vector<256x64xf32>
    %c0_99 = arith.constant 0 : index
    %c0_100 = arith.constant 0 : index
    %190 = vector.load %arg6[%c0_99, %c0_100] : memref<1x64xbf16, #tpu.memory_space<vmem>>, vector<1x64xbf16>
    %191 = arith.truncf %189 : vector<256x64xf32> to vector<256x64xbf16>
    %cst_101 = arith.constant dense<0.000000e+00> : vector<1x256xf32>
    %192 = tpu.matmul %190, %191, %cst_101 {dimension_numbers = #tpu.dot_dimension_numbers<[1], [1], [0], [0], [0, 0, 1, 0], [], []>} : vector<1x64xbf16>, vector<256x64xbf16>, vector<1x256xf32> -> vector<1x256xf32>
    %c0_102 = arith.constant 0 : index
    %c0_103 = arith.constant 0 : index
    %193 = vector.load %arg7[%c0_102, %c0_103] : memref<1x1xf32, #tpu.memory_space<vmem>>, vector<1x1xf32>
    %194 = vector.broadcast %193 : vector<1x1xf32> to vector<1x256xf32>
    %195 = arith.addf %192, %194 : vector<1x256xf32>
    %196 = arith.negf %195 : vector<1x256xf32>
    %197 = math.exp %196 : vector<1x256xf32>
    %cst_104 = arith.constant 1.000000e+00 : f32
    %198 = vector.broadcast %cst_104 : f32 to vector<1x256xf32>
    %199 = arith.addf %198, %197 : vector<1x256xf32>
    %200 = arith.divf %198, %199 : vector<1x256xf32>
    %c0_105 = arith.constant 0 : index
    %c0_106 = arith.constant 0 : index
    %c0_107 = arith.constant 0 : index
    %201 = vector.load %arg8[%c0_105, %c0_106, %c0_107] : memref<1x1x256xf32, #tpu.memory_space<vmem>>, vector<1x1x256xf32>
    %202 = vector.shape_cast %201 : vector<1x1x256xf32> to vector<1x256xf32>
    %203 = arith.mulf %200, %202 : vector<1x256xf32>
    %c0_108 = arith.constant 0 : index
    %c0_109 = arith.constant 0 : index
    %c0_110 = arith.constant 0 : index
    %204 = vector.load %arg9[%c0_108, %c0_109, %c0_110] : memref<1x1x256xf32, #tpu.memory_space<vmem>>, vector<1x1x256xf32>
    %205 = vector.shape_cast %204 : vector<1x1x256xf32> to vector<1x256xf32>
    %206 = vector.shape_cast %203 : vector<1x256xf32> to vector<1x1x256xf32>
    tpu.vector_store %arg9[%c0_108, %c0_109, %c0_110], %206 {strides = array<i32>} : memref<1x1x256xf32, #tpu.memory_space<vmem>>, vector<1x1x256xf32>,
    return
  }
  func.func @transform_0(%arg0: i32) -> (i32, i32, i32, i32) {
    %c0_i32 = arith.constant 0 : i32
    %c0_i32_0 = arith.constant 0 : i32
    %c0_i32_1 = arith.constant 0 : i32
    %c0_i32_2 = arith.constant 0 : i32
    return %arg0, %c0_i32, %c0_i32_0, %c0_i32_1 : i32, i32, i32, i32
  }
  func.func @transform_1(%arg0: i32) -> (i32, i32, i32) {
    %c0_i32 = arith.constant 0 : i32
    %c0_i32_0 = arith.constant 0 : i32
    %c0_i32_1 = arith.constant 0 : i32
    %c0_i32_2 = arith.constant 0 : i32
    return %c0_i32, %c0_i32_0, %c0_i32_1 : i32, i32, i32
  }
  func.func @transform_2(%arg0: i32) -> (i32, i32) {
    %c0_i32 = arith.constant 0 : i32
    %c0_i32_0 = arith.constant 0 : i32
    %c0_i32_1 = arith.constant 0 : i32
    return %c0_i32, %c0_i32_0 : i32, i32
  }
  func.func @transform_3(%arg0: i32) -> (i32, i32, i32, i32) {
    %c0_i32 = arith.constant 0 : i32
    %c0_i32_0 = arith.constant 0 : i32
    %c0_i32_1 = arith.constant 0 : i32
    %c0_i32_2 = arith.constant 0 : i32
    %c0_i32_3 = arith.constant 0 : i32
    return %c0_i32, %c0_i32_0, %c0_i32_1, %c0_i32_2 : i32, i32, i32, i32
  }
  func.func @transform_4(%arg0: i32) -> (i32, i32, i32) {
    %c0_i32 = arith.constant 0 : i32
    %c0_i32_0 = arith.constant 0 : i32
    %c0_i32_1 = arith.constant 0 : i32
    %c0_i32_2 = arith.constant 0 : i32
    return %c0_i32, %c0_i32_0, %c0_i32_1 : i32, i32, i32
  }
  func.func @transform_5(%arg0: i32) -> (i32, i32) {
    %c0_i32 = arith.constant 0 : i32
    %c0_i32_0 = arith.constant 0 : i32
    %c0_i32_1 = arith.constant 0 : i32
    return %c0_i32, %c0_i32_0 : i32, i32
  }
  func.func @transform_6(%arg0: i32) -> (i32, i32) {
    %c0_i32 = arith.constant 0 : i32
    %c0_i32_0 = arith.constant 0 : i32
    %c0_i32_1 = arith.constant 0 : i32
    return %c0_i32, %c0_i32_0 : i32, i32
  }
  func.func @transform_7(%arg0: i32) -> (i32, i32, i32) {
    %c0_i32 = arith.constant 0 : i32
    %c0_i32_0 = arith.constant 0 : i32
    %c0_i32_1 = arith.constant 0 : i32
    return %arg0, %c0_i32, %c0_i32_0 : i32, i32, i32
  }
  func.func @transform_8(%arg0: i32) -> (i32, i32, i32) {
    %c0_i32 = arith.constant 0 : i32
    %c0_i32_0 = arith.constant 0 : i32
    %c0_i32_1 = arith.constant 0 : i32
    return %arg0, %c0_i32, %c0_i32_0 : i32, i32, i32
  }
}

</mosaic_0001>

<llo_original>
// kernel: custom_model_forward.1
$region0: #{custom_model_forward.1}
  #allocation0 [shape = 'u32[]', space=smem, size = 0x4, offset = 0x4, fixed_abs, tag = 'smem constant byte address 0x4 - core index']
  #allocation1 [shape = 'u32[144,128]{1,0:T(1,128)}', space=vmem, size = 0x12000, scoped, tag = 'internal scratch']
  #allocation2 [shape = 'f32[18,18,16]{2,1,0:T(8,128)}', space=vmem, size = 0x36000, scoped, tag = 'scratch operand']
  #allocation3 [shape = 'f32[18,18,64]{2,1,0:T(8,128)}', space=vmem, size = 0x36000, scoped, tag = 'scratch operand']
  #allocation4 [shape = 'f32[18,18,64]{2,1,0:T(8,128)}', space=vmem, size = 0x36000, scoped, tag = 'scratch operand']
  #allocation5 [shape = 'f32[1,1]{1,0:T(1,128)S(1)}', space=vmem, size = 0x200, scoped, tag = 'scoped memory for custom_model_forward.1']
  %s0 = inlined_call_operand.vmem [shape: f32[2,16,16,16], index: 0, kind: input, shape index: {}]
  %s1 = inlined_call_operand.vmem [shape: bf16[3,48,64], index: 1, kind: input, shape index: {}]
  %s2 = inlined_call_operand.vmem [shape: f32[1,64], index: 2, kind: input, shape index: {}]
  %s3 = inlined_call_operand.vmem [shape: bf16[4,3,192,64], index: 3, kind: input, shape index: {}]
  %s4 = inlined_call_operand.vmem [shape: f32[4,1,64], index: 4, kind: input, shape index: {}]
  %s5 = inlined_call_operand.vmem [shape: bf16[1,64], index: 5, kind: input, shape index: {}]
  %s6 = inlined_call_operand.<no memory space> [shape: f32[1,1], index: 6, kind: input, shape index: {}]
  %s7 = inlined_call_operand.vmem [shape: f32[2,1,256], index: 7, kind: input, shape index: {}]
  %s8 = inlined_call_operand.vmem [shape: f32[2,1,256], index: 8, kind: output, shape index: {}]
  %s9 = sld [smem:[#allocation0]]
  $region65: #{custom_model_forward.1} parent=0
    _
  %s11 = ssub.s32 1, %s9
  %s12 = scalar_select 0, %s11, %s9
  %v13 = vstv %s6
  %14 = vst [vmem:[#allocation5] sm:$0x1] %v13
  loop: start=0, step=1, limit=4
  $region2: #{custom_model_forward.1} parent=0 // loop_pre_header
    _
  $region3: #{custom_model_forward.1} parent=0 // loop_header
    %s16 = sphi 0, %s20
    %p17 = scmp.ge.s32.totalorder %s16, 4
    %s26 = sphi 0, %s28
    %s29 = sphi 0, %s26
    %s30 = sphi 0, %s29
    %s46 = sphi 0, %s30
    %s50 = sphi 0, %s50
    %s52 = sphi 0, %s50
    %s53 = sphi 0, %s52
    %s67 = sphi 0, %s53
    %s71 = sphi 0, %s71
    %s73 = sphi 0, %s71
    %s74 = sphi 0, %s73
    %s88 = sphi 0, %s74
    %s92 = sphi 0, %s92
    %s94 = sphi 0, %s92
    %s95 = sphi 0, %s94
    %s109 = sphi 0, %s95
    %s113 = sphi 0, %s113
    %s115 = sphi 0, %s113
    %s116 = sphi 0, %s115
    %s130 = sphi 0, %s116
    %s134 = sphi 0, %s134
    %s136 = sphi 0, %s134
    %s137 = sphi 0, %s136
    %s151 = sphi 0, %s137
    %s155 = sphi 0, %s155
    %s157 = sphi 0, %s155
    %s158 = sphi 0, %s157
    %s172 = sphi 0, %s158
    %s178 = sphi 0, %s180
    %s181 = sphi 0, %s178
    %s182 = sphi 0, %s181
    %s198 = sphi 0, %s182
    %s204 = sphi 0, %s206
    %s207 = sphi 0, %s204
    %s208 = sphi 0, %s207
    %s224 = sphi 0, %s208
  $region4: #{custom_model_forward.1} parent=0 // loop_header_branch
    %19 = sbr.rel (%p17) target = $region8
  $region5: #{custom_model_forward.1} parent=0 // loop_body
    %s21 = ssub.s32 %s16, 1
    %s22 = ssub.s32 %s16, 2
    %s23 = sadd.s32 %s16, 1
    %s24 = ssub.s32 %s16, %s23
    %p25 = scmp.eq.s32.totalorder %s24, 0
    %s27 = sadd.s32 %s26, 1
    %s28 = scalar_select %p25, %s26, %s27
    %p31 = pneg %p25
    %p32 = scmp.eq.s32.totalorder %s16, 1
    %p33 = por %p31, %p32
    %p34 = scmp.ne.s32.totalorder %s26, %s29
    %p35 = scmp.eq.s32.totalorder %s16, 0
    %p36 = por %p34, %p35
    %p37 = scmp.ne.s32.totalorder %s26, %s29
    %p38 = scmp.eq.s32.totalorder %s21, 1
    %p39 = por %p37, %p38
    %p40 = scmp.ne.s32.totalorder %s29, %s30
    %p41 = scmp.eq.s32.totalorder %s21, 0
    %p42 = por %p40, %p41
    %p43 = scmp.ne.s32.totalorder %s29, %s30
    %p44 = scmp.eq.s32.totalorder %s22, 1
    %p45 = por %p43, %p44
    %p47 = scmp.ne.s32.totalorder %s30, %s46
    %p48 = scmp.eq.s32.totalorder %s22, 0
    %p49 = por %p47, %p48
    %s51 = sadd.s32 %s50, 1
    %p54 = scmp.eq.s32.totalorder %s16, 1
    %p55 = scmp.ne.s32.totalorder %s50, %s52
    %p56 = scmp.eq.s32.totalorder %s16, 0
    %p57 = por %p55, %p56
    %p58 = scmp.ne.s32.totalorder %s50, %s52
    %p59 = scmp.eq.s32.totalorder %s21, 1
    %p60 = por %p58, %p59
    %p61 = scmp.ne.s32.totalorder %s52, %s53
    %p62 = scmp.eq.s32.totalorder %s21, 0
    %p63 = por %p61, %p62
    %p64 = scmp.ne.s32.totalorder %s52, %s53
    %p65 = scmp.eq.s32.totalorder %s22, 1
    %p66 = por %p64, %p65
    %p68 = scmp.ne.s32.totalorder %s53, %s67
    %p69 = scmp.eq.s32.totalorder %s22, 0
    %p70 = por %p68, %p69
    %s72 = sadd.s32 %s71, 1
    %p75 = scmp.eq.s32.totalorder %s16, 1
    %p76 = scmp.ne.s32.totalorder %s71, %s73
    %p77 = scmp.eq.s32.totalorder %s16, 0
    %p78 = por %p76, %p77
    %p79 = scmp.ne.s32.totalorder %s71, %s73
    %p80 = scmp.eq.s32.totalorder %s21, 1
    %p81 = por %p79, %p80
    %p82 = scmp.ne.s32.totalorder %s73, %s74
    %p83 = scmp.eq.s32.totalorder %s21, 0
    %p84 = por %p82, %p83
    %p85 = scmp.ne.s32.totalorder %s73, %s74
    %p86 = scmp.eq.s32.totalorder %s22, 1
    %p87 = por %p85, %p86
    %p89 = scmp.ne.s32.totalorder %s74, %s88
    %p90 = scmp.eq.s32.totalorder %s22, 0
    %p91 = por %p89, %p90
    %s93 = sadd.s32 %s92, 1
    %p96 = scmp.eq.s32.totalorder %s16, 1
    %p97 = scmp.ne.s32.totalorder %s92, %s94
    %p98 = scmp.eq.s32.totalorder %s16, 0
    %p99 = por %p97, %p98
    %p100 = scmp.ne.s32.totalorder %s92, %s94
    %p101 = scmp.eq.s32.totalorder %s21, 1
    %p102 = por %p100, %p101
    %p103 = scmp.ne.s32.totalorder %s94, %s95
    %p104 = scmp.eq.s32.totalorder %s21, 0
    %p105 = por %p103, %p104
    %p106 = scmp.ne.s32.totalorder %s94, %s95
    %p107 = scmp.eq.s32.totalorder %s22, 1
    %p108 = por %p106, %p107
    %p110 = scmp.ne.s32.totalorder %s95, %s109
    %p111 = scmp.eq.s32.totalorder %s22, 0
    %p112 = por %p110, %p111
    %s114 = sadd.s32 %s113, 1
    %p117 = scmp.eq.s32.totalorder %s16, 1
    %p118 = scmp.ne.s32.totalorder %s113, %s115
    %p119 = scmp.eq.s32.totalorder %s16, 0
    %p120 = por %p118, %p119
    %p121 = scmp.ne.s32.totalorder %s113, %s115
    %p122 = scmp.eq.s32.totalorder %s21, 1
    %p123 = por %p121, %p122
    %p124 = scmp.ne.s32.totalorder %s115, %s116
    %p125 = scmp.eq.s32.totalorder %s21, 0
    %p126 = por %p124, %p125
    %p127 = scmp.ne.s32.totalorder %s115, %s116
    %p128 = scmp.eq.s32.totalorder %s22, 1
    %p129 = por %p127, %p128
    %p131 = scmp.ne.s32.totalorder %s116, %s130
    %p132 = scmp.eq.s32.totalorder %s22, 0
    %p133 = por %p131, %p132
    %s135 = sadd.s32 %s134, 1
    %p138 = scmp.eq.s32.totalorder %s16, 1
    %p139 = scmp.ne.s32.totalorder %s134, %s136
    %p140 = scmp.eq.s32.totalorder %s16, 0
    %p141 = por %p139, %p140
    %p142 = scmp.ne.s32.totalorder %s134, %s136
    %p143 = scmp.eq.s32.totalorder %s21, 1
    %p144 = por %p142, %p143
    %p145 = scmp.ne.s32.totalorder %s136, %s137
    %p146 = scmp.eq.s32.totalorder %s21, 0
    %p147 = por %p145, %p146
    %p148 = scmp.ne.s32.totalorder %s136, %s137
    %p149 = scmp.eq.s32.totalorder %s22, 1
    %p150 = por %p148, %p149
    %p152 = scmp.ne.s32.totalorder %s137, %s151
    %p153 = scmp.eq.s32.totalorder %s22, 0
    %p154 = por %p152, %p153
    %s156 = sadd.s32 %s155, 1
    %p159 = scmp.eq.s32.totalorder %s16, 1
    %p160 = scmp.ne.s32.totalorder %s155, %s157
    %p161 = scmp.eq.s32.totalorder %s16, 0
    %p162 = por %p160, %p161
    %p163 = scmp.ne.s32.totalorder %s155, %s157
    %p164 = scmp.eq.s32.totalorder %s21, 1
    %p165 = por %p163, %p164
    %p166 = scmp.ne.s32.totalorder %s157, %s158
    %p167 = scmp.eq.s32.totalorder %s21, 0
    %p168 = por %p166, %p167
    %p169 = scmp.ne.s32.totalorder %s157, %s158
    %p170 = scmp.eq.s32.totalorder %s22, 1
    %p171 = por %p169, %p170
    %p173 = scmp.ne.s32.totalorder %s158, %s172
    %p174 = scmp.eq.s32.totalorder %s22, 0
    %p175 = por %p173, %p174
    %s176 = ssub.s32 %s16, %s23
    %p177 = scmp.eq.s32.totalorder %s176, 0
    %s179 = sadd.s32 %s178, 1
    %s180 = scalar_select %p177, %s178, %s179
    %p183 = pneg %p177
    %p184 = scmp.eq.s32.totalorder %s16, 1
    %p185 = por %p183, %p184
    %p186 = scmp.ne.s32.totalorder %s178, %s181
    %p187 = scmp.eq.s32.totalorder %s16, 0
    %p188 = por %p186, %p187
    %p189 = scmp.ne.s32.totalorder %s178, %s181
    %p190 = scmp.eq.s32.totalorder %s21, 1
    %p191 = por %p189, %p190
    %p192 = scmp.ne.s32.totalorder %s181, %s182
    %p193 = scmp.eq.s32.totalorder %s21, 0
    %p194 = por %p192, %p193
    %p195 = scmp.ne.s32.totalorder %s181, %s182
    %p196 = scmp.eq.s32.totalorder %s22, 1
    %p197 = por %p195, %p196
    %p199 = scmp.ne.s32.totalorder %s182, %s198
    %p200 = scmp.eq.s32.totalorder %s22, 0
    %p201 = por %p199, %p200
    %s202 = ssub.s32 %s16, %s23
    %p203 = scmp.eq.s32.totalorder %s202, 0
    %s205 = sadd.s32 %s204, 1
    %s206 = scalar_select %p203, %s204, %s205
    %p209 = pneg %p203
    %p210 = scmp.eq.s32.totalorder %s16, 1
    %p211 = por %p209, %p210
    %p212 = scmp.ne.s32.totalorder %s204, %s207
    %p213 = scmp.eq.s32.totalorder %s16, 0
    %p214 = por %p212, %p213
    %p215 = scmp.ne.s32.totalorder %s204, %s207
    %p216 = scmp.eq.s32.totalorder %s21, 1
    %p217 = por %p215, %p216
    %p218 = scmp.ne.s32.totalorder %s207, %s208
    %p219 = scmp.eq.s32.totalorder %s21, 0
    %p220 = por %p218, %p219
    %p221 = scmp.ne.s32.totalorder %s207, %s208
    %p222 = scmp.eq.s32.totalorder %s22, 1
    %p223 = por %p221, %p222
    %p225 = scmp.ne.s32.totalorder %s208, %s224
    %p226 = scmp.eq.s32.totalorder %s22, 0
    %p227 = por %p225, %p226
    %p228 = scmp.le.s32.totalorder 1, %s16
    %p229 = scmp.lt.s32.totalorder %s16, 3
    %p230 = pnand %p228, %p229
    %p231 = pneg %p230
    // Predicated region
    $region9: #{custom_model_forward.1} parent=5 // pred_check
      _
    $region10: #{custom_model_forward.1} parent=5 // pred_check_branch
      %233 = sbr.rel (%p230) target = $region12
    $region11: #{custom_model_forward.1} parent=5 // pred_region
      %s234 = ssub.s32 %s16, 1
      // Predicated region
      $region13: #{custom_model_forward.1} parent=11 // pred_check
        %p235 = pneg %p63
      $region14: #{custom_model_forward.1} parent=11 // pred_check_branch
        %237 = sbr.rel (%p235) target = $region16
      $region15: #{custom_model_forward.1} parent=11 // pred_region
        _
      $region16: #{custom_model_forward.1} parent=11 // pred_fallthru
        _
      // Predicated region
      $region17: #{custom_model_forward.1} parent=11 // pred_check
        %p238 = pneg %p84
      $region18: #{custom_model_forward.1} parent=11 // pred_check_branch
        %240 = sbr.rel (%p238) target = $region20
      $region19: #{custom_model_forward.1} parent=11 // pred_region
        _
      $region20: #{custom_model_forward.1} parent=11 // pred_fallthru
        _
      // Predicated region
      $region21: #{custom_model_forward.1} parent=11 // pred_check
        %p241 = pneg %p105
      $region22: #{custom_model_forward.1} parent=11 // pred_check_branch
        %243 = sbr.rel (%p241) target = $region24
      $region23: #{custom_model_forward.1} parent=11 // pred_region
        _
      $region24: #{custom_model_forward.1} parent=11 // pred_fallthru
        _
      // Predicated region
      $region25: #{custom_model_forward.1} parent=11 // pred_check
        %p244 = pneg %p126
      $region26: #{custom_model_forward.1} parent=11 // pred_check_branch
        %246 = sbr.rel (%p244) target = $region28
      $region27: #{custom_model_forward.1} parent=11 // pred_region
        _
      $region28: #{custom_model_forward.1} parent=11 // pred_fallthru
        _
      // Predicated region
      $region29: #{custom_model_forward.1} parent=11 // pred_check
        %p247 = pneg %p147
      $region30: #{custom_model_forward.1} parent=11 // pred_check_branch
        %249 = sbr.rel (%p247) target = $region32
      $region31: #{custom_model_forward.1} parent=11 // pred_region
        _
      $region32: #{custom_model_forward.1} parent=11 // pred_fallthru
        _
      // Predicated region
      $region33: #{custom_model_forward.1} parent=11 // pred_check
        %p250 = pneg %p168
      $region34: #{custom_model_forward.1} parent=11 // pred_check_branch
        %252 = sbr.rel (%p250) target = $region36
      $region35: #{custom_model_forward.1} parent=11 // pred_region
        _
      $region36: #{custom_model_forward.1} parent=11 // pred_fallthru
        _
    $region12: #{custom_model_forward.1} parent=5 // pred_fallthru
      _
    %p253 = scmp.lt.s32.totalorder %s16, 2
    // Predicated region
    $region37: #{custom_model_forward.1} parent=5 // pred_check
      %p254 = pneg %p253
    $region38: #{custom_model_forward.1} parent=5 // pred_check_branch
      %256 = sbr.rel (%p254) target = $region40
    $region39: #{custom_model_forward.1} parent=5 // pred_region
      // Predicated region
      $region41: #{custom_model_forward.1} parent=39 // pred_check
        %p257 = pneg %p36
      $region42: #{custom_model_forward.1} parent=39 // pred_check_branch
        %259 = sbr.rel (%p257) target = $region44
      $region43: #{custom_model_forward.1} parent=39 // pred_region
        %p260 = scmp.lt.s32.totalorder %s16, 1
        %s261 = scalar_select %p260, %s16, 1
        %s262 = smul.addr %s261, 32
        %s263 = smul.addr %s262, 8
        %s264 = scalar_lea.vmem %s0, %s263
      $region44: #{custom_model_forward.1} parent=39 // pred_fallthru
        _
      // Predicated region
      $region45: #{custom_model_forward.1} parent=39 // pred_check
        %p265 = pneg %p188
      $region46: #{custom_model_forward.1} parent=39 // pred_check_branch
        %267 = sbr.rel (%p265) target = $region48
      $region47: #{custom_model_forward.1} parent=39 // pred_region
        %p268 = scmp.lt.s32.totalorder %s16, 1
        %s269 = scalar_select %p268, %s16, 1
        %s270 = smul.addr %s269, 2
        %s271 = scalar_lea.vmem %s7, %s270
      $region48: #{custom_model_forward.1} parent=39 // pred_fallthru
        _
    $region40: #{custom_model_forward.1} parent=5 // pred_fallthru
      _
    %p272 = scmp.le.s32.totalorder 1, %s16
    %p273 = scmp.lt.s32.totalorder %s16, 3
    %p274 = pnand %p272, %p273
    %p275 = pneg %p274
    // Predicated region
    $region49: #{custom_model_forward.1} parent=5 // pred_check
      _
    $region50: #{custom_model_forward.1} parent=5 // pred_check_branch
      %277 = sbr.rel (%p274) target = $region52
    $region51: #{custom_model_forward.1} parent=5 // pred_region
      %s278 = ssub.s32 %s16, 1
      %p279 = scmp.lt.s32.totalorder %s21, 1
      %s280 = scalar_select %p279, %s21, 1
      %s281 = smul.addr %s280, 32
      %s282 = smul.addr %s281, 8
      %s283 = scalar_lea.vmem %s0, %s282
      %p284 = pneg %p42
      %p285 = pneg %p39
      %p286 = pneg %p63
      %p287 = pneg %p60
      %p288 = pneg %p84
      %p289 = pneg %p81
      %p290 = pneg %p105
      %p291 = pneg %p102
      %p292 = pneg %p126
      %p293 = pneg %p123
      %p294 = pneg %p147
      %p295 = pneg %p144
      %p296 = pneg %p168
      %p297 = pneg %p165
      %p298 = scmp.lt.s32.totalorder %s21, 1
      %s299 = scalar_select %p298, %s21, 1
      %s300 = smul.addr %s299, 2
      %s301 = scalar_lea.vmem %s7, %s300
      %p302 = pneg %p194
      %p303 = pneg %p191
      %p304 = pneg %p220
      %p305 = pneg %p217
      %p306 = scmp.lt.s32.totalorder %s21, 1
      %s307 = scalar_select %p306, %s21, 1
      %s308 = smul.addr %s307, 2
      %s309 = scalar_lea.vmem %s8, %s308
      %p310 = scmp.lt.s32.totalorder %s21, 1
      %s311 = scalar_select %p310, %s21, 1
      %s312 = smul.addr %s311, 32
      %s313 = smul.addr %s312, 8
      %s314 = scalar_lea.vmem %s0, %s313
      %p315 = scmp.lt.s32.totalorder %s21, 1
      %s316 = scalar_select %p315, %s21, 1
      %s317 = smul.addr %s316, 2
      %s318 = scalar_lea.vmem %s7, %s317
      %p319 = scmp.lt.s32.totalorder %s21, 1
      %s320 = scalar_select %p319, %s21, 1
      %s321 = smul.addr %s320, 2
      %s322 = scalar_lea.vmem %s8, %s321
      %vm324 = vcmask 130048
      %325 = vst.msk [vmem:[#allocation2] sm:$0xff] %vm324, 0.0
      %326 = vst.msk [vmem:[#allocation2 + $0x8] sm:$0xff] %vm324, 0.0
      %vm327 = vcmask 123904
      %328 = vst.msk [vmem:[#allocation2 + $0x10] sm:$0x3] %vm327, 0.0
      %329 = vst.msk [vmem:[#allocation2 + $0x18] sm:$0xff] %vm324, 0.0
      %330 = vst.msk [vmem:[#allocation2 + $0x20] sm:$0xff] %vm324, 0.0
      %331 = vst.msk [vmem:[#allocation2 + $0x28] sm:$0x3] %vm327, 0.0
      %332 = vst.msk [vmem:[#allocation2 + $0x30] sm:$0xff] %vm324, 0.0
      %333 = vst.msk [vmem:[#allocation2 + $0x38] sm:$0xff] %vm324, 0.0
      %334 = vst.msk [vmem:[#allocation2 + $0x40] sm:$0x3] %vm327, 0.0
      %335 = vst.msk [vmem:[#allocation2 + $0x48] sm:$0xff] %vm324, 0.0
      %336 = vst.msk [vmem:[#allocation2 + $0x50] sm:$0xff] %vm324, 0.0
      %337 = vst.msk [vmem:[#allocation2 + $0x58] sm:$0x3] %vm327, 0.0
      %338 = vst.msk [vmem:[#allocation2 + $0x60] sm:$0xff] %vm324, 0.0
      %339 = vst.msk [vmem:[#allocation2 + $0x68] sm:$0xff] %vm324, 0.0
      %340 = vst.msk [vmem:[#allocation2 + $0x70] sm:$0x3] %vm327, 0.0
      %341 = vst.msk [vmem:[#allocation2 + $0x78] sm:$0xff] %vm324, 0.0
      %342 = vst.msk [vmem:[#allocation2 + $0x80] sm:$0xff] %vm324, 0.0
      %343 = vst.msk [vmem:[#allocation2 + $0x88] sm:$0x3] %vm327, 0.0
      %344 = vst.msk [vmem:[#allocation2 + $0x90] sm:$0xff] %vm324, 0.0
      %345 = vst.msk [vmem:[#allocation2 + $0x98] sm:$0xff] %vm324, 0.0
      %346 = vst.msk [vmem:[#allocation2 + $0xa0] sm:$0x3] %vm327, 0.0
      %347 = vst.msk [vmem:[#allocation2 + $0xa8] sm:$0xff] %vm324, 0.0
      %348 = vst.msk [vmem:[#allocation2 + $0xb0] sm:$0xff] %vm324, 0.0
      %349 = vst.msk [vmem:[#allocation2 + $0xb8] sm:$0x3] %vm327, 0.0
      %350 = vst.msk [vmem:[#allocation2 + $0xc0] sm:$0xff] %vm324, 0.0
      %351 = vst.msk [vmem:[#allocation2 + $0xc8] sm:$0xff] %vm324, 0.0
      %352 = vst.msk [vmem:[#allocation2 + $0xd0] sm:$0x3] %vm327, 0.0
      %353 = vst.msk [vmem:[#allocation2 + $0xd8] sm:$0xff] %vm324, 0.0
      %354 = vst.msk [vmem:[#allocation2 + $0xe0] sm:$0xff] %vm324, 0.0
      %355 = vst.msk [vmem:[#allocation2 + $0xe8] sm:$0x3] %vm327, 0.0
      %356 = vst.msk [vmem:[#allocation2 + $0xf0] sm:$0xff] %vm324, 0.0
      %357 = vst.msk [vmem:[#allocation2 + $0xf8] sm:$0xff] %vm324, 0.0
      %358 = vst.msk [vmem:[#allocation2 + $0x100] sm:$0x3] %vm327, 0.0
      %359 = vst.msk [vmem:[#allocation2 + $0x108] sm:$0xff] %vm324, 0.0
      %360 = vst.msk [vmem:[#allocation2 + $0x110] sm:$0xff] %vm324, 0.0
      %361 = vst.msk [vmem:[#allocation2 + $0x118] sm:$0x3] %vm327, 0.0
      %362 = vst.msk [vmem:[#allocation2 + $0x120] sm:$0xff] %vm324, 0.0
      %363 = vst.msk [vmem:[#allocation2 + $0x128] sm:$0xff] %vm324, 0.0
      %364 = vst.msk [vmem:[#allocation2 + $0x130] sm:$0x3] %vm327, 0.0
      %365 = vst.msk [vmem:[#allocation2 + $0x138] sm:$0xff] %vm324, 0.0
      %366 = vst.msk [vmem:[#allocation2 + $0x140] sm:$0xff] %vm324, 0.0
      %367 = vst.msk [vmem:[#allocation2 + $0x148] sm:$0x3] %vm327, 0.0
      %368 = vst.msk [vmem:[#allocation2 + $0x150] sm:$0xff] %vm324, 0.0
      %369 = vst.msk [vmem:[#allocation2 + $0x158] sm:$0xff] %vm324, 0.0
      %370 = vst.msk [vmem:[#allocation2 + $0x160] sm:$0x3] %vm327, 0.0
      %371 = vst.msk [vmem:[#allocation2 + $0x168] sm:$0xff] %vm324, 0.0
      %372 = vst.msk [vmem:[#allocation2 + $0x170] sm:$0xff] %vm324, 0.0
      %373 = vst.msk [vmem:[#allocation2 + $0x178] sm:$0x3] %vm327, 0.0
      %374 = vst.msk [vmem:[#allocation2 + $0x180] sm:$0xff] %vm324, 0.0
      %375 = vst.msk [vmem:[#allocation2 + $0x188] sm:$0xff] %vm324, 0.0
      %376 = vst.msk [vmem:[#allocation2 + $0x190] sm:$0x3] %vm327, 0.0
      %377 = vst.msk [vmem:[#allocation2 + $0x198] sm:$0xff] %vm324, 0.0
      %378 = vst.msk [vmem:[#allocation2 + $0x1a0] sm:$0xff] %vm324, 0.0
      %379 = vst.msk [vmem:[#allocation2 + $0x1a8] sm:$0x3] %vm327, 0.0
      %vm380 = vcmask 523264
      %381 = vst.msk [vmem:[#allocation3] sm:$0xff] %vm380, 0.0
      %382 = vst.msk [vmem:[#allocation3 + $0x8] sm:$0xff] %vm380, 0.0
      %vm383 = vcmask 517120
      %384 = vst.msk [vmem:[#allocation3 + $0x10] sm:$0x3] %vm383, 0.0
      %385 = vst.msk [vmem:[#allocation3 + $0x18] sm:$0xff] %vm380, 0.0
      %386 = vst.msk [vmem:[#allocation3 + $0x20] sm:$0xff] %vm380, 0.0
      %387 = vst.msk [vmem:[#allocation3 + $0x28] sm:$0x3] %vm383, 0.0
      %388 = vst.msk [vmem:[#allocation3 + $0x30] sm:$0xff] %vm380, 0.0
      %389 = vst.msk [vmem:[#allocation3 + $0x38] sm:$0xff] %vm380, 0.0
      %390 = vst.msk [vmem:[#allocation3 + $0x40] sm:$0x3] %vm383, 0.0
      %391 = vst.msk [vmem:[#allocation3 + $0x48] sm:$0xff] %vm380, 0.0
      %392 = vst.msk [vmem:[#allocation3 + $0x50] sm:$0xff] %vm380, 0.0
      %393 = vst.msk [vmem:[#allocation3 + $0x58] sm:$0x3] %vm383, 0.0
      %394 = vst.msk [vmem:[#allocation3 + $0x60] sm:$0xff] %vm380, 0.0
      %395 = vst.msk [vmem:[#allocation3 + $0x68] sm:$0xff] %vm380, 0.0
      %396 = vst.msk [vmem:[#allocation3 + $0x70] sm:$0x3] %vm383, 0.0
      %397 = vst.msk [vmem:[#allocation3 + $0x78] sm:$0xff] %vm380, 0.0
      %398 = vst.msk [vmem:[#allocation3 + $0x80] sm:$0xff] %vm380, 0.0
      %399 = vst.msk [vmem:[#allocation3 + $0x88] sm:$0x3] %vm383, 0.0
      %400 = vst.msk [vmem:[#allocation3 + $0x90] sm:$0xff] %vm380, 0.0
      %401 = vst.msk [vmem:[#allocation3 + $0x98] sm:$0xff] %vm380, 0.0
      %402 = vst.msk [vmem:[#allocation3 + $0xa0] sm:$0x3] %vm383, 0.0
      %403 = vst.msk [vmem:[#allocation3 + $0xa8] sm:$0xff] %vm380, 0.0
      %404 = vst.msk [vmem:[#allocation3 + $0xb0] sm:$0xff] %vm380, 0.0
      %405 = vst.msk [vmem:[#allocation3 + $0xb8] sm:$0x3] %vm383, 0.0
      %406 = vst.msk [vmem:[#allocation3 + $0xc0] sm:$0xff] %vm380, 0.0
      %407 = vst.msk [vmem:[#allocation3 + $0xc8] sm:$0xff] %vm380, 0.0
      %408 = vst.msk [vmem:[#allocation3 + $0xd0] sm:$0x3] %vm383, 0.0
      %409 = vst.msk [vmem:[#allocation3 + $0xd8] sm:$0xff] %vm380, 0.0
      %410 = vst.msk [vmem:[#allocation3 + $0xe0] sm:$0xff] %vm380, 0.0
      %411 = vst.msk [vmem:[#allocation3 + $0xe8] sm:$0x3] %vm383, 0.0
      %412 = vst.msk [vmem:[#allocation3 + $0xf0] sm:$0xff] %vm380, 0.0
      %413 = vst.msk [vmem:[#allocation3 + $0xf8] sm:$0xff] %vm380, 0.0
      %414 = vst.msk [vmem:[#allocation3 + $0x100] sm:$0x3] %vm383, 0.0
      %415 = vst.msk [vmem:[#allocation3 + $0x108] sm:$0xff] %vm380, 0.0
      %416 = vst.msk [vmem:[#allocation3 + $0x110] sm:$0xff] %vm380, 0.0
      %417 = vst.msk [vmem:[#allocation3 + $0x118] sm:$0x3] %vm383, 0.0
      %418 = vst.msk [vmem:[#allocation3 + $0x120] sm:$0xff] %vm380, 0.0
      %419 = vst.msk [vmem:[#allocation3 + $0x128] sm:$0xff] %vm380, 0.0
      %420 = vst.msk [vmem:[#allocation3 + $0x130] sm:$0x3] %vm383, 0.0
      %421 = vst.msk [vmem:[#allocation3 + $0x138] sm:$0xff] %vm380, 0.0
      %422 = vst.msk [vmem:[#allocation3 + $0x140] sm:$0xff] %vm380, 0.0
      %423 = vst.msk [vmem:[#allocation3 + $0x148] sm:$0x3] %vm383, 0.0
      %424 = vst.msk [vmem:[#allocation3 + $0x150] sm:$0xff] %vm380, 0.0
      %425 = vst.msk [vmem:[#allocation3 + $0x158] sm:$0xff] %vm380, 0.0
      %426 = vst.msk [vmem:[#allocation3 + $0x160] sm:$0x3] %vm383, 0.0
      %427 = vst.msk [vmem:[#allocation3 + $0x168] sm:$0xff] %vm380, 0.0
      %428 = vst.msk [vmem:[#allocation3 + $0x170] sm:$0xff] %vm380, 0.0
      %429 = vst.msk [vmem:[#allocation3 + $0x178] sm:$0x3] %vm383, 0.0
      %430 = vst.msk [vmem:[#allocation3 + $0x180] sm:$0xff] %vm380, 0.0
      %431 = vst.msk [vmem:[#allocation3 + $0x188] sm:$0xff] %vm380, 0.0
      %432 = vst.msk [vmem:[#allocation3 + $0x190] sm:$0x3] %vm383, 0.0
      %433 = vst.msk [vmem:[#allocation3 + $0x198] sm:$0xff] %vm380, 0.0
      %434 = vst.msk [vmem:[#allocation3 + $0x1a0] sm:$0xff] %vm380, 0.0
      %435 = vst.msk [vmem:[#allocation3 + $0x1a8] sm:$0x3] %vm383, 0.0
      %436 = vst.msk [vmem:[#allocation4] sm:$0xff] %vm380, 0.0
      %437 = vst.msk [vmem:[#allocation4 + $0x8] sm:$0xff] %vm380, 0.0
      %438 = vst.msk [vmem:[#allocation4 + $0x10] sm:$0x3] %vm383, 0.0
      %439 = vst.msk [vmem:[#allocation4 + $0x18] sm:$0xff] %vm380, 0.0
      %440 = vst.msk [vmem:[#allocation4 + $0x20] sm:$0xff] %vm380, 0.0
      %441 = vst.msk [vmem:[#allocation4 + $0x28] sm:$0x3] %vm383, 0.0
      %442 = vst.msk [vmem:[#allocation4 + $0x30] sm:$0xff] %vm380, 0.0
      %443 = vst.msk [vmem:[#allocation4 + $0x38] sm:$0xff] %vm380, 0.0
      %444 = vst.msk [vmem:[#allocation4 + $0x40] sm:$0x3] %vm383, 0.0
      %445 = vst.msk [vmem:[#allocation4 + $0x48] sm:$0xff] %vm380, 0.0
      %446 = vst.msk [vmem:[#allocation4 + $0x50] sm:$0xff] %vm380, 0.0
      %447 = vst.msk [vmem:[#allocation4 + $0x58] sm:$0x3] %vm383, 0.0
      %448 = vst.msk [vmem:[#allocation4 + $0x60] sm:$0xff] %vm380, 0.0
      %449 = vst.msk [vmem:[#allocation4 + $0x68] sm:$0xff] %vm380, 0.0
      %450 = vst.msk [vmem:[#allocation4 + $0x70] sm:$0x3] %vm383, 0.0
      %451 = vst.msk [vmem:[#allocation4 + $0x78] sm:$0xff] %vm380, 0.0
      %452 = vst.msk [vmem:[#allocation4 + $0x80] sm:$0xff] %vm380, 0.0
      %453 = vst.msk [vmem:[#allocation4 + $0x88] sm:$0x3] %vm383, 0.0
      %454 = vst.msk [vmem:[#allocation4 + $0x90] sm:$0xff] %vm380, 0.0
      %455 = vst.msk [vmem:[#allocation4 + $0x98] sm:$0xff] %vm380, 0.0
      %456 = vst.msk [vmem:[#allocation4 + $0xa0] sm:$0x3] %vm383, 0.0
      %457 = vst.msk [vmem:[#allocation4 + $0xa8] sm:$0xff] %vm380, 0.0
      %458 = vst.msk [vmem:[#allocation4 + $0xb0] sm:$0xff] %vm380, 0.0
      %459 = vst.msk [vmem:[#allocation4 + $0xb8] sm:$0x3] %vm383, 0.0
      %460 = vst.msk [vmem:[#allocation4 + $0xc0] sm:$0xff] %vm380, 0.0
      %461 = vst.msk [vmem:[#allocation4 + $0xc8] sm:$0xff] %vm380, 0.0
      %462 = vst.msk [vmem:[#allocation4 + $0xd0] sm:$0x3] %vm383, 0.0
      %463 = vst.msk [vmem:[#allocation4 + $0xd8] sm:$0xff] %vm380, 0.0
      %464 = vst.msk [vmem:[#allocation4 + $0xe0] sm:$0xff] %vm380, 0.0
      %465 = vst.msk [vmem:[#allocation4 + $0xe8] sm:$0x3] %vm383, 0.0
      %466 = vst.msk [vmem:[#allocation4 + $0xf0] sm:$0xff] %vm380, 0.0
      %467 = vst.msk [vmem:[#allocation4 + $0xf8] sm:$0xff] %vm380, 0.0
      %468 = vst.msk [vmem:[#allocation4 + $0x100] sm:$0x3] %vm383, 0.0
      %469 = vst.msk [vmem:[#allocation4 + $0x108] sm:$0xff] %vm380, 0.0
      %470 = vst.msk [vmem:[#allocation4 + $0x110] sm:$0xff] %vm380, 0.0
      %471 = vst.msk [vmem:[#allocation4 + $0x118] sm:$0x3] %vm383, 0.0
      %472 = vst.msk [vmem:[#allocation4 + $0x120] sm:$0xff] %vm380, 0.0
      %473 = vst.msk [vmem:[#allocation4 + $0x128] sm:$0xff] %vm380, 0.0
      %474 = vst.msk [vmem:[#allocation4 + $0x130] sm:$0x3] %vm383, 0.0
      %475 = vst.msk [vmem:[#allocation4 + $0x138] sm:$0xff] %vm380, 0.0
      %476 = vst.msk [vmem:[#allocation4 + $0x140] sm:$0xff] %vm380, 0.0
      %477 = vst.msk [vmem:[#allocation4 + $0x148] sm:$0x3] %vm383, 0.0
      %478 = vst.msk [vmem:[#allocation4 + $0x150] sm:$0xff] %vm380, 0.0
      %479 = vst.msk [vmem:[#allocation4 + $0x158] sm:$0xff] %vm380, 0.0
      %480 = vst.msk [vmem:[#allocation4 + $0x160] sm:$0x3] %vm383, 0.0
      %481 = vst.msk [vmem:[#allocation4 + $0x168] sm:$0xff] %vm380, 0.0
      %482 = vst.msk [vmem:[#allocation4 + $0x170] sm:$0xff] %vm380, 0.0
      %483 = vst.msk [vmem:[#allocation4 + $0x178] sm:$0x3] %vm383, 0.0
      %484 = vst.msk [vmem:[#allocation4 + $0x180] sm:$0xff] %vm380, 0.0
      %485 = vst.msk [vmem:[#allocation4 + $0x188] sm:$0xff] %vm380, 0.0
      %486 = vst.msk [vmem:[#allocation4 + $0x190] sm:$0x3] %vm383, 0.0
      %487 = vst.msk [vmem:[#allocation4 + $0x198] sm:$0xff] %vm380, 0.0
      %488 = vst.msk [vmem:[#allocation4 + $0x1a0] sm:$0xff] %vm380, 0.0
      %489 = vst.msk [vmem:[#allocation4 + $0x1a8] sm:$0x3] %vm383, 0.0
      %v490 = vld [vmem:[%s314] sm:$0xff]
      %v491 = vld [vmem:[%s314 + $0x8] sm:$0xff]
      %v492 = vld [vmem:[%s314 + $0x10] sm:$0xff]
      %v493 = vld [vmem:[%s314 + $0x18] sm:$0xff]
      %v494 = vld [vmem:[%s314 + $0x20] sm:$0xff]
      %v495 = vld [vmem:[%s314 + $0x28] sm:$0xff]
      %v496 = vld [vmem:[%s314 + $0x30] sm:$0xff]
      %v497 = vld [vmem:[%s314 + $0x38] sm:$0xff]
      %v498 = vld [vmem:[%s314 + $0x40] sm:$0xff]
      %v499 = vld [vmem:[%s314 + $0x48] sm:$0xff]
      %v500 = vld [vmem:[%s314 + $0x50] sm:$0xff]
      %v501 = vld [vmem:[%s314 + $0x58] sm:$0xff]
      %v502 = vld [vmem:[%s314 + $0x60] sm:$0xff]
      %v503 = vld [vmem:[%s314 + $0x68] sm:$0xff]
      %v504 = vld [vmem:[%s314 + $0x70] sm:$0xff]
      %v505 = vld [vmem:[%s314 + $0x78] sm:$0xff]
      %v506 = vld [vmem:[%s314 + $0x80] sm:$0xff]
      %v507 = vld [vmem:[%s314 + $0x88] sm:$0xff]
      %v508 = vld [vmem:[%s314 + $0x90] sm:$0xff]
      %v509 = vld [vmem:[%s314 + $0x98] sm:$0xff]
      %v510 = vld [vmem:[%s314 + $0xa0] sm:$0xff]
      %v511 = vld [vmem:[%s314 + $0xa8] sm:$0xff]
      %v512 = vld [vmem:[%s314 + $0xb0] sm:$0xff]
      %v513 = vld [vmem:[%s314 + $0xb8] sm:$0xff]
      %v514 = vld [vmem:[%s314 + $0xc0] sm:$0xff]
      %v515 = vld [vmem:[%s314 + $0xc8] sm:$0xff]
      %v516 = vld [vmem:[%s314 + $0xd0] sm:$0xff]
      %v517 = vld [vmem:[%s314 + $0xd8] sm:$0xff]
      %v518 = vld [vmem:[%s314 + $0xe0] sm:$0xff]
      %v519 = vld [vmem:[%s314 + $0xe8] sm:$0xff]
      %v520 = vld [vmem:[%s314 + $0xf0] sm:$0xff]
      %v521 = vld [vmem:[%s314 + $0xf8] sm:$0xff]
      %s522 = scalar_lea.vmem [#allocation2], 24
      %523 = vst.msk [vmem:[%s522 + $0x1] sm:$0xff] %vm324, %v490
      %524 = vst.msk [vmem:[%s522 + $0x9] sm:$0xff] %vm324, %v491
      %525 = vst.msk [vmem:[%s522 + $0x19] sm:$0xff] %vm324, %v492
      %526 = vst.msk [vmem:[%s522 + $0x21] sm:$0xff] %vm324, %v493
      %527 = vst.msk [vmem:[%s522 + $0x31] sm:$0xff] %vm324, %v494
      %528 = vst.msk [vmem:[%s522 + $0x39] sm:$0xff] %vm324, %v495
      %529 = vst.msk [vmem:[%s522 + $0x49] sm:$0xff] %vm324, %v496
      %530 = vst.msk [vmem:[%s522 + $0x51] sm:$0xff] %vm324, %v497
      %531 = vst.msk [vmem:[%s522 + $0x61] sm:$0xff] %vm324, %v498
      %532 = vst.msk [vmem:[%s522 + $0x69] sm:$0xff] %vm324, %v499
      %533 = vst.msk [vmem:[%s522 + $0x79] sm:$0xff] %vm324, %v500
      %534 = vst.msk [vmem:[%s522 + $0x81] sm:$0xff] %vm324, %v501
      %535 = vst.msk [vmem:[%s522 + $0x91] sm:$0xff] %vm324, %v502
      %536 = vst.msk [vmem:[%s522 + $0x99] sm:$0xff] %vm324, %v503
      %537 = vst.msk [vmem:[%s522 + $0xa9] sm:$0xff] %vm324, %v504
      %538 = vst.msk [vmem:[%s522 + $0xb1] sm:$0xff] %vm324, %v505
      %539 = vst.msk [vmem:[%s522 + $0xc1] sm:$0xff] %vm324, %v506
      %540 = vst.msk [vmem:[%s522 + $0xc9] sm:$0xff] %vm324, %v507
      %541 = vst.msk [vmem:[%s522 + $0xd9] sm:$0xff] %vm324, %v508
      %542 = vst.msk [vmem:[%s522 + $0xe1] sm:$0xff] %vm324, %v509
      %543 = vst.msk [vmem:[%s522 + $0xf1] sm:$0xff] %vm324, %v510
      %544 = vst.msk [vmem:[%s522 + $0xf9] sm:$0xff] %vm324, %v511
      %545 = vst.msk [vmem:[%s522 + $0x109] sm:$0xff] %vm324, %v512
      %546 = vst.msk [vmem:[%s522 + $0x111] sm:$0xff] %vm324, %v513
      %547 = vst.msk [vmem:[%s522 + $0x121] sm:$0xff] %vm324, %v514
      %548 = vst.msk [vmem:[%s522 + $0x129] sm:$0xff] %vm324, %v515
      %549 = vst.msk [vmem:[%s522 + $0x139] sm:$0xff] %vm324, %v516
      %550 = vst.msk [vmem:[%s522 + $0x141] sm:$0xff] %vm324, %v517
      %551 = vst.msk [vmem:[%s522 + $0x151] sm:$0xff] %vm324, %v518
      %552 = vst.msk [vmem:[%s522 + $0x159] sm:$0xff] %vm324, %v519
      %553 = vst.msk [vmem:[%s522 + $0x169] sm:$0xff] %vm324, %v520
      %554 = vst.msk [vmem:[%s522 + $0x171] sm:$0xff] %vm324, %v521
      %v555 = vld [vmem:[%s1] sm:$0xf]
      %v556 = vld [vmem:[%s1 + $0x4] sm:$0xf]
      %v557 = vld [vmem:[%s1 + $0x8] sm:$0xf]
      %v558 = vld [vmem:[%s1 + $0xc] sm:$0xf]
      %v559 = vld [vmem:[%s1 + $0x10] sm:$0xf]
      %v560 = vld [vmem:[%s1 + $0x14] sm:$0xf]
      %v561 = vld [vmem:[%s1 + $0x18] sm:$0xf]
      %v562 = vld [vmem:[%s1 + $0x1c] sm:$0xf]
      %v563 = vld [vmem:[%s1 + $0x20] sm:$0xf]
      %v564 = vld [vmem:[%s1 + $0x24] sm:$0xf]
      %v565 = vld [vmem:[%s1 + $0x28] sm:$0xf]
      %v566 = vld [vmem:[%s1 + $0x2c] sm:$0xf]
      %v567 = vld [vmem:[%s1 + $0x30] sm:$0xf]
      %v568 = vld [vmem:[%s1 + $0x34] sm:$0xf]
      %v569 = vld [vmem:[%s1 + $0x38] sm:$0xf]
      %v570 = vld [vmem:[%s1 + $0x3c] sm:$0xf]
      %v571 = vld [vmem:[%s1 + $0x40] sm:$0xf]
      %v572 = vld [vmem:[%s1 + $0x44] sm:$0xf]
      %v573 = vld [vmem:[%s2] sm:$0x1]
      %v574 = vld [vmem:[#allocation2] sm:$0xff]
      %v575 = vld [vmem:[#allocation2 + $0x8] sm:$0xff]
      %v576 = vld [vmem:[#allocation2 + $0x10] sm:$0x3]
      %v577 = vld [vmem:[#allocation2 + $0x18] sm:$0xff]
      %v578 = vld [vmem:[#allocation2 + $0x20] sm:$0xff]
      %v579 = vld [vmem:[#allocation2 + $0x28] sm:$0x3]
      %v580 = vld [vmem:[#allocation2 + $0x30] sm:$0xff]
      %v581 = vld [vmem:[#allocation2 + $0x38] sm:$0xff]
      %v582 = vld [vmem:[#allocation2 + $0x40] sm:$0x3]
      %v583 = vld [vmem:[#allocation2 + $0x48] sm:$0xff]
      %v584 = vld [vmem:[#allocation2 + $0x50] sm:$0xff]
      %v585 = vld [vmem:[#allocation2 + $0x58] sm:$0x3]
      %v586 = vld [vmem:[#allocation2 + $0x60] sm:$0xff]
      %v587 = vld [vmem:[#allocation2 + $0x68] sm:$0xff]
      %v588 = vld [vmem:[#allocation2 + $0x70] sm:$0x3]
      %v589 = vld [vmem:[#allocation2 + $0x78] sm:$0xff]
      %v590 = vld [vmem:[#allocation2 + $0x80] sm:$0xff]
      %v591 = vld [vmem:[#allocation2 + $0x88] sm:$0x3]
      %v592 = vld [vmem:[#allocation2 + $0x90] sm:$0xff]
      %v593 = vld [vmem:[#allocation2 + $0x98] sm:$0xff]
      %v594 = vld [vmem:[#allocation2 + $0xa0] sm:$0x3]
      %v595 = vld [vmem:[#allocation2 + $0xa8] sm:$0xff]
      %v596 = vld [vmem:[#allocation2 + $0xb0] sm:$0xff]
      %v597 = vld [vmem:[#allocation2 + $0xb8] sm:$0x3]
      %v598 = vld [vmem:[#allocation2 + $0xc0] sm:$0xff]
      %v599 = vld [vmem:[#allocation2 + $0xc8] sm:$0xff]
      %v600 = vld [vmem:[#allocation2 + $0xd0] sm:$0x3]
      %v601 = vld [vmem:[#allocation2 + $0xd8] sm:$0xff]
      %v602 = vld [vmem:[#allocation2 + $0xe0] sm:$0xff]
      %v603 = vld [vmem:[#allocation2 + $0xe8] sm:$0x3]
      %v604 = vld [vmem:[#allocation2 + $0xf0] sm:$0xff]
      %v605 = vld [vmem:[#allocation2 + $0xf8] sm:$0xff]
      %v606 = vld [vmem:[#allocation2 + $0x100] sm:$0x3]
      %v607 = vld [vmem:[#allocation2 + $0x108] sm:$0xff]
      %v608 = vld [vmem:[#allocation2 + $0x110] sm:$0xff]
      %v609 = vld [vmem:[#allocation2 + $0x118] sm:$0x3]
      %v610 = vld [vmem:[#allocation2 + $0x120] sm:$0xff]
      %v611 = vld [vmem:[#allocation2 + $0x128] sm:$0xff]
      %v612 = vld [vmem:[#allocation2 + $0x130] sm:$0x3]
      %v613 = vld [vmem:[#allocation2 + $0x138] sm:$0xff]
      %v614 = vld [vmem:[#allocation2 + $0x140] sm:$0xff]
      %v615 = vld [vmem:[#allocation2 + $0x148] sm:$0x3]
      %v616 = vld [vmem:[#allocation2 + $0x150] sm:$0xff]
      %v617 = vld [vmem:[#allocation2 + $0x158] sm:$0xff]
      %v618 = vld [vmem:[#allocation2 + $0x160] sm:$0x3]
      %v619 = vld [vmem:[#allocation2 + $0x168] sm:$0xff]
      %v620 = vld [vmem:[#allocation2 + $0x170] sm:$0xff]
      %v621 = vld [vmem:[#allocation2 + $0x178] sm:$0x3]
      %v622 = vld [vmem:[#allocation2 + $0x180] sm:$0xff]
      %v623 = vld [vmem:[#allocation2 + $0x188] sm:$0xff]
      %v624 = vld [vmem:[#allocation2 + $0x190] sm:$0x3]
      %v625 = vld [vmem:[#allocation2 + $0x198] sm:$0xff]
      %v626 = vld [vmem:[#allocation2 + $0x1a0] sm:$0xff]
      %v627 = vld [vmem:[#allocation2 + $0x1a8] sm:$0x3]
      %vm682 = vcmask 1046528
      %v683 = vrot.slane %v574, 1
      %v684 = vrot.slane %v575, 1
      %v685 = vsel %vm682, %v683, %v684
      %v686 = vrot.slane %v576, 1
      %v687 = vsel %vm682, %v684, %v686
      %v688 = vrot.slane %v577, 1
      %v689 = vrot.slane %v578, 1
      %v690 = vsel %vm682, %v688, %v689
      %v691 = vrot.slane %v579, 1
      %v692 = vsel %vm682, %v689, %v691
      %v693 = vrot.slane %v580, 1
      %v694 = vrot.slane %v581, 1
      %v695 = vsel %vm682, %v693, %v694
      %v696 = vrot.slane %v582, 1
      %v697 = vsel %vm682, %v694, %v696
      %v698 = vrot.slane %v583, 1
      %v699 = vrot.slane %v584, 1
      %v700 = vsel %vm682, %v698, %v699
      %v701 = vrot.slane %v585, 1
      %v702 = vsel %vm682, %v699, %v701
      %v703 = vrot.slane %v586, 1
      %v704 = vrot.slane %v587, 1
      %v705 = vsel %vm682, %v703, %v704
      %v706 = vrot.slane %v588, 1
      %v707 = vsel %vm682, %v704, %v706
      %v708 = vrot.slane %v589, 1
      %v709 = vrot.slane %v590, 1
      %v710 = vsel %vm682, %v708, %v709
      %v711 = vrot.slane %v591, 1
      %v712 = vsel %vm682, %v709, %v711
      %v713 = vrot.slane %v592, 1
      %v714 = vrot.slane %v593, 1
      %v715 = vsel %vm682, %v713, %v714
      %v716 = vrot.slane %v594, 1
      %v717 = vsel %vm682, %v714, %v716
      %v718 = vrot.slane %v595, 1
      %v719 = vrot.slane %v596, 1
      %v720 = vsel %vm682, %v718, %v719
      %v721 = vrot.slane %v597, 1
      %v722 = vsel %vm682, %v719, %v721
      %v723 = vrot.slane %v598, 1
      %v724 = vrot.slane %v599, 1
      %v725 = vsel %vm682, %v723, %v724
      %v726 = vrot.slane %v600, 1
      %v727 = vsel %vm682, %v724, %v726
      %v728 = vrot.slane %v601, 1
      %v729 = vrot.slane %v602, 1
      %v730 = vsel %vm682, %v728, %v729
      %v731 = vrot.slane %v603, 1
      %v732 = vsel %vm682, %v729, %v731
      %v733 = vrot.slane %v604, 1
      %v734 = vrot.slane %v605, 1
      %v735 = vsel %vm682, %v733, %v734
      %v736 = vrot.slane %v606, 1
      %v737 = vsel %vm682, %v734, %v736
      %v738 = vrot.slane %v607, 1
      %v739 = vrot.slane %v608, 1
      %v740 = vsel %vm682, %v738, %v739
      %v741 = vrot.slane %v609, 1
      %v742 = vsel %vm682, %v739, %v741
      %v743 = vrot.slane %v610, 1
      %v744 = vrot.slane %v611, 1
      %v745 = vsel %vm682, %v743, %v744
      %v746 = vrot.slane %v612, 1
      %v747 = vsel %vm682, %v744, %v746
      %v748 = vrot.slane %v613, 1
      %v749 = vrot.slane %v614, 1
      %v750 = vsel %vm682, %v748, %v749
      %v751 = vrot.slane %v615, 1
      %v752 = vsel %vm682, %v749, %v751
      %v753 = vrot.slane %v616, 1
      %v754 = vrot.slane %v617, 1
      %v755 = vsel %vm682, %v753, %v754
      %v756 = vrot.slane %v618, 1
      %v757 = vsel %vm682, %v754, %v756
      %v758 = vrot.slane %v619, 1
      %v759 = vrot.slane %v620, 1
      %v760 = vsel %vm682, %v758, %v759
      %v761 = vrot.slane %v621, 1
      %v762 = vsel %vm682, %v759, %v761
      %v763 = vrot.slane %v622, 1
      %v764 = vrot.slane %v623, 1
      %v765 = vsel %vm682, %v763, %v764
      %v766 = vrot.slane %v624, 1
      %v767 = vsel %vm682, %v764, %v766
      %v768 = vrot.slane %v625, 1
      %v769 = vrot.slane %v626, 1
      %v770 = vsel %vm682, %v768, %v769
      %v771 = vrot.slane %v627, 1
      %v772 = vsel %vm682, %v769, %v771
      %773 = vrot.lane.b32.xlu0 %v685, 16
      %v774 = vpop.permute.xlu0 %773
      %775 = vrot.lane.b32.xlu0 %v687, 16
      %v776 = vpop.permute.xlu0 %775
      %777 = vrot.lane.b32.xlu0 %v690, 16
      %v778 = vpop.permute.xlu0 %777
      %779 = vrot.lane.b32.xlu0 %v692, 16
      %v780 = vpop.permute.xlu0 %779
      %781 = vrot.lane.b32.xlu0 %v695, 16
      %v782 = vpop.permute.xlu0 %781
      %783 = vrot.lane.b32.xlu0 %v697, 16
      %v784 = vpop.permute.xlu0 %783
      %785 = vrot.lane.b32.xlu0 %v700, 16
      %v786 = vpop.permute.xlu0 %785
      %787 = vrot.lane.b32.xlu0 %v702, 16
      %v788 = vpop.permute.xlu0 %787
      %789 = vrot.lane.b32.xlu0 %v705, 16
      %v790 = vpop.permute.xlu0 %789
      %791 = vrot.lane.b32.xlu0 %v707, 16
      %v792 = vpop.permute.xlu0 %791
      %793 = vrot.lane.b32.xlu0 %v710, 16
      %v794 = vpop.permute.xlu0 %793
      %795 = vrot.lane.b32.xlu0 %v712, 16
      %v796 = vpop.permute.xlu0 %795
      %797 = vrot.lane.b32.xlu0 %v715, 16
      %v798 = vpop.permute.xlu0 %797
      %799 = vrot.lane.b32.xlu0 %v717, 16
      %v800 = vpop.permute.xlu0 %799
      %801 = vrot.lane.b32.xlu0 %v720, 16
      %v802 = vpop.permute.xlu0 %801
      %803 = vrot.lane.b32.xlu0 %v722, 16
      %v804 = vpop.permute.xlu0 %803
      %805 = vrot.lane.b32.xlu0 %v725, 16
      %v806 = vpop.permute.xlu0 %805
      %807 = vrot.lane.b32.xlu0 %v727, 16
      %v808 = vpop.permute.xlu0 %807
      %809 = vrot.lane.b32.xlu0 %v730, 16
      %v810 = vpop.permute.xlu0 %809
      %811 = vrot.lane.b32.xlu0 %v732, 16
      %v812 = vpop.permute.xlu0 %811
      %813 = vrot.lane.b32.xlu0 %v735, 16
      %v814 = vpop.permute.xlu0 %813
      %815 = vrot.lane.b32.xlu0 %v737, 16
      %v816 = vpop.permute.xlu0 %815
      %817 = vrot.lane.b32.xlu0 %v740, 16
      %v818 = vpop.permute.xlu0 %817
      %819 = vrot.lane.b32.xlu0 %v742, 16
      %v820 = vpop.permute.xlu0 %819
      %821 = vrot.lane.b32.xlu0 %v745, 16
      %v822 = vpop.permute.xlu0 %821
      %823 = vrot.lane.b32.xlu0 %v747, 16
      %v824 = vpop.permute.xlu0 %823
      %825 = vrot.lane.b32.xlu0 %v750, 16
      %v826 = vpop.permute.xlu0 %825
      %827 = vrot.lane.b32.xlu0 %v752, 16
      %v828 = vpop.permute.xlu0 %827
      %829 = vrot.lane.b32.xlu0 %v755, 16
      %v830 = vpop.permute.xlu0 %829
      %831 = vrot.lane.b32.xlu0 %v757, 16
      %v832 = vpop.permute.xlu0 %831
      %833 = vrot.lane.b32.xlu0 %v760, 16
      %v834 = vpop.permute.xlu0 %833
      %835 = vrot.lane.b32.xlu0 %v762, 16
      %v836 = vpop.permute.xlu0 %835
      %837 = vrot.lane.b32.xlu0 %v765, 16
      %v838 = vpop.permute.xlu0 %837
      %839 = vrot.lane.b32.xlu0 %v767, 16
      %v840 = vpop.permute.xlu0 %839
      %841 = vrot.lane.b32.xlu0 %v770, 16
      %v842 = vpop.permute.xlu0 %841
      %843 = vrot.lane.b32.xlu0 %v772, 16
      %v844 = vpop.permute.xlu0 %843
      %vm881 = vcmask 1045504
      %v882 = vrot.slane %v574, 2
      %v883 = vrot.slane %v575, 2
      %v884 = vsel %vm881, %v882, %v883
      %v885 = vrot.slane %v576, 2
      %v886 = vsel %vm881, %v883, %v885
      %v887 = vrot.slane %v577, 2
      %v888 = vrot.slane %v578, 2
      %v889 = vsel %vm881, %v887, %v888
      %v890 = vrot.slane %v579, 2
      %v891 = vsel %vm881, %v888, %v890
      %v892 = vrot.slane %v580, 2
      %v893 = vrot.slane %v581, 2
      %v894 = vsel %vm881, %v892, %v893
      %v895 = vrot.slane %v582, 2
      %v896 = vsel %vm881, %v893, %v895
      %v897 = vrot.slane %v583, 2
      %v898 = vrot.slane %v584, 2
      %v899 = vsel %vm881, %v897, %v898
      %v900 = vrot.slane %v585, 2
      %v901 = vsel %vm881, %v898, %v900
      %v902 = vrot.slane %v586, 2
      %v903 = vrot.slane %v587, 2
      %v904 = vsel %vm881, %v902, %v903
      %v905 = vrot.slane %v588, 2
      %v906 = vsel %vm881, %v903, %v905
      %v907 = vrot.slane %v589, 2
      %v908 = vrot.slane %v590, 2
      %v909 = vsel %vm881, %v907, %v908
      %v910 = vrot.slane %v591, 2
      %v911 = vsel %vm881, %v908, %v910
      %v912 = vrot.slane %v592, 2
      %v913 = vrot.slane %v593, 2
      %v914 = vsel %vm881, %v912, %v913
      %v915 = vrot.slane %v594, 2
      %v916 = vsel %vm881, %v913, %v915
      %v917 = vrot.slane %v595, 2
      %v918 = vrot.slane %v596, 2
      %v919 = vsel %vm881, %v917, %v918
      %v920 = vrot.slane %v597, 2
      %v921 = vsel %vm881, %v918, %v920
      %v922 = vrot.slane %v598, 2
      %v923 = vrot.slane %v599, 2
      %v924 = vsel %vm881, %v922, %v923
      %v925 = vrot.slane %v600, 2
      %v926 = vsel %vm881, %v923, %v925
      %v927 = vrot.slane %v601, 2
      %v928 = vrot.slane %v602, 2
      %v929 = vsel %vm881, %v927, %v928
      %v930 = vrot.slane %v603, 2
      %v931 = vsel %vm881, %v928, %v930
      %v932 = vrot.slane %v604, 2
      %v933 = vrot.slane %v605, 2
      %v934 = vsel %vm881, %v932, %v933
      %v935 = vrot.slane %v606, 2
      %v936 = vsel %vm881, %v933, %v935
      %v937 = vrot.slane %v607, 2
      %v938 = vrot.slane %v608, 2
      %v939 = vsel %vm881, %v937, %v938
      %v940 = vrot.slane %v609, 2
      %v941 = vsel %vm881, %v938, %v940
      %v942 = vrot.slane %v610, 2
      %v943 = vrot.slane %v611, 2
      %v944 = vsel %vm881, %v942, %v943
      %v945 = vrot.slane %v612, 2
      %v946 = vsel %vm881, %v943, %v945
      %v947 = vrot.slane %v613, 2
      %v948 = vrot.slane %v614, 2
      %v949 = vsel %vm881, %v947, %v948
      %v950 = vrot.slane %v615, 2
      %v951 = vsel %vm881, %v948, %v950
      %v952 = vrot.slane %v616, 2
      %v953 = vrot.slane %v617, 2
      %v954 = vsel %vm881, %v952, %v953
      %v955 = vrot.slane %v618, 2
      %v956 = vsel %vm881, %v953, %v955
      %v957 = vrot.slane %v619, 2
      %v958 = vrot.slane %v620, 2
      %v959 = vsel %vm881, %v957, %v958
      %v960 = vrot.slane %v621, 2
      %v961 = vsel %vm881, %v958, %v960
      %v962 = vrot.slane %v622, 2
      %v963 = vrot.slane %v623, 2
      %v964 = vsel %vm881, %v962, %v963
      %v965 = vrot.slane %v624, 2
      %v966 = vsel %vm881, %v963, %v965
      %v967 = vrot.slane %v625, 2
      %v968 = vrot.slane %v626, 2
      %v969 = vsel %vm881, %v967, %v968
      %v970 = vrot.slane %v627, 2
      %v971 = vsel %vm881, %v968, %v970
      %972 = vrot.lane.b32.xlu0 %v884, 32
      %v973 = vpop.permute.xlu0 %972
      %974 = vrot.lane.b32.xlu0 %v886, 32
      %v975 = vpop.permute.xlu0 %974
      %976 = vrot.lane.b32.xlu0 %v889, 32
      %v977 = vpop.permute.xlu0 %976
      %978 = vrot.lane.b32.xlu0 %v891, 32
      %v979 = vpop.permute.xlu0 %978
      %980 = vrot.lane.b32.xlu0 %v894, 32
      %v981 = vpop.permute.xlu0 %980
      %982 = vrot.lane.b32.xlu0 %v896, 32
      %v983 = vpop.permute.xlu0 %982
      %984 = vrot.lane.b32.xlu0 %v899, 32
      %v985 = vpop.permute.xlu0 %984
      %986 = vrot.lane.b32.xlu0 %v901, 32
      %v987 = vpop.permute.xlu0 %986
      %988 = vrot.lane.b32.xlu0 %v904, 32
      %v989 = vpop.permute.xlu0 %988
      %990 = vrot.lane.b32.xlu0 %v906, 32
      %v991 = vpop.permute.xlu0 %990
      %992 = vrot.lane.b32.xlu0 %v909, 32
      %v993 = vpop.permute.xlu0 %992
      %994 = vrot.lane.b32.xlu0 %v911, 32
      %v995 = vpop.permute.xlu0 %994
      %996 = vrot.lane.b32.xlu0 %v914, 32
      %v997 = vpop.permute.xlu0 %996
      %998 = vrot.lane.b32.xlu0 %v916, 32
      %v999 = vpop.permute.xlu0 %998
      %1000 = vrot.lane.b32.xlu0 %v919, 32
      %v1001 = vpop.permute.xlu0 %1000
      %1002 = vrot.lane.b32.xlu0 %v921, 32
      %v1003 = vpop.permute.xlu0 %1002
      %1004 = vrot.lane.b32.xlu0 %v924, 32
      %v1005 = vpop.permute.xlu0 %1004
      %1006 = vrot.lane.b32.xlu0 %v926, 32
      %v1007 = vpop.permute.xlu0 %1006
      %1008 = vrot.lane.b32.xlu0 %v929, 32
      %v1009 = vpop.permute.xlu0 %1008
      %1010 = vrot.lane.b32.xlu0 %v931, 32
      %v1011 = vpop.permute.xlu0 %1010
      %1012 = vrot.lane.b32.xlu0 %v934, 32
      %v1013 = vpop.permute.xlu0 %1012
      %1014 = vrot.lane.b32.xlu0 %v936, 32
      %v1015 = vpop.permute.xlu0 %1014
      %1016 = vrot.lane.b32.xlu0 %v939, 32
      %v1017 = vpop.permute.xlu0 %1016
      %1018 = vrot.lane.b32.xlu0 %v941, 32
      %v1019 = vpop.permute.xlu0 %1018
      %1020 = vrot.lane.b32.xlu0 %v944, 32
      %v1021 = vpop.permute.xlu0 %1020
      %1022 = vrot.lane.b32.xlu0 %v946, 32
      %v1023 = vpop.permute.xlu0 %1022
      %1024 = vrot.lane.b32.xlu0 %v949, 32
      %v1025 = vpop.permute.xlu0 %1024
      %1026 = vrot.lane.b32.xlu0 %v951, 32
      %v1027 = vpop.permute.xlu0 %1026
      %1028 = vrot.lane.b32.xlu0 %v954, 32
      %v1029 = vpop.permute.xlu0 %1028
      %1030 = vrot.lane.b32.xlu0 %v956, 32
      %v1031 = vpop.permute.xlu0 %1030
      %1032 = vrot.lane.b32.xlu0 %v959, 32
      %v1033 = vpop.permute.xlu0 %1032
      %1034 = vrot.lane.b32.xlu0 %v961, 32
      %v1035 = vpop.permute.xlu0 %1034
      %1036 = vrot.lane.b32.xlu0 %v964, 32
      %v1037 = vpop.permute.xlu0 %1036
      %1038 = vrot.lane.b32.xlu0 %v966, 32
      %v1039 = vpop.permute.xlu0 %1038
      %1040 = vrot.lane.b32.xlu0 %v969, 32
      %v1041 = vpop.permute.xlu0 %1040
      %1042 = vrot.lane.b32.xlu0 %v971, 32
      %v1043 = vpop.permute.xlu0 %1042
      %v1080 = vsel %vm324, %v574, %v774
      %v1081 = vsel %vm324, %v575, %v776
      %v1082 = vsel %vm324, %v577, %v778
      %v1083 = vsel %vm324, %v578, %v780
      %v1084 = vsel %vm324, %v580, %v782
      %v1085 = vsel %vm324, %v581, %v784
      %v1086 = vsel %vm324, %v583, %v786
      %v1087 = vsel %vm324, %v584, %v788
      %v1088 = vsel %vm324, %v586, %v790
      %v1089 = vsel %vm324, %v587, %v792
      %v1090 = vsel %vm324, %v589, %v794
      %v1091 = vsel %vm324, %v590, %v796
      %v1092 = vsel %vm324, %v592, %v798
      %v1093 = vsel %vm324, %v593, %v800
      %v1094 = vsel %vm324, %v595, %v802
      %v1095 = vsel %vm324, %v596, %v804
      %v1096 = vsel %vm324, %v598, %v806
      %v1097 = vsel %vm324, %v599, %v808
      %v1098 = vsel %vm324, %v601, %v810
      %v1099 = vsel %vm324, %v602, %v812
      %v1100 = vsel %vm324, %v604, %v814
      %v1101 = vsel %vm324, %v605, %v816
      %v1102 = vsel %vm324, %v607, %v818
      %v1103 = vsel %vm324, %v608, %v820
      %v1104 = vsel %vm324, %v610, %v822
      %v1105 = vsel %vm324, %v611, %v824
      %v1106 = vsel %vm324, %v613, %v826
      %v1107 = vsel %vm324, %v614, %v828
      %v1108 = vsel %vm324, %v616, %v830
      %v1109 = vsel %vm324, %v617, %v832
      %v1110 = vsel %vm324, %v619, %v834
      %v1111 = vsel %vm324, %v620, %v836
      %v1112 = vsel %vm324, %v622, %v838
      %v1113 = vsel %vm324, %v623, %v840
      %v1114 = vsel %vm324, %v625, %v842
      %v1115 = vsel %vm324, %v626, %v844
      %vm1116 = vcmask 261120
      %v1117 = vsel %vm1116, %v1080, %v973
      %v1118 = vsel %vm1116, %v1081, %v975
      %v1119 = vsel %vm1116, %v1082, %v977
      %v1120 = vsel %vm1116, %v1083, %v979
      %v1121 = vsel %vm1116, %v1084, %v981
      %v1122 = vsel %vm1116, %v1085, %v983
      %v1123 = vsel %vm1116, %v1086, %v985
      %v1124 = vsel %vm1116, %v1087, %v987
      %v1125 = vsel %vm1116, %v1088, %v989
      %v1126 = vsel %vm1116, %v1089, %v991
      %v1127 = vsel %vm1116, %v1090, %v993
      %v1128 = vsel %vm1116, %v1091, %v995
      %v1129 = vsel %vm1116, %v1092, %v997
      %v1130 = vsel %vm1116, %v1093, %v999
      %v1131 = vsel %vm1116, %v1094, %v1001
      %v1132 = vsel %vm1116, %v1095, %v1003
      %v1133 = vsel %vm1116, %v1096, %v1005
      %v1134 = vsel %vm1116, %v1097, %v1007
      %v1135 = vsel %vm1116, %v1098, %v1009
      %v1136 = vsel %vm1116, %v1099, %v1011
      %v1137 = vsel %vm1116, %v1100, %v1013
      %v1138 = vsel %vm1116, %v1101, %v1015
      %v1139 = vsel %vm1116, %v1102, %v1017
      %v1140 = vsel %vm1116, %v1103, %v1019
      %v1141 = vsel %vm1116, %v1104, %v1021
      %v1142 = vsel %vm1116, %v1105, %v1023
      %v1143 = vsel %vm1116, %v1106, %v1025
      %v1144 = vsel %vm1116, %v1107, %v1027
      %v1145 = vsel %vm1116, %v1108, %v1029
      %v1146 = vsel %vm1116, %v1109, %v1031
      %v1147 = vsel %vm1116, %v1110, %v1033
      %v1148 = vsel %vm1116, %v1111, %v1035
      %v1149 = vsel %vm1116, %v1112, %v1037
      %v1150 = vsel %vm1116, %v1113, %v1039
      %v1151 = vsel %vm1116, %v1114, %v1041
      %v1152 = vsel %vm1116, %v1115, %v1043
      %v1153 = vpack.c.bf16 %v1118, %v1117
      %v1154 = vpack.c.bf16 %v1120, %v1119
      %v1155 = vpack.c.bf16 %v1122, %v1121
      %v1156 = vpack.c.bf16 %v1124, %v1123
      %v1157 = vpack.c.bf16 %v1126, %v1125
      %v1158 = vpack.c.bf16 %v1128, %v1127
      %v1159 = vpack.c.bf16 %v1130, %v1129
      %v1160 = vpack.c.bf16 %v1132, %v1131
      %v1161 = vpack.c.bf16 %v1134, %v1133
      %v1162 = vpack.c.bf16 %v1136, %v1135
      %v1163 = vpack.c.bf16 %v1138, %v1137
      %v1164 = vpack.c.bf16 %v1140, %v1139
      %v1165 = vpack.c.bf16 %v1142, %v1141
      %v1166 = vpack.c.bf16 %v1144, %v1143
      %v1167 = vpack.c.bf16 %v1146, %v1145
      %v1168 = vpack.c.bf16 %v1148, %v1147
      %v1169 = vpack.c.bf16 %v1150, %v1149
      %v1176 = vunpack.c.l.b16 %v561
      %v1177 = vunpack.c.l.b16 %v562
      %v1178 = vunpack.c.l.b16 %v563
      %v1179 = vunpack.c.l.b16 %v564
      %v1180 = vunpack.c.l.b16 %v565
      %v1181 = vunpack.c.l.b16 %v566
      %v1182 = vpack.c.b16 %v1177, %v1176
      %v1183 = vpack.c.b16 %v1179, %v1178
      %v1184 = vpack.c.b16 %v1181, %v1180
      %vm1188 = vcmask 392192
      %v1190 = vsel %vm1188, %v1154, 0
      %v1193 = vsel %vm1188, %v1155, 0
      %v1196 = vsel %vm1188, %v1156, 0
      %v1199 = vsel %vm1188, %v1157, 0
      %v1202 = vsel %vm1188, %v1158, 0
      %v1205 = vsel %vm1188, %v1159, 0
      %v1208 = vsel %vm1188, %v1160, 0
      %v1211 = vsel %vm1188, %v1161, 0
      %v1214 = vsel %vm1188, %v1162, 0
      %v1217 = vsel %vm1188, %v1163, 0
      %v1220 = vsel %vm1188, %v1164, 0
      %v1223 = vsel %vm1188, %v1165, 0
      %v1226 = vsel %vm1188, %v1166, 0
      %v1229 = vsel %vm1188, %v1167, 0
      %v1232 = vsel %vm1188, %v1168, 0
      %v1235 = vsel %vm1188, %v1169, 0
      %1237 = vmatprep.subr.bf16.mxu0 0
      %1238 = vmatpush1.bf16.msra.mxu0 0
      %1239 = vmatprep.subr.bf16.mxu0 0
      %1240 = vmatpush1.bf16.msra.mxu0 0
      %1241 = vmatprep.subr.bf16.mxu0 0
      %1242 = vmatpush1.bf16.msra.mxu0 0
      %1243 = vmatprep.subr.bf16.mxu0 0
      %1244 = vmatpush1.bf16.msra.mxu0 0
      %1245 = vmatprep.subr.bf16.mxu0 0
      %1246 = vmatpush1.bf16.msra.mxu0 0
      %1247 = vmatprep.subr.bf16.mxu0 0
      %1248 = vmatpush1.bf16.msra.mxu0 %v1184
      %1249 = vmatprep.subr.bf16.mxu0 0
      %1250 = vmatpush1.bf16.msra.mxu0 %v1183
      %1251 = vmatprep.subr.bf16.mxu0 0
      %1252 = vmatpush1.bf16.msra.mxu0 %v1182
      %1253 = vmatprep.subr.bf16.mxu0 0
      %1254 = vmatpush2.bf16.msra.mxu0 0
      %1255 = vmatprep.subr.bf16.mxu0 0
      %1256 = vmatpush2.bf16.msra.mxu0 0
      %1257 = vmatprep.subr.bf16.mxu0 0
      %1258 = vmatpush2.bf16.msra.mxu0 0
      %1259 = vmatprep.subr.bf16.mxu0 0
      %1260 = vmatpush2.bf16.msra.mxu0 0
      %1261 = vmatprep.subr.bf16.mxu0 0
      %1262 = vmatpush2.bf16.msra.mxu0 0
      %1263 = vmatprep.subr.bf16.mxu0 0
      %1264 = vmatpush2.bf16.msra.mxu0 0
      %1265 = vmatprep.subr.bf16.mxu0 0
      %1266 = vmatpush2.bf16.msra.mxu0 0
      %1267 = vmatprep.subr.bf16.mxu0 0
      %1268 = vmatpush2.bf16.msra.mxu0 0
      %1269 = vmatprep.mubr.bf16.mxu0 0
      %1270 = vmatmul.mubr.bf16.gmra.mxu0 %v1190
      %v1271 = vpop.f32.mrf.mxu0
      %v1272 = vadd.f32 0.0, %v1271
      %v1273 = vpop.f32.mrf.mxu0
      %v1274 = vpop.f32.mrf.mxu0
      %v1275 = vadd.f32 0.0, %v1274
      %v1276 = vpop.f32.mrf.mxu0
      %1277 = vmatprep.mubr.bf16.mxu0 0
      %1278 = vmatmul.mubr.bf16.gmra.mxu0 %v1193
      %v1279 = vpop.f32.mrf.mxu0
      %v1280 = vadd.f32 0.0, %v1279
      %v1281 = vpop.f32.mrf.mxu0
      %v1282 = vpop.f32.mrf.mxu0
      %v1283 = vadd.f32 0.0, %v1282
      %v1284 = vpop.f32.mrf.mxu0
      %1285 = vmatprep.mubr.bf16.mxu0 0
      %1286 = vmatmul.mubr.bf16.gmra.mxu0 %v1196
      %v1287 = vpop.f32.mrf.mxu0
      %v1288 = vadd.f32 0.0, %v1287
      %v1289 = vpop.f32.mrf.mxu0
      %v1290 = vpop.f32.mrf.mxu0
      %v1291 = vadd.f32 0.0, %v1290
      %v1292 = vpop.f32.mrf.mxu0
      %1293 = vmatprep.mubr.bf16.mxu0 0
      %1294 = vmatmul.mubr.bf16.gmra.mxu0 %v1199
      %v1295 = vpop.f32.mrf.mxu0
      %v1296 = vadd.f32 0.0, %v1295
      %v1297 = vpop.f32.mrf.mxu0
      %v1298 = vpop.f32.mrf.mxu0
      %v1299 = vadd.f32 0.0, %v1298
      %v1300 = vpop.f32.mrf.mxu0
      %1301 = vmatprep.mubr.bf16.mxu0 0
      %1302 = vmatmul.mubr.bf16.gmra.mxu0 %v1202
      %v1303 = vpop.f32.mrf.mxu0
      %v1304 = vadd.f32 0.0, %v1303
      %v1305 = vpop.f32.mrf.mxu0
      %v1306 = vpop.f32.mrf.mxu0
      %v1307 = vadd.f32 0.0, %v1306
      %v1308 = vpop.f32.mrf.mxu0
      %1309 = vmatprep.mubr.bf16.mxu0 0
      %1310 = vmatmul.mubr.bf16.gmra.mxu0 %v1205
      %v1311 = vpop.f32.mrf.mxu0
      %v1312 = vadd.f32 0.0, %v1311
      %v1313 = vpop.f32.mrf.mxu0
      %v1314 = vpop.f32.mrf.mxu0
      %v1315 = vadd.f32 0.0, %v1314
      %v1316 = vpop.f32.mrf.mxu0
      %1317 = vmatprep.mubr.bf16.mxu0 0
      %1318 = vmatmul.mubr.bf16.gmra.mxu0 %v1208
      %v1319 = vpop.f32.mrf.mxu0
      %v1320 = vadd.f32 0.0, %v1319
      %v1321 = vpop.f32.mrf.mxu0
      %v1322 = vpop.f32.mrf.mxu0
      %v1323 = vadd.f32 0.0, %v1322
      %v1324 = vpop.f32.mrf.mxu0
      %1325 = vmatprep.mubr.bf16.mxu0 0
      %1326 = vmatmul.mubr.bf16.gmra.mxu0 %v1211
      %v1327 = vpop.f32.mrf.mxu0
      %v1328 = vadd.f32 0.0, %v1327
      %v1329 = vpop.f32.mrf.mxu0
      %v1330 = vpop.f32.mrf.mxu0
      %v1331 = vadd.f32 0.0, %v1330
      %v1332 = vpop.f32.mrf.mxu0
      %1333 = vmatprep.mubr.bf16.mxu0 0
      %1334 = vmatmul.mubr.bf16.gmra.mxu0 %v1214
      %v1335 = vpop.f32.mrf.mxu0
      %v1336 = vadd.f32 0.0, %v1335
      %v1337 = vpop.f32.mrf.mxu0
      %v1338 = vpop.f32.mrf.mxu0
      %v1339 = vadd.f32 0.0, %v1338
      %v1340 = vpop.f32.mrf.mxu0
      %1341 = vmatprep.mubr.bf16.mxu0 0
      %1342 = vmatmul.mubr.bf16.gmra.mxu0 %v1217
      %v1343 = vpop.f32.mrf.mxu0
      %v1344 = vadd.f32 0.0, %v1343
      %v1345 = vpop.f32.mrf.mxu0
      %v1346 = vpop.f32.mrf.mxu0
      %v1347 = vadd.f32 0.0, %v1346
      %v1348 = vpop.f32.mrf.mxu0
      %1349 = vmatprep.mubr.bf16.mxu0 0
      %1350 = vmatmul.mubr.bf16.gmra.mxu0 %v1220
      %v1351 = vpop.f32.mrf.mxu0
      %v1352 = vadd.f32 0.0, %v1351
      %v1353 = vpop.f32.mrf.mxu0
      %v1354 = vpop.f32.mrf.mxu0
      %v1355 = vadd.f32 0.0, %v1354
      %v1356 = vpop.f32.mrf.mxu0
      %1357 = vmatprep.mubr.bf16.mxu0 0
      %1358 = vmatmul.mubr.bf16.gmra.mxu0 %v1223
      %v1359 = vpop.f32.mrf.mxu0
      %v1360 = vadd.f32 0.0, %v1359
      %v1361 = vpop.f32.mrf.mxu0
      %v1362 = vpop.f32.mrf.mxu0
      %v1363 = vadd.f32 0.0, %v1362
      %v1364 = vpop.f32.mrf.mxu0
      %1365 = vmatprep.mubr.bf16.mxu0 0
      %1366 = vmatmul.mubr.bf16.gmra.mxu0 %v1226
      %v1367 = vpop.f32.mrf.mxu0
      %v1368 = vadd.f32 0.0, %v1367
      %v1369 = vpop.f32.mrf.mxu0
      %v1370 = vpop.f32.mrf.mxu0
      %v1371 = vadd.f32 0.0, %v1370
      %v1372 = vpop.f32.mrf.mxu0
      %1373 = vmatprep.mubr.bf16.mxu0 0
      %1374 = vmatmul.mubr.bf16.gmra.mxu0 %v1229
      %v1375 = vpop.f32.mrf.mxu0
      %v1376 = vadd.f32 0.0, %v1375
      %v1377 = vpop.f32.mrf.mxu0
      %v1378 = vpop.f32.mrf.mxu0
      %v1379 = vadd.f32 0.0, %v1378
      %v1380 = vpop.f32.mrf.mxu0
      %1381 = vmatprep.mubr.bf16.mxu0 0
      %1382 = vmatmul.mubr.bf16.gmra.mxu0 %v1232
      %v1383 = vpop.f32.mrf.mxu0
      %v1384 = vadd.f32 0.0, %v1383
      %v1385 = vpop.f32.mrf.mxu0
      %v1386 = vpop.f32.mrf.mxu0
      %v1387 = vadd.f32 0.0, %v1386
      %v1388 = vpop.f32.mrf.mxu0
      %1389 = vmatprep.mubr.bf16.mxu0 0
      %1390 = vmatmul.mubr.bf16.gmra.mxu0 %v1235
      %v1391 = vpop.f32.mrf.mxu0
      %v1392 = vadd.f32 0.0, %v1391
      %v1393 = vpop.f32.mrf.mxu0
      %v1394 = vpop.f32.mrf.mxu0
      %v1395 = vadd.f32 0.0, %v1394
      %v1396 = vpop.f32.mrf.mxu0
      %1397 = vdwg.mxu0
      %v1404 = vunpack.c.l.b16 %v555
      %v1405 = vunpack.c.l.b16 %v556
      %v1406 = vunpack.c.l.b16 %v557
      %v1407 = vunpack.c.l.b16 %v558
      %v1408 = vunpack.c.l.b16 %v559
      %v1409 = vunpack.c.l.b16 %v560
      %v1410 = vpack.c.b16 %v1405, %v1404
      %v1411 = vpack.c.b16 %v1407, %v1406
      %v1412 = vpack.c.b16 %v1409, %v1408
      %v1417 = vsel %vm1188, %v1153, 0
      %1419 = vmatprep.subr.bf16.mxu0 0
      %1420 = vmatpush1.bf16.msra.mxu0 0
      %1421 = vmatprep.subr.bf16.mxu0 0
      %1422 = vmatpush1.bf16.msra.mxu0 0
      %1423 = vmatprep.subr.bf16.mxu0 0
      %1424 = vmatpush1.bf16.msra.mxu0 0
      %1425 = vmatprep.subr.bf16.mxu0 0
      %1426 = vmatpush1.bf16.msra.mxu0 0
      %1427 = vmatprep.subr.bf16.mxu0 0
      %1428 = vmatpush1.bf16.msra.mxu0 0
      %1429 = vmatprep.subr.bf16.mxu0 0
      %1430 = vmatpush1.bf16.msra.mxu0 %v1412
      %1431 = vmatprep.subr.bf16.mxu0 0
      %1432 = vmatpush1.bf16.msra.mxu0 %v1411
      %1433 = vmatprep.subr.bf16.mxu0 0
      %1434 = vmatpush1.bf16.msra.mxu0 %v1410
      %1435 = vmatprep.subr.bf16.mxu0 0
      %1436 = vmatpush2.bf16.msra.mxu0 0
      %1437 = vmatprep.subr.bf16.mxu0 0
      %1438 = vmatpush2.bf16.msra.mxu0 0
      %1439 = vmatprep.subr.bf16.mxu0 0
      %1440 = vmatpush2.bf16.msra.mxu0 0
      %1441 = vmatprep.subr.bf16.mxu0 0
      %1442 = vmatpush2.bf16.msra.mxu0 0
      %1443 = vmatprep.subr.bf16.mxu0 0
      %1444 = vmatpush2.bf16.msra.mxu0 0
      %1445 = vmatprep.subr.bf16.mxu0 0
      %1446 = vmatpush2.bf16.msra.mxu0 0
      %1447 = vmatprep.subr.bf16.mxu0 0
      %1448 = vmatpush2.bf16.msra.mxu0 0
      %1449 = vmatprep.subr.bf16.mxu0 0
      %1450 = vmatpush2.bf16.msra.mxu0 0
      %1451 = vmatprep.mubr.bf16.mxu0 0
      %1452 = vmatmul.mubr.bf16.gmra.mxu0 %v1417
      %v1453 = vpop.f32.mrf.mxu0
      %v1454 = vadd.f32 %v1272, %v1453
      %v1455 = vpop.f32.mrf.mxu0
      %v1456 = vpop.f32.mrf.mxu0
      %v1457 = vadd.f32 %v1275, %v1456
      %v1458 = vpop.f32.mrf.mxu0
      %1459 = vmatprep.mubr.bf16.mxu0 0
      %1460 = vmatmul.mubr.bf16.gmra.mxu0 %v1190
      %v1461 = vpop.f32.mrf.mxu0
      %v1462 = vadd.f32 %v1280, %v1461
      %v1463 = vpop.f32.mrf.mxu0
      %v1464 = vpop.f32.mrf.mxu0
      %v1465 = vadd.f32 %v1283, %v1464
      %v1466 = vpop.f32.mrf.mxu0
      %1467 = vmatprep.mubr.bf16.mxu0 0
      %1468 = vmatmul.mubr.bf16.gmra.mxu0 %v1193
      %v1469 = vpop.f32.mrf.mxu0
      %v1470 = vadd.f32 %v1288, %v1469
      %v1471 = vpop.f32.mrf.mxu0
      %v1472 = vpop.f32.mrf.mxu0
      %v1473 = vadd.f32 %v1291, %v1472
      %v1474 = vpop.f32.mrf.mxu0
      %1475 = vmatprep.mubr.bf16.mxu0 0
      %1476 = vmatmul.mubr.bf16.gmra.mxu0 %v1196
      %v1477 = vpop.f32.mrf.mxu0
      %v1478 = vadd.f32 %v1296, %v1477
      %v1479 = vpop.f32.mrf.mxu0
      %v1480 = vpop.f32.mrf.mxu0
      %v1481 = vadd.f32 %v1299, %v1480
      %v1482 = vpop.f32.mrf.mxu0
      %1483 = vmatprep.mubr.bf16.mxu0 0
      %1484 = vmatmul.mubr.bf16.gmra.mxu0 %v1199
      %v1485 = vpop.f32.mrf.mxu0
      %v1486 = vadd.f32 %v1304, %v1485
      %v1487 = vpop.f32.mrf.mxu0
      %v1488 = vpop.f32.mrf.mxu0
      %v1489 = vadd.f32 %v1307, %v1488
      %v1490 = vpop.f32.mrf.mxu0
      %1491 = vmatprep.mubr.bf16.mxu0 0
      %1492 = vmatmul.mubr.bf16.gmra.mxu0 %v1202
      %v1493 = vpop.f32.mrf.mxu0
      %v1494 = vadd.f32 %v1312, %v1493
      %v1495 = vpop.f32.mrf.mxu0
      %v1496 = vpop.f32.mrf.mxu0
      %v1497 = vadd.f32 %v1315, %v1496
      %v1498 = vpop.f32.mrf.mxu0
      %1499 = vmatprep.mubr.bf16.mxu0 0
      %1500 = vmatmul.mubr.bf16.gmra.mxu0 %v1205
      %v1501 = vpop.f32.mrf.mxu0
      %v1502 = vadd.f32 %v1320, %v1501
      %v1503 = vpop.f32.mrf.mxu0
      %v1504 = vpop.f32.mrf.mxu0
      %v1505 = vadd.f32 %v1323, %v1504
      %v1506 = vpop.f32.mrf.mxu0
      %1507 = vmatprep.mubr.bf16.mxu0 0
      %1508 = vmatmul.mubr.bf16.gmra.mxu0 %v1208
      %v1509 = vpop.f32.mrf.mxu0
      %v1510 = vadd.f32 %v1328, %v1509
      %v1511 = vpop.f32.mrf.mxu0
      %v1512 = vpop.f32.mrf.mxu0
      %v1513 = vadd.f32 %v1331, %v1512
      %v1514 = vpop.f32.mrf.mxu0
      %1515 = vmatprep.mubr.bf16.mxu0 0
      %1516 = vmatmul.mubr.bf16.gmra.mxu0 %v1211
      %v1517 = vpop.f32.mrf.mxu0
      %v1518 = vadd.f32 %v1336, %v1517
      %v1519 = vpop.f32.mrf.mxu0
      %v1520 = vpop.f32.mrf.mxu0
      %v1521 = vadd.f32 %v1339, %v1520
      %v1522 = vpop.f32.mrf.mxu0
      %1523 = vmatprep.mubr.bf16.mxu0 0
      %1524 = vmatmul.mubr.bf16.gmra.mxu0 %v1214
      %v1525 = vpop.f32.mrf.mxu0
      %v1526 = vadd.f32 %v1344, %v1525
      %v1527 = vpop.f32.mrf.mxu0
      %v1528 = vpop.f32.mrf.mxu0
      %v1529 = vadd.f32 %v1347, %v1528
      %v1530 = vpop.f32.mrf.mxu0
      %1531 = vmatprep.mubr.bf16.mxu0 0
      %1532 = vmatmul.mubr.bf16.gmra.mxu0 %v1217
      %v1533 = vpop.f32.mrf.mxu0
      %v1534 = vadd.f32 %v1352, %v1533
      %v1535 = vpop.f32.mrf.mxu0
      %v1536 = vpop.f32.mrf.mxu0
      %v1537 = vadd.f32 %v1355, %v1536
      %v1538 = vpop.f32.mrf.mxu0
      %1539 = vmatprep.mubr.bf16.mxu0 0
      %1540 = vmatmul.mubr.bf16.gmra.mxu0 %v1220
      %v1541 = vpop.f32.mrf.mxu0
      %v1542 = vadd.f32 %v1360, %v1541
      %v1543 = vpop.f32.mrf.mxu0
      %v1544 = vpop.f32.mrf.mxu0
      %v1545 = vadd.f32 %v1363, %v1544
      %v1546 = vpop.f32.mrf.mxu0
      %1547 = vmatprep.mubr.bf16.mxu0 0
      %1548 = vmatmul.mubr.bf16.gmra.mxu0 %v1223
      %v1549 = vpop.f32.mrf.mxu0
      %v1550 = vadd.f32 %v1368, %v1549
      %v1551 = vpop.f32.mrf.mxu0
      %v1552 = vpop.f32.mrf.mxu0
      %v1553 = vadd.f32 %v1371, %v1552
      %v1554 = vpop.f32.mrf.mxu0
      %1555 = vmatprep.mubr.bf16.mxu0 0
      %1556 = vmatmul.mubr.bf16.gmra.mxu0 %v1226
      %v1557 = vpop.f32.mrf.mxu0
      %v1558 = vadd.f32 %v1376, %v1557
      %v1559 = vpop.f32.mrf.mxu0
      %v1560 = vpop.f32.mrf.mxu0
      %v1561 = vadd.f32 %v1379, %v1560
      %v1562 = vpop.f32.mrf.mxu0
      %1563 = vmatprep.mubr.bf16.mxu0 0
      %1564 = vmatmul.mubr.bf16.gmra.mxu0 %v1229
      %v1565 = vpop.f32.mrf.mxu0
      %v1566 = vadd.f32 %v1384, %v1565
      %v1567 = vpop.f32.mrf.mxu0
      %v1568 = vpop.f32.mrf.mxu0
      %v1569 = vadd.f32 %v1387, %v1568
      %v1570 = vpop.f32.mrf.mxu0
      %1571 = vmatprep.mubr.bf16.mxu0 0
      %1572 = vmatmul.mubr.bf16.gmra.mxu0 %v1232
      %v1573 = vpop.f32.mrf.mxu0
      %v1574 = vadd.f32 %v1392, %v1573
      %v1575 = vpop.f32.mrf.mxu0
      %v1576 = vpop.f32.mrf.mxu0
      %v1577 = vadd.f32 %v1395, %v1576
      %v1578 = vpop.f32.mrf.mxu0
      %1579 = vdwg.mxu0
      %v1580 = vpack.c.bf16 %v1152, %v1151
      %v1587 = vunpack.c.l.b16 %v567
      %v1588 = vunpack.c.l.b16 %v568
      %v1589 = vunpack.c.l.b16 %v569
      %v1590 = vunpack.c.l.b16 %v570
      %v1591 = vunpack.c.l.b16 %v571
      %v1592 = vunpack.c.l.b16 %v572
      %v1593 = vpack.c.b16 %v1588, %v1587
      %v1594 = vpack.c.b16 %v1590, %v1589
      %v1595 = vpack.c.b16 %v1592, %v1591
      %v1600 = vsel %vm1188, %v1580, 0
      %1602 = vmatprep.subr.bf16.mxu0 0
      %1603 = vmatpush1.bf16.msra.mxu0 0
      %1604 = vmatprep.subr.bf16.mxu0 0
      %1605 = vmatpush1.bf16.msra.mxu0 0
      %1606 = vmatprep.subr.bf16.mxu0 0
      %1607 = vmatpush1.bf16.msra.mxu0 0
      %1608 = vmatprep.subr.bf16.mxu0 0
      %1609 = vmatpush1.bf16.msra.mxu0 0
      %1610 = vmatprep.subr.bf16.mxu0 0
      %1611 = vmatpush1.bf16.msra.mxu0 0
      %1612 = vmatprep.subr.bf16.mxu0 0
      %1613 = vmatpush1.bf16.msra.mxu0 %v1595
      %1614 = vmatprep.subr.bf16.mxu0 0
      %1615 = vmatpush1.bf16.msra.mxu0 %v1594
      %1616 = vmatprep.subr.bf16.mxu0 0
      %1617 = vmatpush1.bf16.msra.mxu0 %v1593
      %1618 = vmatprep.subr.bf16.mxu0 0
      %1619 = vmatpush2.bf16.msra.mxu0 0
      %1620 = vmatprep.subr.bf16.mxu0 0
      %1621 = vmatpush2.bf16.msra.mxu0 0
      %1622 = vmatprep.subr.bf16.mxu0 0
      %1623 = vmatpush2.bf16.msra.mxu0 0
      %1624 = vmatprep.subr.bf16.mxu0 0
      %1625 = vmatpush2.bf16.msra.mxu0 0
      %1626 = vmatprep.subr.bf16.mxu0 0
      %1627 = vmatpush2.bf16.msra.mxu0 0
      %1628 = vmatprep.subr.bf16.mxu0 0
      %1629 = vmatpush2.bf16.msra.mxu0 0
      %1630 = vmatprep.subr.bf16.mxu0 0
      %1631 = vmatpush2.bf16.msra.mxu0 0
      %1632 = vmatprep.subr.bf16.mxu0 0
      %1633 = vmatpush2.bf16.msra.mxu0 0
      %1634 = vmatprep.mubr.bf16.mxu0 0
      %1635 = vmatmul.mubr.bf16.gmra.mxu0 %v1193
      %v1636 = vpop.f32.mrf.mxu0
      %v1637 = vadd.f32 0.0, %v1636
      %v1638 = vpop.f32.mrf.mxu0
      %v1639 = vpop.f32.mrf.mxu0
      %v1640 = vadd.f32 0.0, %v1639
      %v1641 = vpop.f32.mrf.mxu0
      %1642 = vmatprep.mubr.bf16.mxu0 0
      %1643 = vmatmul.mubr.bf16.gmra.mxu0 %v1196
      %v1644 = vpop.f32.mrf.mxu0
      %v1645 = vadd.f32 0.0, %v1644
      %v1646 = vpop.f32.mrf.mxu0
      %v1647 = vpop.f32.mrf.mxu0
      %v1648 = vadd.f32 0.0, %v1647
      %v1649 = vpop.f32.mrf.mxu0
      %1650 = vmatprep.mubr.bf16.mxu0 0
      %1651 = vmatmul.mubr.bf16.gmra.mxu0 %v1199
      %v1652 = vpop.f32.mrf.mxu0
      %v1653 = vadd.f32 0.0, %v1652
      %v1654 = vpop.f32.mrf.mxu0
      %v1655 = vpop.f32.mrf.mxu0
      %v1656 = vadd.f32 0.0, %v1655
      %v1657 = vpop.f32.mrf.mxu0
      %1658 = vmatprep.mubr.bf16.mxu0 0
      %1659 = vmatmul.mubr.bf16.gmra.mxu0 %v1202
      %v1660 = vpop.f32.mrf.mxu0
      %v1661 = vadd.f32 0.0, %v1660
      %v1662 = vpop.f32.mrf.mxu0
      %v1663 = vpop.f32.mrf.mxu0
      %v1664 = vadd.f32 0.0, %v1663
      %v1665 = vpop.f32.mrf.mxu0
      %1666 = vmatprep.mubr.bf16.mxu0 0
      %1667 = vmatmul.mubr.bf16.gmra.mxu0 %v1205
      %v1668 = vpop.f32.mrf.mxu0
      %v1669 = vadd.f32 0.0, %v1668
      %v1670 = vpop.f32.mrf.mxu0
      %v1671 = vpop.f32.mrf.mxu0
      %v1672 = vadd.f32 0.0, %v1671
      %v1673 = vpop.f32.mrf.mxu0
      %1674 = vmatprep.mubr.bf16.mxu0 0
      %1675 = vmatmul.mubr.bf16.gmra.mxu0 %v1208
      %v1676 = vpop.f32.mrf.mxu0
      %v1677 = vadd.f32 0.0, %v1676
      %v1678 = vpop.f32.mrf.mxu0
      %v1679 = vpop.f32.mrf.mxu0
      %v1680 = vadd.f32 0.0, %v1679
      %v1681 = vpop.f32.mrf.mxu0
      %1682 = vmatprep.mubr.bf16.mxu0 0
      %1683 = vmatmul.mubr.bf16.gmra.mxu0 %v1211
      %v1684 = vpop.f32.mrf.mxu0
      %v1685 = vadd.f32 0.0, %v1684
      %v1686 = vpop.f32.mrf.mxu0
      %v1687 = vpop.f32.mrf.mxu0
      %v1688 = vadd.f32 0.0, %v1687
      %v1689 = vpop.f32.mrf.mxu0
      %1690 = vmatprep.mubr.bf16.mxu0 0
      %1691 = vmatmul.mubr.bf16.gmra.mxu0 %v1214
      %v1692 = vpop.f32.mrf.mxu0
      %v1693 = vadd.f32 0.0, %v1692
      %v1694 = vpop.f32.mrf.mxu0
      %v1695 = vpop.f32.mrf.mxu0
      %v1696 = vadd.f32 0.0, %v1695
      %v1697 = vpop.f32.mrf.mxu0
      %1698 = vmatprep.mubr.bf16.mxu0 0
      %1699 = vmatmul.mubr.bf16.gmra.mxu0 %v1217
      %v1700 = vpop.f32.mrf.mxu0
      %v1701 = vadd.f32 0.0, %v1700
      %v1702 = vpop.f32.mrf.mxu0
      %v1703 = vpop.f32.mrf.mxu0
      %v1704 = vadd.f32 0.0, %v1703
      %v1705 = vpop.f32.mrf.mxu0
      %1706 = vmatprep.mubr.bf16.mxu0 0
      %1707 = vmatmul.mubr.bf16.gmra.mxu0 %v1220
      %v1708 = vpop.f32.mrf.mxu0
      %v1709 = vadd.f32 0.0, %v1708
      %v1710 = vpop.f32.mrf.mxu0
      %v1711 = vpop.f32.mrf.mxu0
      %v1712 = vadd.f32 0.0, %v1711
      %v1713 = vpop.f32.mrf.mxu0
      %1714 = vmatprep.mubr.bf16.mxu0 0
      %1715 = vmatmul.mubr.bf16.gmra.mxu0 %v1223
      %v1716 = vpop.f32.mrf.mxu0
      %v1717 = vadd.f32 0.0, %v1716
      %v1718 = vpop.f32.mrf.mxu0
      %v1719 = vpop.f32.mrf.mxu0
      %v1720 = vadd.f32 0.0, %v1719
      %v1721 = vpop.f32.mrf.mxu0
      %1722 = vmatprep.mubr.bf16.mxu0 0
      %1723 = vmatmul.mubr.bf16.gmra.mxu0 %v1226
      %v1724 = vpop.f32.mrf.mxu0
      %v1725 = vadd.f32 0.0, %v1724
      %v1726 = vpop.f32.mrf.mxu0
      %v1727 = vpop.f32.mrf.mxu0
      %v1728 = vadd.f32 0.0, %v1727
      %v1729 = vpop.f32.mrf.mxu0
      %1730 = vmatprep.mubr.bf16.mxu0 0
      %1731 = vmatmul.mubr.bf16.gmra.mxu0 %v1229
      %v1732 = vpop.f32.mrf.mxu0
      %v1733 = vadd.f32 0.0, %v1732
      %v1734 = vpop.f32.mrf.mxu0
      %v1735 = vpop.f32.mrf.mxu0
      %v1736 = vadd.f32 0.0, %v1735
      %v1737 = vpop.f32.mrf.mxu0
      %1738 = vmatprep.mubr.bf16.mxu0 0
      %1739 = vmatmul.mubr.bf16.gmra.mxu0 %v1232
      %v1740 = vpop.f32.mrf.mxu0
      %v1741 = vadd.f32 0.0, %v1740
      %v1742 = vpop.f32.mrf.mxu0
      %v1743 = vpop.f32.mrf.mxu0
      %v1744 = vadd.f32 0.0, %v1743
      %v1745 = vpop.f32.mrf.mxu0
      %1746 = vmatprep.mubr.bf16.mxu0 0
      %1747 = vmatmul.mubr.bf16.gmra.mxu0 %v1235
      %v1748 = vpop.f32.mrf.mxu0
      %v1749 = vadd.f32 0.0, %v1748
      %v1750 = vpop.f32.mrf.mxu0
      %v1751 = vpop.f32.mrf.mxu0
      %v1752 = vadd.f32 0.0, %v1751
      %v1753 = vpop.f32.mrf.mxu0
      %1754 = vmatprep.mubr.bf16.mxu0 0
      %1755 = vmatmul.mubr.bf16.gmra.mxu0 %v1600
      %v1756 = vpop.f32.mrf.mxu0
      %v1757 = vadd.f32 0.0, %v1756
      %v1758 = vpop.f32.mrf.mxu0
      %v1759 = vpop.f32.mrf.mxu0
      %v1760 = vadd.f32 0.0, %v1759
      %v1761 = vpop.f32.mrf.mxu0
      %1762 = vdwg.mxu0
      %v1763 = vadd.f32 %v1454, %v1637
      %v1764 = vadd.f32 %v1457, %v1640
      %v1765 = vadd.f32 %v1462, %v1645
      %v1766 = vadd.f32 %v1465, %v1648
      %v1767 = vadd.f32 %v1470, %v1653
      %v1768 = vadd.f32 %v1473, %v1656
      %v1769 = vadd.f32 %v1478, %v1661
      %v1770 = vadd.f32 %v1481, %v1664
      %v1771 = vadd.f32 %v1486, %v1669
      %v1772 = vadd.f32 %v1489, %v1672
      %v1773 = vadd.f32 %v1494, %v1677
      %v1774 = vadd.f32 %v1497, %v1680
      %v1775 = vadd.f32 %v1502, %v1685
      %v1776 = vadd.f32 %v1505, %v1688
      %v1777 = vadd.f32 %v1510, %v1693
      %v1778 = vadd.f32 %v1513, %v1696
      %v1779 = vadd.f32 %v1518, %v1701
      %v1780 = vadd.f32 %v1521, %v1704
      %v1781 = vadd.f32 %v1526, %v1709
      %v1782 = vadd.f32 %v1529, %v1712
      %v1783 = vadd.f32 %v1534, %v1717
      %v1784 = vadd.f32 %v1537, %v1720
      %v1785 = vadd.f32 %v1542, %v1725
      %v1786 = vadd.f32 %v1545, %v1728
      %v1787 = vadd.f32 %v1550, %v1733
      %v1788 = vadd.f32 %v1553, %v1736
      %v1789 = vadd.f32 %v1558, %v1741
      %v1790 = vadd.f32 %v1561, %v1744
      %v1791 = vadd.f32 %v1566, %v1749
      %v1792 = vadd.f32 %v1569, %v1752
      %v1793 = vadd.f32 %v1574, %v1757
      %v1794 = vadd.f32 %v1577, %v1760
      %v1796 = vlaneseq
      %v1797 = vshrl.u32 %v1796, 7
      %v1798 = vsub.s32 0, %v1797
      %v1799 = vrot.slane %v573, %v1798
      %v1801 = vadd.f32 %v1763, %v1799
      %v1802 = vadd.f32 %v1764, %v1799
      %v1803 = vadd.f32 %v1765, %v1799
      %v1804 = vadd.f32 %v1766, %v1799
      %v1805 = vadd.f32 %v1767, %v1799
      %v1806 = vadd.f32 %v1768, %v1799
      %v1807 = vadd.f32 %v1769, %v1799
      %v1808 = vadd.f32 %v1770, %v1799
      %v1809 = vadd.f32 %v1771, %v1799
      %v1810 = vadd.f32 %v1772, %v1799
      %v1811 = vadd.f32 %v1773, %v1799
      %v1812 = vadd.f32 %v1774, %v1799
      %v1813 = vadd.f32 %v1775, %v1799
      %v1814 = vadd.f32 %v1776, %v1799
      %v1815 = vadd.f32 %v1777, %v1799
      %v1816 = vadd.f32 %v1778, %v1799
      %v1817 = vadd.f32 %v1779, %v1799
      %v1818 = vadd.f32 %v1780, %v1799
      %v1819 = vadd.f32 %v1781, %v1799
      %v1820 = vadd.f32 %v1782, %v1799
      %v1821 = vadd.f32 %v1783, %v1799
      %v1822 = vadd.f32 %v1784, %v1799
      %v1823 = vadd.f32 %v1785, %v1799
      %v1824 = vadd.f32 %v1786, %v1799
      %v1825 = vadd.f32 %v1787, %v1799
      %v1826 = vadd.f32 %v1788, %v1799
      %v1827 = vadd.f32 %v1789, %v1799
      %v1828 = vadd.f32 %v1790, %v1799
      %v1829 = vadd.f32 %v1791, %v1799
      %v1830 = vadd.f32 %v1792, %v1799
      %v1831 = vadd.f32 %v1793, %v1799
      %v1832 = vadd.f32 %v1794, %v1799
      %v1833 = vmax.f32 %v1801, 0.0
      %v1834 = vmax.f32 %v1802, 0.0
      %v1835 = vmax.f32 %v1803, 0.0
      %v1836 = vmax.f32 %v1804, 0.0
      %v1837 = vmax.f32 %v1805, 0.0
      %v1838 = vmax.f32 %v1806, 0.0
      %v1839 = vmax.f32 %v1807, 0.0
      %v1840 = vmax.f32 %v1808, 0.0
      %v1841 = vmax.f32 %v1809, 0.0
      %v1842 = vmax.f32 %v1810, 0.0
      %v1843 = vmax.f32 %v1811, 0.0
      %v1844 = vmax.f32 %v1812, 0.0
      %v1845 = vmax.f32 %v1813, 0.0
      %v1846 = vmax.f32 %v1814, 0.0
      %v1847 = vmax.f32 %v1815, 0.0
      %v1848 = vmax.f32 %v1816, 0.0
      %v1849 = vmax.f32 %v1817, 0.0
      %v1850 = vmax.f32 %v1818, 0.0
      %v1851 = vmax.f32 %v1819, 0.0
      %v1852 = vmax.f32 %v1820, 0.0
      %v1853 = vmax.f32 %v1821, 0.0
      %v1854 = vmax.f32 %v1822, 0.0
      %v1855 = vmax.f32 %v1823, 0.0
      %v1856 = vmax.f32 %v1824, 0.0
      %v1857 = vmax.f32 %v1825, 0.0
      %v1858 = vmax.f32 %v1826, 0.0
      %v1859 = vmax.f32 %v1827, 0.0
      %v1860 = vmax.f32 %v1828, 0.0
      %v1861 = vmax.f32 %v1829, 0.0
      %v1862 = vmax.f32 %v1830, 0.0
      %v1863 = vmax.f32 %v1831, 0.0
      %v1864 = vmax.f32 %v1832, 0.0
      %s1865 = scalar_lea.vmem [#allocation3], 24
      %1866 = vst.msk [vmem:[%s1865 + $0x1] sm:$0xff] %vm380, %v1833
      %1867 = vst.msk [vmem:[%s1865 + $0x9] sm:$0xff] %vm380, %v1834
      %1868 = vst.msk [vmem:[%s1865 + $0x19] sm:$0xff] %vm380, %v1835
      %1869 = vst.msk [vmem:[%s1865 + $0x21] sm:$0xff] %vm380, %v1836
      %1870 = vst.msk [vmem:[%s1865 + $0x31] sm:$0xff] %vm380, %v1837
      %1871 = vst.msk [vmem:[%s1865 + $0x39] sm:$0xff] %vm380, %v1838
      %1872 = vst.msk [vmem:[%s1865 + $0x49] sm:$0xff] %vm380, %v1839
      %1873 = vst.msk [vmem:[%s1865 + $0x51] sm:$0xff] %vm380, %v1840
      %1874 = vst.msk [vmem:[%s1865 + $0x61] sm:$0xff] %vm380, %v1841
      %1875 = vst.msk [vmem:[%s1865 + $0x69] sm:$0xff] %vm380, %v1842
      %1876 = vst.msk [vmem:[%s1865 + $0x79] sm:$0xff] %vm380, %v1843
      %1877 = vst.msk [vmem:[%s1865 + $0x81] sm:$0xff] %vm380, %v1844
      %1878 = vst.msk [vmem:[%s1865 + $0x91] sm:$0xff] %vm380, %v1845
      %1879 = vst.msk [vmem:[%s1865 + $0x99] sm:$0xff] %vm380, %v1846
      %1880 = vst.msk [vmem:[%s1865 + $0xa9] sm:$0xff] %vm380, %v1847
      %1881 = vst.msk [vmem:[%s1865 + $0xb1] sm:$0xff] %vm380, %v1848
      %1882 = vst.msk [vmem:[%s1865 + $0xc1] sm:$0xff] %vm380, %v1849
      %1883 = vst.msk [vmem:[%s1865 + $0xc9] sm:$0xff] %vm380, %v1850
      %1884 = vst.msk [vmem:[%s1865 + $0xd9] sm:$0xff] %vm380, %v1851
      %1885 = vst.msk [vmem:[%s1865 + $0xe1] sm:$0xff] %vm380, %v1852
      %1886 = vst.msk [vmem:[%s1865 + $0xf1] sm:$0xff] %vm380, %v1853
      %1887 = vst.msk [vmem:[%s1865 + $0xf9] sm:$0xff] %vm380, %v1854
      %1888 = vst.msk [vmem:[%s1865 + $0x109] sm:$0xff] %vm380, %v1855
      %1889 = vst.msk [vmem:[%s1865 + $0x111] sm:$0xff] %vm380, %v1856
      %1890 = vst.msk [vmem:[%s1865 + $0x121] sm:$0xff] %vm380, %v1857
      %1891 = vst.msk [vmem:[%s1865 + $0x129] sm:$0xff] %vm380, %v1858
      %1892 = vst.msk [vmem:[%s1865 + $0x139] sm:$0xff] %vm380, %v1859
      %1893 = vst.msk [vmem:[%s1865 + $0x141] sm:$0xff] %vm380, %v1860
      %1894 = vst.msk [vmem:[%s1865 + $0x151] sm:$0xff] %vm380, %v1861
      %1895 = vst.msk [vmem:[%s1865 + $0x159] sm:$0xff] %vm380, %v1862
      %1896 = vst.msk [vmem:[%s1865 + $0x169] sm:$0xff] %vm380, %v1863
      %1897 = vst.msk [vmem:[%s1865 + $0x171] sm:$0xff] %vm380, %v1864
      %v1898 = vld [vmem:[%s3] sm:$0xf]
      %v1899 = vld [vmem:[%s3 + $0x4] sm:$0xf]
      %v1900 = vld [vmem:[%s3 + $0x8] sm:$0xf]
      %v1901 = vld [vmem:[%s3 + $0xc] sm:$0xf]
      %v1902 = vld [vmem:[%s3 + $0x10] sm:$0xf]
      %v1903 = vld [vmem:[%s3 + $0x14] sm:$0xf]
      %v1904 = vld [vmem:[%s3 + $0x18] sm:$0xf]
      %v1905 = vld [vmem:[%s3 + $0x1c] sm:$0xf]
      %v1906 = vld [vmem:[%s3 + $0x20] sm:$0xf]
      %v1907 = vld [vmem:[%s3 + $0x24] sm:$0xf]
      %v1908 = vld [vmem:[%s3 + $0x28] sm:$0xf]
      %v1909 = vld [vmem:[%s3 + $0x2c] sm:$0xf]
      %v1910 = vld [vmem:[%s3 + $0x30] sm:$0xf]
      %v1911 = vld [vmem:[%s3 + $0x34] sm:$0xf]
      %v1912 = vld [vmem:[%s3 + $0x38] sm:$0xf]
      %v1913 = vld [vmem:[%s3 + $0x3c] sm:$0xf]
      %v1914 = vld [vmem:[%s3 + $0x40] sm:$0xf]
      %v1915 = vld [vmem:[%s3 + $0x44] sm:$0xf]
      %v1916 = vld [vmem:[%s3 + $0x48] sm:$0xf]
      %v1917 = vld [vmem:[%s3 + $0x4c] sm:$0xf]
      %v1918 = vld [vmem:[%s3 + $0x50] sm:$0xf]
      %v1919 = vld [vmem:[%s3 + $0x54] sm:$0xf]
      %v1920 = vld [vmem:[%s3 + $0x58] sm:$0xf]
      %v1921 = vld [vmem:[%s3 + $0x5c] sm:$0xf]
      %v1922 = vld [vmem:[%s3 + $0x60] sm:$0xf]
      %v1923 = vld [vmem:[%s3 + $0x64] sm:$0xf]
      %v1924 = vld [vmem:[%s3 + $0x68] sm:$0xf]
      %v1925 = vld [vmem:[%s3 + $0x6c] sm:$0xf]
      %v1926 = vld [vmem:[%s3 + $0x70] sm:$0xf]
      %v1927 = vld [vmem:[%s3 + $0x74] sm:$0xf]
      %v1928 = vld [vmem:[%s3 + $0x78] sm:$0xf]
      %v1929 = vld [vmem:[%s3 + $0x7c] sm:$0xf]
      %v1930 = vld [vmem:[%s3 + $0x80] sm:$0xf]
      %v1931 = vld [vmem:[%s3 + $0x84] sm:$0xf]
      %v1932 = vld [vmem:[%s3 + $0x88] sm:$0xf]
      %v1933 = vld [vmem:[%s3 + $0x8c] sm:$0xf]
      %v1934 = vld [vmem:[%s3 + $0x90] sm:$0xf]
      %v1935 = vld [vmem:[%s3 + $0x94] sm:$0xf]
      %v1936 = vld [vmem:[%s3 + $0x98] sm:$0xf]
      %v1937 = vld [vmem:[%s3 + $0x9c] sm:$0xf]
      %v1938 = vld [vmem:[%s3 + $0xa0] sm:$0xf]
      %v1939 = vld [vmem:[%s3 + $0xa4] sm:$0xf]
      %v1940 = vld [vmem:[%s3 + $0xa8] sm:$0xf]
      %v1941 = vld [vmem:[%s3 + $0xac] sm:$0xf]
      %v1942 = vld [vmem:[%s3 + $0xb0] sm:$0xf]
      %v1943 = vld [vmem:[%s3 + $0xb4] sm:$0xf]
      %v1944 = vld [vmem:[%s3 + $0xb8] sm:$0xf]
      %v1945 = vld [vmem:[%s3 + $0xbc] sm:$0xf]
      %v1946 = vld [vmem:[%s3 + $0xc0] sm:$0xf]
      %v1947 = vld [vmem:[%s3 + $0xc4] sm:$0xf]
      %v1948 = vld [vmem:[%s3 + $0xc8] sm:$0xf]
      %v1949 = vld [vmem:[%s3 + $0xcc] sm:$0xf]
      %v1950 = vld [vmem:[%s3 + $0xd0] sm:$0xf]
      %v1951 = vld [vmem:[%s3 + $0xd4] sm:$0xf]
      %v1952 = vld [vmem:[%s3 + $0xd8] sm:$0xf]
      %v1953 = vld [vmem:[%s3 + $0xdc] sm:$0xf]
      %v1954 = vld [vmem:[%s3 + $0xe0] sm:$0xf]
      %v1955 = vld [vmem:[%s3 + $0xe4] sm:$0xf]
      %v1956 = vld [vmem:[%s3 + $0xe8] sm:$0xf]
      %v1957 = vld [vmem:[%s3 + $0xec] sm:$0xf]
      %v1958 = vld [vmem:[%s3 + $0xf0] sm:$0xf]
      %v1959 = vld [vmem:[%s3 + $0xf4] sm:$0xf]
      %v1960 = vld [vmem:[%s3 + $0xf8] sm:$0xf]
      %v1961 = vld [vmem:[%s3 + $0xfc] sm:$0xf]
      %v1962 = vld [vmem:[%s3 + $0x100] sm:$0xf]
      %v1963 = vld [vmem:[%s3 + $0x104] sm:$0xf]
      %v1964 = vld [vmem:[%s3 + $0x108] sm:$0xf]
      %v1965 = vld [vmem:[%s3 + $0x10c] sm:$0xf]
      %v1966 = vld [vmem:[%s3 + $0x110] sm:$0xf]
      %v1967 = vld [vmem:[%s3 + $0x114] sm:$0xf]
      %v1968 = vld [vmem:[%s3 + $0x118] sm:$0xf]
      %v1969 = vld [vmem:[%s3 + $0x11c] sm:$0xf]
      %v1970 = vld [vmem:[%s4] sm:$0x1]
      %v1971 = vld [vmem:[#allocation3] sm:$0xff]
      %v1972 = vld [vmem:[#allocation3 + $0x8] sm:$0xff]
      %v1973 = vld [vmem:[#allocation3 + $0x10] sm:$0x3]
      %v1974 = vld [vmem:[#allocation3 + $0x18] sm:$0xff]
      %v1975 = vld [vmem:[#allocation3 + $0x20] sm:$0xff]
      %v1976 = vld [vmem:[#allocation3 + $0x28] sm:$0x3]
      %v1977 = vld [vmem:[#allocation3 + $0x30] sm:$0xff]
      %v1978 = vld [vmem:[#allocation3 + $0x38] sm:$0xff]
      %v1979 = vld [vmem:[#allocation3 + $0x40] sm:$0x3]
      %v1980 = vld [vmem:[#allocation3 + $0x48] sm:$0xff]
      %v1981 = vld [vmem:[#allocation3 + $0x50] sm:$0xff]
      %v1982 = vld [vmem:[#allocation3 + $0x58] sm:$0x3]
      %v1983 = vld [vmem:[#allocation3 + $0x60] sm:$0xff]
      %v1984 = vld [vmem:[#allocation3 + $0x68] sm:$0xff]
      %v1985 = vld [vmem:[#allocation3 + $0x70] sm:$0x3]
      %v1986 = vld [vmem:[#allocation3 + $0x78] sm:$0xff]
      %v1987 = vld [vmem:[#allocation3 + $0x80] sm:$0xff]
      %v1988 = vld [vmem:[#allocation3 + $0x88] sm:$0x3]
      %v1989 = vld [vmem:[#allocation3 + $0x90] sm:$0xff]
      %v1990 = vld [vmem:[#allocation3 + $0x98] sm:$0xff]
      %v1991 = vld [vmem:[#allocation3 + $0xa0] sm:$0x3]
      %v1992 = vld [vmem:[#allocation3 + $0xa8] sm:$0xff]
      %v1993 = vld [vmem:[#allocation3 + $0xb0] sm:$0xff]
      %v1994 = vld [vmem:[#allocation3 + $0xb8] sm:$0x3]
      %v1995 = vld [vmem:[#allocation3 + $0xc0] sm:$0xff]
      %v1996 = vld [vmem:[#allocation3 + $0xc8] sm:$0xff]
      %v1997 = vld [vmem:[#allocation3 + $0xd0] sm:$0x3]
      %v1998 = vld [vmem:[#allocation3 + $0xd8] sm:$0xff]
      %v1999 = vld [vmem:[#allocation3 + $0xe0] sm:$0xff]
      %v2000 = vld [vmem:[#allocation3 + $0xe8] sm:$0x3]
      %v2001 = vld [vmem:[#allocation3 + $0xf0] sm:$0xff]
      %v2002 = vld [vmem:[#allocation3 + $0xf8] sm:$0xff]
      %v2003 = vld [vmem:[#allocation3 + $0x100] sm:$0x3]
      %v2004 = vld [vmem:[#allocation3 + $0x108] sm:$0xff]
      %v2005 = vld [vmem:[#allocation3 + $0x110] sm:$0xff]
      %v2006 = vld [vmem:[#allocation3 + $0x118] sm:$0x3]
      %v2007 = vld [vmem:[#allocation3 + $0x120] sm:$0xff]
      %v2008 = vld [vmem:[#allocation3 + $0x128] sm:$0xff]
      %v2009 = vld [vmem:[#allocation3 + $0x130] sm:$0x3]
      %v2010 = vld [vmem:[#allocation3 + $0x138] sm:$0xff]
      %v2011 = vld [vmem:[#allocation3 + $0x140] sm:$0xff]
      %v2012 = vld [vmem:[#allocation3 + $0x148] sm:$0x3]
      %v2013 = vld [vmem:[#allocation3 + $0x150] sm:$0xff]
      %v2014 = vld [vmem:[#allocation3 + $0x158] sm:$0xff]
      %v2015 = vld [vmem:[#allocation3 + $0x160] sm:$0x3]
      %v2016 = vld [vmem:[#allocation3 + $0x168] sm:$0xff]
      %v2017 = vld [vmem:[#allocation3 + $0x170] sm:$0xff]
      %v2018 = vld [vmem:[#allocation3 + $0x178] sm:$0x3]
      %v2019 = vld [vmem:[#allocation3 + $0x180] sm:$0xff]
      %v2020 = vld [vmem:[#allocation3 + $0x188] sm:$0xff]
      %v2021 = vld [vmem:[#allocation3 + $0x190] sm:$0x3]
      %v2022 = vld [vmem:[#allocation3 + $0x198] sm:$0xff]
      %v2023 = vld [vmem:[#allocation3 + $0x1a0] sm:$0xff]
      %v2024 = vld [vmem:[#allocation3 + $0x1a8] sm:$0x3]
      %v2079 = vrot.slane %v1971, 1
      %v2080 = vrot.slane %v1972, 1
      %v2081 = vsel %vm682, %v2079, %v2080
      %v2082 = vrot.slane %v1973, 1
      %v2083 = vsel %vm682, %v2080, %v2082
      %v2084 = vrot.slane %v1974, 1
      %v2085 = vrot.slane %v1975, 1
      %v2086 = vsel %vm682, %v2084, %v2085
      %v2087 = vrot.slane %v1976, 1
      %v2088 = vsel %vm682, %v2085, %v2087
      %v2089 = vrot.slane %v1977, 1
      %v2090 = vrot.slane %v1978, 1
      %v2091 = vsel %vm682, %v2089, %v2090
      %v2092 = vrot.slane %v1979, 1
      %v2093 = vsel %vm682, %v2090, %v2092
      %v2094 = vrot.slane %v1980, 1
      %v2095 = vrot.slane %v1981, 1
      %v2096 = vsel %vm682, %v2094, %v2095
      %v2097 = vrot.slane %v1982, 1
      %v2098 = vsel %vm682, %v2095, %v2097
      %v2099 = vrot.slane %v1983, 1
      %v2100 = vrot.slane %v1984, 1
      %v2101 = vsel %vm682, %v2099, %v2100
      %v2102 = vrot.slane %v1985, 1
      %v2103 = vsel %vm682, %v2100, %v2102
      %v2104 = vrot.slane %v1986, 1
      %v2105 = vrot.slane %v1987, 1
      %v2106 = vsel %vm682, %v2104, %v2105
      %v2107 = vrot.slane %v1988, 1
      %v2108 = vsel %vm682, %v2105, %v2107
      %v2109 = vrot.slane %v1989, 1
      %v2110 = vrot.slane %v1990, 1
      %v2111 = vsel %vm682, %v2109, %v2110
      %v2112 = vrot.slane %v1991, 1
      %v2113 = vsel %vm682, %v2110, %v2112
      %v2114 = vrot.slane %v1992, 1
      %v2115 = vrot.slane %v1993, 1
      %v2116 = vsel %vm682, %v2114, %v2115
      %v2117 = vrot.slane %v1994, 1
      %v2118 = vsel %vm682, %v2115, %v2117
      %v2119 = vrot.slane %v1995, 1
      %v2120 = vrot.slane %v1996, 1
      %v2121 = vsel %vm682, %v2119, %v2120
      %v2122 = vrot.slane %v1997, 1
      %v2123 = vsel %vm682, %v2120, %v2122
      %v2124 = vrot.slane %v1998, 1
      %v2125 = vrot.slane %v1999, 1
      %v2126 = vsel %vm682, %v2124, %v2125
      %v2127 = vrot.slane %v2000, 1
      %v2128 = vsel %vm682, %v2125, %v2127
      %v2129 = vrot.slane %v2001, 1
      %v2130 = vrot.slane %v2002, 1
      %v2131 = vsel %vm682, %v2129, %v2130
      %v2132 = vrot.slane %v2003, 1
      %v2133 = vsel %vm682, %v2130, %v2132
      %v2134 = vrot.slane %v2004, 1
      %v2135 = vrot.slane %v2005, 1
      %v2136 = vsel %vm682, %v2134, %v2135
      %v2137 = vrot.slane %v2006, 1
      %v2138 = vsel %vm682, %v2135, %v2137
      %v2139 = vrot.slane %v2007, 1
      %v2140 = vrot.slane %v2008, 1
      %v2141 = vsel %vm682, %v2139, %v2140
      %v2142 = vrot.slane %v2009, 1
      %v2143 = vsel %vm682, %v2140, %v2142
      %v2144 = vrot.slane %v2010, 1
      %v2145 = vrot.slane %v2011, 1
      %v2146 = vsel %vm682, %v2144, %v2145
      %v2147 = vrot.slane %v2012, 1
      %v2148 = vsel %vm682, %v2145, %v2147
      %v2149 = vrot.slane %v2013, 1
      %v2150 = vrot.slane %v2014, 1
      %v2151 = vsel %vm682, %v2149, %v2150
      %v2152 = vrot.slane %v2015, 1
      %v2153 = vsel %vm682, %v2150, %v2152
      %v2154 = vrot.slane %v2016, 1
      %v2155 = vrot.slane %v2017, 1
      %v2156 = vsel %vm682, %v2154, %v2155
      %v2157 = vrot.slane %v2018, 1
      %v2158 = vsel %vm682, %v2155, %v2157
      %v2159 = vrot.slane %v2019, 1
      %v2160 = vrot.slane %v2020, 1
      %v2161 = vsel %vm682, %v2159, %v2160
      %v2162 = vrot.slane %v2021, 1
      %v2163 = vsel %vm682, %v2160, %v2162
      %v2164 = vrot.slane %v2022, 1
      %v2165 = vrot.slane %v2023, 1
      %v2166 = vsel %vm682, %v2164, %v2165
      %v2167 = vrot.slane %v2024, 1
      %v2168 = vsel %vm682, %v2165, %v2167
      %2169 = vrot.lane.b32.xlu0 %v2081, 64
      %v2170 = vpop.permute.xlu0 %2169
      %2171 = vrot.lane.b32.xlu0 %v2083, 64
      %v2172 = vpop.permute.xlu0 %2171
      %2173 = vrot.lane.b32.xlu0 %v2086, 64
      %v2174 = vpop.permute.xlu0 %2173
      %2175 = vrot.lane.b32.xlu0 %v2088, 64
      %v2176 = vpop.permute.xlu0 %2175
      %2177 = vrot.lane.b32.xlu0 %v2091, 64
      %v2178 = vpop.permute.xlu0 %2177
      %2179 = vrot.lane.b32.xlu0 %v2093, 64
      %v2180 = vpop.permute.xlu0 %2179
      %2181 = vrot.lane.b32.xlu0 %v2096, 64
      %v2182 = vpop.permute.xlu0 %2181
      %2183 = vrot.lane.b32.xlu0 %v2098, 64
      %v2184 = vpop.permute.xlu0 %2183
      %2185 = vrot.lane.b32.xlu0 %v2101, 64
      %v2186 = vpop.permute.xlu0 %2185
      %2187 = vrot.lane.b32.xlu0 %v2103, 64
      %v2188 = vpop.permute.xlu0 %2187
      %2189 = vrot.lane.b32.xlu0 %v2106, 64
      %v2190 = vpop.permute.xlu0 %2189
      %2191 = vrot.lane.b32.xlu0 %v2108, 64
      %v2192 = vpop.permute.xlu0 %2191
      %2193 = vrot.lane.b32.xlu0 %v2111, 64
      %v2194 = vpop.permute.xlu0 %2193
      %2195 = vrot.lane.b32.xlu0 %v2113, 64
      %v2196 = vpop.permute.xlu0 %2195
      %2197 = vrot.lane.b32.xlu0 %v2116, 64
      %v2198 = vpop.permute.xlu0 %2197
      %2199 = vrot.lane.b32.xlu0 %v2118, 64
      %v2200 = vpop.permute.xlu0 %2199
      %2201 = vrot.lane.b32.xlu0 %v2121, 64
      %v2202 = vpop.permute.xlu0 %2201
      %2203 = vrot.lane.b32.xlu0 %v2123, 64
      %v2204 = vpop.permute.xlu0 %2203
      %2205 = vrot.lane.b32.xlu0 %v2126, 64
      %v2206 = vpop.permute.xlu0 %2205
      %2207 = vrot.lane.b32.xlu0 %v2128, 64
      %v2208 = vpop.permute.xlu0 %2207
      %2209 = vrot.lane.b32.xlu0 %v2131, 64
      %v2210 = vpop.permute.xlu0 %2209
      %2211 = vrot.lane.b32.xlu0 %v2133, 64
      %v2212 = vpop.permute.xlu0 %2211
      %2213 = vrot.lane.b32.xlu0 %v2136, 64
      %v2214 = vpop.permute.xlu0 %2213
      %2215 = vrot.lane.b32.xlu0 %v2138, 64
      %v2216 = vpop.permute.xlu0 %2215
      %2217 = vrot.lane.b32.xlu0 %v2141, 64
      %v2218 = vpop.permute.xlu0 %2217
      %2219 = vrot.lane.b32.xlu0 %v2143, 64
      %v2220 = vpop.permute.xlu0 %2219
      %2221 = vrot.lane.b32.xlu0 %v2146, 64
      %v2222 = vpop.permute.xlu0 %2221
      %2223 = vrot.lane.b32.xlu0 %v2148, 64
      %v2224 = vpop.permute.xlu0 %2223
      %2225 = vrot.lane.b32.xlu0 %v2151, 64
      %v2226 = vpop.permute.xlu0 %2225
      %2227 = vrot.lane.b32.xlu0 %v2153, 64
      %v2228 = vpop.permute.xlu0 %2227
      %2229 = vrot.lane.b32.xlu0 %v2156, 64
      %v2230 = vpop.permute.xlu0 %2229
      %2231 = vrot.lane.b32.xlu0 %v2158, 64
      %v2232 = vpop.permute.xlu0 %2231
      %2233 = vrot.lane.b32.xlu0 %v2161, 64
      %v2234 = vpop.permute.xlu0 %2233
      %2235 = vrot.lane.b32.xlu0 %v2163, 64
      %v2236 = vpop.permute.xlu0 %2235
      %2237 = vrot.lane.b32.xlu0 %v2166, 64
      %v2238 = vpop.permute.xlu0 %2237
      %2239 = vrot.lane.b32.xlu0 %v2168, 64
      %v2240 = vpop.permute.xlu0 %2239
      %v2277 = vrot.slane %v1971, 2
      %v2278 = vrot.slane %v1972, 2
      %v2279 = vsel %vm881, %v2277, %v2278
      %v2280 = vrot.slane %v1973, 2
      %v2281 = vsel %vm881, %v2278, %v2280
      %v2282 = vrot.slane %v1974, 2
      %v2283 = vrot.slane %v1975, 2
      %v2284 = vsel %vm881, %v2282, %v2283
      %v2285 = vrot.slane %v1976, 2
      %v2286 = vsel %vm881, %v2283, %v2285
      %v2287 = vrot.slane %v1977, 2
      %v2288 = vrot.slane %v1978, 2
      %v2289 = vsel %vm881, %v2287, %v2288
      %v2290 = vrot.slane %v1979, 2
      %v2291 = vsel %vm881, %v2288, %v2290
      %v2292 = vrot.slane %v1980, 2
      %v2293 = vrot.slane %v1981, 2
      %v2294 = vsel %vm881, %v2292, %v2293
      %v2295 = vrot.slane %v1982, 2
      %v2296 = vsel %vm881, %v2293, %v2295
      %v2297 = vrot.slane %v1983, 2
      %v2298 = vrot.slane %v1984, 2
      %v2299 = vsel %vm881, %v2297, %v2298
      %v2300 = vrot.slane %v1985, 2
      %v2301 = vsel %vm881, %v2298, %v2300
      %v2302 = vrot.slane %v1986, 2
      %v2303 = vrot.slane %v1987, 2
      %v2304 = vsel %vm881, %v2302, %v2303
      %v2305 = vrot.slane %v1988, 2
      %v2306 = vsel %vm881, %v2303, %v2305
      %v2307 = vrot.slane %v1989, 2
      %v2308 = vrot.slane %v1990, 2
      %v2309 = vsel %vm881, %v2307, %v2308
      %v2310 = vrot.slane %v1991, 2
      %v2311 = vsel %vm881, %v2308, %v2310
      %v2312 = vrot.slane %v1992, 2
      %v2313 = vrot.slane %v1993, 2
      %v2314 = vsel %vm881, %v2312, %v2313
      %v2315 = vrot.slane %v1994, 2
      %v2316 = vsel %vm881, %v2313, %v2315
      %v2317 = vrot.slane %v1995, 2
      %v2318 = vrot.slane %v1996, 2
      %v2319 = vsel %vm881, %v2317, %v2318
      %v2320 = vrot.slane %v1997, 2
      %v2321 = vsel %vm881, %v2318, %v2320
      %v2322 = vrot.slane %v1998, 2
      %v2323 = vrot.slane %v1999, 2
      %v2324 = vsel %vm881, %v2322, %v2323
      %v2325 = vrot.slane %v2000, 2
      %v2326 = vsel %vm881, %v2323, %v2325
      %v2327 = vrot.slane %v2001, 2
      %v2328 = vrot.slane %v2002, 2
      %v2329 = vsel %vm881, %v2327, %v2328
      %v2330 = vrot.slane %v2003, 2
      %v2331 = vsel %vm881, %v2328, %v2330
      %v2332 = vrot.slane %v2004, 2
      %v2333 = vrot.slane %v2005, 2
      %v2334 = vsel %vm881, %v2332, %v2333
      %v2335 = vrot.slane %v2006, 2
      %v2336 = vsel %vm881, %v2333, %v2335
      %v2337 = vrot.slane %v2007, 2
      %v2338 = vrot.slane %v2008, 2
      %v2339 = vsel %vm881, %v2337, %v2338
      %v2340 = vrot.slane %v2009, 2
      %v2341 = vsel %vm881, %v2338, %v2340
      %v2342 = vrot.slane %v2010, 2
      %v2343 = vrot.slane %v2011, 2
      %v2344 = vsel %vm881, %v2342, %v2343
      %v2345 = vrot.slane %v2012, 2
      %v2346 = vsel %vm881, %v2343, %v2345
      %v2347 = vrot.slane %v2013, 2
      %v2348 = vrot.slane %v2014, 2
      %v2349 = vsel %vm881, %v2347, %v2348
      %v2350 = vrot.slane %v2015, 2
      %v2351 = vsel %vm881, %v2348, %v2350
      %v2352 = vrot.slane %v2016, 2
      %v2353 = vrot.slane %v2017, 2
      %v2354 = vsel %vm881, %v2352, %v2353
      %v2355 = vrot.slane %v2018, 2
      %v2356 = vsel %vm881, %v2353, %v2355
      %v2357 = vrot.slane %v2019, 2
      %v2358 = vrot.slane %v2020, 2
      %v2359 = vsel %vm881, %v2357, %v2358
      %v2360 = vrot.slane %v2021, 2
      %v2361 = vsel %vm881, %v2358, %v2360
      %v2362 = vrot.slane %v2022, 2
      %v2363 = vrot.slane %v2023, 2
      %v2364 = vsel %vm881, %v2362, %v2363
      %v2365 = vrot.slane %v2024, 2
      %v2366 = vsel %vm881, %v2363, %v2365
      %v2403 = vsel %vm380, %v1971, %v2170
      %v2404 = vsel %vm380, %v1972, %v2172
      %v2405 = vsel %vm380, %v1974, %v2174
      %v2406 = vsel %vm380, %v1975, %v2176
      %v2407 = vsel %vm380, %v1977, %v2178
      %v2408 = vsel %vm380, %v1978, %v2180
      %v2409 = vsel %vm380, %v1980, %v2182
      %v2410 = vsel %vm380, %v1981, %v2184
      %v2411 = vsel %vm380, %v1983, %v2186
      %v2412 = vsel %vm380, %v1984, %v2188
      %v2413 = vsel %vm380, %v1986, %v2190
      %v2414 = vsel %vm380, %v1987, %v2192
      %v2415 = vsel %vm380, %v1989, %v2194
      %v2416 = vsel %vm380, %v1990, %v2196
      %v2417 = vsel %vm380, %v1992, %v2198
      %v2418 = vsel %vm380, %v1993, %v2200
      %v2419 = vsel %vm380, %v1995, %v2202
      %v2420 = vsel %vm380, %v1996, %v2204
      %v2421 = vsel %vm380, %v1998, %v2206
      %v2422 = vsel %vm380, %v1999, %v2208
      %v2423 = vsel %vm380, %v2001, %v2210
      %v2424 = vsel %vm380, %v2002, %v2212
      %v2425 = vsel %vm380, %v2004, %v2214
      %v2426 = vsel %vm380, %v2005, %v2216
      %v2427 = vsel %vm380, %v2007, %v2218
      %v2428 = vsel %vm380, %v2008, %v2220
      %v2429 = vsel %vm380, %v2010, %v2222
      %v2430 = vsel %vm380, %v2011, %v2224
      %v2431 = vsel %vm380, %v2013, %v2226
      %v2432 = vsel %vm380, %v2014, %v2228
      %v2433 = vsel %vm380, %v2016, %v2230
      %v2434 = vsel %vm380, %v2017, %v2232
      %v2435 = vsel %vm380, %v2019, %v2234
      %v2436 = vsel %vm380, %v2020, %v2236
      %v2437 = vsel %vm380, %v2022, %v2238
      %v2438 = vsel %vm380, %v2023, %v2240
      %v2439 = vpack.c.bf16 %v2404, %v2403
      %v2440 = vpack.c.bf16 %v2281, %v2279
      %v2441 = vpack.c.bf16 %v2406, %v2405
      %v2442 = vpack.c.bf16 %v2286, %v2284
      %v2443 = vpack.c.bf16 %v2408, %v2407
      %v2444 = vpack.c.bf16 %v2291, %v2289
      %v2445 = vpack.c.bf16 %v2410, %v2409
      %v2446 = vpack.c.bf16 %v2296, %v2294
      %v2447 = vpack.c.bf16 %v2412, %v2411
      %v2448 = vpack.c.bf16 %v2301, %v2299
      %v2449 = vpack.c.bf16 %v2414, %v2413
      %v2450 = vpack.c.bf16 %v2306, %v2304
      %v2451 = vpack.c.bf16 %v2416, %v2415
      %v2452 = vpack.c.bf16 %v2311, %v2309
      %v2453 = vpack.c.bf16 %v2418, %v2417
      %v2454 = vpack.c.bf16 %v2316, %v2314
      %v2455 = vpack.c.bf16 %v2420, %v2419
      %v2456 = vpack.c.bf16 %v2321, %v2319
      %v2457 = vpack.c.bf16 %v2422, %v2421
      %v2458 = vpack.c.bf16 %v2326, %v2324
      %v2459 = vpack.c.bf16 %v2424, %v2423
      %v2460 = vpack.c.bf16 %v2331, %v2329
      %v2461 = vpack.c.bf16 %v2426, %v2425
      %v2462 = vpack.c.bf16 %v2336, %v2334
      %v2463 = vpack.c.bf16 %v2428, %v2427
      %v2464 = vpack.c.bf16 %v2341, %v2339
      %v2465 = vpack.c.bf16 %v2430, %v2429
      %v2466 = vpack.c.bf16 %v2346, %v2344
      %v2467 = vpack.c.bf16 %v2432, %v2431
      %v2468 = vpack.c.bf16 %v2351, %v2349
      %v2469 = vpack.c.bf16 %v2434, %v2433
      %v2470 = vpack.c.bf16 %v2356, %v2354
      %v2471 = vpack.c.bf16 %v2436, %v2435
      %v2472 = vpack.c.bf16 %v2361, %v2359
      %v2497 = vunpack.c.l.b16 %v1922
      %v2498 = vunpack.c.l.b16 %v1923
      %v2499 = vunpack.c.l.b16 %v1924
      %v2500 = vunpack.c.l.b16 %v1925
      %v2501 = vunpack.c.l.b16 %v1926
      %v2502 = vunpack.c.l.b16 %v1927
      %v2503 = vunpack.c.l.b16 %v1928
      %v2504 = vunpack.c.l.b16 %v1929
      %v2505 = vunpack.c.l.b16 %v1930
      %v2506 = vunpack.c.l.b16 %v1931
      %v2507 = vunpack.c.l.b16 %v1932
      %v2508 = vunpack.c.l.b16 %v1933
      %v2509 = vunpack.c.l.b16 %v1934
      %v2510 = vunpack.c.l.b16 %v1935
      %v2511 = vunpack.c.l.b16 %v1936
      %v2512 = vunpack.c.l.b16 %v1937
      %v2513 = vunpack.c.l.b16 %v1938
      %v2514 = vunpack.c.l.b16 %v1939
      %v2515 = vunpack.c.l.b16 %v1940
      %v2516 = vunpack.c.l.b16 %v1941
      %v2517 = vunpack.c.l.b16 %v1942
      %v2518 = vunpack.c.l.b16 %v1943
      %v2519 = vunpack.c.l.b16 %v1944
      %v2520 = vunpack.c.l.b16 %v1945
      %v2521 = vpack.c.b16 %v2498, %v2497
      %v2522 = vpack.c.b16 %v2500, %v2499
      %v2523 = vpack.c.b16 %v2502, %v2501
      %v2524 = vpack.c.b16 %v2504, %v2503
      %v2525 = vpack.c.b16 %v2506, %v2505
      %v2526 = vpack.c.b16 %v2508, %v2507
      %v2527 = vpack.c.b16 %v2510, %v2509
      %v2528 = vpack.c.b16 %v2512, %v2511
      %v2529 = vpack.c.b16 %v2514, %v2513
      %v2530 = vpack.c.b16 %v2516, %v2515
      %v2531 = vpack.c.b16 %v2518, %v2517
      %v2532 = vpack.c.b16 %v2520, %v2519
      %v2546 = vsel %vm380, %v2442, 0
      %v2549 = vsel %vm380, %v2444, 0
      %v2552 = vsel %vm380, %v2446, 0
      %v2555 = vsel %vm380, %v2448, 0
      %v2558 = vsel %vm380, %v2450, 0
      %v2561 = vsel %vm380, %v2452, 0
      %v2564 = vsel %vm380, %v2454, 0
      %v2567 = vsel %vm380, %v2456, 0
      %v2570 = vsel %vm380, %v2458, 0
      %v2573 = vsel %vm380, %v2460, 0
      %v2576 = vsel %vm380, %v2462, 0
      %v2579 = vsel %vm380, %v2464, 0
      %v2582 = vsel %vm380, %v2466, 0
      %v2585 = vsel %vm380, %v2468, 0
      %v2588 = vsel %vm380, %v2470, 0
      %v2591 = vsel %vm380, %v2472, 0
      %2593 = vmatprep.subr.bf16.mxu0 0
      %2594 = vmatpush1.bf16.msra.mxu0 %v2528
      %2595 = vmatprep.subr.bf16.mxu0 0
      %2596 = vmatpush1.bf16.msra.mxu0 %v2527
      %2597 = vmatprep.subr.bf16.mxu0 0
      %2598 = vmatpush1.bf16.msra.mxu0 %v2526
      %2599 = vmatprep.subr.bf16.mxu0 0
      %2600 = vmatpush1.bf16.msra.mxu0 %v2525
      %2601 = vmatprep.subr.bf16.mxu0 0
      %2602 = vmatpush1.bf16.msra.mxu0 %v2524
      %2603 = vmatprep.subr.bf16.mxu0 0
      %2604 = vmatpush1.bf16.msra.mxu0 %v2523
      %2605 = vmatprep.subr.bf16.mxu0 0
      %2606 = vmatpush1.bf16.msra.mxu0 %v2522
      %2607 = vmatprep.subr.bf16.mxu0 0
      %2608 = vmatpush1.bf16.msra.mxu0 %v2521
      %2609 = vmatprep.subr.bf16.mxu0 0
      %2610 = vmatpush2.bf16.msra.mxu0 0
      %2611 = vmatprep.subr.bf16.mxu0 0
      %2612 = vmatpush2.bf16.msra.mxu0 0
      %2613 = vmatprep.subr.bf16.mxu0 0
      %2614 = vmatpush2.bf16.msra.mxu0 0
      %2615 = vmatprep.subr.bf16.mxu0 0
      %2616 = vmatpush2.bf16.msra.mxu0 0
      %2617 = vmatprep.subr.bf16.mxu0 0
      %2618 = vmatpush2.bf16.msra.mxu0 %v2532
      %2619 = vmatprep.subr.bf16.mxu0 0
      %2620 = vmatpush2.bf16.msra.mxu0 %v2531
      %2621 = vmatprep.subr.bf16.mxu0 0
      %2622 = vmatpush2.bf16.msra.mxu0 %v2530
      %2623 = vmatprep.subr.bf16.mxu0 0
      %2624 = vmatpush2.bf16.msra.mxu0 %v2529
      %2625 = vmatprep.mubr.bf16.mxu0 %v2546
      %2626 = vmatmul.mubr.bf16.gmra.mxu0 %v2441
      %v2627 = vpop.f32.mrf.mxu0
      %v2628 = vadd.f32 0.0, %v2627
      %v2629 = vpop.f32.mrf.mxu0
      %v2630 = vpop.f32.mrf.mxu0
      %v2631 = vadd.f32 0.0, %v2630
      %v2632 = vpop.f32.mrf.mxu0
      %2633 = vmatprep.mubr.bf16.mxu0 %v2549
      %2634 = vmatmul.mubr.bf16.gmra.mxu0 %v2443
      %v2635 = vpop.f32.mrf.mxu0
      %v2636 = vadd.f32 0.0, %v2635
      %v2637 = vpop.f32.mrf.mxu0
      %v2638 = vpop.f32.mrf.mxu0
      %v2639 = vadd.f32 0.0, %v2638
      %v2640 = vpop.f32.mrf.mxu0
      %2641 = vmatprep.mubr.bf16.mxu0 %v2552
      %2642 = vmatmul.mubr.bf16.gmra.mxu0 %v2445
      %v2643 = vpop.f32.mrf.mxu0
      %v2644 = vadd.f32 0.0, %v2643
      %v2645 = vpop.f32.mrf.mxu0
      %v2646 = vpop.f32.mrf.mxu0
      %v2647 = vadd.f32 0.0, %v2646
      %v2648 = vpop.f32.mrf.mxu0
      %2649 = vmatprep.mubr.bf16.mxu0 %v2555
      %2650 = vmatmul.mubr.bf16.gmra.mxu0 %v2447
      %v2651 = vpop.f32.mrf.mxu0
      %v2652 = vadd.f32 0.0, %v2651
      %v2653 = vpop.f32.mrf.mxu0
      %v2654 = vpop.f32.mrf.mxu0
      %v2655 = vadd.f32 0.0, %v2654
      %v2656 = vpop.f32.mrf.mxu0
      %2657 = vmatprep.mubr.bf16.mxu0 %v2558
      %2658 = vmatmul.mubr.bf16.gmra.mxu0 %v2449
      %v2659 = vpop.f32.mrf.mxu0
      %v2660 = vadd.f32 0.0, %v2659
      %v2661 = vpop.f32.mrf.mxu0
      %v2662 = vpop.f32.mrf.mxu0
      %v2663 = vadd.f32 0.0, %v2662
      %v2664 = vpop.f32.mrf.mxu0
      %2665 = vmatprep.mubr.bf16.mxu0 %v2561
      %2666 = vmatmul.mubr.bf16.gmra.mxu0 %v2451
      %v2667 = vpop.f32.mrf.mxu0
      %v2668 = vadd.f32 0.0, %v2667
      %v2669 = vpop.f32.mrf.mxu0
      %v2670 = vpop.f32.mrf.mxu0
      %v2671 = vadd.f32 0.0, %v2670
      %v2672 = vpop.f32.mrf.mxu0
      %2673 = vmatprep.mubr.bf16.mxu0 %v2564
      %2674 = vmatmul.mubr.bf16.gmra.mxu0 %v2453
      %v2675 = vpop.f32.mrf.mxu0
      %v2676 = vadd.f32 0.0, %v2675
      %v2677 = vpop.f32.mrf.mxu0
      %v2678 = vpop.f32.mrf.mxu0
      %v2679 = vadd.f32 0.0, %v2678
      %v2680 = vpop.f32.mrf.mxu0
      %2681 = vmatprep.mubr.bf16.mxu0 %v2567
      %2682 = vmatmul.mubr.bf16.gmra.mxu0 %v2455
      %v2683 = vpop.f32.mrf.mxu0
      %v2684 = vadd.f32 0.0, %v2683
      %v2685 = vpop.f32.mrf.mxu0
      %v2686 = vpop.f32.mrf.mxu0
      %v2687 = vadd.f32 0.0, %v2686
      %v2688 = vpop.f32.mrf.mxu0
      %2689 = vmatprep.mubr.bf16.mxu0 %v2570
      %2690 = vmatmul.mubr.bf16.gmra.mxu0 %v2457
      %v2691 = vpop.f32.mrf.mxu0
      %v2692 = vadd.f32 0.0, %v2691
      %v2693 = vpop.f32.mrf.mxu0
      %v2694 = vpop.f32.mrf.mxu0
      %v2695 = vadd.f32 0.0, %v2694
      %v2696 = vpop.f32.mrf.mxu0
      %2697 = vmatprep.mubr.bf16.mxu0 %v2573
      %2698 = vmatmul.mubr.bf16.gmra.mxu0 %v2459
      %v2699 = vpop.f32.mrf.mxu0
      %v2700 = vadd.f32 0.0, %v2699
      %v2701 = vpop.f32.mrf.mxu0
      %v2702 = vpop.f32.mrf.mxu0
      %v2703 = vadd.f32 0.0, %v2702
      %v2704 = vpop.f32.mrf.mxu0
      %2705 = vmatprep.mubr.bf16.mxu0 %v2576
      %2706 = vmatmul.mubr.bf16.gmra.mxu0 %v2461
      %v2707 = vpop.f32.mrf.mxu0
      %v2708 = vadd.f32 0.0, %v2707
      %v2709 = vpop.f32.mrf.mxu0
      %v2710 = vpop.f32.mrf.mxu0
      %v2711 = vadd.f32 0.0, %v2710
      %v2712 = vpop.f32.mrf.mxu0
      %2713 = vmatprep.mubr.bf16.mxu0 %v2579
      %2714 = vmatmul.mubr.bf16.gmra.mxu0 %v2463
      %v2715 = vpop.f32.mrf.mxu0
      %v2716 = vadd.f32 0.0, %v2715
      %v2717 = vpop.f32.mrf.mxu0
      %v2718 = vpop.f32.mrf.mxu0
      %v2719 = vadd.f32 0.0, %v2718
      %v2720 = vpop.f32.mrf.mxu0
      %2721 = vmatprep.mubr.bf16.mxu0 %v2582
      %2722 = vmatmul.mubr.bf16.gmra.mxu0 %v2465
      %v2723 = vpop.f32.mrf.mxu0
      %v2724 = vadd.f32 0.0, %v2723
      %v2725 = vpop.f32.mrf.mxu0
      %v2726 = vpop.f32.mrf.mxu0
      %v2727 = vadd.f32 0.0, %v2726
      %v2728 = vpop.f32.mrf.mxu0
      %2729 = vmatprep.mubr.bf16.mxu0 %v2585
      %2730 = vmatmul.mubr.bf16.gmra.mxu0 %v2467
      %v2731 = vpop.f32.mrf.mxu0
      %v2732 = vadd.f32 0.0, %v2731
      %v2733 = vpop.f32.mrf.mxu0
      %v2734 = vpop.f32.mrf.mxu0
      %v2735 = vadd.f32 0.0, %v2734
      %v2736 = vpop.f32.mrf.mxu0
      %2737 = vmatprep.mubr.bf16.mxu0 %v2588
      %2738 = vmatmul.mubr.bf16.gmra.mxu0 %v2469
      %v2739 = vpop.f32.mrf.mxu0
      %v2740 = vadd.f32 0.0, %v2739
      %v2741 = vpop.f32.mrf.mxu0
      %v2742 = vpop.f32.mrf.mxu0
      %v2743 = vadd.f32 0.0, %v2742
      %v2744 = vpop.f32.mrf.mxu0
      %2745 = vmatprep.mubr.bf16.mxu0 %v2591
      %2746 = vmatmul.mubr.bf16.gmra.mxu0 %v2471
      %v2747 = vpop.f32.mrf.mxu0
      %v2748 = vadd.f32 0.0, %v2747
      %v2749 = vpop.f32.mrf.mxu0
      %v2750 = vpop.f32.mrf.mxu0
      %v2751 = vadd.f32 0.0, %v2750
      %v2752 = vpop.f32.mrf.mxu0
      %2753 = vdwg.mxu0
      %v2778 = vunpack.c.l.b16 %v1898
      %v2779 = vunpack.c.l.b16 %v1899
      %v2780 = vunpack.c.l.b16 %v1900
      %v2781 = vunpack.c.l.b16 %v1901
      %v2782 = vunpack.c.l.b16 %v1902
      %v2783 = vunpack.c.l.b16 %v1903
      %v2784 = vunpack.c.l.b16 %v1904
      %v2785 = vunpack.c.l.b16 %v1905
      %v2786 = vunpack.c.l.b16 %v1906
      %v2787 = vunpack.c.l.b16 %v1907
      %v2788 = vunpack.c.l.b16 %v1908
      %v2789 = vunpack.c.l.b16 %v1909
      %v2790 = vunpack.c.l.b16 %v1910
      %v2791 = vunpack.c.l.b16 %v1911
      %v2792 = vunpack.c.l.b16 %v1912
      %v2793 = vunpack.c.l.b16 %v1913
      %v2794 = vunpack.c.l.b16 %v1914
      %v2795 = vunpack.c.l.b16 %v1915
      %v2796 = vunpack.c.l.b16 %v1916
      %v2797 = vunpack.c.l.b16 %v1917
      %v2798 = vunpack.c.l.b16 %v1918
      %v2799 = vunpack.c.l.b16 %v1919
      %v2800 = vunpack.c.l.b16 %v1920
      %v2801 = vunpack.c.l.b16 %v1921
      %v2802 = vpack.c.b16 %v2779, %v2778
      %v2803 = vpack.c.b16 %v2781, %v2780
      %v2804 = vpack.c.b16 %v2783, %v2782
      %v2805 = vpack.c.b16 %v2785, %v2784
      %v2806 = vpack.c.b16 %v2787, %v2786
      %v2807 = vpack.c.b16 %v2789, %v2788
      %v2808 = vpack.c.b16 %v2791, %v2790
      %v2809 = vpack.c.b16 %v2793, %v2792
      %v2810 = vpack.c.b16 %v2795, %v2794
      %v2811 = vpack.c.b16 %v2797, %v2796
      %v2812 = vpack.c.b16 %v2799, %v2798
      %v2813 = vpack.c.b16 %v2801, %v2800
      %v2827 = vsel %vm380, %v2440, 0
      %2829 = vmatprep.subr.bf16.mxu0 0
      %2830 = vmatpush1.bf16.msra.mxu0 %v2809
      %2831 = vmatprep.subr.bf16.mxu0 0
      %2832 = vmatpush1.bf16.msra.mxu0 %v2808
      %2833 = vmatprep.subr.bf16.mxu0 0
      %2834 = vmatpush1.bf16.msra.mxu0 %v2807
      %2835 = vmatprep.subr.bf16.mxu0 0
      %2836 = vmatpush1.bf16.msra.mxu0 %v2806
      %2837 = vmatprep.subr.bf16.mxu0 0
      %2838 = vmatpush1.bf16.msra.mxu0 %v2805
      %2839 = vmatprep.subr.bf16.mxu0 0
      %2840 = vmatpush1.bf16.msra.mxu0 %v2804
      %2841 = vmatprep.subr.bf16.mxu0 0
      %2842 = vmatpush1.bf16.msra.mxu0 %v2803
      %2843 = vmatprep.subr.bf16.mxu0 0
      %2844 = vmatpush1.bf16.msra.mxu0 %v2802
      %2845 = vmatprep.subr.bf16.mxu0 0
      %2846 = vmatpush2.bf16.msra.mxu0 0
      %2847 = vmatprep.subr.bf16.mxu0 0
      %2848 = vmatpush2.bf16.msra.mxu0 0
      %2849 = vmatprep.subr.bf16.mxu0 0
      %2850 = vmatpush2.bf16.msra.mxu0 0
      %2851 = vmatprep.subr.bf16.mxu0 0
      %2852 = vmatpush2.bf16.msra.mxu0 0
      %2853 = vmatprep.subr.bf16.mxu0 0
      %2854 = vmatpush2.bf16.msra.mxu0 %v2813
      %2855 = vmatprep.subr.bf16.mxu0 0
      %2856 = vmatpush2.bf16.msra.mxu0 %v2812
      %2857 = vmatprep.subr.bf16.mxu0 0
      %2858 = vmatpush2.bf16.msra.mxu0 %v2811
      %2859 = vmatprep.subr.bf16.mxu0 0
      %2860 = vmatpush2.bf16.msra.mxu0 %v2810
      %2861 = vmatprep.mubr.bf16.mxu0 %v2827
      %2862 = vmatmul.mubr.bf16.gmra.mxu0 %v2439
      %v2863 = vpop.f32.mrf.mxu0
      %v2864 = vadd.f32 %v2628, %v2863
      %v2865 = vpop.f32.mrf.mxu0
      %v2866 = vpop.f32.mrf.mxu0
      %v2867 = vadd.f32 %v2631, %v2866
      %v2868 = vpop.f32.mrf.mxu0
      %2869 = vmatprep.mubr.bf16.mxu0 %v2546
      %2870 = vmatmul.mubr.bf16.gmra.mxu0 %v2441
      %v2871 = vpop.f32.mrf.mxu0
      %v2872 = vadd.f32 %v2636, %v2871
      %v2873 = vpop.f32.mrf.mxu0
      %v2874 = vpop.f32.mrf.mxu0
      %v2875 = vadd.f32 %v2639, %v2874
      %v2876 = vpop.f32.mrf.mxu0
      %2877 = vmatprep.mubr.bf16.mxu0 %v2549
      %2878 = vmatmul.mubr.bf16.gmra.mxu0 %v2443
      %v2879 = vpop.f32.mrf.mxu0
      %v2880 = vadd.f32 %v2644, %v2879
      %v2881 = vpop.f32.mrf.mxu0
      %v2882 = vpop.f32.mrf.mxu0
      %v2883 = vadd.f32 %v2647, %v2882
      %v2884 = vpop.f32.mrf.mxu0
      %2885 = vmatprep.mubr.bf16.mxu0 %v2552
      %2886 = vmatmul.mubr.bf16.gmra.mxu0 %v2445
      %v2887 = vpop.f32.mrf.mxu0
      %v2888 = vadd.f32 %v2652, %v2887
      %v2889 = vpop.f32.mrf.mxu0
      %v2890 = vpop.f32.mrf.mxu0
      %v2891 = vadd.f32 %v2655, %v2890
      %v2892 = vpop.f32.mrf.mxu0
      %2893 = vmatprep.mubr.bf16.mxu0 %v2555
      %2894 = vmatmul.mubr.bf16.gmra.mxu0 %v2447
      %v2895 = vpop.f32.mrf.mxu0
      %v2896 = vadd.f32 %v2660, %v2895
      %v2897 = vpop.f32.mrf.mxu0
      %v2898 = vpop.f32.mrf.mxu0
      %v2899 = vadd.f32 %v2663, %v2898
      %v2900 = vpop.f32.mrf.mxu0
      %2901 = vmatprep.mubr.bf16.mxu0 %v2558
      %2902 = vmatmul.mubr.bf16.gmra.mxu0 %v2449
      %v2903 = vpop.f32.mrf.mxu0
      %v2904 = vadd.f32 %v2668, %v2903
      %v2905 = vpop.f32.mrf.mxu0
      %v2906 = vpop.f32.mrf.mxu0
      %v2907 = vadd.f32 %v2671, %v2906
      %v2908 = vpop.f32.mrf.mxu0
      %2909 = vmatprep.mubr.bf16.mxu0 %v2561
      %2910 = vmatmul.mubr.bf16.gmra.mxu0 %v2451
      %v2911 = vpop.f32.mrf.mxu0
      %v2912 = vadd.f32 %v2676, %v2911
      %v2913 = vpop.f32.mrf.mxu0
      %v2914 = vpop.f32.mrf.mxu0
      %v2915 = vadd.f32 %v2679, %v2914
      %v2916 = vpop.f32.mrf.mxu0
      %2917 = vmatprep.mubr.bf16.mxu0 %v2564
      %2918 = vmatmul.mubr.bf16.gmra.mxu0 %v2453
      %v2919 = vpop.f32.mrf.mxu0
      %v2920 = vadd.f32 %v2684, %v2919
      %v2921 = vpop.f32.mrf.mxu0
      %v2922 = vpop.f32.mrf.mxu0
      %v2923 = vadd.f32 %v2687, %v2922
      %v2924 = vpop.f32.mrf.mxu0
      %2925 = vmatprep.mubr.bf16.mxu0 %v2567
      %2926 = vmatmul.mubr.bf16.gmra.mxu0 %v2455
      %v2927 = vpop.f32.mrf.mxu0
      %v2928 = vadd.f32 %v2692, %v2927
      %v2929 = vpop.f32.mrf.mxu0
      %v2930 = vpop.f32.mrf.mxu0
      %v2931 = vadd.f32 %v2695, %v2930
      %v2932 = vpop.f32.mrf.mxu0
      %2933 = vmatprep.mubr.bf16.mxu0 %v2570
      %2934 = vmatmul.mubr.bf16.gmra.mxu0 %v2457
      %v2935 = vpop.f32.mrf.mxu0
      %v2936 = vadd.f32 %v2700, %v2935
      %v2937 = vpop.f32.mrf.mxu0
      %v2938 = vpop.f32.mrf.mxu0
      %v2939 = vadd.f32 %v2703, %v2938
      %v2940 = vpop.f32.mrf.mxu0
      %2941 = vmatprep.mubr.bf16.mxu0 %v2573
      %2942 = vmatmul.mubr.bf16.gmra.mxu0 %v2459
      %v2943 = vpop.f32.mrf.mxu0
      %v2944 = vadd.f32 %v2708, %v2943
      %v2945 = vpop.f32.mrf.mxu0
      %v2946 = vpop.f32.mrf.mxu0
      %v2947 = vadd.f32 %v2711, %v2946
      %v2948 = vpop.f32.mrf.mxu0
      %2949 = vmatprep.mubr.bf16.mxu0 %v2576
      %2950 = vmatmul.mubr.bf16.gmra.mxu0 %v2461
      %v2951 = vpop.f32.mrf.mxu0
      %v2952 = vadd.f32 %v2716, %v2951
      %v2953 = vpop.f32.mrf.mxu0
      %v2954 = vpop.f32.mrf.mxu0
      %v2955 = vadd.f32 %v2719, %v2954
      %v2956 = vpop.f32.mrf.mxu0
      %2957 = vmatprep.mubr.bf16.mxu0 %v2579
      %2958 = vmatmul.mubr.bf16.gmra.mxu0 %v2463
      %v2959 = vpop.f32.mrf.mxu0
      %v2960 = vadd.f32 %v2724, %v2959
      %v2961 = vpop.f32.mrf.mxu0
      %v2962 = vpop.f32.mrf.mxu0
      %v2963 = vadd.f32 %v2727, %v2962
      %v2964 = vpop.f32.mrf.mxu0
      %2965 = vmatprep.mubr.bf16.mxu0 %v2582
      %2966 = vmatmul.mubr.bf16.gmra.mxu0 %v2465
      %v2967 = vpop.f32.mrf.mxu0
      %v2968 = vadd.f32 %v2732, %v2967
      %v2969 = vpop.f32.mrf.mxu0
      %v2970 = vpop.f32.mrf.mxu0
      %v2971 = vadd.f32 %v2735, %v2970
      %v2972 = vpop.f32.mrf.mxu0
      %2973 = vmatprep.mubr.bf16.mxu0 %v2585
      %2974 = vmatmul.mubr.bf16.gmra.mxu0 %v2467
      %v2975 = vpop.f32.mrf.mxu0
      %v2976 = vadd.f32 %v2740, %v2975
      %v2977 = vpop.f32.mrf.mxu0
      %v2978 = vpop.f32.mrf.mxu0
      %v2979 = vadd.f32 %v2743, %v2978
      %v2980 = vpop.f32.mrf.mxu0
      %2981 = vmatprep.mubr.bf16.mxu0 %v2588
      %2982 = vmatmul.mubr.bf16.gmra.mxu0 %v2469
      %v2983 = vpop.f32.mrf.mxu0
      %v2984 = vadd.f32 %v2748, %v2983
      %v2985 = vpop.f32.mrf.mxu0
      %v2986 = vpop.f32.mrf.mxu0
      %v2987 = vadd.f32 %v2751, %v2986
      %v2988 = vpop.f32.mrf.mxu0
      %2989 = vdwg.mxu0
      %v2990 = vpack.c.bf16 %v2438, %v2437
      %v2991 = vpack.c.bf16 %v2366, %v2364
      %v3016 = vunpack.c.l.b16 %v1946
      %v3017 = vunpack.c.l.b16 %v1947
      %v3018 = vunpack.c.l.b16 %v1948
      %v3019 = vunpack.c.l.b16 %v1949
      %v3020 = vunpack.c.l.b16 %v1950
      %v3021 = vunpack.c.l.b16 %v1951
      %v3022 = vunpack.c.l.b16 %v1952
      %v3023 = vunpack.c.l.b16 %v1953
      %v3024 = vunpack.c.l.b16 %v1954
      %v3025 = vunpack.c.l.b16 %v1955
      %v3026 = vunpack.c.l.b16 %v1956
      %v3027 = vunpack.c.l.b16 %v1957
      %v3028 = vunpack.c.l.b16 %v1958
      %v3029 = vunpack.c.l.b16 %v1959
      %v3030 = vunpack.c.l.b16 %v1960
      %v3031 = vunpack.c.l.b16 %v1961
      %v3032 = vunpack.c.l.b16 %v1962
      %v3033 = vunpack.c.l.b16 %v1963
      %v3034 = vunpack.c.l.b16 %v1964
      %v3035 = vunpack.c.l.b16 %v1965
      %v3036 = vunpack.c.l.b16 %v1966
      %v3037 = vunpack.c.l.b16 %v1967
      %v3038 = vunpack.c.l.b16 %v1968
      %v3039 = vunpack.c.l.b16 %v1969
      %v3040 = vpack.c.b16 %v3017, %v3016
      %v3041 = vpack.c.b16 %v3019, %v3018
      %v3042 = vpack.c.b16 %v3021, %v3020
      %v3043 = vpack.c.b16 %v3023, %v3022
      %v3044 = vpack.c.b16 %v3025, %v3024
      %v3045 = vpack.c.b16 %v3027, %v3026
      %v3046 = vpack.c.b16 %v3029, %v3028
      %v3047 = vpack.c.b16 %v3031, %v3030
      %v3048 = vpack.c.b16 %v3033, %v3032
      %v3049 = vpack.c.b16 %v3035, %v3034
      %v3050 = vpack.c.b16 %v3037, %v3036
      %v3051 = vpack.c.b16 %v3039, %v3038
      %v3065 = vsel %vm380, %v2991, 0
      %3067 = vmatprep.subr.bf16.mxu0 0
      %3068 = vmatpush1.bf16.msra.mxu0 %v3047
      %3069 = vmatprep.subr.bf16.mxu0 0
      %3070 = vmatpush1.bf16.msra.mxu0 %v3046
      %3071 = vmatprep.subr.bf16.mxu0 0
      %3072 = vmatpush1.bf16.msra.mxu0 %v3045
      %3073 = vmatprep.subr.bf16.mxu0 0
      %3074 = vmatpush1.bf16.msra.mxu0 %v3044
      %3075 = vmatprep.subr.bf16.mxu0 0
      %3076 = vmatpush1.bf16.msra.mxu0 %v3043
      %3077 = vmatprep.subr.bf16.mxu0 0
      %3078 = vmatpush1.bf16.msra.mxu0 %v3042
      %3079 = vmatprep.subr.bf16.mxu0 0
      %3080 = vmatpush1.bf16.msra.mxu0 %v3041
      %3081 = vmatprep.subr.bf16.mxu0 0
      %3082 = vmatpush1.bf16.msra.mxu0 %v3040
      %3083 = vmatprep.subr.bf16.mxu0 0
      %3084 = vmatpush2.bf16.msra.mxu0 0
      %3085 = vmatprep.subr.bf16.mxu0 0
      %3086 = vmatpush2.bf16.msra.mxu0 0
      %3087 = vmatprep.subr.bf16.mxu0 0
      %3088 = vmatpush2.bf16.msra.mxu0 0
      %3089 = vmatprep.subr.bf16.mxu0 0
      %3090 = vmatpush2.bf16.msra.mxu0 0
      %3091 = vmatprep.subr.bf16.mxu0 0
      %3092 = vmatpush2.bf16.msra.mxu0 %v3051
      %3093 = vmatprep.subr.bf16.mxu0 0
      %3094 = vmatpush2.bf16.msra.mxu0 %v3050
      %3095 = vmatprep.subr.bf16.mxu0 0
      %3096 = vmatpush2.bf16.msra.mxu0 %v3049
      %3097 = vmatprep.subr.bf16.mxu0 0
      %3098 = vmatpush2.bf16.msra.mxu0 %v3048
      %3099 = vmatprep.mubr.bf16.mxu0 %v2549
      %3100 = vmatmul.mubr.bf16.gmra.mxu0 %v2443
      %v3101 = vpop.f32.mrf.mxu0
      %v3102 = vadd.f32 0.0, %v3101
      %v3103 = vpop.f32.mrf.mxu0
      %v3104 = vpop.f32.mrf.mxu0
      %v3105 = vadd.f32 0.0, %v3104
      %v3106 = vpop.f32.mrf.mxu0
      %3107 = vmatprep.mubr.bf16.mxu0 %v2552
      %3108 = vmatmul.mubr.bf16.gmra.mxu0 %v2445
      %v3109 = vpop.f32.mrf.mxu0
      %v3110 = vadd.f32 0.0, %v3109
      %v3111 = vpop.f32.mrf.mxu0
      %v3112 = vpop.f32.mrf.mxu0
      %v3113 = vadd.f32 0.0, %v3112
      %v3114 = vpop.f32.mrf.mxu0
      %3115 = vmatprep.mubr.bf16.mxu0 %v2555
      %3116 = vmatmul.mubr.bf16.gmra.mxu0 %v2447
      %v3117 = vpop.f32.mrf.mxu0
      %v3118 = vadd.f32 0.0, %v3117
      %v3119 = vpop.f32.mrf.mxu0
      %v3120 = vpop.f32.mrf.mxu0
      %v3121 = vadd.f32 0.0, %v3120
      %v3122 = vpop.f32.mrf.mxu0
      %3123 = vmatprep.mubr.bf16.mxu0 %v2558
      %3124 = vmatmul.mubr.bf16.gmra.mxu0 %v2449
      %v3125 = vpop.f32.mrf.mxu0
      %v3126 = vadd.f32 0.0, %v3125
      %v3127 = vpop.f32.mrf.mxu0
      %v3128 = vpop.f32.mrf.mxu0
      %v3129 = vadd.f32 0.0, %v3128
      %v3130 = vpop.f32.mrf.mxu0
      %3131 = vmatprep.mubr.bf16.mxu0 %v2561
      %3132 = vmatmul.mubr.bf16.gmra.mxu0 %v2451
      %v3133 = vpop.f32.mrf.mxu0
      %v3134 = vadd.f32 0.0, %v3133
      %v3135 = vpop.f32.mrf.mxu0
      %v3136 = vpop.f32.mrf.mxu0
      %v3137 = vadd.f32 0.0, %v3136
      %v3138 = vpop.f32.mrf.mxu0
      %3139 = vmatprep.mubr.bf16.mxu0 %v2564
      %3140 = vmatmul.mubr.bf16.gmra.mxu0 %v2453
      %v3141 = vpop.f32.mrf.mxu0
      %v3142 = vadd.f32 0.0, %v3141
      %v3143 = vpop.f32.mrf.mxu0
      %v3144 = vpop.f32.mrf.mxu0
      %v3145 = vadd.f32 0.0, %v3144
      %v3146 = vpop.f32.mrf.mxu0
      %3147 = vmatprep.mubr.bf16.mxu0 %v2567
      %3148 = vmatmul.mubr.bf16.gmra.mxu0 %v2455
      %v3149 = vpop.f32.mrf.mxu0
      %v3150 = vadd.f32 0.0, %v3149
      %v3151 = vpop.f32.mrf.mxu0
      %v3152 = vpop.f32.mrf.mxu0
      %v3153 = vadd.f32 0.0, %v3152
      %v3154 = vpop.f32.mrf.mxu0
      %3155 = vmatprep.mubr.bf16.mxu0 %v2570
      %3156 = vmatmul.mubr.bf16.gmra.mxu0 %v2457
      %v3157 = vpop.f32.mrf.mxu0
      %v3158 = vadd.f32 0.0, %v3157
      %v3159 = vpop.f32.mrf.mxu0
      %v3160 = vpop.f32.mrf.mxu0
      %v3161 = vadd.f32 0.0, %v3160
      %v3162 = vpop.f32.mrf.mxu0
      %3163 = vmatprep.mubr.bf16.mxu0 %v2573
      %3164 = vmatmul.mubr.bf16.gmra.mxu0 %v2459
      %v3165 = vpop.f32.mrf.mxu0
      %v3166 = vadd.f32 0.0, %v3165
      %v3167 = vpop.f32.mrf.mxu0
      %v3168 = vpop.f32.mrf.mxu0
      %v3169 = vadd.f32 0.0, %v3168
      %v3170 = vpop.f32.mrf.mxu0
      %3171 = vmatprep.mubr.bf16.mxu0 %v2576
      %3172 = vmatmul.mubr.bf16.gmra.mxu0 %v2461
      %v3173 = vpop.f32.mrf.mxu0
      %v3174 = vadd.f32 0.0, %v3173
      %v3175 = vpop.f32.mrf.mxu0
      %v3176 = vpop.f32.mrf.mxu0
      %v3177 = vadd.f32 0.0, %v3176
      %v3178 = vpop.f32.mrf.mxu0
      %3179 = vmatprep.mubr.bf16.mxu0 %v2579
      %3180 = vmatmul.mubr.bf16.gmra.mxu0 %v2463
      %v3181 = vpop.f32.mrf.mxu0
      %v3182 = vadd.f32 0.0, %v3181
      %v3183 = vpop.f32.mrf.mxu0
      %v3184 = vpop.f32.mrf.mxu0
      %v3185 = vadd.f32 0.0, %v3184
      %v3186 = vpop.f32.mrf.mxu0
      %3187 = vmatprep.mubr.bf16.mxu0 %v2582
      %3188 = vmatmul.mubr.bf16.gmra.mxu0 %v2465
      %v3189 = vpop.f32.mrf.mxu0
      %v3190 = vadd.f32 0.0, %v3189
      %v3191 = vpop.f32.mrf.mxu0
      %v3192 = vpop.f32.mrf.mxu0
      %v3193 = vadd.f32 0.0, %v3192
      %v3194 = vpop.f32.mrf.mxu0
      %3195 = vmatprep.mubr.bf16.mxu0 %v2585
      %3196 = vmatmul.mubr.bf16.gmra.mxu0 %v2467
      %v3197 = vpop.f32.mrf.mxu0
      %v3198 = vadd.f32 0.0, %v3197
      %v3199 = vpop.f32.mrf.mxu0
      %v3200 = vpop.f32.mrf.mxu0
      %v3201 = vadd.f32 0.0, %v3200
      %v3202 = vpop.f32.mrf.mxu0
      %3203 = vmatprep.mubr.bf16.mxu0 %v2588
      %3204 = vmatmul.mubr.bf16.gmra.mxu0 %v2469
      %v3205 = vpop.f32.mrf.mxu0
      %v3206 = vadd.f32 0.0, %v3205
      %v3207 = vpop.f32.mrf.mxu0
      %v3208 = vpop.f32.mrf.mxu0
      %v3209 = vadd.f32 0.0, %v3208
      %v3210 = vpop.f32.mrf.mxu0
      %3211 = vmatprep.mubr.bf16.mxu0 %v2591
      %3212 = vmatmul.mubr.bf16.gmra.mxu0 %v2471
      %v3213 = vpop.f32.mrf.mxu0
      %v3214 = vadd.f32 0.0, %v3213
      %v3215 = vpop.f32.mrf.mxu0
      %v3216 = vpop.f32.mrf.mxu0
      %v3217 = vadd.f32 0.0, %v3216
      %v3218 = vpop.f32.mrf.mxu0
      %3219 = vmatprep.mubr.bf16.mxu0 %v3065
      %3220 = vmatmul.mubr.bf16.gmra.mxu0 %v2990
      %v3221 = vpop.f32.mrf.mxu0
      %v3222 = vadd.f32 0.0, %v3221
      %v3223 = vpop.f32.mrf.mxu0
      %v3224 = vpop.f32.mrf.mxu0
      %v3225 = vadd.f32 0.0, %v3224
      %v3226 = vpop.f32.mrf.mxu0
      %3227 = vdwg.mxu0
      %v3228 = vadd.f32 %v2864, %v3102
      %v3229 = vadd.f32 %v2867, %v3105
      %v3230 = vadd.f32 %v2872, %v3110
      %v3231 = vadd.f32 %v2875, %v3113
      %v3232 = vadd.f32 %v2880, %v3118
      %v3233 = vadd.f32 %v2883, %v3121
      %v3234 = vadd.f32 %v2888, %v3126
      %v3235 = vadd.f32 %v2891, %v3129
      %v3236 = vadd.f32 %v2896, %v3134
      %v3237 = vadd.f32 %v2899, %v3137
      %v3238 = vadd.f32 %v2904, %v3142
      %v3239 = vadd.f32 %v2907, %v3145
      %v3240 = vadd.f32 %v2912, %v3150
      %v3241 = vadd.f32 %v2915, %v3153
      %v3242 = vadd.f32 %v2920, %v3158
      %v3243 = vadd.f32 %v2923, %v3161
      %v3244 = vadd.f32 %v2928, %v3166
      %v3245 = vadd.f32 %v2931, %v3169
      %v3246 = vadd.f32 %v2936, %v3174
      %v3247 = vadd.f32 %v2939, %v3177
      %v3248 = vadd.f32 %v2944, %v3182
      %v3249 = vadd.f32 %v2947, %v3185
      %v3250 = vadd.f32 %v2952, %v3190
      %v3251 = vadd.f32 %v2955, %v3193
      %v3252 = vadd.f32 %v2960, %v3198
      %v3253 = vadd.f32 %v2963, %v3201
      %v3254 = vadd.f32 %v2968, %v3206
      %v3255 = vadd.f32 %v2971, %v3209
      %v3256 = vadd.f32 %v2976, %v3214
      %v3257 = vadd.f32 %v2979, %v3217
      %v3258 = vadd.f32 %v2984, %v3222
      %v3259 = vadd.f32 %v2987, %v3225
      %v3261 = vlaneseq
      %v3262 = vshrl.u32 %v3261, 7
      %v3263 = vsub.s32 0, %v3262
      %v3264 = vrot.slane %v1970, %v3263
      %v3266 = vadd.f32 %v3228, %v3264
      %v3267 = vadd.f32 %v3229, %v3264
      %v3268 = vadd.f32 %v3230, %v3264
      %v3269 = vadd.f32 %v3231, %v3264
      %v3270 = vadd.f32 %v3232, %v3264
      %v3271 = vadd.f32 %v3233, %v3264
      %v3272 = vadd.f32 %v3234, %v3264
      %v3273 = vadd.f32 %v3235, %v3264
      %v3274 = vadd.f32 %v3236, %v3264
      %v3275 = vadd.f32 %v3237, %v3264
      %v3276 = vadd.f32 %v3238, %v3264
      %v3277 = vadd.f32 %v3239, %v3264
      %v3278 = vadd.f32 %v3240, %v3264
      %v3279 = vadd.f32 %v3241, %v3264
      %v3280 = vadd.f32 %v3242, %v3264
      %v3281 = vadd.f32 %v3243, %v3264
      %v3282 = vadd.f32 %v3244, %v3264
      %v3283 = vadd.f32 %v3245, %v3264
      %v3284 = vadd.f32 %v3246, %v3264
      %v3285 = vadd.f32 %v3247, %v3264
      %v3286 = vadd.f32 %v3248, %v3264
      %v3287 = vadd.f32 %v3249, %v3264
      %v3288 = vadd.f32 %v3250, %v3264
      %v3289 = vadd.f32 %v3251, %v3264
      %v3290 = vadd.f32 %v3252, %v3264
      %v3291 = vadd.f32 %v3253, %v3264
      %v3292 = vadd.f32 %v3254, %v3264
      %v3293 = vadd.f32 %v3255, %v3264
      %v3294 = vadd.f32 %v3256, %v3264
      %v3295 = vadd.f32 %v3257, %v3264
      %v3296 = vadd.f32 %v3258, %v3264
      %v3297 = vadd.f32 %v3259, %v3264
      %v3298 = vmax.f32 %v3266, 0.0
      %v3299 = vmax.f32 %v3267, 0.0
      %v3300 = vmax.f32 %v3268, 0.0
      %v3301 = vmax.f32 %v3269, 0.0
      %v3302 = vmax.f32 %v3270, 0.0
      %v3303 = vmax.f32 %v3271, 0.0
      %v3304 = vmax.f32 %v3272, 0.0
      %v3305 = vmax.f32 %v3273, 0.0
      %v3306 = vmax.f32 %v3274, 0.0
      %v3307 = vmax.f32 %v3275, 0.0
      %v3308 = vmax.f32 %v3276, 0.0
      %v3309 = vmax.f32 %v3277, 0.0
      %v3310 = vmax.f32 %v3278, 0.0
      %v3311 = vmax.f32 %v3279, 0.0
      %v3312 = vmax.f32 %v3280, 0.0
      %v3313 = vmax.f32 %v3281, 0.0
      %v3314 = vmax.f32 %v3282, 0.0
      %v3315 = vmax.f32 %v3283, 0.0
      %v3316 = vmax.f32 %v3284, 0.0
      %v3317 = vmax.f32 %v3285, 0.0
      %v3318 = vmax.f32 %v3286, 0.0
      %v3319 = vmax.f32 %v3287, 0.0
      %v3320 = vmax.f32 %v3288, 0.0
      %v3321 = vmax.f32 %v3289, 0.0
      %v3322 = vmax.f32 %v3290, 0.0
      %v3323 = vmax.f32 %v3291, 0.0
      %v3324 = vmax.f32 %v3292, 0.0
      %v3325 = vmax.f32 %v3293, 0.0
      %v3326 = vmax.f32 %v3294, 0.0
      %v3327 = vmax.f32 %v3295, 0.0
      %v3328 = vmax.f32 %v3296, 0.0
      %v3329 = vmax.f32 %v3297, 0.0
      %s3330 = scalar_lea.vmem [#allocation4], 24
      %3331 = vst.msk [vmem:[%s3330 + $0x1] sm:$0xff] %vm380, %v3298
      %3332 = vst.msk [vmem:[%s3330 + $0x9] sm:$0xff] %vm380, %v3299
      %3333 = vst.msk [vmem:[%s3330 + $0x19] sm:$0xff] %vm380, %v3300
      %3334 = vst.msk [vmem:[%s3330 + $0x21] sm:$0xff] %vm380, %v3301
      %3335 = vst.msk [vmem:[%s3330 + $0x31] sm:$0xff] %vm380, %v3302
      %3336 = vst.msk [vmem:[%s3330 + $0x39] sm:$0xff] %vm380, %v3303
      %3337 = vst.msk [vmem:[%s3330 + $0x49] sm:$0xff] %vm380, %v3304
      %3338 = vst.msk [vmem:[%s3330 + $0x51] sm:$0xff] %vm380, %v3305
      %3339 = vst.msk [vmem:[%s3330 + $0x61] sm:$0xff] %vm380, %v3306
      %3340 = vst.msk [vmem:[%s3330 + $0x69] sm:$0xff] %vm380, %v3307
      %3341 = vst.msk [vmem:[%s3330 + $0x79] sm:$0xff] %vm380, %v3308
      %3342 = vst.msk [vmem:[%s3330 + $0x81] sm:$0xff] %vm380, %v3309
      %3343 = vst.msk [vmem:[%s3330 + $0x91] sm:$0xff] %vm380, %v3310
      %3344 = vst.msk [vmem:[%s3330 + $0x99] sm:$0xff] %vm380, %v3311
      %3345 = vst.msk [vmem:[%s3330 + $0xa9] sm:$0xff] %vm380, %v3312
      %3346 = vst.msk [vmem:[%s3330 + $0xb1] sm:$0xff] %vm380, %v3313
      %3347 = vst.msk [vmem:[%s3330 + $0xc1] sm:$0xff] %vm380, %v3314
      %3348 = vst.msk [vmem:[%s3330 + $0xc9] sm:$0xff] %vm380, %v3315
      %3349 = vst.msk [vmem:[%s3330 + $0xd9] sm:$0xff] %vm380, %v3316
      %3350 = vst.msk [vmem:[%s3330 + $0xe1] sm:$0xff] %vm380, %v3317
      %3351 = vst.msk [vmem:[%s3330 + $0xf1] sm:$0xff] %vm380, %v3318
      %3352 = vst.msk [vmem:[%s3330 + $0xf9] sm:$0xff] %vm380, %v3319
      %3353 = vst.msk [vmem:[%s3330 + $0x109] sm:$0xff] %vm380, %v3320
      %3354 = vst.msk [vmem:[%s3330 + $0x111] sm:$0xff] %vm380, %v3321
      %3355 = vst.msk [vmem:[%s3330 + $0x121] sm:$0xff] %vm380, %v3322
      %3356 = vst.msk [vmem:[%s3330 + $0x129] sm:$0xff] %vm380, %v3323
      %3357 = vst.msk [vmem:[%s3330 + $0x139] sm:$0xff] %vm380, %v3324
      %3358 = vst.msk [vmem:[%s3330 + $0x141] sm:$0xff] %vm380, %v3325
      %3359 = vst.msk [vmem:[%s3330 + $0x151] sm:$0xff] %vm380, %v3326
      %3360 = vst.msk [vmem:[%s3330 + $0x159] sm:$0xff] %vm380, %v3327
      %3361 = vst.msk [vmem:[%s3330 + $0x169] sm:$0xff] %vm380, %v3328
      %3362 = vst.msk [vmem:[%s3330 + $0x171] sm:$0xff] %vm380, %v3329
      %s3363 = scalar_lea.vmem %s3, 288
      %v3364 = vld [vmem:[%s3363] sm:$0xf]
      %v3365 = vld [vmem:[%s3363 + $0x4] sm:$0xf]
      %v3366 = vld [vmem:[%s3363 + $0x8] sm:$0xf]
      %v3367 = vld [vmem:[%s3363 + $0xc] sm:$0xf]
      %v3368 = vld [vmem:[%s3363 + $0x10] sm:$0xf]
      %v3369 = vld [vmem:[%s3363 + $0x14] sm:$0xf]
      %v3370 = vld [vmem:[%s3363 + $0x18] sm:$0xf]
      %v3371 = vld [vmem:[%s3363 + $0x1c] sm:$0xf]
      %v3372 = vld [vmem:[%s3363 + $0x20] sm:$0xf]
      %v3373 = vld [vmem:[%s3363 + $0x24] sm:$0xf]
      %v3374 = vld [vmem:[%s3363 + $0x28] sm:$0xf]
      %v3375 = vld [vmem:[%s3363 + $0x2c] sm:$0xf]
      %v3376 = vld [vmem:[%s3363 + $0x30] sm:$0xf]
      %v3377 = vld [vmem:[%s3363 + $0x34] sm:$0xf]
      %v3378 = vld [vmem:[%s3363 + $0x38] sm:$0xf]
      %v3379 = vld [vmem:[%s3363 + $0x3c] sm:$0xf]
      %v3380 = vld [vmem:[%s3363 + $0x40] sm:$0xf]
      %v3381 = vld [vmem:[%s3363 + $0x44] sm:$0xf]
      %v3382 = vld [vmem:[%s3363 + $0x48] sm:$0xf]
      %v3383 = vld [vmem:[%s3363 + $0x4c] sm:$0xf]
      %v3384 = vld [vmem:[%s3363 + $0x50] sm:$0xf]
      %v3385 = vld [vmem:[%s3363 + $0x54] sm:$0xf]
      %v3386 = vld [vmem:[%s3363 + $0x58] sm:$0xf]
      %v3387 = vld [vmem:[%s3363 + $0x5c] sm:$0xf]
      %v3388 = vld [vmem:[%s3363 + $0x60] sm:$0xf]
      %v3389 = vld [vmem:[%s3363 + $0x64] sm:$0xf]
      %v3390 = vld [vmem:[%s3363 + $0x68] sm:$0xf]
      %v3391 = vld [vmem:[%s3363 + $0x6c] sm:$0xf]
      %v3392 = vld [vmem:[%s3363 + $0x70] sm:$0xf]
      %v3393 = vld [vmem:[%s3363 + $0x74] sm:$0xf]
      %v3394 = vld [vmem:[%s3363 + $0x78] sm:$0xf]
      %v3395 = vld [vmem:[%s3363 + $0x7c] sm:$0xf]
      %v3396 = vld [vmem:[%s3363 + $0x80] sm:$0xf]
      %v3397 = vld [vmem:[%s3363 + $0x84] sm:$0xf]
      %v3398 = vld [vmem:[%s3363 + $0x88] sm:$0xf]
      %v3399 = vld [vmem:[%s3363 + $0x8c] sm:$0xf]
      %v3400 = vld [vmem:[%s3363 + $0x90] sm:$0xf]
      %v3401 = vld [vmem:[%s3363 + $0x94] sm:$0xf]
      %v3402 = vld [vmem:[%s3363 + $0x98] sm:$0xf]
      %v3403 = vld [vmem:[%s3363 + $0x9c] sm:$0xf]
      %v3404 = vld [vmem:[%s3363 + $0xa0] sm:$0xf]
      %v3405 = vld [vmem:[%s3363 + $0xa4] sm:$0xf]
      %v3406 = vld [vmem:[%s3363 + $0xa8] sm:$0xf]
      %v3407 = vld [vmem:[%s3363 + $0xac] sm:$0xf]
      %v3408 = vld [vmem:[%s3363 + $0xb0] sm:$0xf]
      %v3409 = vld [vmem:[%s3363 + $0xb4] sm:$0xf]
      %v3410 = vld [vmem:[%s3363 + $0xb8] sm:$0xf]
      %v3411 = vld [vmem:[%s3363 + $0xbc] sm:$0xf]
      %v3412 = vld [vmem:[%s3363 + $0xc0] sm:$0xf]
      %v3413 = vld [vmem:[%s3363 + $0xc4] sm:$0xf]
      %v3414 = vld [vmem:[%s3363 + $0xc8] sm:$0xf]
      %v3415 = vld [vmem:[%s3363 + $0xcc] sm:$0xf]
      %v3416 = vld [vmem:[%s3363 + $0xd0] sm:$0xf]
      %v3417 = vld [vmem:[%s3363 + $0xd4] sm:$0xf]
      %v3418 = vld [vmem:[%s3363 + $0xd8] sm:$0xf]
      %v3419 = vld [vmem:[%s3363 + $0xdc] sm:$0xf]
      %v3420 = vld [vmem:[%s3363 + $0xe0] sm:$0xf]
      %v3421 = vld [vmem:[%s3363 + $0xe4] sm:$0xf]
      %v3422 = vld [vmem:[%s3363 + $0xe8] sm:$0xf]
      %v3423 = vld [vmem:[%s3363 + $0xec] sm:$0xf]
      %v3424 = vld [vmem:[%s3363 + $0xf0] sm:$0xf]
      %v3425 = vld [vmem:[%s3363 + $0xf4] sm:$0xf]
      %v3426 = vld [vmem:[%s3363 + $0xf8] sm:$0xf]
      %v3427 = vld [vmem:[%s3363 + $0xfc] sm:$0xf]
      %v3428 = vld [vmem:[%s3363 + $0x100] sm:$0xf]
      %v3429 = vld [vmem:[%s3363 + $0x104] sm:$0xf]
      %v3430 = vld [vmem:[%s3363 + $0x108] sm:$0xf]
      %v3431 = vld [vmem:[%s3363 + $0x10c] sm:$0xf]
      %v3432 = vld [vmem:[%s3363 + $0x110] sm:$0xf]
      %v3433 = vld [vmem:[%s3363 + $0x114] sm:$0xf]
      %v3434 = vld [vmem:[%s3363 + $0x118] sm:$0xf]
      %v3435 = vld [vmem:[%s3363 + $0x11c] sm:$0xf]
      %s3436 = scalar_lea.vmem %s4, 1
      %v3437 = vld [vmem:[%s3436] sm:$0x1]
      %v3438 = vld [vmem:[#allocation4] sm:$0xff]
      %v3439 = vld [vmem:[#allocation4 + $0x8] sm:$0xff]
      %v3440 = vld [vmem:[#allocation4 + $0x10] sm:$0x3]
      %v3441 = vld [vmem:[#allocation4 + $0x18] sm:$0xff]
      %v3442 = vld [vmem:[#allocation4 + $0x20] sm:$0xff]
      %v3443 = vld [vmem:[#allocation4 + $0x28] sm:$0x3]
      %v3444 = vld [vmem:[#allocation4 + $0x30] sm:$0xff]
      %v3445 = vld [vmem:[#allocation4 + $0x38] sm:$0xff]
      %v3446 = vld [vmem:[#allocation4 + $0x40] sm:$0x3]
      %v3447 = vld [vmem:[#allocation4 + $0x48] sm:$0xff]
      %v3448 = vld [vmem:[#allocation4 + $0x50] sm:$0xff]
      %v3449 = vld [vmem:[#allocation4 + $0x58] sm:$0x3]
      %v3450 = vld [vmem:[#allocation4 + $0x60] sm:$0xff]
      %v3451 = vld [vmem:[#allocation4 + $0x68] sm:$0xff]
      %v3452 = vld [vmem:[#allocation4 + $0x70] sm:$0x3]
      %v3453 = vld [vmem:[#allocation4 + $0x78] sm:$0xff]
      %v3454 = vld [vmem:[#allocation4 + $0x80] sm:$0xff]
      %v3455 = vld [vmem:[#allocation4 + $0x88] sm:$0x3]
      %v3456 = vld [vmem:[#allocation4 + $0x90] sm:$0xff]
      %v3457 = vld [vmem:[#allocation4 + $0x98] sm:$0xff]
      %v3458 = vld [vmem:[#allocation4 + $0xa0] sm:$0x3]
      %v3459 = vld [vmem:[#allocation4 + $0xa8] sm:$0xff]
      %v3460 = vld [vmem:[#allocation4 + $0xb0] sm:$0xff]
      %v3461 = vld [vmem:[#allocation4 + $0xb8] sm:$0x3]
      %v3462 = vld [vmem:[#allocation4 + $0xc0] sm:$0xff]
      %v3463 = vld [vmem:[#allocation4 + $0xc8] sm:$0xff]
      %v3464 = vld [vmem:[#allocation4 + $0xd0] sm:$0x3]
      %v3465 = vld [vmem:[#allocation4 + $0xd8] sm:$0xff]
      %v3466 = vld [vmem:[#allocation4 + $0xe0] sm:$0xff]
      %v3467 = vld [vmem:[#allocation4 + $0xe8] sm:$0x3]
      %v3468 = vld [vmem:[#allocation4 + $0xf0] sm:$0xff]
      %v3469 = vld [vmem:[#allocation4 + $0xf8] sm:$0xff]
      %v3470 = vld [vmem:[#allocation4 + $0x100] sm:$0x3]
      %v3471 = vld [vmem:[#allocation4 + $0x108] sm:$0xff]
      %v3472 = vld [vmem:[#allocation4 + $0x110] sm:$0xff]
      %v3473 = vld [vmem:[#allocation4 + $0x118] sm:$0x3]
      %v3474 = vld [vmem:[#allocation4 + $0x120] sm:$0xff]
      %v3475 = vld [vmem:[#allocation4 + $0x128] sm:$0xff]
      %v3476 = vld [vmem:[#allocation4 + $0x130] sm:$0x3]
      %v3477 = vld [vmem:[#allocation4 + $0x138] sm:$0xff]
      %v3478 = vld [vmem:[#allocation4 + $0x140] sm:$0xff]
      %v3479 = vld [vmem:[#allocation4 + $0x148] sm:$0x3]
      %v3480 = vld [vmem:[#allocation4 + $0x150] sm:$0xff]
      %v3481 = vld [vmem:[#allocation4 + $0x158] sm:$0xff]
      %v3482 = vld [vmem:[#allocation4 + $0x160] sm:$0x3]
      %v3483 = vld [vmem:[#allocation4 + $0x168] sm:$0xff]
      %v3484 = vld [vmem:[#allocation4 + $0x170] sm:$0xff]
      %v3485 = vld [vmem:[#allocation4 + $0x178] sm:$0x3]
      %v3486 = vld [vmem:[#allocation4 + $0x180] sm:$0xff]
      %v3487 = vld [vmem:[#allocation4 + $0x188] sm:$0xff]
      %v3488 = vld [vmem:[#allocation4 + $0x190] sm:$0x3]
      %v3489 = vld [vmem:[#allocation4 + $0x198] sm:$0xff]
      %v3490 = vld [vmem:[#allocation4 + $0x1a0] sm:$0xff]
      %v3491 = vld [vmem:[#allocation4 + $0x1a8] sm:$0x3]
      %v3546 = vrot.slane %v3438, 1
      %v3547 = vrot.slane %v3439, 1
      %v3548 = vsel %vm682, %v3546, %v3547
      %v3549 = vrot.slane %v3440, 1
      %v3550 = vsel %vm682, %v3547, %v3549
      %v3551 = vrot.slane %v3441, 1
      %v3552 = vrot.slane %v3442, 1
      %v3553 = vsel %vm682, %v3551, %v3552
      %v3554 = vrot.slane %v3443, 1
      %v3555 = vsel %vm682, %v3552, %v3554
      %v3556 = vrot.slane %v3444, 1
      %v3557 = vrot.slane %v3445, 1
      %v3558 = vsel %vm682, %v3556, %v3557
      %v3559 = vrot.slane %v3446, 1
      %v3560 = vsel %vm682, %v3557, %v3559
      %v3561 = vrot.slane %v3447, 1
      %v3562 = vrot.slane %v3448, 1
      %v3563 = vsel %vm682, %v3561, %v3562
      %v3564 = vrot.slane %v3449, 1
      %v3565 = vsel %vm682, %v3562, %v3564
      %v3566 = vrot.slane %v3450, 1
      %v3567 = vrot.slane %v3451, 1
      %v3568 = vsel %vm682, %v3566, %v3567
      %v3569 = vrot.slane %v3452, 1
      %v3570 = vsel %vm682, %v3567, %v3569
      %v3571 = vrot.slane %v3453, 1
      %v3572 = vrot.slane %v3454, 1
      %v3573 = vsel %vm682, %v3571, %v3572
      %v3574 = vrot.slane %v3455, 1
      %v3575 = vsel %vm682, %v3572, %v3574
      %v3576 = vrot.slane %v3456, 1
      %v3577 = vrot.slane %v3457, 1
      %v3578 = vsel %vm682, %v3576, %v3577
      %v3579 = vrot.slane %v3458, 1
      %v3580 = vsel %vm682, %v3577, %v3579
      %v3581 = vrot.slane %v3459, 1
      %v3582 = vrot.slane %v3460, 1
      %v3583 = vsel %vm682, %v3581, %v3582
      %v3584 = vrot.slane %v3461, 1
      %v3585 = vsel %vm682, %v3582, %v3584
      %v3586 = vrot.slane %v3462, 1
      %v3587 = vrot.slane %v3463, 1
      %v3588 = vsel %vm682, %v3586, %v3587
      %v3589 = vrot.slane %v3464, 1
      %v3590 = vsel %vm682, %v3587, %v3589
      %v3591 = vrot.slane %v3465, 1
      %v3592 = vrot.slane %v3466, 1
      %v3593 = vsel %vm682, %v3591, %v3592
      %v3594 = vrot.slane %v3467, 1
      %v3595 = vsel %vm682, %v3592, %v3594
      %v3596 = vrot.slane %v3468, 1
      %v3597 = vrot.slane %v3469, 1
      %v3598 = vsel %vm682, %v3596, %v3597
      %v3599 = vrot.slane %v3470, 1
      %v3600 = vsel %vm682, %v3597, %v3599
      %v3601 = vrot.slane %v3471, 1
      %v3602 = vrot.slane %v3472, 1
      %v3603 = vsel %vm682, %v3601, %v3602
      %v3604 = vrot.slane %v3473, 1
      %v3605 = vsel %vm682, %v3602, %v3604
      %v3606 = vrot.slane %v3474, 1
      %v3607 = vrot.slane %v3475, 1
      %v3608 = vsel %vm682, %v3606, %v3607
      %v3609 = vrot.slane %v3476, 1
      %v3610 = vsel %vm682, %v3607, %v3609
      %v3611 = vrot.slane %v3477, 1
      %v3612 = vrot.slane %v3478, 1
      %v3613 = vsel %vm682, %v3611, %v3612
      %v3614 = vrot.slane %v3479, 1
      %v3615 = vsel %vm682, %v3612, %v3614
      %v3616 = vrot.slane %v3480, 1
      %v3617 = vrot.slane %v3481, 1
      %v3618 = vsel %vm682, %v3616, %v3617
      %v3619 = vrot.slane %v3482, 1
      %v3620 = vsel %vm682, %v3617, %v3619
      %v3621 = vrot.slane %v3483, 1
      %v3622 = vrot.slane %v3484, 1
      %v3623 = vsel %vm682, %v3621, %v3622
      %v3624 = vrot.slane %v3485, 1
      %v3625 = vsel %vm682, %v3622, %v3624
      %v3626 = vrot.slane %v3486, 1
      %v3627 = vrot.slane %v3487, 1
      %v3628 = vsel %vm682, %v3626, %v3627
      %v3629 = vrot.slane %v3488, 1
      %v3630 = vsel %vm682, %v3627, %v3629
      %v3631 = vrot.slane %v3489, 1
      %v3632 = vrot.slane %v3490, 1
      %v3633 = vsel %vm682, %v3631, %v3632
      %v3634 = vrot.slane %v3491, 1
      %v3635 = vsel %vm682, %v3632, %v3634
      %3636 = vrot.lane.b32.xlu0 %v3548, 64
      %v3637 = vpop.permute.xlu0 %3636
      %3638 = vrot.lane.b32.xlu0 %v3550, 64
      %v3639 = vpop.permute.xlu0 %3638
      %3640 = vrot.lane.b32.xlu0 %v3553, 64
      %v3641 = vpop.permute.xlu0 %3640
      %3642 = vrot.lane.b32.xlu0 %v3555, 64
      %v3643 = vpop.permute.xlu0 %3642
      %3644 = vrot.lane.b32.xlu0 %v3558, 64
      %v3645 = vpop.permute.xlu0 %3644
      %3646 = vrot.lane.b32.xlu0 %v3560, 64
      %v3647 = vpop.permute.xlu0 %3646
      %3648 = vrot.lane.b32.xlu0 %v3563, 64
      %v3649 = vpop.permute.xlu0 %3648
      %3650 = vrot.lane.b32.xlu0 %v3565, 64
      %v3651 = vpop.permute.xlu0 %3650
      %3652 = vrot.lane.b32.xlu0 %v3568, 64
      %v3653 = vpop.permute.xlu0 %3652
      %3654 = vrot.lane.b32.xlu0 %v3570, 64
      %v3655 = vpop.permute.xlu0 %3654
      %3656 = vrot.lane.b32.xlu0 %v3573, 64
      %v3657 = vpop.permute.xlu0 %3656
      %3658 = vrot.lane.b32.xlu0 %v3575, 64
      %v3659 = vpop.permute.xlu0 %3658
      %3660 = vrot.lane.b32.xlu0 %v3578, 64
      %v3661 = vpop.permute.xlu0 %3660
      %3662 = vrot.lane.b32.xlu0 %v3580, 64
      %v3663 = vpop.permute.xlu0 %3662
      %3664 = vrot.lane.b32.xlu0 %v3583, 64
      %v3665 = vpop.permute.xlu0 %3664
      %3666 = vrot.lane.b32.xlu0 %v3585, 64
      %v3667 = vpop.permute.xlu0 %3666
      %3668 = vrot.lane.b32.xlu0 %v3588, 64
      %v3669 = vpop.permute.xlu0 %3668
      %3670 = vrot.lane.b32.xlu0 %v3590, 64
      %v3671 = vpop.permute.xlu0 %3670
      %3672 = vrot.lane.b32.xlu0 %v3593, 64
      %v3673 = vpop.permute.xlu0 %3672
      %3674 = vrot.lane.b32.xlu0 %v3595, 64
      %v3675 = vpop.permute.xlu0 %3674
      %3676 = vrot.lane.b32.xlu0 %v3598, 64
      %v3677 = vpop.permute.xlu0 %3676
      %3678 = vrot.lane.b32.xlu0 %v3600, 64
      %v3679 = vpop.permute.xlu0 %3678
      %3680 = vrot.lane.b32.xlu0 %v3603, 64
      %v3681 = vpop.permute.xlu0 %3680
      %3682 = vrot.lane.b32.xlu0 %v3605, 64
      %v3683 = vpop.permute.xlu0 %3682
      %3684 = vrot.lane.b32.xlu0 %v3608, 64
      %v3685 = vpop.permute.xlu0 %3684
      %3686 = vrot.lane.b32.xlu0 %v3610, 64
      %v3687 = vpop.permute.xlu0 %3686
      %3688 = vrot.lane.b32.xlu0 %v3613, 64
      %v3689 = vpop.permute.xlu0 %3688
      %3690 = vrot.lane.b32.xlu0 %v3615, 64
      %v3691 = vpop.permute.xlu0 %3690
      %3692 = vrot.lane.b32.xlu0 %v3618, 64
      %v3693 = vpop.permute.xlu0 %3692
      %3694 = vrot.lane.b32.xlu0 %v3620, 64
      %v3695 = vpop.permute.xlu0 %3694
      %3696 = vrot.lane.b32.xlu0 %v3623, 64
      %v3697 = vpop.permute.xlu0 %3696
      %3698 = vrot.lane.b32.xlu0 %v3625, 64
      %v3699 = vpop.permute.xlu0 %3698
      %3700 = vrot.lane.b32.xlu0 %v3628, 64
      %v3701 = vpop.permute.xlu0 %3700
      %3702 = vrot.lane.b32.xlu0 %v3630, 64
      %v3703 = vpop.permute.xlu0 %3702
      %3704 = vrot.lane.b32.xlu0 %v3633, 64
      %v3705 = vpop.permute.xlu0 %3704
      %3706 = vrot.lane.b32.xlu0 %v3635, 64
      %v3707 = vpop.permute.xlu0 %3706
      %v3744 = vrot.slane %v3438, 2
      %v3745 = vrot.slane %v3439, 2
      %v3746 = vsel %vm881, %v3744, %v3745
      %v3747 = vrot.slane %v3440, 2
      %v3748 = vsel %vm881, %v3745, %v3747
      %v3749 = vrot.slane %v3441, 2
      %v3750 = vrot.slane %v3442, 2
      %v3751 = vsel %vm881, %v3749, %v3750
      %v3752 = vrot.slane %v3443, 2
      %v3753 = vsel %vm881, %v3750, %v3752
      %v3754 = vrot.slane %v3444, 2
      %v3755 = vrot.slane %v3445, 2
      %v3756 = vsel %vm881, %v3754, %v3755
      %v3757 = vrot.slane %v3446, 2
      %v3758 = vsel %vm881, %v3755, %v3757
      %v3759 = vrot.slane %v3447, 2
      %v3760 = vrot.slane %v3448, 2
      %v3761 = vsel %vm881, %v3759, %v3760
      %v3762 = vrot.slane %v3449, 2
      %v3763 = vsel %vm881, %v3760, %v3762
      %v3764 = vrot.slane %v3450, 2
      %v3765 = vrot.slane %v3451, 2
      %v3766 = vsel %vm881, %v3764, %v3765
      %v3767 = vrot.slane %v3452, 2
      %v3768 = vsel %vm881, %v3765, %v3767
      %v3769 = vrot.slane %v3453, 2
      %v3770 = vrot.slane %v3454, 2
      %v3771 = vsel %vm881, %v3769, %v3770
      %v3772 = vrot.slane %v3455, 2
      %v3773 = vsel %vm881, %v3770, %v3772
      %v3774 = vrot.slane %v3456, 2
      %v3775 = vrot.slane %v3457, 2
      %v3776 = vsel %vm881, %v3774, %v3775
      %v3777 = vrot.slane %v3458, 2
      %v3778 = vsel %vm881, %v3775, %v3777
      %v3779 = vrot.slane %v3459, 2
      %v3780 = vrot.slane %v3460, 2
      %v3781 = vsel %vm881, %v3779, %v3780
      %v3782 = vrot.slane %v3461, 2
      %v3783 = vsel %vm881, %v3780, %v3782
      %v3784 = vrot.slane %v3462, 2
      %v3785 = vrot.slane %v3463, 2
      %v3786 = vsel %vm881, %v3784, %v3785
      %v3787 = vrot.slane %v3464, 2
      %v3788 = vsel %vm881, %v3785, %v3787
      %v3789 = vrot.slane %v3465, 2
      %v3790 = vrot.slane %v3466, 2
      %v3791 = vsel %vm881, %v3789, %v3790
      %v3792 = vrot.slane %v3467, 2
      %v3793 = vsel %vm881, %v3790, %v3792
      %v3794 = vrot.slane %v3468, 2
      %v3795 = vrot.slane %v3469, 2
      %v3796 = vsel %vm881, %v3794, %v3795
      %v3797 = vrot.slane %v3470, 2
      %v3798 = vsel %vm881, %v3795, %v3797
      %v3799 = vrot.slane %v3471, 2
      %v3800 = vrot.slane %v3472, 2
      %v3801 = vsel %vm881, %v3799, %v3800
      %v3802 = vrot.slane %v3473, 2
      %v3803 = vsel %vm881, %v3800, %v3802
      %v3804 = vrot.slane %v3474, 2
      %v3805 = vrot.slane %v3475, 2
      %v3806 = vsel %vm881, %v3804, %v3805
      %v3807 = vrot.slane %v3476, 2
      %v3808 = vsel %vm881, %v3805, %v3807
      %v3809 = vrot.slane %v3477, 2
      %v3810 = vrot.slane %v3478, 2
      %v3811 = vsel %vm881, %v3809, %v3810
      %v3812 = vrot.slane %v3479, 2
      %v3813 = vsel %vm881, %v3810, %v3812
      %v3814 = vrot.slane %v3480, 2
      %v3815 = vrot.slane %v3481, 2
      %v3816 = vsel %vm881, %v3814, %v3815
      %v3817 = vrot.slane %v3482, 2
      %v3818 = vsel %vm881, %v3815, %v3817
      %v3819 = vrot.slane %v3483, 2
      %v3820 = vrot.slane %v3484, 2
      %v3821 = vsel %vm881, %v3819, %v3820
      %v3822 = vrot.slane %v3485, 2
      %v3823 = vsel %vm881, %v3820, %v3822
      %v3824 = vrot.slane %v3486, 2
      %v3825 = vrot.slane %v3487, 2
      %v3826 = vsel %vm881, %v3824, %v3825
      %v3827 = vrot.slane %v3488, 2
      %v3828 = vsel %vm881, %v3825, %v3827
      %v3829 = vrot.slane %v3489, 2
      %v3830 = vrot.slane %v3490, 2
      %v3831 = vsel %vm881, %v3829, %v3830
      %v3832 = vrot.slane %v3491, 2
      %v3833 = vsel %vm881, %v3830, %v3832
      %v3870 = vsel %vm380, %v3438, %v3637
      %v3871 = vsel %vm380, %v3439, %v3639
      %v3872 = vsel %vm380, %v3441, %v3641
      %v3873 = vsel %vm380, %v3442, %v3643
      %v3874 = vsel %vm380, %v3444, %v3645
      %v3875 = vsel %vm380, %v3445, %v3647
      %v3876 = vsel %vm380, %v3447, %v3649
      %v3877 = vsel %vm380, %v3448, %v3651
      %v3878 = vsel %vm380, %v3450, %v3653
      %v3879 = vsel %vm380, %v3451, %v3655
      %v3880 = vsel %vm380, %v3453, %v3657
      %v3881 = vsel %vm380, %v3454, %v3659
      %v3882 = vsel %vm380, %v3456, %v3661
      %v3883 = vsel %vm380, %v3457, %v3663
      %v3884 = vsel %vm380, %v3459, %v3665
      %v3885 = vsel %vm380, %v3460, %v3667
      %v3886 = vsel %vm380, %v3462, %v3669
      %v3887 = vsel %vm380, %v3463, %v3671
      %v3888 = vsel %vm380, %v3465, %v3673
      %v3889 = vsel %vm380, %v3466, %v3675
      %v3890 = vsel %vm380, %v3468, %v3677
      %v3891 = vsel %vm380, %v3469, %v3679
      %v3892 = vsel %vm380, %v3471, %v3681
      %v3893 = vsel %vm380, %v3472, %v3683
      %v3894 = vsel %vm380, %v3474, %v3685
      %v3895 = vsel %vm380, %v3475, %v3687
      %v3896 = vsel %vm380, %v3477, %v3689
      %v3897 = vsel %vm380, %v3478, %v3691
      %v3898 = vsel %vm380, %v3480, %v3693
      %v3899 = vsel %vm380, %v3481, %v3695
      %v3900 = vsel %vm380, %v3483, %v3697
      %v3901 = vsel %vm380, %v3484, %v3699
      %v3902 = vsel %vm380, %v3486, %v3701
      %v3903 = vsel %vm380, %v3487, %v3703
      %v3904 = vsel %vm380, %v3489, %v3705
      %v3905 = vsel %vm380, %v3490, %v3707
      %v3906 = vpack.c.bf16 %v3871, %v3870
      %v3907 = vpack.c.bf16 %v3748, %v3746
      %v3908 = vpack.c.bf16 %v3873, %v3872
      %v3909 = vpack.c.bf16 %v3753, %v3751
      %v3910 = vpack.c.bf16 %v3875, %v3874
      %v3911 = vpack.c.bf16 %v3758, %v3756
      %v3912 = vpack.c.bf16 %v3877, %v3876
      %v3913 = vpack.c.bf16 %v3763, %v3761
      %v3914 = vpack.c.bf16 %v3879, %v3878
      %v3915 = vpack.c.bf16 %v3768, %v3766
      %v3916 = vpack.c.bf16 %v3881, %v3880
      %v3917 = vpack.c.bf16 %v3773, %v3771
      %v3918 = vpack.c.bf16 %v3883, %v3882
      %v3919 = vpack.c.bf16 %v3778, %v3776
      %v3920 = vpack.c.bf16 %v3885, %v3884
      %v3921 = vpack.c.bf16 %v3783, %v3781
      %v3922 = vpack.c.bf16 %v3887, %v3886
      %v3923 = vpack.c.bf16 %v3788, %v3786
      %v3924 = vpack.c.bf16 %v3889, %v3888
      %v3925 = vpack.c.bf16 %v3793, %v3791
      %v3926 = vpack.c.bf16 %v3891, %v3890
      %v3927 = vpack.c.bf16 %v3798, %v3796
      %v3928 = vpack.c.bf16 %v3893, %v3892
      %v3929 = vpack.c.bf16 %v3803, %v3801
      %v3930 = vpack.c.bf16 %v3895, %v3894
      %v3931 = vpack.c.bf16 %v3808, %v3806
      %v3932 = vpack.c.bf16 %v3897, %v3896
      %v3933 = vpack.c.bf16 %v3813, %v3811
      %v3934 = vpack.c.bf16 %v3899, %v3898
      %v3935 = vpack.c.bf16 %v3818, %v3816
      %v3936 = vpack.c.bf16 %v3901, %v3900
      %v3937 = vpack.c.bf16 %v3823, %v3821
      %v3938 = vpack.c.bf16 %v3903, %v3902
      %v3939 = vpack.c.bf16 %v3828, %v3826
      %v3964 = vunpack.c.l.b16 %v3388
      %v3965 = vunpack.c.l.b16 %v3389
      %v3966 = vunpack.c.l.b16 %v3390
      %v3967 = vunpack.c.l.b16 %v3391
      %v3968 = vunpack.c.l.b16 %v3392
      %v3969 = vunpack.c.l.b16 %v3393
      %v3970 = vunpack.c.l.b16 %v3394
      %v3971 = vunpack.c.l.b16 %v3395
      %v3972 = vunpack.c.l.b16 %v3396
      %v3973 = vunpack.c.l.b16 %v3397
      %v3974 = vunpack.c.l.b16 %v3398
      %v3975 = vunpack.c.l.b16 %v3399
      %v3976 = vunpack.c.l.b16 %v3400
      %v3977 = vunpack.c.l.b16 %v3401
      %v3978 = vunpack.c.l.b16 %v3402
      %v3979 = vunpack.c.l.b16 %v3403
      %v3980 = vunpack.c.l.b16 %v3404
      %v3981 = vunpack.c.l.b16 %v3405
      %v3982 = vunpack.c.l.b16 %v3406
      %v3983 = vunpack.c.l.b16 %v3407
      %v3984 = vunpack.c.l.b16 %v3408
      %v3985 = vunpack.c.l.b16 %v3409
      %v3986 = vunpack.c.l.b16 %v3410
      %v3987 = vunpack.c.l.b16 %v3411
      %v3988 = vpack.c.b16 %v3965, %v3964
      %v3989 = vpack.c.b16 %v3967, %v3966
      %v3990 = vpack.c.b16 %v3969, %v3968
      %v3991 = vpack.c.b16 %v3971, %v3970
      %v3992 = vpack.c.b16 %v3973, %v3972
      %v3993 = vpack.c.b16 %v3975, %v3974
      %v3994 = vpack.c.b16 %v3977, %v3976
      %v3995 = vpack.c.b16 %v3979, %v3978
      %v3996 = vpack.c.b16 %v3981, %v3980
      %v3997 = vpack.c.b16 %v3983, %v3982
      %v3998 = vpack.c.b16 %v3985, %v3984
      %v3999 = vpack.c.b16 %v3987, %v3986
      %v4013 = vsel %vm380, %v3909, 0
      %v4016 = vsel %vm380, %v3911, 0
      %v4019 = vsel %vm380, %v3913, 0
      %v4022 = vsel %vm380, %v3915, 0
      %v4025 = vsel %vm380, %v3917, 0
      %v4028 = vsel %vm380, %v3919, 0
      %v4031 = vsel %vm380, %v3921, 0
      %v4034 = vsel %vm380, %v3923, 0
      %v4037 = vsel %vm380, %v3925, 0
      %v4040 = vsel %vm380, %v3927, 0
      %v4043 = vsel %vm380, %v3929, 0
      %v4046 = vsel %vm380, %v3931, 0
      %v4049 = vsel %vm380, %v3933, 0
      %v4052 = vsel %vm380, %v3935, 0
      %v4055 = vsel %vm380, %v3937, 0
      %v4058 = vsel %vm380, %v3939, 0
      %4060 = vmatprep.subr.bf16.mxu0 0
      %4061 = vmatpush1.bf16.msra.mxu0 %v3995
      %4062 = vmatprep.subr.bf16.mxu0 0
      %4063 = vmatpush1.bf16.msra.mxu0 %v3994
      %4064 = vmatprep.subr.bf16.mxu0 0
      %4065 = vmatpush1.bf16.msra.mxu0 %v3993
      %4066 = vmatprep.subr.bf16.mxu0 0
      %4067 = vmatpush1.bf16.msra.mxu0 %v3992
      %4068 = vmatprep.subr.bf16.mxu0 0
      %4069 = vmatpush1.bf16.msra.mxu0 %v3991
      %4070 = vmatprep.subr.bf16.mxu0 0
      %4071 = vmatpush1.bf16.msra.mxu0 %v3990
      %4072 = vmatprep.subr.bf16.mxu0 0
      %4073 = vmatpush1.bf16.msra.mxu0 %v3989
      %4074 = vmatprep.subr.bf16.mxu0 0
      %4075 = vmatpush1.bf16.msra.mxu0 %v3988
      %4076 = vmatprep.subr.bf16.mxu0 0
      %4077 = vmatpush2.bf16.msra.mxu0 0
      %4078 = vmatprep.subr.bf16.mxu0 0
      %4079 = vmatpush2.bf16.msra.mxu0 0
      %4080 = vmatprep.subr.bf16.mxu0 0
      %4081 = vmatpush2.bf16.msra.mxu0 0
      %4082 = vmatprep.subr.bf16.mxu0 0
      %4083 = vmatpush2.bf16.msra.mxu0 0
      %4084 = vmatprep.subr.bf16.mxu0 0
      %4085 = vmatpush2.bf16.msra.mxu0 %v3999
      %4086 = vmatprep.subr.bf16.mxu0 0
      %4087 = vmatpush2.bf16.msra.mxu0 %v3998
      %4088 = vmatprep.subr.bf16.mxu0 0
      %4089 = vmatpush2.bf16.msra.mxu0 %v3997
      %4090 = vmatprep.subr.bf16.mxu0 0
      %4091 = vmatpush2.bf16.msra.mxu0 %v3996
      %4092 = vmatprep.mubr.bf16.mxu0 %v4013
      %4093 = vmatmul.mubr.bf16.gmra.mxu0 %v3908
      %v4094 = vpop.f32.mrf.mxu0
      %v4095 = vadd.f32 0.0, %v4094
      %v4096 = vpop.f32.mrf.mxu0
      %v4097 = vpop.f32.mrf.mxu0
      %v4098 = vadd.f32 0.0, %v4097
      %v4099 = vpop.f32.mrf.mxu0
      %4100 = vmatprep.mubr.bf16.mxu0 %v4016
      %4101 = vmatmul.mubr.bf16.gmra.mxu0 %v3910
      %v4102 = vpop.f32.mrf.mxu0
      %v4103 = vadd.f32 0.0, %v4102
      %v4104 = vpop.f32.mrf.mxu0
      %v4105 = vpop.f32.mrf.mxu0
      %v4106 = vadd.f32 0.0, %v4105
      %v4107 = vpop.f32.mrf.mxu0
      %4108 = vmatprep.mubr.bf16.mxu0 %v4019
      %4109 = vmatmul.mubr.bf16.gmra.mxu0 %v3912
      %v4110 = vpop.f32.mrf.mxu0
      %v4111 = vadd.f32 0.0, %v4110
      %v4112 = vpop.f32.mrf.mxu0
      %v4113 = vpop.f32.mrf.mxu0
      %v4114 = vadd.f32 0.0, %v4113
      %v4115 = vpop.f32.mrf.mxu0
      %4116 = vmatprep.mubr.bf16.mxu0 %v4022
      %4117 = vmatmul.mubr.bf16.gmra.mxu0 %v3914
      %v4118 = vpop.f32.mrf.mxu0
      %v4119 = vadd.f32 0.0, %v4118
      %v4120 = vpop.f32.mrf.mxu0
      %v4121 = vpop.f32.mrf.mxu0
      %v4122 = vadd.f32 0.0, %v4121
      %v4123 = vpop.f32.mrf.mxu0
      %4124 = vmatprep.mubr.bf16.mxu0 %v4025
      %4125 = vmatmul.mubr.bf16.gmra.mxu0 %v3916
      %v4126 = vpop.f32.mrf.mxu0
      %v4127 = vadd.f32 0.0, %v4126
      %v4128 = vpop.f32.mrf.mxu0
      %v4129 = vpop.f32.mrf.mxu0
      %v4130 = vadd.f32 0.0, %v4129
      %v4131 = vpop.f32.mrf.mxu0
      %4132 = vmatprep.mubr.bf16.mxu0 %v4028
      %4133 = vmatmul.mubr.bf16.gmra.mxu0 %v3918
      %v4134 = vpop.f32.mrf.mxu0
      %v4135 = vadd.f32 0.0, %v4134
      %v4136 = vpop.f32.mrf.mxu0
      %v4137 = vpop.f32.mrf.mxu0
      %v4138 = vadd.f32 0.0, %v4137
      %v4139 = vpop.f32.mrf.mxu0
      %4140 = vmatprep.mubr.bf16.mxu0 %v4031
      %4141 = vmatmul.mubr.bf16.gmra.mxu0 %v3920
      %v4142 = vpop.f32.mrf.mxu0
      %v4143 = vadd.f32 0.0, %v4142
      %v4144 = vpop.f32.mrf.mxu0
      %v4145 = vpop.f32.mrf.mxu0
      %v4146 = vadd.f32 0.0, %v4145
      %v4147 = vpop.f32.mrf.mxu0
      %4148 = vmatprep.mubr.bf16.mxu0 %v4034
      %4149 = vmatmul.mubr.bf16.gmra.mxu0 %v3922
      %v4150 = vpop.f32.mrf.mxu0
      %v4151 = vadd.f32 0.0, %v4150
      %v4152 = vpop.f32.mrf.mxu0
      %v4153 = vpop.f32.mrf.mxu0
      %v4154 = vadd.f32 0.0, %v4153
      %v4155 = vpop.f32.mrf.mxu0
      %4156 = vmatprep.mubr.bf16.mxu0 %v4037
      %4157 = vmatmul.mubr.bf16.gmra.mxu0 %v3924
      %v4158 = vpop.f32.mrf.mxu0
      %v4159 = vadd.f32 0.0, %v4158
      %v4160 = vpop.f32.mrf.mxu0
      %v4161 = vpop.f32.mrf.mxu0
      %v4162 = vadd.f32 0.0, %v4161
      %v4163 = vpop.f32.mrf.mxu0
      %4164 = vmatprep.mubr.bf16.mxu0 %v4040
      %4165 = vmatmul.mubr.bf16.gmra.mxu0 %v3926
      %v4166 = vpop.f32.mrf.mxu0
      %v4167 = vadd.f32 0.0, %v4166
      %v4168 = vpop.f32.mrf.mxu0
      %v4169 = vpop.f32.mrf.mxu0
      %v4170 = vadd.f32 0.0, %v4169
      %v4171 = vpop.f32.mrf.mxu0
      %4172 = vmatprep.mubr.bf16.mxu0 %v4043
      %4173 = vmatmul.mubr.bf16.gmra.mxu0 %v3928
      %v4174 = vpop.f32.mrf.mxu0
      %v4175 = vadd.f32 0.0, %v4174
      %v4176 = vpop.f32.mrf.mxu0
      %v4177 = vpop.f32.mrf.mxu0
      %v4178 = vadd.f32 0.0, %v4177
      %v4179 = vpop.f32.mrf.mxu0
      %4180 = vmatprep.mubr.bf16.mxu0 %v4046
      %4181 = vmatmul.mubr.bf16.gmra.mxu0 %v3930
      %v4182 = vpop.f32.mrf.mxu0
      %v4183 = vadd.f32 0.0, %v4182
      %v4184 = vpop.f32.mrf.mxu0
      %v4185 = vpop.f32.mrf.mxu0
      %v4186 = vadd.f32 0.0, %v4185
      %v4187 = vpop.f32.mrf.mxu0
      %4188 = vmatprep.mubr.bf16.mxu0 %v4049
      %4189 = vmatmul.mubr.bf16.gmra.mxu0 %v3932
      %v4190 = vpop.f32.mrf.mxu0
      %v4191 = vadd.f32 0.0, %v4190
      %v4192 = vpop.f32.mrf.mxu0
      %v4193 = vpop.f32.mrf.mxu0
      %v4194 = vadd.f32 0.0, %v4193
      %v4195 = vpop.f32.mrf.mxu0
      %4196 = vmatprep.mubr.bf16.mxu0 %v4052
      %4197 = vmatmul.mubr.bf16.gmra.mxu0 %v3934
      %v4198 = vpop.f32.mrf.mxu0
      %v4199 = vadd.f32 0.0, %v4198
      %v4200 = vpop.f32.mrf.mxu0
      %v4201 = vpop.f32.mrf.mxu0
      %v4202 = vadd.f32 0.0, %v4201
      %v4203 = vpop.f32.mrf.mxu0
      %4204 = vmatprep.mubr.bf16.mxu0 %v4055
      %4205 = vmatmul.mubr.bf16.gmra.mxu0 %v3936
      %v4206 = vpop.f32.mrf.mxu0
      %v4207 = vadd.f32 0.0, %v4206
      %v4208 = vpop.f32.mrf.mxu0
      %v4209 = vpop.f32.mrf.mxu0
      %v4210 = vadd.f32 0.0, %v4209
      %v4211 = vpop.f32.mrf.mxu0
      %4212 = vmatprep.mubr.bf16.mxu0 %v4058
      %4213 = vmatmul.mubr.bf16.gmra.mxu0 %v3938
      %v4214 = vpop.f32.mrf.mxu0
      %v4215 = vadd.f32 0.0, %v4214
      %v4216 = vpop.f32.mrf.mxu0
      %v4217 = vpop.f32.mrf.mxu0
      %v4218 = vadd.f32 0.0, %v4217
      %v4219 = vpop.f32.mrf.mxu0
      %4220 = vdwg.mxu0
      %v4245 = vunpack.c.l.b16 %v3364
      %v4246 = vunpack.c.l.b16 %v3365
      %v4247 = vunpack.c.l.b16 %v3366
      %v4248 = vunpack.c.l.b16 %v3367
      %v4249 = vunpack.c.l.b16 %v3368
      %v4250 = vunpack.c.l.b16 %v3369
      %v4251 = vunpack.c.l.b16 %v3370
      %v4252 = vunpack.c.l.b16 %v3371
      %v4253 = vunpack.c.l.b16 %v3372
      %v4254 = vunpack.c.l.b16 %v3373
      %v4255 = vunpack.c.l.b16 %v3374
      %v4256 = vunpack.c.l.b16 %v3375
      %v4257 = vunpack.c.l.b16 %v3376
      %v4258 = vunpack.c.l.b16 %v3377
      %v4259 = vunpack.c.l.b16 %v3378
      %v4260 = vunpack.c.l.b16 %v3379
      %v4261 = vunpack.c.l.b16 %v3380
      %v4262 = vunpack.c.l.b16 %v3381
      %v4263 = vunpack.c.l.b16 %v3382
      %v4264 = vunpack.c.l.b16 %v3383
      %v4265 = vunpack.c.l.b16 %v3384
      %v4266 = vunpack.c.l.b16 %v3385
      %v4267 = vunpack.c.l.b16 %v3386
      %v4268 = vunpack.c.l.b16 %v3387
      %v4269 = vpack.c.b16 %v4246, %v4245
      %v4270 = vpack.c.b16 %v4248, %v4247
      %v4271 = vpack.c.b16 %v4250, %v4249
      %v4272 = vpack.c.b16 %v4252, %v4251
      %v4273 = vpack.c.b16 %v4254, %v4253
      %v4274 = vpack.c.b16 %v4256, %v4255
      %v4275 = vpack.c.b16 %v4258, %v4257
      %v4276 = vpack.c.b16 %v4260, %v4259
      %v4277 = vpack.c.b16 %v4262, %v4261
      %v4278 = vpack.c.b16 %v4264, %v4263
      %v4279 = vpack.c.b16 %v4266, %v4265
      %v4280 = vpack.c.b16 %v4268, %v4267
      %v4294 = vsel %vm380, %v3907, 0
      %4296 = vmatprep.subr.bf16.mxu0 0
      %4297 = vmatpush1.bf16.msra.mxu0 %v4276
      %4298 = vmatprep.subr.bf16.mxu0 0
      %4299 = vmatpush1.bf16.msra.mxu0 %v4275
      %4300 = vmatprep.subr.bf16.mxu0 0
      %4301 = vmatpush1.bf16.msra.mxu0 %v4274
      %4302 = vmatprep.subr.bf16.mxu0 0
      %4303 = vmatpush1.bf16.msra.mxu0 %v4273
      %4304 = vmatprep.subr.bf16.mxu0 0
      %4305 = vmatpush1.bf16.msra.mxu0 %v4272
      %4306 = vmatprep.subr.bf16.mxu0 0
      %4307 = vmatpush1.bf16.msra.mxu0 %v4271
      %4308 = vmatprep.subr.bf16.mxu0 0
      %4309 = vmatpush1.bf16.msra.mxu0 %v4270
      %4310 = vmatprep.subr.bf16.mxu0 0
      %4311 = vmatpush1.bf16.msra.mxu0 %v4269
      %4312 = vmatprep.subr.bf16.mxu0 0
      %4313 = vmatpush2.bf16.msra.mxu0 0
      %4314 = vmatprep.subr.bf16.mxu0 0
      %4315 = vmatpush2.bf16.msra.mxu0 0
      %4316 = vmatprep.subr.bf16.mxu0 0
      %4317 = vmatpush2.bf16.msra.mxu0 0
      %4318 = vmatprep.subr.bf16.mxu0 0
      %4319 = vmatpush2.bf16.msra.mxu0 0
      %4320 = vmatprep.subr.bf16.mxu0 0
      %4321 = vmatpush2.bf16.msra.mxu0 %v4280
      %4322 = vmatprep.subr.bf16.mxu0 0
      %4323 = vmatpush2.bf16.msra.mxu0 %v4279
      %4324 = vmatprep.subr.bf16.mxu0 0
      %4325 = vmatpush2.bf16.msra.mxu0 %v4278
      %4326 = vmatprep.subr.bf16.mxu0 0
      %4327 = vmatpush2.bf16.msra.mxu0 %v4277
      %4328 = vmatprep.mubr.bf16.mxu0 %v4294
      %4329 = vmatmul.mubr.bf16.gmra.mxu0 %v3906
      %v4330 = vpop.f32.mrf.mxu0
      %v4331 = vadd.f32 %v4095, %v4330
      %v4332 = vpop.f32.mrf.mxu0
      %v4333 = vpop.f32.mrf.mxu0
      %v4334 = vadd.f32 %v4098, %v4333
      %v4335 = vpop.f32.mrf.mxu0
      %4336 = vmatprep.mubr.bf16.mxu0 %v4013
      %4337 = vmatmul.mubr.bf16.gmra.mxu0 %v3908
      %v4338 = vpop.f32.mrf.mxu0
      %v4339 = vadd.f32 %v4103, %v4338
      %v4340 = vpop.f32.mrf.mxu0
      %v4341 = vpop.f32.mrf.mxu0
      %v4342 = vadd.f32 %v4106, %v4341
      %v4343 = vpop.f32.mrf.mxu0
      %4344 = vmatprep.mubr.bf16.mxu0 %v4016
      %4345 = vmatmul.mubr.bf16.gmra.mxu0 %v3910
      %v4346 = vpop.f32.mrf.mxu0
      %v4347 = vadd.f32 %v4111, %v4346
      %v4348 = vpop.f32.mrf.mxu0
      %v4349 = vpop.f32.mrf.mxu0
      %v4350 = vadd.f32 %v4114, %v4349
      %v4351 = vpop.f32.mrf.mxu0
      %4352 = vmatprep.mubr.bf16.mxu0 %v4019
      %4353 = vmatmul.mubr.bf16.gmra.mxu0 %v3912
      %v4354 = vpop.f32.mrf.mxu0
      %v4355 = vadd.f32 %v4119, %v4354
      %v4356 = vpop.f32.mrf.mxu0
      %v4357 = vpop.f32.mrf.mxu0
      %v4358 = vadd.f32 %v4122, %v4357
      %v4359 = vpop.f32.mrf.mxu0
      %4360 = vmatprep.mubr.bf16.mxu0 %v4022
      %4361 = vmatmul.mubr.bf16.gmra.mxu0 %v3914
      %v4362 = vpop.f32.mrf.mxu0
      %v4363 = vadd.f32 %v4127, %v4362
      %v4364 = vpop.f32.mrf.mxu0
      %v4365 = vpop.f32.mrf.mxu0
      %v4366 = vadd.f32 %v4130, %v4365
      %v4367 = vpop.f32.mrf.mxu0
      %4368 = vmatprep.mubr.bf16.mxu0 %v4025
      %4369 = vmatmul.mubr.bf16.gmra.mxu0 %v3916
      %v4370 = vpop.f32.mrf.mxu0
      %v4371 = vadd.f32 %v4135, %v4370
      %v4372 = vpop.f32.mrf.mxu0
      %v4373 = vpop.f32.mrf.mxu0
      %v4374 = vadd.f32 %v4138, %v4373
      %v4375 = vpop.f32.mrf.mxu0
      %4376 = vmatprep.mubr.bf16.mxu0 %v4028
      %4377 = vmatmul.mubr.bf16.gmra.mxu0 %v3918
      %v4378 = vpop.f32.mrf.mxu0
      %v4379 = vadd.f32 %v4143, %v4378
      %v4380 = vpop.f32.mrf.mxu0
      %v4381 = vpop.f32.mrf.mxu0
      %v4382 = vadd.f32 %v4146, %v4381
      %v4383 = vpop.f32.mrf.mxu0
      %4384 = vmatprep.mubr.bf16.mxu0 %v4031
      %4385 = vmatmul.mubr.bf16.gmra.mxu0 %v3920
      %v4386 = vpop.f32.mrf.mxu0
      %v4387 = vadd.f32 %v4151, %v4386
      %v4388 = vpop.f32.mrf.mxu0
      %v4389 = vpop.f32.mrf.mxu0
      %v4390 = vadd.f32 %v4154, %v4389
      %v4391 = vpop.f32.mrf.mxu0
      %4392 = vmatprep.mubr.bf16.mxu0 %v4034
      %4393 = vmatmul.mubr.bf16.gmra.mxu0 %v3922
      %v4394 = vpop.f32.mrf.mxu0
      %v4395 = vadd.f32 %v4159, %v4394
      %v4396 = vpop.f32.mrf.mxu0
      %v4397 = vpop.f32.mrf.mxu0
      %v4398 = vadd.f32 %v4162, %v4397
      %v4399 = vpop.f32.mrf.mxu0
      %4400 = vmatprep.mubr.bf16.mxu0 %v4037
      %4401 = vmatmul.mubr.bf16.gmra.mxu0 %v3924
      %v4402 = vpop.f32.mrf.mxu0
      %v4403 = vadd.f32 %v4167, %v4402
      %v4404 = vpop.f32.mrf.mxu0
      %v4405 = vpop.f32.mrf.mxu0
      %v4406 = vadd.f32 %v4170, %v4405
      %v4407 = vpop.f32.mrf.mxu0
      %4408 = vmatprep.mubr.bf16.mxu0 %v4040
      %4409 = vmatmul.mubr.bf16.gmra.mxu0 %v3926
      %v4410 = vpop.f32.mrf.mxu0
      %v4411 = vadd.f32 %v4175, %v4410
      %v4412 = vpop.f32.mrf.mxu0
      %v4413 = vpop.f32.mrf.mxu0
      %v4414 = vadd.f32 %v4178, %v4413
      %v4415 = vpop.f32.mrf.mxu0
      %4416 = vmatprep.mubr.bf16.mxu0 %v4043
      %4417 = vmatmul.mubr.bf16.gmra.mxu0 %v3928
      %v4418 = vpop.f32.mrf.mxu0
      %v4419 = vadd.f32 %v4183, %v4418
      %v4420 = vpop.f32.mrf.mxu0
      %v4421 = vpop.f32.mrf.mxu0
      %v4422 = vadd.f32 %v4186, %v4421
      %v4423 = vpop.f32.mrf.mxu0
      %4424 = vmatprep.mubr.bf16.mxu0 %v4046
      %4425 = vmatmul.mubr.bf16.gmra.mxu0 %v3930
      %v4426 = vpop.f32.mrf.mxu0
      %v4427 = vadd.f32 %v4191, %v4426
      %v4428 = vpop.f32.mrf.mxu0
      %v4429 = vpop.f32.mrf.mxu0
      %v4430 = vadd.f32 %v4194, %v4429
      %v4431 = vpop.f32.mrf.mxu0
      %4432 = vmatprep.mubr.bf16.mxu0 %v4049
      %4433 = vmatmul.mubr.bf16.gmra.mxu0 %v3932
      %v4434 = vpop.f32.mrf.mxu0
      %v4435 = vadd.f32 %v4199, %v4434
      %v4436 = vpop.f32.mrf.mxu0
      %v4437 = vpop.f32.mrf.mxu0
      %v4438 = vadd.f32 %v4202, %v4437
      %v4439 = vpop.f32.mrf.mxu0
      %4440 = vmatprep.mubr.bf16.mxu0 %v4052
      %4441 = vmatmul.mubr.bf16.gmra.mxu0 %v3934
      %v4442 = vpop.f32.mrf.mxu0
      %v4443 = vadd.f32 %v4207, %v4442
      %v4444 = vpop.f32.mrf.mxu0
      %v4445 = vpop.f32.mrf.mxu0
      %v4446 = vadd.f32 %v4210, %v4445
      %v4447 = vpop.f32.mrf.mxu0
      %4448 = vmatprep.mubr.bf16.mxu0 %v4055
      %4449 = vmatmul.mubr.bf16.gmra.mxu0 %v3936
      %v4450 = vpop.f32.mrf.mxu0
      %v4451 = vadd.f32 %v4215, %v4450
      %v4452 = vpop.f32.mrf.mxu0
      %v4453 = vpop.f32.mrf.mxu0
      %v4454 = vadd.f32 %v4218, %v4453
      %v4455 = vpop.f32.mrf.mxu0
      %4456 = vdwg.mxu0
      %v4457 = vpack.c.bf16 %v3905, %v3904
      %v4458 = vpack.c.bf16 %v3833, %v3831
      %v4483 = vunpack.c.l.b16 %v3412
      %v4484 = vunpack.c.l.b16 %v3413
      %v4485 = vunpack.c.l.b16 %v3414
      %v4486 = vunpack.c.l.b16 %v3415
      %v4487 = vunpack.c.l.b16 %v3416
      %v4488 = vunpack.c.l.b16 %v3417
      %v4489 = vunpack.c.l.b16 %v3418
      %v4490 = vunpack.c.l.b16 %v3419
      %v4491 = vunpack.c.l.b16 %v3420
      %v4492 = vunpack.c.l.b16 %v3421
      %v4493 = vunpack.c.l.b16 %v3422
      %v4494 = vunpack.c.l.b16 %v3423
      %v4495 = vunpack.c.l.b16 %v3424
      %v4496 = vunpack.c.l.b16 %v3425
      %v4497 = vunpack.c.l.b16 %v3426
      %v4498 = vunpack.c.l.b16 %v3427
      %v4499 = vunpack.c.l.b16 %v3428
      %v4500 = vunpack.c.l.b16 %v3429
      %v4501 = vunpack.c.l.b16 %v3430
      %v4502 = vunpack.c.l.b16 %v3431
      %v4503 = vunpack.c.l.b16 %v3432
      %v4504 = vunpack.c.l.b16 %v3433
      %v4505 = vunpack.c.l.b16 %v3434
      %v4506 = vunpack.c.l.b16 %v3435
      %v4507 = vpack.c.b16 %v4484, %v4483
      %v4508 = vpack.c.b16 %v4486, %v4485
      %v4509 = vpack.c.b16 %v4488, %v4487
      %v4510 = vpack.c.b16 %v4490, %v4489
      %v4511 = vpack.c.b16 %v4492, %v4491
      %v4512 = vpack.c.b16 %v4494, %v4493
      %v4513 = vpack.c.b16 %v4496, %v4495
      %v4514 = vpack.c.b16 %v4498, %v4497
      %v4515 = vpack.c.b16 %v4500, %v4499
      %v4516 = vpack.c.b16 %v4502, %v4501
      %v4517 = vpack.c.b16 %v4504, %v4503
      %v4518 = vpack.c.b16 %v4506, %v4505
      %v4532 = vsel %vm380, %v4458, 0
      %4534 = vmatprep.subr.bf16.mxu0 0
      %4535 = vmatpush1.bf16.msra.mxu0 %v4514
      %4536 = vmatprep.subr.bf16.mxu0 0
      %4537 = vmatpush1.bf16.msra.mxu0 %v4513
      %4538 = vmatprep.subr.bf16.mxu0 0
      %4539 = vmatpush1.bf16.msra.mxu0 %v4512
      %4540 = vmatprep.subr.bf16.mxu0 0
      %4541 = vmatpush1.bf16.msra.mxu0 %v4511
      %4542 = vmatprep.subr.bf16.mxu0 0
      %4543 = vmatpush1.bf16.msra.mxu0 %v4510
      %4544 = vmatprep.subr.bf16.mxu0 0
      %4545 = vmatpush1.bf16.msra.mxu0 %v4509
      %4546 = vmatprep.subr.bf16.mxu0 0
      %4547 = vmatpush1.bf16.msra.mxu0 %v4508
      %4548 = vmatprep.subr.bf16.mxu0 0
      %4549 = vmatpush1.bf16.msra.mxu0 %v4507
      %4550 = vmatprep.subr.bf16.mxu0 0
      %4551 = vmatpush2.bf16.msra.mxu0 0
      %4552 = vmatprep.subr.bf16.mxu0 0
      %4553 = vmatpush2.bf16.msra.mxu0 0
      %4554 = vmatprep.subr.bf16.mxu0 0
      %4555 = vmatpush2.bf16.msra.mxu0 0
      %4556 = vmatprep.subr.bf16.mxu0 0
      %4557 = vmatpush2.bf16.msra.mxu0 0
      %4558 = vmatprep.subr.bf16.mxu0 0
      %4559 = vmatpush2.bf16.msra.mxu0 %v4518
      %4560 = vmatprep.subr.bf16.mxu0 0
      %4561 = vmatpush2.bf16.msra.mxu0 %v4517
      %4562 = vmatprep.subr.bf16.mxu0 0
      %4563 = vmatpush2.bf16.msra.mxu0 %v4516
      %4564 = vmatprep.subr.bf16.mxu0 0
      %4565 = vmatpush2.bf16.msra.mxu0 %v4515
      %4566 = vmatprep.mubr.bf16.mxu0 %v4016
      %4567 = vmatmul.mubr.bf16.gmra.mxu0 %v3910
      %v4568 = vpop.f32.mrf.mxu0
      %v4569 = vadd.f32 0.0, %v4568
      %v4570 = vpop.f32.mrf.mxu0
      %v4571 = vpop.f32.mrf.mxu0
      %v4572 = vadd.f32 0.0, %v4571
      %v4573 = vpop.f32.mrf.mxu0
      %4574 = vmatprep.mubr.bf16.mxu0 %v4019
      %4575 = vmatmul.mubr.bf16.gmra.mxu0 %v3912
      %v4576 = vpop.f32.mrf.mxu0
      %v4577 = vadd.f32 0.0, %v4576
      %v4578 = vpop.f32.mrf.mxu0
      %v4579 = vpop.f32.mrf.mxu0
      %v4580 = vadd.f32 0.0, %v4579
      %v4581 = vpop.f32.mrf.mxu0
      %4582 = vmatprep.mubr.bf16.mxu0 %v4022
      %4583 = vmatmul.mubr.bf16.gmra.mxu0 %v3914
      %v4584 = vpop.f32.mrf.mxu0
      %v4585 = vadd.f32 0.0, %v4584
      %v4586 = vpop.f32.mrf.mxu0
      %v4587 = vpop.f32.mrf.mxu0
      %v4588 = vadd.f32 0.0, %v4587
      %v4589 = vpop.f32.mrf.mxu0
      %4590 = vmatprep.mubr.bf16.mxu0 %v4025
      %4591 = vmatmul.mubr.bf16.gmra.mxu0 %v3916
      %v4592 = vpop.f32.mrf.mxu0
      %v4593 = vadd.f32 0.0, %v4592
      %v4594 = vpop.f32.mrf.mxu0
      %v4595 = vpop.f32.mrf.mxu0
      %v4596 = vadd.f32 0.0, %v4595
      %v4597 = vpop.f32.mrf.mxu0
      %4598 = vmatprep.mubr.bf16.mxu0 %v4028
      %4599 = vmatmul.mubr.bf16.gmra.mxu0 %v3918
      %v4600 = vpop.f32.mrf.mxu0
      %v4601 = vadd.f32 0.0, %v4600
      %v4602 = vpop.f32.mrf.mxu0
      %v4603 = vpop.f32.mrf.mxu0
      %v4604 = vadd.f32 0.0, %v4603
      %v4605 = vpop.f32.mrf.mxu0
      %4606 = vmatprep.mubr.bf16.mxu0 %v4031
      %4607 = vmatmul.mubr.bf16.gmra.mxu0 %v3920
      %v4608 = vpop.f32.mrf.mxu0
      %v4609 = vadd.f32 0.0, %v4608
      %v4610 = vpop.f32.mrf.mxu0
      %v4611 = vpop.f32.mrf.mxu0
      %v4612 = vadd.f32 0.0, %v4611
      %v4613 = vpop.f32.mrf.mxu0
      %4614 = vmatprep.mubr.bf16.mxu0 %v4034
      %4615 = vmatmul.mubr.bf16.gmra.mxu0 %v3922
      %v4616 = vpop.f32.mrf.mxu0
      %v4617 = vadd.f32 0.0, %v4616
      %v4618 = vpop.f32.mrf.mxu0
      %v4619 = vpop.f32.mrf.mxu0
      %v4620 = vadd.f32 0.0, %v4619
      %v4621 = vpop.f32.mrf.mxu0
      %4622 = vmatprep.mubr.bf16.mxu0 %v4037
      %4623 = vmatmul.mubr.bf16.gmra.mxu0 %v3924
      %v4624 = vpop.f32.mrf.mxu0
      %v4625 = vadd.f32 0.0, %v4624
      %v4626 = vpop.f32.mrf.mxu0
      %v4627 = vpop.f32.mrf.mxu0
      %v4628 = vadd.f32 0.0, %v4627
      %v4629 = vpop.f32.mrf.mxu0
      %4630 = vmatprep.mubr.bf16.mxu0 %v4040
      %4631 = vmatmul.mubr.bf16.gmra.mxu0 %v3926
      %v4632 = vpop.f32.mrf.mxu0
      %v4633 = vadd.f32 0.0, %v4632
      %v4634 = vpop.f32.mrf.mxu0
      %v4635 = vpop.f32.mrf.mxu0
      %v4636 = vadd.f32 0.0, %v4635
      %v4637 = vpop.f32.mrf.mxu0
      %4638 = vmatprep.mubr.bf16.mxu0 %v4043
      %4639 = vmatmul.mubr.bf16.gmra.mxu0 %v3928
      %v4640 = vpop.f32.mrf.mxu0
      %v4641 = vadd.f32 0.0, %v4640
      %v4642 = vpop.f32.mrf.mxu0
      %v4643 = vpop.f32.mrf.mxu0
      %v4644 = vadd.f32 0.0, %v4643
      %v4645 = vpop.f32.mrf.mxu0
      %4646 = vmatprep.mubr.bf16.mxu0 %v4046
      %4647 = vmatmul.mubr.bf16.gmra.mxu0 %v3930
      %v4648 = vpop.f32.mrf.mxu0
      %v4649 = vadd.f32 0.0, %v4648
      %v4650 = vpop.f32.mrf.mxu0
      %v4651 = vpop.f32.mrf.mxu0
      %v4652 = vadd.f32 0.0, %v4651
      %v4653 = vpop.f32.mrf.mxu0
      %4654 = vmatprep.mubr.bf16.mxu0 %v4049
      %4655 = vmatmul.mubr.bf16.gmra.mxu0 %v3932
      %v4656 = vpop.f32.mrf.mxu0
      %v4657 = vadd.f32 0.0, %v4656
      %v4658 = vpop.f32.mrf.mxu0
      %v4659 = vpop.f32.mrf.mxu0
      %v4660 = vadd.f32 0.0, %v4659
      %v4661 = vpop.f32.mrf.mxu0
      %4662 = vmatprep.mubr.bf16.mxu0 %v4052
      %4663 = vmatmul.mubr.bf16.gmra.mxu0 %v3934
      %v4664 = vpop.f32.mrf.mxu0
      %v4665 = vadd.f32 0.0, %v4664
      %v4666 = vpop.f32.mrf.mxu0
      %v4667 = vpop.f32.mrf.mxu0
      %v4668 = vadd.f32 0.0, %v4667
      %v4669 = vpop.f32.mrf.mxu0
      %4670 = vmatprep.mubr.bf16.mxu0 %v4055
      %4671 = vmatmul.mubr.bf16.gmra.mxu0 %v3936
      %v4672 = vpop.f32.mrf.mxu0
      %v4673 = vadd.f32 0.0, %v4672
      %v4674 = vpop.f32.mrf.mxu0
      %v4675 = vpop.f32.mrf.mxu0
      %v4676 = vadd.f32 0.0, %v4675
      %v4677 = vpop.f32.mrf.mxu0
      %4678 = vmatprep.mubr.bf16.mxu0 %v4058
      %4679 = vmatmul.mubr.bf16.gmra.mxu0 %v3938
      %v4680 = vpop.f32.mrf.mxu0
      %v4681 = vadd.f32 0.0, %v4680
      %v4682 = vpop.f32.mrf.mxu0
      %v4683 = vpop.f32.mrf.mxu0
      %v4684 = vadd.f32 0.0, %v4683
      %v4685 = vpop.f32.mrf.mxu0
      %4686 = vmatprep.mubr.bf16.mxu0 %v4532
      %4687 = vmatmul.mubr.bf16.gmra.mxu0 %v4457
      %v4688 = vpop.f32.mrf.mxu0
      %v4689 = vadd.f32 0.0, %v4688
      %v4690 = vpop.f32.mrf.mxu0
      %v4691 = vpop.f32.mrf.mxu0
      %v4692 = vadd.f32 0.0, %v4691
      %v4693 = vpop.f32.mrf.mxu0
      %4694 = vdwg.mxu0
      %v4695 = vadd.f32 %v4331, %v4569
      %v4696 = vadd.f32 %v4334, %v4572
      %v4697 = vadd.f32 %v4339, %v4577
      %v4698 = vadd.f32 %v4342, %v4580
      %v4699 = vadd.f32 %v4347, %v4585
      %v4700 = vadd.f32 %v4350, %v4588
      %v4701 = vadd.f32 %v4355, %v4593
      %v4702 = vadd.f32 %v4358, %v4596
      %v4703 = vadd.f32 %v4363, %v4601
      %v4704 = vadd.f32 %v4366, %v4604
      %v4705 = vadd.f32 %v4371, %v4609
      %v4706 = vadd.f32 %v4374, %v4612
      %v4707 = vadd.f32 %v4379, %v4617
      %v4708 = vadd.f32 %v4382, %v4620
      %v4709 = vadd.f32 %v4387, %v4625
      %v4710 = vadd.f32 %v4390, %v4628
      %v4711 = vadd.f32 %v4395, %v4633
      %v4712 = vadd.f32 %v4398, %v4636
      %v4713 = vadd.f32 %v4403, %v4641
      %v4714 = vadd.f32 %v4406, %v4644
      %v4715 = vadd.f32 %v4411, %v4649
      %v4716 = vadd.f32 %v4414, %v4652
      %v4717 = vadd.f32 %v4419, %v4657
      %v4718 = vadd.f32 %v4422, %v4660
      %v4719 = vadd.f32 %v4427, %v4665
      %v4720 = vadd.f32 %v4430, %v4668
      %v4721 = vadd.f32 %v4435, %v4673
      %v4722 = vadd.f32 %v4438, %v4676
      %v4723 = vadd.f32 %v4443, %v4681
      %v4724 = vadd.f32 %v4446, %v4684
      %v4725 = vadd.f32 %v4451, %v4689
      %v4726 = vadd.f32 %v4454, %v4692
      %v4728 = vlaneseq
      %v4729 = vshrl.u32 %v4728, 7
      %v4730 = vsub.s32 0, %v4729
      %v4731 = vrot.slane %v3437, %v4730
      %v4733 = vadd.f32 %v4695, %v4731
      %v4734 = vadd.f32 %v4696, %v4731
      %v4735 = vadd.f32 %v4697, %v4731
      %v4736 = vadd.f32 %v4698, %v4731
      %v4737 = vadd.f32 %v4699, %v4731
      %v4738 = vadd.f32 %v4700, %v4731
      %v4739 = vadd.f32 %v4701, %v4731
      %v4740 = vadd.f32 %v4702, %v4731
      %v4741 = vadd.f32 %v4703, %v4731
      %v4742 = vadd.f32 %v4704, %v4731
      %v4743 = vadd.f32 %v4705, %v4731
      %v4744 = vadd.f32 %v4706, %v4731
      %v4745 = vadd.f32 %v4707, %v4731
      %v4746 = vadd.f32 %v4708, %v4731
      %v4747 = vadd.f32 %v4709, %v4731
      %v4748 = vadd.f32 %v4710, %v4731
      %v4749 = vadd.f32 %v4711, %v4731
      %v4750 = vadd.f32 %v4712, %v4731
      %v4751 = vadd.f32 %v4713, %v4731
      %v4752 = vadd.f32 %v4714, %v4731
      %v4753 = vadd.f32 %v4715, %v4731
      %v4754 = vadd.f32 %v4716, %v4731
      %v4755 = vadd.f32 %v4717, %v4731
      %v4756 = vadd.f32 %v4718, %v4731
      %v4757 = vadd.f32 %v4719, %v4731
      %v4758 = vadd.f32 %v4720, %v4731
      %v4759 = vadd.f32 %v4721, %v4731
      %v4760 = vadd.f32 %v4722, %v4731
      %v4761 = vadd.f32 %v4723, %v4731
      %v4762 = vadd.f32 %v4724, %v4731
      %v4763 = vadd.f32 %v4725, %v4731
      %v4764 = vadd.f32 %v4726, %v4731
      %v4765 = vmax.f32 %v4733, 0.0
      %v4766 = vmax.f32 %v4734, 0.0
      %v4767 = vmax.f32 %v4735, 0.0
      %v4768 = vmax.f32 %v4736, 0.0
      %v4769 = vmax.f32 %v4737, 0.0
      %v4770 = vmax.f32 %v4738, 0.0
      %v4771 = vmax.f32 %v4739, 0.0
      %v4772 = vmax.f32 %v4740, 0.0
      %v4773 = vmax.f32 %v4741, 0.0
      %v4774 = vmax.f32 %v4742, 0.0
      %v4775 = vmax.f32 %v4743, 0.0
      %v4776 = vmax.f32 %v4744, 0.0
      %v4777 = vmax.f32 %v4745, 0.0
      %v4778 = vmax.f32 %v4746, 0.0
      %v4779 = vmax.f32 %v4747, 0.0
      %v4780 = vmax.f32 %v4748, 0.0
      %v4781 = vmax.f32 %v4749, 0.0
      %v4782 = vmax.f32 %v4750, 0.0
      %v4783 = vmax.f32 %v4751, 0.0
      %v4784 = vmax.f32 %v4752, 0.0
      %v4785 = vmax.f32 %v4753, 0.0
      %v4786 = vmax.f32 %v4754, 0.0
      %v4787 = vmax.f32 %v4755, 0.0
      %v4788 = vmax.f32 %v4756, 0.0
      %v4789 = vmax.f32 %v4757, 0.0
      %v4790 = vmax.f32 %v4758, 0.0
      %v4791 = vmax.f32 %v4759, 0.0
      %v4792 = vmax.f32 %v4760, 0.0
      %v4793 = vmax.f32 %v4761, 0.0
      %v4794 = vmax.f32 %v4762, 0.0
      %v4795 = vmax.f32 %v4763, 0.0
      %v4796 = vmax.f32 %v4764, 0.0
      %4797 = vst.msk [vmem:[%s1865 + $0x1] sm:$0xff] %vm380, %v4765
      %4798 = vst.msk [vmem:[%s1865 + $0x9] sm:$0xff] %vm380, %v4766
      %4799 = vst.msk [vmem:[%s1865 + $0x19] sm:$0xff] %vm380, %v4767
      %4800 = vst.msk [vmem:[%s1865 + $0x21] sm:$0xff] %vm380, %v4768
      %4801 = vst.msk [vmem:[%s1865 + $0x31] sm:$0xff] %vm380, %v4769
      %4802 = vst.msk [vmem:[%s1865 + $0x39] sm:$0xff] %vm380, %v4770
      %4803 = vst.msk [vmem:[%s1865 + $0x49] sm:$0xff] %vm380, %v4771
      %4804 = vst.msk [vmem:[%s1865 + $0x51] sm:$0xff] %vm380, %v4772
      %4805 = vst.msk [vmem:[%s1865 + $0x61] sm:$0xff] %vm380, %v4773
      %4806 = vst.msk [vmem:[%s1865 + $0x69] sm:$0xff] %vm380, %v4774
      %4807 = vst.msk [vmem:[%s1865 + $0x79] sm:$0xff] %vm380, %v4775
      %4808 = vst.msk [vmem:[%s1865 + $0x81] sm:$0xff] %vm380, %v4776
      %4809 = vst.msk [vmem:[%s1865 + $0x91] sm:$0xff] %vm380, %v4777
      %4810 = vst.msk [vmem:[%s1865 + $0x99] sm:$0xff] %vm380, %v4778
      %4811 = vst.msk [vmem:[%s1865 + $0xa9] sm:$0xff] %vm380, %v4779
      %4812 = vst.msk [vmem:[%s1865 + $0xb1] sm:$0xff] %vm380, %v4780
      %4813 = vst.msk [vmem:[%s1865 + $0xc1] sm:$0xff] %vm380, %v4781
      %4814 = vst.msk [vmem:[%s1865 + $0xc9] sm:$0xff] %vm380, %v4782
      %4815 = vst.msk [vmem:[%s1865 + $0xd9] sm:$0xff] %vm380, %v4783
      %4816 = vst.msk [vmem:[%s1865 + $0xe1] sm:$0xff] %vm380, %v4784
      %4817 = vst.msk [vmem:[%s1865 + $0xf1] sm:$0xff] %vm380, %v4785
      %4818 = vst.msk [vmem:[%s1865 + $0xf9] sm:$0xff] %vm380, %v4786
      %4819 = vst.msk [vmem:[%s1865 + $0x109] sm:$0xff] %vm380, %v4787
      %4820 = vst.msk [vmem:[%s1865 + $0x111] sm:$0xff] %vm380, %v4788
      %4821 = vst.msk [vmem:[%s1865 + $0x121] sm:$0xff] %vm380, %v4789
      %4822 = vst.msk [vmem:[%s1865 + $0x129] sm:$0xff] %vm380, %v4790
      %4823 = vst.msk [vmem:[%s1865 + $0x139] sm:$0xff] %vm380, %v4791
      %4824 = vst.msk [vmem:[%s1865 + $0x141] sm:$0xff] %vm380, %v4792
      %4825 = vst.msk [vmem:[%s1865 + $0x151] sm:$0xff] %vm380, %v4793
      %4826 = vst.msk [vmem:[%s1865 + $0x159] sm:$0xff] %vm380, %v4794
      %4827 = vst.msk [vmem:[%s1865 + $0x169] sm:$0xff] %vm380, %v4795
      %4828 = vst.msk [vmem:[%s1865 + $0x171] sm:$0xff] %vm380, %v4796
      %s4829 = scalar_lea.vmem %s3, 576
      %v4830 = vld [vmem:[%s4829] sm:$0xf]
      %v4831 = vld [vmem:[%s4829 + $0x4] sm:$0xf]
      %v4832 = vld [vmem:[%s4829 + $0x8] sm:$0xf]
      %v4833 = vld [vmem:[%s4829 + $0xc] sm:$0xf]
      %v4834 = vld [vmem:[%s4829 + $0x10] sm:$0xf]
      %v4835 = vld [vmem:[%s4829 + $0x14] sm:$0xf]
      %v4836 = vld [vmem:[%s4829 + $0x18] sm:$0xf]
      %v4837 = vld [vmem:[%s4829 + $0x1c] sm:$0xf]
      %v4838 = vld [vmem:[%s4829 + $0x20] sm:$0xf]
      %v4839 = vld [vmem:[%s4829 + $0x24] sm:$0xf]
      %v4840 = vld [vmem:[%s4829 + $0x28] sm:$0xf]
      %v4841 = vld [vmem:[%s4829 + $0x2c] sm:$0xf]
      %v4842 = vld [vmem:[%s4829 + $0x30] sm:$0xf]
      %v4843 = vld [vmem:[%s4829 + $0x34] sm:$0xf]
      %v4844 = vld [vmem:[%s4829 + $0x38] sm:$0xf]
      %v4845 = vld [vmem:[%s4829 + $0x3c] sm:$0xf]
      %v4846 = vld [vmem:[%s4829 + $0x40] sm:$0xf]
      %v4847 = vld [vmem:[%s4829 + $0x44] sm:$0xf]
      %v4848 = vld [vmem:[%s4829 + $0x48] sm:$0xf]
      %v4849 = vld [vmem:[%s4829 + $0x4c] sm:$0xf]
      %v4850 = vld [vmem:[%s4829 + $0x50] sm:$0xf]
      %v4851 = vld [vmem:[%s4829 + $0x54] sm:$0xf]
      %v4852 = vld [vmem:[%s4829 + $0x58] sm:$0xf]
      %v4853 = vld [vmem:[%s4829 + $0x5c] sm:$0xf]
      %v4854 = vld [vmem:[%s4829 + $0x60] sm:$0xf]
      %v4855 = vld [vmem:[%s4829 + $0x64] sm:$0xf]
      %v4856 = vld [vmem:[%s4829 + $0x68] sm:$0xf]
      %v4857 = vld [vmem:[%s4829 + $0x6c] sm:$0xf]
      %v4858 = vld [vmem:[%s4829 + $0x70] sm:$0xf]
      %v4859 = vld [vmem:[%s4829 + $0x74] sm:$0xf]
      %v4860 = vld [vmem:[%s4829 + $0x78] sm:$0xf]
      %v4861 = vld [vmem:[%s4829 + $0x7c] sm:$0xf]
      %v4862 = vld [vmem:[%s4829 + $0x80] sm:$0xf]
      %v4863 = vld [vmem:[%s4829 + $0x84] sm:$0xf]
      %v4864 = vld [vmem:[%s4829 + $0x88] sm:$0xf]
      %v4865 = vld [vmem:[%s4829 + $0x8c] sm:$0xf]
      %v4866 = vld [vmem:[%s4829 + $0x90] sm:$0xf]
      %v4867 = vld [vmem:[%s4829 + $0x94] sm:$0xf]
      %v4868 = vld [vmem:[%s4829 + $0x98] sm:$0xf]
      %v4869 = vld [vmem:[%s4829 + $0x9c] sm:$0xf]
      %v4870 = vld [vmem:[%s4829 + $0xa0] sm:$0xf]
      %v4871 = vld [vmem:[%s4829 + $0xa4] sm:$0xf]
      %v4872 = vld [vmem:[%s4829 + $0xa8] sm:$0xf]
      %v4873 = vld [vmem:[%s4829 + $0xac] sm:$0xf]
      %v4874 = vld [vmem:[%s4829 + $0xb0] sm:$0xf]
      %v4875 = vld [vmem:[%s4829 + $0xb4] sm:$0xf]
      %v4876 = vld [vmem:[%s4829 + $0xb8] sm:$0xf]
      %v4877 = vld [vmem:[%s4829 + $0xbc] sm:$0xf]
      %v4878 = vld [vmem:[%s4829 + $0xc0] sm:$0xf]
      %v4879 = vld [vmem:[%s4829 + $0xc4] sm:$0xf]
      %v4880 = vld [vmem:[%s4829 + $0xc8] sm:$0xf]
      %v4881 = vld [vmem:[%s4829 + $0xcc] sm:$0xf]
      %v4882 = vld [vmem:[%s4829 + $0xd0] sm:$0xf]
      %v4883 = vld [vmem:[%s4829 + $0xd4] sm:$0xf]
      %v4884 = vld [vmem:[%s4829 + $0xd8] sm:$0xf]
      %v4885 = vld [vmem:[%s4829 + $0xdc] sm:$0xf]
      %v4886 = vld [vmem:[%s4829 + $0xe0] sm:$0xf]
      %v4887 = vld [vmem:[%s4829 + $0xe4] sm:$0xf]
      %v4888 = vld [vmem:[%s4829 + $0xe8] sm:$0xf]
      %v4889 = vld [vmem:[%s4829 + $0xec] sm:$0xf]
      %v4890 = vld [vmem:[%s4829 + $0xf0] sm:$0xf]
      %v4891 = vld [vmem:[%s4829 + $0xf4] sm:$0xf]
      %v4892 = vld [vmem:[%s4829 + $0xf8] sm:$0xf]
      %v4893 = vld [vmem:[%s4829 + $0xfc] sm:$0xf]
      %v4894 = vld [vmem:[%s4829 + $0x100] sm:$0xf]
      %v4895 = vld [vmem:[%s4829 + $0x104] sm:$0xf]
      %v4896 = vld [vmem:[%s4829 + $0x108] sm:$0xf]
      %v4897 = vld [vmem:[%s4829 + $0x10c] sm:$0xf]
      %v4898 = vld [vmem:[%s4829 + $0x110] sm:$0xf]
      %v4899 = vld [vmem:[%s4829 + $0x114] sm:$0xf]
      %v4900 = vld [vmem:[%s4829 + $0x118] sm:$0xf]
      %v4901 = vld [vmem:[%s4829 + $0x11c] sm:$0xf]
      %s4902 = scalar_lea.vmem %s4, 2
      %v4903 = vld [vmem:[%s4902] sm:$0x1]
      %v4904 = vld [vmem:[#allocation3] sm:$0xff]
      %v4905 = vld [vmem:[#allocation3 + $0x8] sm:$0xff]
      %v4906 = vld [vmem:[#allocation3 + $0x10] sm:$0x3]
      %v4907 = vld [vmem:[#allocation3 + $0x18] sm:$0xff]
      %v4908 = vld [vmem:[#allocation3 + $0x20] sm:$0xff]
      %v4909 = vld [vmem:[#allocation3 + $0x28] sm:$0x3]
      %v4910 = vld [vmem:[#allocation3 + $0x30] sm:$0xff]
      %v4911 = vld [vmem:[#allocation3 + $0x38] sm:$0xff]
      %v4912 = vld [vmem:[#allocation3 + $0x40] sm:$0x3]
      %v4913 = vld [vmem:[#allocation3 + $0x48] sm:$0xff]
      %v4914 = vld [vmem:[#allocation3 + $0x50] sm:$0xff]
      %v4915 = vld [vmem:[#allocation3 + $0x58] sm:$0x3]
      %v4916 = vld [vmem:[#allocation3 + $0x60] sm:$0xff]
      %v4917 = vld [vmem:[#allocation3 + $0x68] sm:$0xff]
      %v4918 = vld [vmem:[#allocation3 + $0x70] sm:$0x3]
      %v4919 = vld [vmem:[#allocation3 + $0x78] sm:$0xff]
      %v4920 = vld [vmem:[#allocation3 + $0x80] sm:$0xff]
      %v4921 = vld [vmem:[#allocation3 + $0x88] sm:$0x3]
      %v4922 = vld [vmem:[#allocation3 + $0x90] sm:$0xff]
      %v4923 = vld [vmem:[#allocation3 + $0x98] sm:$0xff]
      %v4924 = vld [vmem:[#allocation3 + $0xa0] sm:$0x3]
      %v4925 = vld [vmem:[#allocation3 + $0xa8] sm:$0xff]
      %v4926 = vld [vmem:[#allocation3 + $0xb0] sm:$0xff]
      %v4927 = vld [vmem:[#allocation3 + $0xb8] sm:$0x3]
      %v4928 = vld [vmem:[#allocation3 + $0xc0] sm:$0xff]
      %v4929 = vld [vmem:[#allocation3 + $0xc8] sm:$0xff]
      %v4930 = vld [vmem:[#allocation3 + $0xd0] sm:$0x3]
      %v4931 = vld [vmem:[#allocation3 + $0xd8] sm:$0xff]
      %v4932 = vld [vmem:[#allocation3 + $0xe0] sm:$0xff]
      %v4933 = vld [vmem:[#allocation3 + $0xe8] sm:$0x3]
      %v4934 = vld [vmem:[#allocation3 + $0xf0] sm:$0xff]
      %v4935 = vld [vmem:[#allocation3 + $0xf8] sm:$0xff]
      %v4936 = vld [vmem:[#allocation3 + $0x100] sm:$0x3]
      %v4937 = vld [vmem:[#allocation3 + $0x108] sm:$0xff]
      %v4938 = vld [vmem:[#allocation3 + $0x110] sm:$0xff]
      %v4939 = vld [vmem:[#allocation3 + $0x118] sm:$0x3]
      %v4940 = vld [vmem:[#allocation3 + $0x120] sm:$0xff]
      %v4941 = vld [vmem:[#allocation3 + $0x128] sm:$0xff]
      %v4942 = vld [vmem:[#allocation3 + $0x130] sm:$0x3]
      %v4943 = vld [vmem:[#allocation3 + $0x138] sm:$0xff]
      %v4944 = vld [vmem:[#allocation3 + $0x140] sm:$0xff]
      %v4945 = vld [vmem:[#allocation3 + $0x148] sm:$0x3]
      %v4946 = vld [vmem:[#allocation3 + $0x150] sm:$0xff]
      %v4947 = vld [vmem:[#allocation3 + $0x158] sm:$0xff]
      %v4948 = vld [vmem:[#allocation3 + $0x160] sm:$0x3]
      %v4949 = vld [vmem:[#allocation3 + $0x168] sm:$0xff]
      %v4950 = vld [vmem:[#allocation3 + $0x170] sm:$0xff]
      %v4951 = vld [vmem:[#allocation3 + $0x178] sm:$0x3]
      %v4952 = vld [vmem:[#allocation3 + $0x180] sm:$0xff]
      %v4953 = vld [vmem:[#allocation3 + $0x188] sm:$0xff]
      %v4954 = vld [vmem:[#allocation3 + $0x190] sm:$0x3]
      %v4955 = vld [vmem:[#allocation3 + $0x198] sm:$0xff]
      %v4956 = vld [vmem:[#allocation3 + $0x1a0] sm:$0xff]
      %v4957 = vld [vmem:[#allocation3 + $0x1a8] sm:$0x3]
      %v5012 = vrot.slane %v4904, 1
      %v5013 = vrot.slane %v4905, 1
      %v5014 = vsel %vm682, %v5012, %v5013
      %v5015 = vrot.slane %v4906, 1
      %v5016 = vsel %vm682, %v5013, %v5015
      %v5017 = vrot.slane %v4907, 1
      %v5018 = vrot.slane %v4908, 1
      %v5019 = vsel %vm682, %v5017, %v5018
      %v5020 = vrot.slane %v4909, 1
      %v5021 = vsel %vm682, %v5018, %v5020
      %v5022 = vrot.slane %v4910, 1
      %v5023 = vrot.slane %v4911, 1
      %v5024 = vsel %vm682, %v5022, %v5023
      %v5025 = vrot.slane %v4912, 1
      %v5026 = vsel %vm682, %v5023, %v5025
      %v5027 = vrot.slane %v4913, 1
      %v5028 = vrot.slane %v4914, 1
      %v5029 = vsel %vm682, %v5027, %v5028
      %v5030 = vrot.slane %v4915, 1
      %v5031 = vsel %vm682, %v5028, %v5030
      %v5032 = vrot.slane %v4916, 1
      %v5033 = vrot.slane %v4917, 1
      %v5034 = vsel %vm682, %v5032, %v5033
      %v5035 = vrot.slane %v4918, 1
      %v5036 = vsel %vm682, %v5033, %v5035
      %v5037 = vrot.slane %v4919, 1
      %v5038 = vrot.slane %v4920, 1
      %v5039 = vsel %vm682, %v5037, %v5038
      %v5040 = vrot.slane %v4921, 1
      %v5041 = vsel %vm682, %v5038, %v5040
      %v5042 = vrot.slane %v4922, 1
      %v5043 = vrot.slane %v4923, 1
      %v5044 = vsel %vm682, %v5042, %v5043
      %v5045 = vrot.slane %v4924, 1
      %v5046 = vsel %vm682, %v5043, %v5045
      %v5047 = vrot.slane %v4925, 1
      %v5048 = vrot.slane %v4926, 1
      %v5049 = vsel %vm682, %v5047, %v5048
      %v5050 = vrot.slane %v4927, 1
      %v5051 = vsel %vm682, %v5048, %v5050
      %v5052 = vrot.slane %v4928, 1
      %v5053 = vrot.slane %v4929, 1
      %v5054 = vsel %vm682, %v5052, %v5053
      %v5055 = vrot.slane %v4930, 1
      %v5056 = vsel %vm682, %v5053, %v5055
      %v5057 = vrot.slane %v4931, 1
      %v5058 = vrot.slane %v4932, 1
      %v5059 = vsel %vm682, %v5057, %v5058
      %v5060 = vrot.slane %v4933, 1
      %v5061 = vsel %vm682, %v5058, %v5060
      %v5062 = vrot.slane %v4934, 1
      %v5063 = vrot.slane %v4935, 1
      %v5064 = vsel %vm682, %v5062, %v5063
      %v5065 = vrot.slane %v4936, 1
      %v5066 = vsel %vm682, %v5063, %v5065
      %v5067 = vrot.slane %v4937, 1
      %v5068 = vrot.slane %v4938, 1
      %v5069 = vsel %vm682, %v5067, %v5068
      %v5070 = vrot.slane %v4939, 1
      %v5071 = vsel %vm682, %v5068, %v5070
      %v5072 = vrot.slane %v4940, 1
      %v5073 = vrot.slane %v4941, 1
      %v5074 = vsel %vm682, %v5072, %v5073
      %v5075 = vrot.slane %v4942, 1
      %v5076 = vsel %vm682, %v5073, %v5075
      %v5077 = vrot.slane %v4943, 1
      %v5078 = vrot.slane %v4944, 1
      %v5079 = vsel %vm682, %v5077, %v5078
      %v5080 = vrot.slane %v4945, 1
      %v5081 = vsel %vm682, %v5078, %v5080
      %v5082 = vrot.slane %v4946, 1
      %v5083 = vrot.slane %v4947, 1
      %v5084 = vsel %vm682, %v5082, %v5083
      %v5085 = vrot.slane %v4948, 1
      %v5086 = vsel %vm682, %v5083, %v5085
      %v5087 = vrot.slane %v4949, 1
      %v5088 = vrot.slane %v4950, 1
      %v5089 = vsel %vm682, %v5087, %v5088
      %v5090 = vrot.slane %v4951, 1
      %v5091 = vsel %vm682, %v5088, %v5090
      %v5092 = vrot.slane %v4952, 1
      %v5093 = vrot.slane %v4953, 1
      %v5094 = vsel %vm682, %v5092, %v5093
      %v5095 = vrot.slane %v4954, 1
      %v5096 = vsel %vm682, %v5093, %v5095
      %v5097 = vrot.slane %v4955, 1
      %v5098 = vrot.slane %v4956, 1
      %v5099 = vsel %vm682, %v5097, %v5098
      %v5100 = vrot.slane %v4957, 1
      %v5101 = vsel %vm682, %v5098, %v5100
      %5102 = vrot.lane.b32.xlu0 %v5014, 64
      %v5103 = vpop.permute.xlu0 %5102
      %5104 = vrot.lane.b32.xlu0 %v5016, 64
      %v5105 = vpop.permute.xlu0 %5104
      %5106 = vrot.lane.b32.xlu0 %v5019, 64
      %v5107 = vpop.permute.xlu0 %5106
      %5108 = vrot.lane.b32.xlu0 %v5021, 64
      %v5109 = vpop.permute.xlu0 %5108
      %5110 = vrot.lane.b32.xlu0 %v5024, 64
      %v5111 = vpop.permute.xlu0 %5110
      %5112 = vrot.lane.b32.xlu0 %v5026, 64
      %v5113 = vpop.permute.xlu0 %5112
      %5114 = vrot.lane.b32.xlu0 %v5029, 64
      %v5115 = vpop.permute.xlu0 %5114
      %5116 = vrot.lane.b32.xlu0 %v5031, 64
      %v5117 = vpop.permute.xlu0 %5116
      %5118 = vrot.lane.b32.xlu0 %v5034, 64
      %v5119 = vpop.permute.xlu0 %5118
      %5120 = vrot.lane.b32.xlu0 %v5036, 64
      %v5121 = vpop.permute.xlu0 %5120
      %5122 = vrot.lane.b32.xlu0 %v5039, 64
      %v5123 = vpop.permute.xlu0 %5122
      %5124 = vrot.lane.b32.xlu0 %v5041, 64
      %v5125 = vpop.permute.xlu0 %5124
      %5126 = vrot.lane.b32.xlu0 %v5044, 64
      %v5127 = vpop.permute.xlu0 %5126
      %5128 = vrot.lane.b32.xlu0 %v5046, 64
      %v5129 = vpop.permute.xlu0 %5128
      %5130 = vrot.lane.b32.xlu0 %v5049, 64
      %v5131 = vpop.permute.xlu0 %5130
      %5132 = vrot.lane.b32.xlu0 %v5051, 64
      %v5133 = vpop.permute.xlu0 %5132
      %5134 = vrot.lane.b32.xlu0 %v5054, 64
      %v5135 = vpop.permute.xlu0 %5134
      %5136 = vrot.lane.b32.xlu0 %v5056, 64
      %v5137 = vpop.permute.xlu0 %5136
      %5138 = vrot.lane.b32.xlu0 %v5059, 64
      %v5139 = vpop.permute.xlu0 %5138
      %5140 = vrot.lane.b32.xlu0 %v5061, 64
      %v5141 = vpop.permute.xlu0 %5140
      %5142 = vrot.lane.b32.xlu0 %v5064, 64
      %v5143 = vpop.permute.xlu0 %5142
      %5144 = vrot.lane.b32.xlu0 %v5066, 64
      %v5145 = vpop.permute.xlu0 %5144
      %5146 = vrot.lane.b32.xlu0 %v5069, 64
      %v5147 = vpop.permute.xlu0 %5146
      %5148 = vrot.lane.b32.xlu0 %v5071, 64
      %v5149 = vpop.permute.xlu0 %5148
      %5150 = vrot.lane.b32.xlu0 %v5074, 64
      %v5151 = vpop.permute.xlu0 %5150
      %5152 = vrot.lane.b32.xlu0 %v5076, 64
      %v5153 = vpop.permute.xlu0 %5152
      %5154 = vrot.lane.b32.xlu0 %v5079, 64
      %v5155 = vpop.permute.xlu0 %5154
      %5156 = vrot.lane.b32.xlu0 %v5081, 64
      %v5157 = vpop.permute.xlu0 %5156
      %5158 = vrot.lane.b32.xlu0 %v5084, 64
      %v5159 = vpop.permute.xlu0 %5158
      %5160 = vrot.lane.b32.xlu0 %v5086, 64
      %v5161 = vpop.permute.xlu0 %5160
      %5162 = vrot.lane.b32.xlu0 %v5089, 64
      %v5163 = vpop.permute.xlu0 %5162
      %5164 = vrot.lane.b32.xlu0 %v5091, 64
      %v5165 = vpop.permute.xlu0 %5164
      %5166 = vrot.lane.b32.xlu0 %v5094, 64
      %v5167 = vpop.permute.xlu0 %5166
      %5168 = vrot.lane.b32.xlu0 %v5096, 64
      %v5169 = vpop.permute.xlu0 %5168
      %5170 = vrot.lane.b32.xlu0 %v5099, 64
      %v5171 = vpop.permute.xlu0 %5170
      %5172 = vrot.lane.b32.xlu0 %v5101, 64
      %v5173 = vpop.permute.xlu0 %5172
      %v5210 = vrot.slane %v4904, 2
      %v5211 = vrot.slane %v4905, 2
      %v5212 = vsel %vm881, %v5210, %v5211
      %v5213 = vrot.slane %v4906, 2
      %v5214 = vsel %vm881, %v5211, %v5213
      %v5215 = vrot.slane %v4907, 2
      %v5216 = vrot.slane %v4908, 2
      %v5217 = vsel %vm881, %v5215, %v5216
      %v5218 = vrot.slane %v4909, 2
      %v5219 = vsel %vm881, %v5216, %v5218
      %v5220 = vrot.slane %v4910, 2
      %v5221 = vrot.slane %v4911, 2
      %v5222 = vsel %vm881, %v5220, %v5221
      %v5223 = vrot.slane %v4912, 2
      %v5224 = vsel %vm881, %v5221, %v5223
      %v5225 = vrot.slane %v4913, 2
      %v5226 = vrot.slane %v4914, 2
      %v5227 = vsel %vm881, %v5225, %v5226
      %v5228 = vrot.slane %v4915, 2
      %v5229 = vsel %vm881, %v5226, %v5228
      %v5230 = vrot.slane %v4916, 2
      %v5231 = vrot.slane %v4917, 2
      %v5232 = vsel %vm881, %v5230, %v5231
      %v5233 = vrot.slane %v4918, 2
      %v5234 = vsel %vm881, %v5231, %v5233
      %v5235 = vrot.slane %v4919, 2
      %v5236 = vrot.slane %v4920, 2
      %v5237 = vsel %vm881, %v5235, %v5236
      %v5238 = vrot.slane %v4921, 2
      %v5239 = vsel %vm881, %v5236, %v5238
      %v5240 = vrot.slane %v4922, 2
      %v5241 = vrot.slane %v4923, 2
      %v5242 = vsel %vm881, %v5240, %v5241
      %v5243 = vrot.slane %v4924, 2
      %v5244 = vsel %vm881, %v5241, %v5243
      %v5245 = vrot.slane %v4925, 2
      %v5246 = vrot.slane %v4926, 2
      %v5247 = vsel %vm881, %v5245, %v5246
      %v5248 = vrot.slane %v4927, 2
      %v5249 = vsel %vm881, %v5246, %v5248
      %v5250 = vrot.slane %v4928, 2
      %v5251 = vrot.slane %v4929, 2
      %v5252 = vsel %vm881, %v5250, %v5251
      %v5253 = vrot.slane %v4930, 2
      %v5254 = vsel %vm881, %v5251, %v5253
      %v5255 = vrot.slane %v4931, 2
      %v5256 = vrot.slane %v4932, 2
      %v5257 = vsel %vm881, %v5255, %v5256
      %v5258 = vrot.slane %v4933, 2
      %v5259 = vsel %vm881, %v5256, %v5258
      %v5260 = vrot.slane %v4934, 2
      %v5261 = vrot.slane %v4935, 2
      %v5262 = vsel %vm881, %v5260, %v5261
      %v5263 = vrot.slane %v4936, 2
      %v5264 = vsel %vm881, %v5261, %v5263
      %v5265 = vrot.slane %v4937, 2
      %v5266 = vrot.slane %v4938, 2
      %v5267 = vsel %vm881, %v5265, %v5266
      %v5268 = vrot.slane %v4939, 2
      %v5269 = vsel %vm881, %v5266, %v5268
      %v5270 = vrot.slane %v4940, 2
      %v5271 = vrot.slane %v4941, 2
      %v5272 = vsel %vm881, %v5270, %v5271
      %v5273 = vrot.slane %v4942, 2
      %v5274 = vsel %vm881, %v5271, %v5273
      %v5275 = vrot.slane %v4943, 2
      %v5276 = vrot.slane %v4944, 2
      %v5277 = vsel %vm881, %v5275, %v5276
      %v5278 = vrot.slane %v4945, 2
      %v5279 = vsel %vm881, %v5276, %v5278
      %v5280 = vrot.slane %v4946, 2
      %v5281 = vrot.slane %v4947, 2
      %v5282 = vsel %vm881, %v5280, %v5281
      %v5283 = vrot.slane %v4948, 2
      %v5284 = vsel %vm881, %v5281, %v5283
      %v5285 = vrot.slane %v4949, 2
      %v5286 = vrot.slane %v4950, 2
      %v5287 = vsel %vm881, %v5285, %v5286
      %v5288 = vrot.slane %v4951, 2
      %v5289 = vsel %vm881, %v5286, %v5288
      %v5290 = vrot.slane %v4952, 2
      %v5291 = vrot.slane %v4953, 2
      %v5292 = vsel %vm881, %v5290, %v5291
      %v5293 = vrot.slane %v4954, 2
      %v5294 = vsel %vm881, %v5291, %v5293
      %v5295 = vrot.slane %v4955, 2
      %v5296 = vrot.slane %v4956, 2
      %v5297 = vsel %vm881, %v5295, %v5296
      %v5298 = vrot.slane %v4957, 2
      %v5299 = vsel %vm881, %v5296, %v5298
      %v5336 = vsel %vm380, %v4904, %v5103
      %v5337 = vsel %vm380, %v4905, %v5105
      %v5338 = vsel %vm380, %v4907, %v5107
      %v5339 = vsel %vm380, %v4908, %v5109
      %v5340 = vsel %vm380, %v4910, %v5111
      %v5341 = vsel %vm380, %v4911, %v5113
      %v5342 = vsel %vm380, %v4913, %v5115
      %v5343 = vsel %vm380, %v4914, %v5117
      %v5344 = vsel %vm380, %v4916, %v5119
      %v5345 = vsel %vm380, %v4917, %v5121
      %v5346 = vsel %vm380, %v4919, %v5123
      %v5347 = vsel %vm380, %v4920, %v5125
      %v5348 = vsel %vm380, %v4922, %v5127
      %v5349 = vsel %vm380, %v4923, %v5129
      %v5350 = vsel %vm380, %v4925, %v5131
      %v5351 = vsel %vm380, %v4926, %v5133
      %v5352 = vsel %vm380, %v4928, %v5135
      %v5353 = vsel %vm380, %v4929, %v5137
      %v5354 = vsel %vm380, %v4931, %v5139
      %v5355 = vsel %vm380, %v4932, %v5141
      %v5356 = vsel %vm380, %v4934, %v5143
      %v5357 = vsel %vm380, %v4935, %v5145
      %v5358 = vsel %vm380, %v4937, %v5147
      %v5359 = vsel %vm380, %v4938, %v5149
      %v5360 = vsel %vm380, %v4940, %v5151
      %v5361 = vsel %vm380, %v4941, %v5153
      %v5362 = vsel %vm380, %v4943, %v5155
      %v5363 = vsel %vm380, %v4944, %v5157
      %v5364 = vsel %vm380, %v4946, %v5159
      %v5365 = vsel %vm380, %v4947, %v5161
      %v5366 = vsel %vm380, %v4949, %v5163
      %v5367 = vsel %vm380, %v4950, %v5165
      %v5368 = vsel %vm380, %v4952, %v5167
      %v5369 = vsel %vm380, %v4953, %v5169
      %v5370 = vsel %vm380, %v4955, %v5171
      %v5371 = vsel %vm380, %v4956, %v5173
      %v5372 = vpack.c.bf16 %v5337, %v5336
      %v5373 = vpack.c.bf16 %v5214, %v5212
      %v5374 = vpack.c.bf16 %v5339, %v5338
      %v5375 = vpack.c.bf16 %v5219, %v5217
      %v5376 = vpack.c.bf16 %v5341, %v5340
      %v5377 = vpack.c.bf16 %v5224, %v5222
      %v5378 = vpack.c.bf16 %v5343, %v5342
      %v5379 = vpack.c.bf16 %v5229, %v5227
      %v5380 = vpack.c.bf16 %v5345, %v5344
      %v5381 = vpack.c.bf16 %v5234, %v5232
      %v5382 = vpack.c.bf16 %v5347, %v5346
      %v5383 = vpack.c.bf16 %v5239, %v5237
      %v5384 = vpack.c.bf16 %v5349, %v5348
      %v5385 = vpack.c.bf16 %v5244, %v5242
      %v5386 = vpack.c.bf16 %v5351, %v5350
      %v5387 = vpack.c.bf16 %v5249, %v5247
      %v5388 = vpack.c.bf16 %v5353, %v5352
      %v5389 = vpack.c.bf16 %v5254, %v5252
      %v5390 = vpack.c.bf16 %v5355, %v5354
      %v5391 = vpack.c.bf16 %v5259, %v5257
      %v5392 = vpack.c.bf16 %v5357, %v5356
      %v5393 = vpack.c.bf16 %v5264, %v5262
      %v5394 = vpack.c.bf16 %v5359, %v5358
      %v5395 = vpack.c.bf16 %v5269, %v5267
      %v5396 = vpack.c.bf16 %v5361, %v5360
      %v5397 = vpack.c.bf16 %v5274, %v5272
      %v5398 = vpack.c.bf16 %v5363, %v5362
      %v5399 = vpack.c.bf16 %v5279, %v5277
      %v5400 = vpack.c.bf16 %v5365, %v5364
      %v5401 = vpack.c.bf16 %v5284, %v5282
      %v5402 = vpack.c.bf16 %v5367, %v5366
      %v5403 = vpack.c.bf16 %v5289, %v5287
      %v5404 = vpack.c.bf16 %v5369, %v5368
      %v5405 = vpack.c.bf16 %v5294, %v5292
      %v5430 = vunpack.c.l.b16 %v4854
      %v5431 = vunpack.c.l.b16 %v4855
      %v5432 = vunpack.c.l.b16 %v4856
      %v5433 = vunpack.c.l.b16 %v4857
      %v5434 = vunpack.c.l.b16 %v4858
      %v5435 = vunpack.c.l.b16 %v4859
      %v5436 = vunpack.c.l.b16 %v4860
      %v5437 = vunpack.c.l.b16 %v4861
      %v5438 = vunpack.c.l.b16 %v4862
      %v5439 = vunpack.c.l.b16 %v4863
      %v5440 = vunpack.c.l.b16 %v4864
      %v5441 = vunpack.c.l.b16 %v4865
      %v5442 = vunpack.c.l.b16 %v4866
      %v5443 = vunpack.c.l.b16 %v4867
      %v5444 = vunpack.c.l.b16 %v4868
      %v5445 = vunpack.c.l.b16 %v4869
      %v5446 = vunpack.c.l.b16 %v4870
      %v5447 = vunpack.c.l.b16 %v4871
      %v5448 = vunpack.c.l.b16 %v4872
      %v5449 = vunpack.c.l.b16 %v4873
      %v5450 = vunpack.c.l.b16 %v4874
      %v5451 = vunpack.c.l.b16 %v4875
      %v5452 = vunpack.c.l.b16 %v4876
      %v5453 = vunpack.c.l.b16 %v4877
      %v5454 = vpack.c.b16 %v5431, %v5430
      %v5455 = vpack.c.b16 %v5433, %v5432
      %v5456 = vpack.c.b16 %v5435, %v5434
      %v5457 = vpack.c.b16 %v5437, %v5436
      %v5458 = vpack.c.b16 %v5439, %v5438
      %v5459 = vpack.c.b16 %v5441, %v5440
      %v5460 = vpack.c.b16 %v5443, %v5442
      %v5461 = vpack.c.b16 %v5445, %v5444
      %v5462 = vpack.c.b16 %v5447, %v5446
      %v5463 = vpack.c.b16 %v5449, %v5448
      %v5464 = vpack.c.b16 %v5451, %v5450
      %v5465 = vpack.c.b16 %v5453, %v5452
      %v5479 = vsel %vm380, %v5375, 0
      %v5482 = vsel %vm380, %v5377, 0
      %v5485 = vsel %vm380, %v5379, 0
      %v5488 = vsel %vm380, %v5381, 0
      %v5491 = vsel %vm380, %v5383, 0
      %v5494 = vsel %vm380, %v5385, 0
      %v5497 = vsel %vm380, %v5387, 0
      %v5500 = vsel %vm380, %v5389, 0
      %v5503 = vsel %vm380, %v5391, 0
      %v5506 = vsel %vm380, %v5393, 0
      %v5509 = vsel %vm380, %v5395, 0
      %v5512 = vsel %vm380, %v5397, 0
      %v5515 = vsel %vm380, %v5399, 0
      %v5518 = vsel %vm380, %v5401, 0
      %v5521 = vsel %vm380, %v5403, 0
      %v5524 = vsel %vm380, %v5405, 0
      %5526 = vmatprep.subr.bf16.mxu0 0
      %5527 = vmatpush1.bf16.msra.mxu0 %v5461
      %5528 = vmatprep.subr.bf16.mxu0 0
      %5529 = vmatpush1.bf16.msra.mxu0 %v5460
      %5530 = vmatprep.subr.bf16.mxu0 0
      %5531 = vmatpush1.bf16.msra.mxu0 %v5459
      %5532 = vmatprep.subr.bf16.mxu0 0
      %5533 = vmatpush1.bf16.msra.mxu0 %v5458
      %5534 = vmatprep.subr.bf16.mxu0 0
      %5535 = vmatpush1.bf16.msra.mxu0 %v5457
      %5536 = vmatprep.subr.bf16.mxu0 0
      %5537 = vmatpush1.bf16.msra.mxu0 %v5456
      %5538 = vmatprep.subr.bf16.mxu0 0
      %5539 = vmatpush1.bf16.msra.mxu0 %v5455
      %5540 = vmatprep.subr.bf16.mxu0 0
      %5541 = vmatpush1.bf16.msra.mxu0 %v5454
      %5542 = vmatprep.subr.bf16.mxu0 0
      %5543 = vmatpush2.bf16.msra.mxu0 0
      %5544 = vmatprep.subr.bf16.mxu0 0
      %5545 = vmatpush2.bf16.msra.mxu0 0
      %5546 = vmatprep.subr.bf16.mxu0 0
      %5547 = vmatpush2.bf16.msra.mxu0 0
      %5548 = vmatprep.subr.bf16.mxu0 0
      %5549 = vmatpush2.bf16.msra.mxu0 0
      %5550 = vmatprep.subr.bf16.mxu0 0
      %5551 = vmatpush2.bf16.msra.mxu0 %v5465
      %5552 = vmatprep.subr.bf16.mxu0 0
      %5553 = vmatpush2.bf16.msra.mxu0 %v5464
      %5554 = vmatprep.subr.bf16.mxu0 0
      %5555 = vmatpush2.bf16.msra.mxu0 %v5463
      %5556 = vmatprep.subr.bf16.mxu0 0
      %5557 = vmatpush2.bf16.msra.mxu0 %v5462
      %5558 = vmatprep.mubr.bf16.mxu0 %v5479
      %5559 = vmatmul.mubr.bf16.gmra.mxu0 %v5374
      %v5560 = vpop.f32.mrf.mxu0
      %v5561 = vadd.f32 0.0, %v5560
      %v5562 = vpop.f32.mrf.mxu0
      %v5563 = vpop.f32.mrf.mxu0
      %v5564 = vadd.f32 0.0, %v5563
      %v5565 = vpop.f32.mrf.mxu0
      %5566 = vmatprep.mubr.bf16.mxu0 %v5482
      %5567 = vmatmul.mubr.bf16.gmra.mxu0 %v5376
      %v5568 = vpop.f32.mrf.mxu0
      %v5569 = vadd.f32 0.0, %v5568
      %v5570 = vpop.f32.mrf.mxu0
      %v5571 = vpop.f32.mrf.mxu0
      %v5572 = vadd.f32 0.0, %v5571
      %v5573 = vpop.f32.mrf.mxu0
      %5574 = vmatprep.mubr.bf16.mxu0 %v5485
      %5575 = vmatmul.mubr.bf16.gmra.mxu0 %v5378
      %v5576 = vpop.f32.mrf.mxu0
      %v5577 = vadd.f32 0.0, %v5576
      %v5578 = vpop.f32.mrf.mxu0
      %v5579 = vpop.f32.mrf.mxu0
      %v5580 = vadd.f32 0.0, %v5579
      %v5581 = vpop.f32.mrf.mxu0
      %5582 = vmatprep.mubr.bf16.mxu0 %v5488
      %5583 = vmatmul.mubr.bf16.gmra.mxu0 %v5380
      %v5584 = vpop.f32.mrf.mxu0
      %v5585 = vadd.f32 0.0, %v5584
      %v5586 = vpop.f32.mrf.mxu0
      %v5587 = vpop.f32.mrf.mxu0
      %v5588 = vadd.f32 0.0, %v5587
      %v5589 = vpop.f32.mrf.mxu0
      %5590 = vmatprep.mubr.bf16.mxu0 %v5491
      %5591 = vmatmul.mubr.bf16.gmra.mxu0 %v5382
      %v5592 = vpop.f32.mrf.mxu0
      %v5593 = vadd.f32 0.0, %v5592
      %v5594 = vpop.f32.mrf.mxu0
      %v5595 = vpop.f32.mrf.mxu0
      %v5596 = vadd.f32 0.0, %v5595
      %v5597 = vpop.f32.mrf.mxu0
      %5598 = vmatprep.mubr.bf16.mxu0 %v5494
      %5599 = vmatmul.mubr.bf16.gmra.mxu0 %v5384
      %v5600 = vpop.f32.mrf.mxu0
      %v5601 = vadd.f32 0.0, %v5600
      %v5602 = vpop.f32.mrf.mxu0
      %v5603 = vpop.f32.mrf.mxu0
      %v5604 = vadd.f32 0.0, %v5603
      %v5605 = vpop.f32.mrf.mxu0
      %5606 = vmatprep.mubr.bf16.mxu0 %v5497
      %5607 = vmatmul.mubr.bf16.gmra.mxu0 %v5386
      %v5608 = vpop.f32.mrf.mxu0
      %v5609 = vadd.f32 0.0, %v5608
      %v5610 = vpop.f32.mrf.mxu0
      %v5611 = vpop.f32.mrf.mxu0
      %v5612 = vadd.f32 0.0, %v5611
      %v5613 = vpop.f32.mrf.mxu0
      %5614 = vmatprep.mubr.bf16.mxu0 %v5500
      %5615 = vmatmul.mubr.bf16.gmra.mxu0 %v5388
      %v5616 = vpop.f32.mrf.mxu0
      %v5617 = vadd.f32 0.0, %v5616
      %v5618 = vpop.f32.mrf.mxu0
      %v5619 = vpop.f32.mrf.mxu0
      %v5620 = vadd.f32 0.0, %v5619
      %v5621 = vpop.f32.mrf.mxu0
      %5622 = vmatprep.mubr.bf16.mxu0 %v5503
      %5623 = vmatmul.mubr.bf16.gmra.mxu0 %v5390
      %v5624 = vpop.f32.mrf.mxu0
      %v5625 = vadd.f32 0.0, %v5624
      %v5626 = vpop.f32.mrf.mxu0
      %v5627 = vpop.f32.mrf.mxu0
      %v5628 = vadd.f32 0.0, %v5627
      %v5629 = vpop.f32.mrf.mxu0
      %5630 = vmatprep.mubr.bf16.mxu0 %v5506
      %5631 = vmatmul.mubr.bf16.gmra.mxu0 %v5392
      %v5632 = vpop.f32.mrf.mxu0
      %v5633 = vadd.f32 0.0, %v5632
      %v5634 = vpop.f32.mrf.mxu0
      %v5635 = vpop.f32.mrf.mxu0
      %v5636 = vadd.f32 0.0, %v5635
      %v5637 = vpop.f32.mrf.mxu0
      %5638 = vmatprep.mubr.bf16.mxu0 %v5509
      %5639 = vmatmul.mubr.bf16.gmra.mxu0 %v5394
      %v5640 = vpop.f32.mrf.mxu0
      %v5641 = vadd.f32 0.0, %v5640
      %v5642 = vpop.f32.mrf.mxu0
      %v5643 = vpop.f32.mrf.mxu0
      %v5644 = vadd.f32 0.0, %v5643
      %v5645 = vpop.f32.mrf.mxu0
      %5646 = vmatprep.mubr.bf16.mxu0 %v5512
      %5647 = vmatmul.mubr.bf16.gmra.mxu0 %v5396
      %v5648 = vpop.f32.mrf.mxu0
      %v5649 = vadd.f32 0.0, %v5648
      %v5650 = vpop.f32.mrf.mxu0
      %v5651 = vpop.f32.mrf.mxu0
      %v5652 = vadd.f32 0.0, %v5651
      %v5653 = vpop.f32.mrf.mxu0
      %5654 = vmatprep.mubr.bf16.mxu0 %v5515
      %5655 = vmatmul.mubr.bf16.gmra.mxu0 %v5398
      %v5656 = vpop.f32.mrf.mxu0
      %v5657 = vadd.f32 0.0, %v5656
      %v5658 = vpop.f32.mrf.mxu0
      %v5659 = vpop.f32.mrf.mxu0
      %v5660 = vadd.f32 0.0, %v5659
      %v5661 = vpop.f32.mrf.mxu0
      %5662 = vmatprep.mubr.bf16.mxu0 %v5518
      %5663 = vmatmul.mubr.bf16.gmra.mxu0 %v5400
      %v5664 = vpop.f32.mrf.mxu0
      %v5665 = vadd.f32 0.0, %v5664
      %v5666 = vpop.f32.mrf.mxu0
      %v5667 = vpop.f32.mrf.mxu0
      %v5668 = vadd.f32 0.0, %v5667
      %v5669 = vpop.f32.mrf.mxu0
      %5670 = vmatprep.mubr.bf16.mxu0 %v5521
      %5671 = vmatmul.mubr.bf16.gmra.mxu0 %v5402
      %v5672 = vpop.f32.mrf.mxu0
      %v5673 = vadd.f32 0.0, %v5672
      %v5674 = vpop.f32.mrf.mxu0
      %v5675 = vpop.f32.mrf.mxu0
      %v5676 = vadd.f32 0.0, %v5675
      %v5677 = vpop.f32.mrf.mxu0
      %5678 = vmatprep.mubr.bf16.mxu0 %v5524
      %5679 = vmatmul.mubr.bf16.gmra.mxu0 %v5404
      %v5680 = vpop.f32.mrf.mxu0
      %v5681 = vadd.f32 0.0, %v5680
      %v5682 = vpop.f32.mrf.mxu0
      %v5683 = vpop.f32.mrf.mxu0
      %v5684 = vadd.f32 0.0, %v5683
      %v5685 = vpop.f32.mrf.mxu0
      %5686 = vdwg.mxu0
      %v5711 = vunpack.c.l.b16 %v4830
      %v5712 = vunpack.c.l.b16 %v4831
      %v5713 = vunpack.c.l.b16 %v4832
      %v5714 = vunpack.c.l.b16 %v4833
      %v5715 = vunpack.c.l.b16 %v4834
      %v5716 = vunpack.c.l.b16 %v4835
      %v5717 = vunpack.c.l.b16 %v4836
      %v5718 = vunpack.c.l.b16 %v4837
      %v5719 = vunpack.c.l.b16 %v4838
      %v5720 = vunpack.c.l.b16 %v4839
      %v5721 = vunpack.c.l.b16 %v4840
      %v5722 = vunpack.c.l.b16 %v4841
      %v5723 = vunpack.c.l.b16 %v4842
      %v5724 = vunpack.c.l.b16 %v4843
      %v5725 = vunpack.c.l.b16 %v4844
      %v5726 = vunpack.c.l.b16 %v4845
      %v5727 = vunpack.c.l.b16 %v4846
      %v5728 = vunpack.c.l.b16 %v4847
      %v5729 = vunpack.c.l.b16 %v4848
      %v5730 = vunpack.c.l.b16 %v4849
      %v5731 = vunpack.c.l.b16 %v4850
      %v5732 = vunpack.c.l.b16 %v4851
      %v5733 = vunpack.c.l.b16 %v4852
      %v5734 = vunpack.c.l.b16 %v4853
      %v5735 = vpack.c.b16 %v5712, %v5711
      %v5736 = vpack.c.b16 %v5714, %v5713
      %v5737 = vpack.c.b16 %v5716, %v5715
      %v5738 = vpack.c.b16 %v5718, %v5717
      %v5739 = vpack.c.b16 %v5720, %v5719
      %v5740 = vpack.c.b16 %v5722, %v5721
      %v5741 = vpack.c.b16 %v5724, %v5723
      %v5742 = vpack.c.b16 %v5726, %v5725
      %v5743 = vpack.c.b16 %v5728, %v5727
      %v5744 = vpack.c.b16 %v5730, %v5729
      %v5745 = vpack.c.b16 %v5732, %v5731
      %v5746 = vpack.c.b16 %v5734, %v5733
      %v5760 = vsel %vm380, %v5373, 0
      %5762 = vmatprep.subr.bf16.mxu0 0
      %5763 = vmatpush1.bf16.msra.mxu0 %v5742
      %5764 = vmatprep.subr.bf16.mxu0 0
      %5765 = vmatpush1.bf16.msra.mxu0 %v5741
      %5766 = vmatprep.subr.bf16.mxu0 0
      %5767 = vmatpush1.bf16.msra.mxu0 %v5740
      %5768 = vmatprep.subr.bf16.mxu0 0
      %5769 = vmatpush1.bf16.msra.mxu0 %v5739
      %5770 = vmatprep.subr.bf16.mxu0 0
      %5771 = vmatpush1.bf16.msra.mxu0 %v5738
      %5772 = vmatprep.subr.bf16.mxu0 0
      %5773 = vmatpush1.bf16.msra.mxu0 %v5737
      %5774 = vmatprep.subr.bf16.mxu0 0
      %5775 = vmatpush1.bf16.msra.mxu0 %v5736
      %5776 = vmatprep.subr.bf16.mxu0 0
      %5777 = vmatpush1.bf16.msra.mxu0 %v5735
      %5778 = vmatprep.subr.bf16.mxu0 0
      %5779 = vmatpush2.bf16.msra.mxu0 0
      %5780 = vmatprep.subr.bf16.mxu0 0
      %5781 = vmatpush2.bf16.msra.mxu0 0
      %5782 = vmatprep.subr.bf16.mxu0 0
      %5783 = vmatpush2.bf16.msra.mxu0 0
      %5784 = vmatprep.subr.bf16.mxu0 0
      %5785 = vmatpush2.bf16.msra.mxu0 0
      %5786 = vmatprep.subr.bf16.mxu0 0
      %5787 = vmatpush2.bf16.msra.mxu0 %v5746
      %5788 = vmatprep.subr.bf16.mxu0 0
      %5789 = vmatpush2.bf16.msra.mxu0 %v5745
      %5790 = vmatprep.subr.bf16.mxu0 0
      %5791 = vmatpush2.bf16.msra.mxu0 %v5744
      %5792 = vmatprep.subr.bf16.mxu0 0
      %5793 = vmatpush2.bf16.msra.mxu0 %v5743
      %5794 = vmatprep.mubr.bf16.mxu0 %v5760
      %5795 = vmatmul.mubr.bf16.gmra.mxu0 %v5372
      %v5796 = vpop.f32.mrf.mxu0
      %v5797 = vadd.f32 %v5561, %v5796
      %v5798 = vpop.f32.mrf.mxu0
      %v5799 = vpop.f32.mrf.mxu0
      %v5800 = vadd.f32 %v5564, %v5799
      %v5801 = vpop.f32.mrf.mxu0
      %5802 = vmatprep.mubr.bf16.mxu0 %v5479
      %5803 = vmatmul.mubr.bf16.gmra.mxu0 %v5374
      %v5804 = vpop.f32.mrf.mxu0
      %v5805 = vadd.f32 %v5569, %v5804
      %v5806 = vpop.f32.mrf.mxu0
      %v5807 = vpop.f32.mrf.mxu0
      %v5808 = vadd.f32 %v5572, %v5807
      %v5809 = vpop.f32.mrf.mxu0
      %5810 = vmatprep.mubr.bf16.mxu0 %v5482
      %5811 = vmatmul.mubr.bf16.gmra.mxu0 %v5376
      %v5812 = vpop.f32.mrf.mxu0
      %v5813 = vadd.f32 %v5577, %v5812
      %v5814 = vpop.f32.mrf.mxu0
      %v5815 = vpop.f32.mrf.mxu0
      %v5816 = vadd.f32 %v5580, %v5815
      %v5817 = vpop.f32.mrf.mxu0
      %5818 = vmatprep.mubr.bf16.mxu0 %v5485
      %5819 = vmatmul.mubr.bf16.gmra.mxu0 %v5378
      %v5820 = vpop.f32.mrf.mxu0
      %v5821 = vadd.f32 %v5585, %v5820
      %v5822 = vpop.f32.mrf.mxu0
      %v5823 = vpop.f32.mrf.mxu0
      %v5824 = vadd.f32 %v5588, %v5823
      %v5825 = vpop.f32.mrf.mxu0
      %5826 = vmatprep.mubr.bf16.mxu0 %v5488
      %5827 = vmatmul.mubr.bf16.gmra.mxu0 %v5380
      %v5828 = vpop.f32.mrf.mxu0
      %v5829 = vadd.f32 %v5593, %v5828
      %v5830 = vpop.f32.mrf.mxu0
      %v5831 = vpop.f32.mrf.mxu0
      %v5832 = vadd.f32 %v5596, %v5831
      %v5833 = vpop.f32.mrf.mxu0
      %5834 = vmatprep.mubr.bf16.mxu0 %v5491
      %5835 = vmatmul.mubr.bf16.gmra.mxu0 %v5382
      %v5836 = vpop.f32.mrf.mxu0
      %v5837 = vadd.f32 %v5601, %v5836
      %v5838 = vpop.f32.mrf.mxu0
      %v5839 = vpop.f32.mrf.mxu0
      %v5840 = vadd.f32 %v5604, %v5839
      %v5841 = vpop.f32.mrf.mxu0
      %5842 = vmatprep.mubr.bf16.mxu0 %v5494
      %5843 = vmatmul.mubr.bf16.gmra.mxu0 %v5384
      %v5844 = vpop.f32.mrf.mxu0
      %v5845 = vadd.f32 %v5609, %v5844
      %v5846 = vpop.f32.mrf.mxu0
      %v5847 = vpop.f32.mrf.mxu0
      %v5848 = vadd.f32 %v5612, %v5847
      %v5849 = vpop.f32.mrf.mxu0
      %5850 = vmatprep.mubr.bf16.mxu0 %v5497
      %5851 = vmatmul.mubr.bf16.gmra.mxu0 %v5386
      %v5852 = vpop.f32.mrf.mxu0
      %v5853 = vadd.f32 %v5617, %v5852
      %v5854 = vpop.f32.mrf.mxu0
      %v5855 = vpop.f32.mrf.mxu0
      %v5856 = vadd.f32 %v5620, %v5855
      %v5857 = vpop.f32.mrf.mxu0
      %5858 = vmatprep.mubr.bf16.mxu0 %v5500
      %5859 = vmatmul.mubr.bf16.gmra.mxu0 %v5388
      %v5860 = vpop.f32.mrf.mxu0
      %v5861 = vadd.f32 %v5625, %v5860
      %v5862 = vpop.f32.mrf.mxu0
      %v5863 = vpop.f32.mrf.mxu0
      %v5864 = vadd.f32 %v5628, %v5863
      %v5865 = vpop.f32.mrf.mxu0
      %5866 = vmatprep.mubr.bf16.mxu0 %v5503
      %5867 = vmatmul.mubr.bf16.gmra.mxu0 %v5390
      %v5868 = vpop.f32.mrf.mxu0
      %v5869 = vadd.f32 %v5633, %v5868
      %v5870 = vpop.f32.mrf.mxu0
      %v5871 = vpop.f32.mrf.mxu0
      %v5872 = vadd.f32 %v5636, %v5871
      %v5873 = vpop.f32.mrf.mxu0
      %5874 = vmatprep.mubr.bf16.mxu0 %v5506
      %5875 = vmatmul.mubr.bf16.gmra.mxu0 %v5392
      %v5876 = vpop.f32.mrf.mxu0
      %v5877 = vadd.f32 %v5641, %v5876
      %v5878 = vpop.f32.mrf.mxu0
      %v5879 = vpop.f32.mrf.mxu0
      %v5880 = vadd.f32 %v5644, %v5879
      %v5881 = vpop.f32.mrf.mxu0
      %5882 = vmatprep.mubr.bf16.mxu0 %v5509
      %5883 = vmatmul.mubr.bf16.gmra.mxu0 %v5394
      %v5884 = vpop.f32.mrf.mxu0
      %v5885 = vadd.f32 %v5649, %v5884
      %v5886 = vpop.f32.mrf.mxu0
      %v5887 = vpop.f32.mrf.mxu0
      %v5888 = vadd.f32 %v5652, %v5887
      %v5889 = vpop.f32.mrf.mxu0
      %5890 = vmatprep.mubr.bf16.mxu0 %v5512
      %5891 = vmatmul.mubr.bf16.gmra.mxu0 %v5396
      %v5892 = vpop.f32.mrf.mxu0
      %v5893 = vadd.f32 %v5657, %v5892
      %v5894 = vpop.f32.mrf.mxu0
      %v5895 = vpop.f32.mrf.mxu0
      %v5896 = vadd.f32 %v5660, %v5895
      %v5897 = vpop.f32.mrf.mxu0
      %5898 = vmatprep.mubr.bf16.mxu0 %v5515
      %5899 = vmatmul.mubr.bf16.gmra.mxu0 %v5398
      %v5900 = vpop.f32.mrf.mxu0
      %v5901 = vadd.f32 %v5665, %v5900
      %v5902 = vpop.f32.mrf.mxu0
      %v5903 = vpop.f32.mrf.mxu0
      %v5904 = vadd.f32 %v5668, %v5903
      %v5905 = vpop.f32.mrf.mxu0
      %5906 = vmatprep.mubr.bf16.mxu0 %v5518
      %5907 = vmatmul.mubr.bf16.gmra.mxu0 %v5400
      %v5908 = vpop.f32.mrf.mxu0
      %v5909 = vadd.f32 %v5673, %v5908
      %v5910 = vpop.f32.mrf.mxu0
      %v5911 = vpop.f32.mrf.mxu0
      %v5912 = vadd.f32 %v5676, %v5911
      %v5913 = vpop.f32.mrf.mxu0
      %5914 = vmatprep.mubr.bf16.mxu0 %v5521
      %5915 = vmatmul.mubr.bf16.gmra.mxu0 %v5402
      %v5916 = vpop.f32.mrf.mxu0
      %v5917 = vadd.f32 %v5681, %v5916
      %v5918 = vpop.f32.mrf.mxu0
      %v5919 = vpop.f32.mrf.mxu0
      %v5920 = vadd.f32 %v5684, %v5919
      %v5921 = vpop.f32.mrf.mxu0
      %5922 = vdwg.mxu0
      %v5923 = vpack.c.bf16 %v5371, %v5370
      %v5924 = vpack.c.bf16 %v5299, %v5297
      %v5949 = vunpack.c.l.b16 %v4878
      %v5950 = vunpack.c.l.b16 %v4879
      %v5951 = vunpack.c.l.b16 %v4880
      %v5952 = vunpack.c.l.b16 %v4881
      %v5953 = vunpack.c.l.b16 %v4882
      %v5954 = vunpack.c.l.b16 %v4883
      %v5955 = vunpack.c.l.b16 %v4884
      %v5956 = vunpack.c.l.b16 %v4885
      %v5957 = vunpack.c.l.b16 %v4886
      %v5958 = vunpack.c.l.b16 %v4887
      %v5959 = vunpack.c.l.b16 %v4888
      %v5960 = vunpack.c.l.b16 %v4889
      %v5961 = vunpack.c.l.b16 %v4890
      %v5962 = vunpack.c.l.b16 %v4891
      %v5963 = vunpack.c.l.b16 %v4892
      %v5964 = vunpack.c.l.b16 %v4893
      %v5965 = vunpack.c.l.b16 %v4894
      %v5966 = vunpack.c.l.b16 %v4895
      %v5967 = vunpack.c.l.b16 %v4896
      %v5968 = vunpack.c.l.b16 %v4897
      %v5969 = vunpack.c.l.b16 %v4898
      %v5970 = vunpack.c.l.b16 %v4899
      %v5971 = vunpack.c.l.b16 %v4900
      %v5972 = vunpack.c.l.b16 %v4901
      %v5973 = vpack.c.b16 %v5950, %v5949
      %v5974 = vpack.c.b16 %v5952, %v5951
      %v5975 = vpack.c.b16 %v5954, %v5953
      %v5976 = vpack.c.b16 %v5956, %v5955
      %v5977 = vpack.c.b16 %v5958, %v5957
      %v5978 = vpack.c.b16 %v5960, %v5959
      %v5979 = vpack.c.b16 %v5962, %v5961
      %v5980 = vpack.c.b16 %v5964, %v5963
      %v5981 = vpack.c.b16 %v5966, %v5965
      %v5982 = vpack.c.b16 %v5968, %v5967
      %v5983 = vpack.c.b16 %v5970, %v5969
      %v5984 = vpack.c.b16 %v5972, %v5971
      %v5998 = vsel %vm380, %v5924, 0
      %6000 = vmatprep.subr.bf16.mxu0 0
      %6001 = vmatpush1.bf16.msra.mxu0 %v5980
      %6002 = vmatprep.subr.bf16.mxu0 0
      %6003 = vmatpush1.bf16.msra.mxu0 %v5979
      %6004 = vmatprep.subr.bf16.mxu0 0
      %6005 = vmatpush1.bf16.msra.mxu0 %v5978
      %6006 = vmatprep.subr.bf16.mxu0 0
      %6007 = vmatpush1.bf16.msra.mxu0 %v5977
      %6008 = vmatprep.subr.bf16.mxu0 0
      %6009 = vmatpush1.bf16.msra.mxu0 %v5976
      %6010 = vmatprep.subr.bf16.mxu0 0
      %6011 = vmatpush1.bf16.msra.mxu0 %v5975
      %6012 = vmatprep.subr.bf16.mxu0 0
      %6013 = vmatpush1.bf16.msra.mxu0 %v5974
      %6014 = vmatprep.subr.bf16.mxu0 0
      %6015 = vmatpush1.bf16.msra.mxu0 %v5973
      %6016 = vmatprep.subr.bf16.mxu0 0
      %6017 = vmatpush2.bf16.msra.mxu0 0
      %6018 = vmatprep.subr.bf16.mxu0 0
      %6019 = vmatpush2.bf16.msra.mxu0 0
      %6020 = vmatprep.subr.bf16.mxu0 0
      %6021 = vmatpush2.bf16.msra.mxu0 0
      %6022 = vmatprep.subr.bf16.mxu0 0
      %6023 = vmatpush2.bf16.msra.mxu0 0
      %6024 = vmatprep.subr.bf16.mxu0 0
      %6025 = vmatpush2.bf16.msra.mxu0 %v5984
      %6026 = vmatprep.subr.bf16.mxu0 0
      %6027 = vmatpush2.bf16.msra.mxu0 %v5983
      %6028 = vmatprep.subr.bf16.mxu0 0
      %6029 = vmatpush2.bf16.msra.mxu0 %v5982
      %6030 = vmatprep.subr.bf16.mxu0 0
      %6031 = vmatpush2.bf16.msra.mxu0 %v5981
      %6032 = vmatprep.mubr.bf16.mxu0 %v5482
      %6033 = vmatmul.mubr.bf16.gmra.mxu0 %v5376
      %v6034 = vpop.f32.mrf.mxu0
      %v6035 = vadd.f32 0.0, %v6034
      %v6036 = vpop.f32.mrf.mxu0
      %v6037 = vpop.f32.mrf.mxu0
      %v6038 = vadd.f32 0.0, %v6037
      %v6039 = vpop.f32.mrf.mxu0
      %6040 = vmatprep.mubr.bf16.mxu0 %v5485
      %6041 = vmatmul.mubr.bf16.gmra.mxu0 %v5378
      %v6042 = vpop.f32.mrf.mxu0
      %v6043 = vadd.f32 0.0, %v6042
      %v6044 = vpop.f32.mrf.mxu0
      %v6045 = vpop.f32.mrf.mxu0
      %v6046 = vadd.f32 0.0, %v6045
      %v6047 = vpop.f32.mrf.mxu0
      %6048 = vmatprep.mubr.bf16.mxu0 %v5488
      %6049 = vmatmul.mubr.bf16.gmra.mxu0 %v5380
      %v6050 = vpop.f32.mrf.mxu0
      %v6051 = vadd.f32 0.0, %v6050
      %v6052 = vpop.f32.mrf.mxu0
      %v6053 = vpop.f32.mrf.mxu0
      %v6054 = vadd.f32 0.0, %v6053
      %v6055 = vpop.f32.mrf.mxu0
      %6056 = vmatprep.mubr.bf16.mxu0 %v5491
      %6057 = vmatmul.mubr.bf16.gmra.mxu0 %v5382
      %v6058 = vpop.f32.mrf.mxu0
      %v6059 = vadd.f32 0.0, %v6058
      %v6060 = vpop.f32.mrf.mxu0
      %v6061 = vpop.f32.mrf.mxu0
      %v6062 = vadd.f32 0.0, %v6061
      %v6063 = vpop.f32.mrf.mxu0
      %6064 = vmatprep.mubr.bf16.mxu0 %v5494
      %6065 = vmatmul.mubr.bf16.gmra.mxu0 %v5384
      %v6066 = vpop.f32.mrf.mxu0
      %v6067 = vadd.f32 0.0, %v6066
      %v6068 = vpop.f32.mrf.mxu0
      %v6069 = vpop.f32.mrf.mxu0
      %v6070 = vadd.f32 0.0, %v6069
      %v6071 = vpop.f32.mrf.mxu0
      %6072 = vmatprep.mubr.bf16.mxu0 %v5497
      %6073 = vmatmul.mubr.bf16.gmra.mxu0 %v5386
      %v6074 = vpop.f32.mrf.mxu0
      %v6075 = vadd.f32 0.0, %v6074
      %v6076 = vpop.f32.mrf.mxu0
      %v6077 = vpop.f32.mrf.mxu0
      %v6078 = vadd.f32 0.0, %v6077
      %v6079 = vpop.f32.mrf.mxu0
      %6080 = vmatprep.mubr.bf16.mxu0 %v5500
      %6081 = vmatmul.mubr.bf16.gmra.mxu0 %v5388
      %v6082 = vpop.f32.mrf.mxu0
      %v6083 = vadd.f32 0.0, %v6082
      %v6084 = vpop.f32.mrf.mxu0
      %v6085 = vpop.f32.mrf.mxu0
      %v6086 = vadd.f32 0.0, %v6085
      %v6087 = vpop.f32.mrf.mxu0
      %6088 = vmatprep.mubr.bf16.mxu0 %v5503
      %6089 = vmatmul.mubr.bf16.gmra.mxu0 %v5390
      %v6090 = vpop.f32.mrf.mxu0
      %v6091 = vadd.f32 0.0, %v6090
      %v6092 = vpop.f32.mrf.mxu0
      %v6093 = vpop.f32.mrf.mxu0
      %v6094 = vadd.f32 0.0, %v6093
      %v6095 = vpop.f32.mrf.mxu0
      %6096 = vmatprep.mubr.bf16.mxu0 %v5506
      %6097 = vmatmul.mubr.bf16.gmra.mxu0 %v5392
      %v6098 = vpop.f32.mrf.mxu0
      %v6099 = vadd.f32 0.0, %v6098
      %v6100 = vpop.f32.mrf.mxu0
      %v6101 = vpop.f32.mrf.mxu0
      %v6102 = vadd.f32 0.0, %v6101
      %v6103 = vpop.f32.mrf.mxu0
      %6104 = vmatprep.mubr.bf16.mxu0 %v5509
      %6105 = vmatmul.mubr.bf16.gmra.mxu0 %v5394
      %v6106 = vpop.f32.mrf.mxu0
      %v6107 = vadd.f32 0.0, %v6106
      %v6108 = vpop.f32.mrf.mxu0
      %v6109 = vpop.f32.mrf.mxu0
      %v6110 = vadd.f32 0.0, %v6109
      %v6111 = vpop.f32.mrf.mxu0
      %6112 = vmatprep.mubr.bf16.mxu0 %v5512
      %6113 = vmatmul.mubr.bf16.gmra.mxu0 %v5396
      %v6114 = vpop.f32.mrf.mxu0
      %v6115 = vadd.f32 0.0, %v6114
      %v6116 = vpop.f32.mrf.mxu0
      %v6117 = vpop.f32.mrf.mxu0
      %v6118 = vadd.f32 0.0, %v6117
      %v6119 = vpop.f32.mrf.mxu0
      %6120 = vmatprep.mubr.bf16.mxu0 %v5515
      %6121 = vmatmul.mubr.bf16.gmra.mxu0 %v5398
      %v6122 = vpop.f32.mrf.mxu0
      %v6123 = vadd.f32 0.0, %v6122
      %v6124 = vpop.f32.mrf.mxu0
      %v6125 = vpop.f32.mrf.mxu0
      %v6126 = vadd.f32 0.0, %v6125
      %v6127 = vpop.f32.mrf.mxu0
      %6128 = vmatprep.mubr.bf16.mxu0 %v5518
      %6129 = vmatmul.mubr.bf16.gmra.mxu0 %v5400
      %v6130 = vpop.f32.mrf.mxu0
      %v6131 = vadd.f32 0.0, %v6130
      %v6132 = vpop.f32.mrf.mxu0
      %v6133 = vpop.f32.mrf.mxu0
      %v6134 = vadd.f32 0.0, %v6133
      %v6135 = vpop.f32.mrf.mxu0
      %6136 = vmatprep.mubr.bf16.mxu0 %v5521
      %6137 = vmatmul.mubr.bf16.gmra.mxu0 %v5402
      %v6138 = vpop.f32.mrf.mxu0
      %v6139 = vadd.f32 0.0, %v6138
      %v6140 = vpop.f32.mrf.mxu0
      %v6141 = vpop.f32.mrf.mxu0
      %v6142 = vadd.f32 0.0, %v6141
      %v6143 = vpop.f32.mrf.mxu0
      %6144 = vmatprep.mubr.bf16.mxu0 %v5524
      %6145 = vmatmul.mubr.bf16.gmra.mxu0 %v5404
      %v6146 = vpop.f32.mrf.mxu0
      %v6147 = vadd.f32 0.0, %v6146
      %v6148 = vpop.f32.mrf.mxu0
      %v6149 = vpop.f32.mrf.mxu0
      %v6150 = vadd.f32 0.0, %v6149
      %v6151 = vpop.f32.mrf.mxu0
      %6152 = vmatprep.mubr.bf16.mxu0 %v5998
      %6153 = vmatmul.mubr.bf16.gmra.mxu0 %v5923
      %v6154 = vpop.f32.mrf.mxu0
      %v6155 = vadd.f32 0.0, %v6154
      %v6156 = vpop.f32.mrf.mxu0
      %v6157 = vpop.f32.mrf.mxu0
      %v6158 = vadd.f32 0.0, %v6157
      %v6159 = vpop.f32.mrf.mxu0
      %6160 = vdwg.mxu0
      %v6161 = vadd.f32 %v5797, %v6035
      %v6162 = vadd.f32 %v5800, %v6038
      %v6163 = vadd.f32 %v5805, %v6043
      %v6164 = vadd.f32 %v5808, %v6046
      %v6165 = vadd.f32 %v5813, %v6051
      %v6166 = vadd.f32 %v5816, %v6054
      %v6167 = vadd.f32 %v5821, %v6059
      %v6168 = vadd.f32 %v5824, %v6062
      %v6169 = vadd.f32 %v5829, %v6067
      %v6170 = vadd.f32 %v5832, %v6070
      %v6171 = vadd.f32 %v5837, %v6075
      %v6172 = vadd.f32 %v5840, %v6078
      %v6173 = vadd.f32 %v5845, %v6083
      %v6174 = vadd.f32 %v5848, %v6086
      %v6175 = vadd.f32 %v5853, %v6091
      %v6176 = vadd.f32 %v5856, %v6094
      %v6177 = vadd.f32 %v5861, %v6099
      %v6178 = vadd.f32 %v5864, %v6102
      %v6179 = vadd.f32 %v5869, %v6107
      %v6180 = vadd.f32 %v5872, %v6110
      %v6181 = vadd.f32 %v5877, %v6115
      %v6182 = vadd.f32 %v5880, %v6118
      %v6183 = vadd.f32 %v5885, %v6123
      %v6184 = vadd.f32 %v5888, %v6126
      %v6185 = vadd.f32 %v5893, %v6131
      %v6186 = vadd.f32 %v5896, %v6134
      %v6187 = vadd.f32 %v5901, %v6139
      %v6188 = vadd.f32 %v5904, %v6142
      %v6189 = vadd.f32 %v5909, %v6147
      %v6190 = vadd.f32 %v5912, %v6150
      %v6191 = vadd.f32 %v5917, %v6155
      %v6192 = vadd.f32 %v5920, %v6158
      %v6194 = vlaneseq
      %v6195 = vshrl.u32 %v6194, 7
      %v6196 = vsub.s32 0, %v6195
      %v6197 = vrot.slane %v4903, %v6196
      %v6199 = vadd.f32 %v6161, %v6197
      %v6200 = vadd.f32 %v6162, %v6197
      %v6201 = vadd.f32 %v6163, %v6197
      %v6202 = vadd.f32 %v6164, %v6197
      %v6203 = vadd.f32 %v6165, %v6197
      %v6204 = vadd.f32 %v6166, %v6197
      %v6205 = vadd.f32 %v6167, %v6197
      %v6206 = vadd.f32 %v6168, %v6197
      %v6207 = vadd.f32 %v6169, %v6197
      %v6208 = vadd.f32 %v6170, %v6197
      %v6209 = vadd.f32 %v6171, %v6197
      %v6210 = vadd.f32 %v6172, %v6197
      %v6211 = vadd.f32 %v6173, %v6197
      %v6212 = vadd.f32 %v6174, %v6197
      %v6213 = vadd.f32 %v6175, %v6197
      %v6214 = vadd.f32 %v6176, %v6197
      %v6215 = vadd.f32 %v6177, %v6197
      %v6216 = vadd.f32 %v6178, %v6197
      %v6217 = vadd.f32 %v6179, %v6197
      %v6218 = vadd.f32 %v6180, %v6197
      %v6219 = vadd.f32 %v6181, %v6197
      %v6220 = vadd.f32 %v6182, %v6197
      %v6221 = vadd.f32 %v6183, %v6197
      %v6222 = vadd.f32 %v6184, %v6197
      %v6223 = vadd.f32 %v6185, %v6197
      %v6224 = vadd.f32 %v6186, %v6197
      %v6225 = vadd.f32 %v6187, %v6197
      %v6226 = vadd.f32 %v6188, %v6197
      %v6227 = vadd.f32 %v6189, %v6197
      %v6228 = vadd.f32 %v6190, %v6197
      %v6229 = vadd.f32 %v6191, %v6197
      %v6230 = vadd.f32 %v6192, %v6197
      %v6231 = vmax.f32 %v6199, 0.0
      %v6232 = vmax.f32 %v6200, 0.0
      %v6233 = vmax.f32 %v6201, 0.0
      %v6234 = vmax.f32 %v6202, 0.0
      %v6235 = vmax.f32 %v6203, 0.0
      %v6236 = vmax.f32 %v6204, 0.0
      %v6237 = vmax.f32 %v6205, 0.0
      %v6238 = vmax.f32 %v6206, 0.0
      %v6239 = vmax.f32 %v6207, 0.0
      %v6240 = vmax.f32 %v6208, 0.0
      %v6241 = vmax.f32 %v6209, 0.0
      %v6242 = vmax.f32 %v6210, 0.0
      %v6243 = vmax.f32 %v6211, 0.0
      %v6244 = vmax.f32 %v6212, 0.0
      %v6245 = vmax.f32 %v6213, 0.0
      %v6246 = vmax.f32 %v6214, 0.0
      %v6247 = vmax.f32 %v6215, 0.0
      %v6248 = vmax.f32 %v6216, 0.0
      %v6249 = vmax.f32 %v6217, 0.0
      %v6250 = vmax.f32 %v6218, 0.0
      %v6251 = vmax.f32 %v6219, 0.0
      %v6252 = vmax.f32 %v6220, 0.0
      %v6253 = vmax.f32 %v6221, 0.0
      %v6254 = vmax.f32 %v6222, 0.0
      %v6255 = vmax.f32 %v6223, 0.0
      %v6256 = vmax.f32 %v6224, 0.0
      %v6257 = vmax.f32 %v6225, 0.0
      %v6258 = vmax.f32 %v6226, 0.0
      %v6259 = vmax.f32 %v6227, 0.0
      %v6260 = vmax.f32 %v6228, 0.0
      %v6261 = vmax.f32 %v6229, 0.0
      %v6262 = vmax.f32 %v6230, 0.0
      %6263 = vst.msk [vmem:[%s3330 + $0x1] sm:$0xff] %vm380, %v6231
      %6264 = vst.msk [vmem:[%s3330 + $0x9] sm:$0xff] %vm380, %v6232
      %6265 = vst.msk [vmem:[%s3330 + $0x19] sm:$0xff] %vm380, %v6233
      %6266 = vst.msk [vmem:[%s3330 + $0x21] sm:$0xff] %vm380, %v6234
      %6267 = vst.msk [vmem:[%s3330 + $0x31] sm:$0xff] %vm380, %v6235
      %6268 = vst.msk [vmem:[%s3330 + $0x39] sm:$0xff] %vm380, %v6236
      %6269 = vst.msk [vmem:[%s3330 + $0x49] sm:$0xff] %vm380, %v6237
      %6270 = vst.msk [vmem:[%s3330 + $0x51] sm:$0xff] %vm380, %v6238
      %6271 = vst.msk [vmem:[%s3330 + $0x61] sm:$0xff] %vm380, %v6239
      %6272 = vst.msk [vmem:[%s3330 + $0x69] sm:$0xff] %vm380, %v6240
      %6273 = vst.msk [vmem:[%s3330 + $0x79] sm:$0xff] %vm380, %v6241
      %6274 = vst.msk [vmem:[%s3330 + $0x81] sm:$0xff] %vm380, %v6242
      %6275 = vst.msk [vmem:[%s3330 + $0x91] sm:$0xff] %vm380, %v6243
      %6276 = vst.msk [vmem:[%s3330 + $0x99] sm:$0xff] %vm380, %v6244
      %6277 = vst.msk [vmem:[%s3330 + $0xa9] sm:$0xff] %vm380, %v6245
      %6278 = vst.msk [vmem:[%s3330 + $0xb1] sm:$0xff] %vm380, %v6246
      %6279 = vst.msk [vmem:[%s3330 + $0xc1] sm:$0xff] %vm380, %v6247
      %6280 = vst.msk [vmem:[%s3330 + $0xc9] sm:$0xff] %vm380, %v6248
      %6281 = vst.msk [vmem:[%s3330 + $0xd9] sm:$0xff] %vm380, %v6249
      %6282 = vst.msk [vmem:[%s3330 + $0xe1] sm:$0xff] %vm380, %v6250
      %6283 = vst.msk [vmem:[%s3330 + $0xf1] sm:$0xff] %vm380, %v6251
      %6284 = vst.msk [vmem:[%s3330 + $0xf9] sm:$0xff] %vm380, %v6252
      %6285 = vst.msk [vmem:[%s3330 + $0x109] sm:$0xff] %vm380, %v6253
      %6286 = vst.msk [vmem:[%s3330 + $0x111] sm:$0xff] %vm380, %v6254
      %6287 = vst.msk [vmem:[%s3330 + $0x121] sm:$0xff] %vm380, %v6255
      %6288 = vst.msk [vmem:[%s3330 + $0x129] sm:$0xff] %vm380, %v6256
      %6289 = vst.msk [vmem:[%s3330 + $0x139] sm:$0xff] %vm380, %v6257
      %6290 = vst.msk [vmem:[%s3330 + $0x141] sm:$0xff] %vm380, %v6258
      %6291 = vst.msk [vmem:[%s3330 + $0x151] sm:$0xff] %vm380, %v6259
      %6292 = vst.msk [vmem:[%s3330 + $0x159] sm:$0xff] %vm380, %v6260
      %6293 = vst.msk [vmem:[%s3330 + $0x169] sm:$0xff] %vm380, %v6261
      %6294 = vst.msk [vmem:[%s3330 + $0x171] sm:$0xff] %vm380, %v6262
      %s6295 = scalar_lea.vmem %s3, 864
      %v6296 = vld [vmem:[%s6295] sm:$0xf]
      %v6297 = vld [vmem:[%s6295 + $0x4] sm:$0xf]
      %v6298 = vld [vmem:[%s6295 + $0x8] sm:$0xf]
      %v6299 = vld [vmem:[%s6295 + $0xc] sm:$0xf]
      %v6300 = vld [vmem:[%s6295 + $0x10] sm:$0xf]
      %v6301 = vld [vmem:[%s6295 + $0x14] sm:$0xf]
      %v6302 = vld [vmem:[%s6295 + $0x18] sm:$0xf]
      %v6303 = vld [vmem:[%s6295 + $0x1c] sm:$0xf]
      %v6304 = vld [vmem:[%s6295 + $0x20] sm:$0xf]
      %v6305 = vld [vmem:[%s6295 + $0x24] sm:$0xf]
      %v6306 = vld [vmem:[%s6295 + $0x28] sm:$0xf]
      %v6307 = vld [vmem:[%s6295 + $0x2c] sm:$0xf]
      %v6308 = vld [vmem:[%s6295 + $0x30] sm:$0xf]
      %v6309 = vld [vmem:[%s6295 + $0x34] sm:$0xf]
      %v6310 = vld [vmem:[%s6295 + $0x38] sm:$0xf]
      %v6311 = vld [vmem:[%s6295 + $0x3c] sm:$0xf]
      %v6312 = vld [vmem:[%s6295 + $0x40] sm:$0xf]
      %v6313 = vld [vmem:[%s6295 + $0x44] sm:$0xf]
      %v6314 = vld [vmem:[%s6295 + $0x48] sm:$0xf]
      %v6315 = vld [vmem:[%s6295 + $0x4c] sm:$0xf]
      %v6316 = vld [vmem:[%s6295 + $0x50] sm:$0xf]
      %v6317 = vld [vmem:[%s6295 + $0x54] sm:$0xf]
      %v6318 = vld [vmem:[%s6295 + $0x58] sm:$0xf]
      %v6319 = vld [vmem:[%s6295 + $0x5c] sm:$0xf]
      %v6320 = vld [vmem:[%s6295 + $0x60] sm:$0xf]
      %v6321 = vld [vmem:[%s6295 + $0x64] sm:$0xf]
      %v6322 = vld [vmem:[%s6295 + $0x68] sm:$0xf]
      %v6323 = vld [vmem:[%s6295 + $0x6c] sm:$0xf]
      %v6324 = vld [vmem:[%s6295 + $0x70] sm:$0xf]
      %v6325 = vld [vmem:[%s6295 + $0x74] sm:$0xf]
      %v6326 = vld [vmem:[%s6295 + $0x78] sm:$0xf]
      %v6327 = vld [vmem:[%s6295 + $0x7c] sm:$0xf]
      %v6328 = vld [vmem:[%s6295 + $0x80] sm:$0xf]
      %v6329 = vld [vmem:[%s6295 + $0x84] sm:$0xf]
      %v6330 = vld [vmem:[%s6295 + $0x88] sm:$0xf]
      %v6331 = vld [vmem:[%s6295 + $0x8c] sm:$0xf]
      %v6332 = vld [vmem:[%s6295 + $0x90] sm:$0xf]
      %v6333 = vld [vmem:[%s6295 + $0x94] sm:$0xf]
      %v6334 = vld [vmem:[%s6295 + $0x98] sm:$0xf]
      %v6335 = vld [vmem:[%s6295 + $0x9c] sm:$0xf]
      %v6336 = vld [vmem:[%s6295 + $0xa0] sm:$0xf]
      %v6337 = vld [vmem:[%s6295 + $0xa4] sm:$0xf]
      %v6338 = vld [vmem:[%s6295 + $0xa8] sm:$0xf]
      %v6339 = vld [vmem:[%s6295 + $0xac] sm:$0xf]
      %v6340 = vld [vmem:[%s6295 + $0xb0] sm:$0xf]
      %v6341 = vld [vmem:[%s6295 + $0xb4] sm:$0xf]
      %v6342 = vld [vmem:[%s6295 + $0xb8] sm:$0xf]
      %v6343 = vld [vmem:[%s6295 + $0xbc] sm:$0xf]
      %v6344 = vld [vmem:[%s6295 + $0xc0] sm:$0xf]
      %v6345 = vld [vmem:[%s6295 + $0xc4] sm:$0xf]
      %v6346 = vld [vmem:[%s6295 + $0xc8] sm:$0xf]
      %v6347 = vld [vmem:[%s6295 + $0xcc] sm:$0xf]
      %v6348 = vld [vmem:[%s6295 + $0xd0] sm:$0xf]
      %v6349 = vld [vmem:[%s6295 + $0xd4] sm:$0xf]
      %v6350 = vld [vmem:[%s6295 + $0xd8] sm:$0xf]
      %v6351 = vld [vmem:[%s6295 + $0xdc] sm:$0xf]
      %v6352 = vld [vmem:[%s6295 + $0xe0] sm:$0xf]
      %v6353 = vld [vmem:[%s6295 + $0xe4] sm:$0xf]
      %v6354 = vld [vmem:[%s6295 + $0xe8] sm:$0xf]
      %v6355 = vld [vmem:[%s6295 + $0xec] sm:$0xf]
      %v6356 = vld [vmem:[%s6295 + $0xf0] sm:$0xf]
      %v6357 = vld [vmem:[%s6295 + $0xf4] sm:$0xf]
      %v6358 = vld [vmem:[%s6295 + $0xf8] sm:$0xf]
      %v6359 = vld [vmem:[%s6295 + $0xfc] sm:$0xf]
      %v6360 = vld [vmem:[%s6295 + $0x100] sm:$0xf]
      %v6361 = vld [vmem:[%s6295 + $0x104] sm:$0xf]
      %v6362 = vld [vmem:[%s6295 + $0x108] sm:$0xf]
      %v6363 = vld [vmem:[%s6295 + $0x10c] sm:$0xf]
      %v6364 = vld [vmem:[%s6295 + $0x110] sm:$0xf]
      %v6365 = vld [vmem:[%s6295 + $0x114] sm:$0xf]
      %v6366 = vld [vmem:[%s6295 + $0x118] sm:$0xf]
      %v6367 = vld [vmem:[%s6295 + $0x11c] sm:$0xf]
      %s6368 = scalar_lea.vmem %s4, 3
      %v6369 = vld [vmem:[%s6368] sm:$0x1]
      %v6370 = vld [vmem:[#allocation4] sm:$0xff]
      %v6371 = vld [vmem:[#allocation4 + $0x8] sm:$0xff]
      %v6372 = vld [vmem:[#allocation4 + $0x10] sm:$0x3]
      %v6373 = vld [vmem:[#allocation4 + $0x18] sm:$0xff]
      %v6374 = vld [vmem:[#allocation4 + $0x20] sm:$0xff]
      %v6375 = vld [vmem:[#allocation4 + $0x28] sm:$0x3]
      %v6376 = vld [vmem:[#allocation4 + $0x30] sm:$0xff]
      %v6377 = vld [vmem:[#allocation4 + $0x38] sm:$0xff]
      %v6378 = vld [vmem:[#allocation4 + $0x40] sm:$0x3]
      %v6379 = vld [vmem:[#allocation4 + $0x48] sm:$0xff]
      %v6380 = vld [vmem:[#allocation4 + $0x50] sm:$0xff]
      %v6381 = vld [vmem:[#allocation4 + $0x58] sm:$0x3]
      %v6382 = vld [vmem:[#allocation4 + $0x60] sm:$0xff]
      %v6383 = vld [vmem:[#allocation4 + $0x68] sm:$0xff]
      %v6384 = vld [vmem:[#allocation4 + $0x70] sm:$0x3]
      %v6385 = vld [vmem:[#allocation4 + $0x78] sm:$0xff]
      %v6386 = vld [vmem:[#allocation4 + $0x80] sm:$0xff]
      %v6387 = vld [vmem:[#allocation4 + $0x88] sm:$0x3]
      %v6388 = vld [vmem:[#allocation4 + $0x90] sm:$0xff]
      %v6389 = vld [vmem:[#allocation4 + $0x98] sm:$0xff]
      %v6390 = vld [vmem:[#allocation4 + $0xa0] sm:$0x3]
      %v6391 = vld [vmem:[#allocation4 + $0xa8] sm:$0xff]
      %v6392 = vld [vmem:[#allocation4 + $0xb0] sm:$0xff]
      %v6393 = vld [vmem:[#allocation4 + $0xb8] sm:$0x3]
      %v6394 = vld [vmem:[#allocation4 + $0xc0] sm:$0xff]
      %v6395 = vld [vmem:[#allocation4 + $0xc8] sm:$0xff]
      %v6396 = vld [vmem:[#allocation4 + $0xd0] sm:$0x3]
      %v6397 = vld [vmem:[#allocation4 + $0xd8] sm:$0xff]
      %v6398 = vld [vmem:[#allocation4 + $0xe0] sm:$0xff]
      %v6399 = vld [vmem:[#allocation4 + $0xe8] sm:$0x3]
      %v6400 = vld [vmem:[#allocation4 + $0xf0] sm:$0xff]
      %v6401 = vld [vmem:[#allocation4 + $0xf8] sm:$0xff]
      %v6402 = vld [vmem:[#allocation4 + $0x100] sm:$0x3]
      %v6403 = vld [vmem:[#allocation4 + $0x108] sm:$0xff]
      %v6404 = vld [vmem:[#allocation4 + $0x110] sm:$0xff]
      %v6405 = vld [vmem:[#allocation4 + $0x118] sm:$0x3]
      %v6406 = vld [vmem:[#allocation4 + $0x120] sm:$0xff]
      %v6407 = vld [vmem:[#allocation4 + $0x128] sm:$0xff]
      %v6408 = vld [vmem:[#allocation4 + $0x130] sm:$0x3]
      %v6409 = vld [vmem:[#allocation4 + $0x138] sm:$0xff]
      %v6410 = vld [vmem:[#allocation4 + $0x140] sm:$0xff]
      %v6411 = vld [vmem:[#allocation4 + $0x148] sm:$0x3]
      %v6412 = vld [vmem:[#allocation4 + $0x150] sm:$0xff]
      %v6413 = vld [vmem:[#allocation4 + $0x158] sm:$0xff]
      %v6414 = vld [vmem:[#allocation4 + $0x160] sm:$0x3]
      %v6415 = vld [vmem:[#allocation4 + $0x168] sm:$0xff]
      %v6416 = vld [vmem:[#allocation4 + $0x170] sm:$0xff]
      %v6417 = vld [vmem:[#allocation4 + $0x178] sm:$0x3]
      %v6418 = vld [vmem:[#allocation4 + $0x180] sm:$0xff]
      %v6419 = vld [vmem:[#allocation4 + $0x188] sm:$0xff]
      %v6420 = vld [vmem:[#allocation4 + $0x190] sm:$0x3]
      %v6421 = vld [vmem:[#allocation4 + $0x198] sm:$0xff]
      %v6422 = vld [vmem:[#allocation4 + $0x1a0] sm:$0xff]
      %v6423 = vld [vmem:[#allocation4 + $0x1a8] sm:$0x3]
      %v6478 = vrot.slane %v6370, 1
      %v6479 = vrot.slane %v6371, 1
      %v6480 = vsel %vm682, %v6478, %v6479
      %v6481 = vrot.slane %v6372, 1
      %v6482 = vsel %vm682, %v6479, %v6481
      %v6483 = vrot.slane %v6373, 1
      %v6484 = vrot.slane %v6374, 1
      %v6485 = vsel %vm682, %v6483, %v6484
      %v6486 = vrot.slane %v6375, 1
      %v6487 = vsel %vm682, %v6484, %v6486
      %v6488 = vrot.slane %v6376, 1
      %v6489 = vrot.slane %v6377, 1
      %v6490 = vsel %vm682, %v6488, %v6489
      %v6491 = vrot.slane %v6378, 1
      %v6492 = vsel %vm682, %v6489, %v6491
      %v6493 = vrot.slane %v6379, 1
      %v6494 = vrot.slane %v6380, 1
      %v6495 = vsel %vm682, %v6493, %v6494
      %v6496 = vrot.slane %v6381, 1
      %v6497 = vsel %vm682, %v6494, %v6496
      %v6498 = vrot.slane %v6382, 1
      %v6499 = vrot.slane %v6383, 1
      %v6500 = vsel %vm682, %v6498, %v6499
      %v6501 = vrot.slane %v6384, 1
      %v6502 = vsel %vm682, %v6499, %v6501
      %v6503 = vrot.slane %v6385, 1
      %v6504 = vrot.slane %v6386, 1
      %v6505 = vsel %vm682, %v6503, %v6504
      %v6506 = vrot.slane %v6387, 1
      %v6507 = vsel %vm682, %v6504, %v6506
      %v6508 = vrot.slane %v6388, 1
      %v6509 = vrot.slane %v6389, 1
      %v6510 = vsel %vm682, %v6508, %v6509
      %v6511 = vrot.slane %v6390, 1
      %v6512 = vsel %vm682, %v6509, %v6511
      %v6513 = vrot.slane %v6391, 1
      %v6514 = vrot.slane %v6392, 1
      %v6515 = vsel %vm682, %v6513, %v6514
      %v6516 = vrot.slane %v6393, 1
      %v6517 = vsel %vm682, %v6514, %v6516
      %v6518 = vrot.slane %v6394, 1
      %v6519 = vrot.slane %v6395, 1
      %v6520 = vsel %vm682, %v6518, %v6519
      %v6521 = vrot.slane %v6396, 1
      %v6522 = vsel %vm682, %v6519, %v6521
      %v6523 = vrot.slane %v6397, 1
      %v6524 = vrot.slane %v6398, 1
      %v6525 = vsel %vm682, %v6523, %v6524
      %v6526 = vrot.slane %v6399, 1
      %v6527 = vsel %vm682, %v6524, %v6526
      %v6528 = vrot.slane %v6400, 1
      %v6529 = vrot.slane %v6401, 1
      %v6530 = vsel %vm682, %v6528, %v6529
      %v6531 = vrot.slane %v6402, 1
      %v6532 = vsel %vm682, %v6529, %v6531
      %v6533 = vrot.slane %v6403, 1
      %v6534 = vrot.slane %v6404, 1
      %v6535 = vsel %vm682, %v6533, %v6534
      %v6536 = vrot.slane %v6405, 1
      %v6537 = vsel %vm682, %v6534, %v6536
      %v6538 = vrot.slane %v6406, 1
      %v6539 = vrot.slane %v6407, 1
      %v6540 = vsel %vm682, %v6538, %v6539
      %v6541 = vrot.slane %v6408, 1
      %v6542 = vsel %vm682, %v6539, %v6541
      %v6543 = vrot.slane %v6409, 1
      %v6544 = vrot.slane %v6410, 1
      %v6545 = vsel %vm682, %v6543, %v6544
      %v6546 = vrot.slane %v6411, 1
      %v6547 = vsel %vm682, %v6544, %v6546
      %v6548 = vrot.slane %v6412, 1
      %v6549 = vrot.slane %v6413, 1
      %v6550 = vsel %vm682, %v6548, %v6549
      %v6551 = vrot.slane %v6414, 1
      %v6552 = vsel %vm682, %v6549, %v6551
      %v6553 = vrot.slane %v6415, 1
      %v6554 = vrot.slane %v6416, 1
      %v6555 = vsel %vm682, %v6553, %v6554
      %v6556 = vrot.slane %v6417, 1
      %v6557 = vsel %vm682, %v6554, %v6556
      %v6558 = vrot.slane %v6418, 1
      %v6559 = vrot.slane %v6419, 1
      %v6560 = vsel %vm682, %v6558, %v6559
      %v6561 = vrot.slane %v6420, 1
      %v6562 = vsel %vm682, %v6559, %v6561
      %v6563 = vrot.slane %v6421, 1
      %v6564 = vrot.slane %v6422, 1
      %v6565 = vsel %vm682, %v6563, %v6564
      %v6566 = vrot.slane %v6423, 1
      %v6567 = vsel %vm682, %v6564, %v6566
      %6568 = vrot.lane.b32.xlu0 %v6480, 64
      %v6569 = vpop.permute.xlu0 %6568
      %6570 = vrot.lane.b32.xlu0 %v6482, 64
      %v6571 = vpop.permute.xlu0 %6570
      %6572 = vrot.lane.b32.xlu0 %v6485, 64
      %v6573 = vpop.permute.xlu0 %6572
      %6574 = vrot.lane.b32.xlu0 %v6487, 64
      %v6575 = vpop.permute.xlu0 %6574
      %6576 = vrot.lane.b32.xlu0 %v6490, 64
      %v6577 = vpop.permute.xlu0 %6576
      %6578 = vrot.lane.b32.xlu0 %v6492, 64
      %v6579 = vpop.permute.xlu0 %6578
      %6580 = vrot.lane.b32.xlu0 %v6495, 64
      %v6581 = vpop.permute.xlu0 %6580
      %6582 = vrot.lane.b32.xlu0 %v6497, 64
      %v6583 = vpop.permute.xlu0 %6582
      %6584 = vrot.lane.b32.xlu0 %v6500, 64
      %v6585 = vpop.permute.xlu0 %6584
      %6586 = vrot.lane.b32.xlu0 %v6502, 64
      %v6587 = vpop.permute.xlu0 %6586
      %6588 = vrot.lane.b32.xlu0 %v6505, 64
      %v6589 = vpop.permute.xlu0 %6588
      %6590 = vrot.lane.b32.xlu0 %v6507, 64
      %v6591 = vpop.permute.xlu0 %6590
      %6592 = vrot.lane.b32.xlu0 %v6510, 64
      %v6593 = vpop.permute.xlu0 %6592
      %6594 = vrot.lane.b32.xlu0 %v6512, 64
      %v6595 = vpop.permute.xlu0 %6594
      %6596 = vrot.lane.b32.xlu0 %v6515, 64
      %v6597 = vpop.permute.xlu0 %6596
      %6598 = vrot.lane.b32.xlu0 %v6517, 64
      %v6599 = vpop.permute.xlu0 %6598
      %6600 = vrot.lane.b32.xlu0 %v6520, 64
      %v6601 = vpop.permute.xlu0 %6600
      %6602 = vrot.lane.b32.xlu0 %v6522, 64
      %v6603 = vpop.permute.xlu0 %6602
      %6604 = vrot.lane.b32.xlu0 %v6525, 64
      %v6605 = vpop.permute.xlu0 %6604
      %6606 = vrot.lane.b32.xlu0 %v6527, 64
      %v6607 = vpop.permute.xlu0 %6606
      %6608 = vrot.lane.b32.xlu0 %v6530, 64
      %v6609 = vpop.permute.xlu0 %6608
      %6610 = vrot.lane.b32.xlu0 %v6532, 64
      %v6611 = vpop.permute.xlu0 %6610
      %6612 = vrot.lane.b32.xlu0 %v6535, 64
      %v6613 = vpop.permute.xlu0 %6612
      %6614 = vrot.lane.b32.xlu0 %v6537, 64
      %v6615 = vpop.permute.xlu0 %6614
      %6616 = vrot.lane.b32.xlu0 %v6540, 64
      %v6617 = vpop.permute.xlu0 %6616
      %6618 = vrot.lane.b32.xlu0 %v6542, 64
      %v6619 = vpop.permute.xlu0 %6618
      %6620 = vrot.lane.b32.xlu0 %v6545, 64
      %v6621 = vpop.permute.xlu0 %6620
      %6622 = vrot.lane.b32.xlu0 %v6547, 64
      %v6623 = vpop.permute.xlu0 %6622
      %6624 = vrot.lane.b32.xlu0 %v6550, 64
      %v6625 = vpop.permute.xlu0 %6624
      %6626 = vrot.lane.b32.xlu0 %v6552, 64
      %v6627 = vpop.permute.xlu0 %6626
      %6628 = vrot.lane.b32.xlu0 %v6555, 64
      %v6629 = vpop.permute.xlu0 %6628
      %6630 = vrot.lane.b32.xlu0 %v6557, 64
      %v6631 = vpop.permute.xlu0 %6630
      %6632 = vrot.lane.b32.xlu0 %v6560, 64
      %v6633 = vpop.permute.xlu0 %6632
      %6634 = vrot.lane.b32.xlu0 %v6562, 64
      %v6635 = vpop.permute.xlu0 %6634
      %6636 = vrot.lane.b32.xlu0 %v6565, 64
      %v6637 = vpop.permute.xlu0 %6636
      %6638 = vrot.lane.b32.xlu0 %v6567, 64
      %v6639 = vpop.permute.xlu0 %6638
      %v6676 = vrot.slane %v6370, 2
      %v6677 = vrot.slane %v6371, 2
      %v6678 = vsel %vm881, %v6676, %v6677
      %v6679 = vrot.slane %v6372, 2
      %v6680 = vsel %vm881, %v6677, %v6679
      %v6681 = vrot.slane %v6373, 2
      %v6682 = vrot.slane %v6374, 2
      %v6683 = vsel %vm881, %v6681, %v6682
      %v6684 = vrot.slane %v6375, 2
      %v6685 = vsel %vm881, %v6682, %v6684
      %v6686 = vrot.slane %v6376, 2
      %v6687 = vrot.slane %v6377, 2
      %v6688 = vsel %vm881, %v6686, %v6687
      %v6689 = vrot.slane %v6378, 2
      %v6690 = vsel %vm881, %v6687, %v6689
      %v6691 = vrot.slane %v6379, 2
      %v6692 = vrot.slane %v6380, 2
      %v6693 = vsel %vm881, %v6691, %v6692
      %v6694 = vrot.slane %v6381, 2
      %v6695 = vsel %vm881, %v6692, %v6694
      %v6696 = vrot.slane %v6382, 2
      %v6697 = vrot.slane %v6383, 2
      %v6698 = vsel %vm881, %v6696, %v6697
      %v6699 = vrot.slane %v6384, 2
      %v6700 = vsel %vm881, %v6697, %v6699
      %v6701 = vrot.slane %v6385, 2
      %v6702 = vrot.slane %v6386, 2
      %v6703 = vsel %vm881, %v6701, %v6702
      %v6704 = vrot.slane %v6387, 2
      %v6705 = vsel %vm881, %v6702, %v6704
      %v6706 = vrot.slane %v6388, 2
      %v6707 = vrot.slane %v6389, 2
      %v6708 = vsel %vm881, %v6706, %v6707
      %v6709 = vrot.slane %v6390, 2
      %v6710 = vsel %vm881, %v6707, %v6709
      %v6711 = vrot.slane %v6391, 2
      %v6712 = vrot.slane %v6392, 2
      %v6713 = vsel %vm881, %v6711, %v6712
      %v6714 = vrot.slane %v6393, 2
      %v6715 = vsel %vm881, %v6712, %v6714
      %v6716 = vrot.slane %v6394, 2
      %v6717 = vrot.slane %v6395, 2
      %v6718 = vsel %vm881, %v6716, %v6717
      %v6719 = vrot.slane %v6396, 2
      %v6720 = vsel %vm881, %v6717, %v6719
      %v6721 = vrot.slane %v6397, 2
      %v6722 = vrot.slane %v6398, 2
      %v6723 = vsel %vm881, %v6721, %v6722
      %v6724 = vrot.slane %v6399, 2
      %v6725 = vsel %vm881, %v6722, %v6724
      %v6726 = vrot.slane %v6400, 2
      %v6727 = vrot.slane %v6401, 2
      %v6728 = vsel %vm881, %v6726, %v6727
      %v6729 = vrot.slane %v6402, 2
      %v6730 = vsel %vm881, %v6727, %v6729
      %v6731 = vrot.slane %v6403, 2
      %v6732 = vrot.slane %v6404, 2
      %v6733 = vsel %vm881, %v6731, %v6732
      %v6734 = vrot.slane %v6405, 2
      %v6735 = vsel %vm881, %v6732, %v6734
      %v6736 = vrot.slane %v6406, 2
      %v6737 = vrot.slane %v6407, 2
      %v6738 = vsel %vm881, %v6736, %v6737
      %v6739 = vrot.slane %v6408, 2
      %v6740 = vsel %vm881, %v6737, %v6739
      %v6741 = vrot.slane %v6409, 2
      %v6742 = vrot.slane %v6410, 2
      %v6743 = vsel %vm881, %v6741, %v6742
      %v6744 = vrot.slane %v6411, 2
      %v6745 = vsel %vm881, %v6742, %v6744
      %v6746 = vrot.slane %v6412, 2
      %v6747 = vrot.slane %v6413, 2
      %v6748 = vsel %vm881, %v6746, %v6747
      %v6749 = vrot.slane %v6414, 2
      %v6750 = vsel %vm881, %v6747, %v6749
      %v6751 = vrot.slane %v6415, 2
      %v6752 = vrot.slane %v6416, 2
      %v6753 = vsel %vm881, %v6751, %v6752
      %v6754 = vrot.slane %v6417, 2
      %v6755 = vsel %vm881, %v6752, %v6754
      %v6756 = vrot.slane %v6418, 2
      %v6757 = vrot.slane %v6419, 2
      %v6758 = vsel %vm881, %v6756, %v6757
      %v6759 = vrot.slane %v6420, 2
      %v6760 = vsel %vm881, %v6757, %v6759
      %v6761 = vrot.slane %v6421, 2
      %v6762 = vrot.slane %v6422, 2
      %v6763 = vsel %vm881, %v6761, %v6762
      %v6764 = vrot.slane %v6423, 2
      %v6765 = vsel %vm881, %v6762, %v6764
      %v6802 = vsel %vm380, %v6370, %v6569
      %v6803 = vsel %vm380, %v6371, %v6571
      %v6804 = vsel %vm380, %v6373, %v6573
      %v6805 = vsel %vm380, %v6374, %v6575
      %v6806 = vsel %vm380, %v6376, %v6577
      %v6807 = vsel %vm380, %v6377, %v6579
      %v6808 = vsel %vm380, %v6379, %v6581
      %v6809 = vsel %vm380, %v6380, %v6583
      %v6810 = vsel %vm380, %v6382, %v6585
      %v6811 = vsel %vm380, %v6383, %v6587
      %v6812 = vsel %vm380, %v6385, %v6589
      %v6813 = vsel %vm380, %v6386, %v6591
      %v6814 = vsel %vm380, %v6388, %v6593
      %v6815 = vsel %vm380, %v6389, %v6595
      %v6816 = vsel %vm380, %v6391, %v6597
      %v6817 = vsel %vm380, %v6392, %v6599
      %v6818 = vsel %vm380, %v6394, %v6601
      %v6819 = vsel %vm380, %v6395, %v6603
      %v6820 = vsel %vm380, %v6397, %v6605
      %v6821 = vsel %vm380, %v6398, %v6607
      %v6822 = vsel %vm380, %v6400, %v6609
      %v6823 = vsel %vm380, %v6401, %v6611
      %v6824 = vsel %vm380, %v6403, %v6613
      %v6825 = vsel %vm380, %v6404, %v6615
      %v6826 = vsel %vm380, %v6406, %v6617
      %v6827 = vsel %vm380, %v6407, %v6619
      %v6828 = vsel %vm380, %v6409, %v6621
      %v6829 = vsel %vm380, %v6410, %v6623
      %v6830 = vsel %vm380, %v6412, %v6625
      %v6831 = vsel %vm380, %v6413, %v6627
      %v6832 = vsel %vm380, %v6415, %v6629
      %v6833 = vsel %vm380, %v6416, %v6631
      %v6834 = vsel %vm380, %v6418, %v6633
      %v6835 = vsel %vm380, %v6419, %v6635
      %v6836 = vsel %vm380, %v6421, %v6637
      %v6837 = vsel %vm380, %v6422, %v6639
      %v6838 = vpack.c.bf16 %v6803, %v6802
      %v6839 = vpack.c.bf16 %v6680, %v6678
      %v6840 = vpack.c.bf16 %v6805, %v6804
      %v6841 = vpack.c.bf16 %v6685, %v6683
      %v6842 = vpack.c.bf16 %v6807, %v6806
      %v6843 = vpack.c.bf16 %v6690, %v6688
      %v6844 = vpack.c.bf16 %v6809, %v6808
      %v6845 = vpack.c.bf16 %v6695, %v6693
      %v6846 = vpack.c.bf16 %v6811, %v6810
      %v6847 = vpack.c.bf16 %v6700, %v6698
      %v6848 = vpack.c.bf16 %v6813, %v6812
      %v6849 = vpack.c.bf16 %v6705, %v6703
      %v6850 = vpack.c.bf16 %v6815, %v6814
      %v6851 = vpack.c.bf16 %v6710, %v6708
      %v6852 = vpack.c.bf16 %v6817, %v6816
      %v6853 = vpack.c.bf16 %v6715, %v6713
      %v6854 = vpack.c.bf16 %v6819, %v6818
      %v6855 = vpack.c.bf16 %v6720, %v6718
      %v6856 = vpack.c.bf16 %v6821, %v6820
      %v6857 = vpack.c.bf16 %v6725, %v6723
      %v6858 = vpack.c.bf16 %v6823, %v6822
      %v6859 = vpack.c.bf16 %v6730, %v6728
      %v6860 = vpack.c.bf16 %v6825, %v6824
      %v6861 = vpack.c.bf16 %v6735, %v6733
      %v6862 = vpack.c.bf16 %v6827, %v6826
      %v6863 = vpack.c.bf16 %v6740, %v6738
      %v6864 = vpack.c.bf16 %v6829, %v6828
      %v6865 = vpack.c.bf16 %v6745, %v6743
      %v6866 = vpack.c.bf16 %v6831, %v6830
      %v6867 = vpack.c.bf16 %v6750, %v6748
      %v6868 = vpack.c.bf16 %v6833, %v6832
      %v6869 = vpack.c.bf16 %v6755, %v6753
      %v6870 = vpack.c.bf16 %v6835, %v6834
      %v6871 = vpack.c.bf16 %v6760, %v6758
      %v6896 = vunpack.c.l.b16 %v6320
      %v6897 = vunpack.c.l.b16 %v6321
      %v6898 = vunpack.c.l.b16 %v6322
      %v6899 = vunpack.c.l.b16 %v6323
      %v6900 = vunpack.c.l.b16 %v6324
      %v6901 = vunpack.c.l.b16 %v6325
      %v6902 = vunpack.c.l.b16 %v6326
      %v6903 = vunpack.c.l.b16 %v6327
      %v6904 = vunpack.c.l.b16 %v6328
      %v6905 = vunpack.c.l.b16 %v6329
      %v6906 = vunpack.c.l.b16 %v6330
      %v6907 = vunpack.c.l.b16 %v6331
      %v6908 = vunpack.c.l.b16 %v6332
      %v6909 = vunpack.c.l.b16 %v6333
      %v6910 = vunpack.c.l.b16 %v6334
      %v6911 = vunpack.c.l.b16 %v6335
      %v6912 = vunpack.c.l.b16 %v6336
      %v6913 = vunpack.c.l.b16 %v6337
      %v6914 = vunpack.c.l.b16 %v6338
      %v6915 = vunpack.c.l.b16 %v6339
      %v6916 = vunpack.c.l.b16 %v6340
      %v6917 = vunpack.c.l.b16 %v6341
      %v6918 = vunpack.c.l.b16 %v6342
      %v6919 = vunpack.c.l.b16 %v6343
      %v6920 = vpack.c.b16 %v6897, %v6896
      %v6921 = vpack.c.b16 %v6899, %v6898
      %v6922 = vpack.c.b16 %v6901, %v6900
      %v6923 = vpack.c.b16 %v6903, %v6902
      %v6924 = vpack.c.b16 %v6905, %v6904
      %v6925 = vpack.c.b16 %v6907, %v6906
      %v6926 = vpack.c.b16 %v6909, %v6908
      %v6927 = vpack.c.b16 %v6911, %v6910
      %v6928 = vpack.c.b16 %v6913, %v6912
      %v6929 = vpack.c.b16 %v6915, %v6914
      %v6930 = vpack.c.b16 %v6917, %v6916
      %v6931 = vpack.c.b16 %v6919, %v6918
      %v6945 = vsel %vm380, %v6841, 0
      %v6948 = vsel %vm380, %v6843, 0
      %v6951 = vsel %vm380, %v6845, 0
      %v6954 = vsel %vm380, %v6847, 0
      %v6957 = vsel %vm380, %v6849, 0
      %v6960 = vsel %vm380, %v6851, 0
      %v6963 = vsel %vm380, %v6853, 0
      %v6966 = vsel %vm380, %v6855, 0
      %v6969 = vsel %vm380, %v6857, 0
      %v6972 = vsel %vm380, %v6859, 0
      %v6975 = vsel %vm380, %v6861, 0
      %v6978 = vsel %vm380, %v6863, 0
      %v6981 = vsel %vm380, %v6865, 0
      %v6984 = vsel %vm380, %v6867, 0
      %v6987 = vsel %vm380, %v6869, 0
      %v6990 = vsel %vm380, %v6871, 0
      %6992 = vmatprep.subr.bf16.mxu0 0
      %6993 = vmatpush1.bf16.msra.mxu0 %v6927
      %6994 = vmatprep.subr.bf16.mxu0 0
      %6995 = vmatpush1.bf16.msra.mxu0 %v6926
      %6996 = vmatprep.subr.bf16.mxu0 0
      %6997 = vmatpush1.bf16.msra.mxu0 %v6925
      %6998 = vmatprep.subr.bf16.mxu0 0
      %6999 = vmatpush1.bf16.msra.mxu0 %v6924
      %7000 = vmatprep.subr.bf16.mxu0 0
      %7001 = vmatpush1.bf16.msra.mxu0 %v6923
      %7002 = vmatprep.subr.bf16.mxu0 0
      %7003 = vmatpush1.bf16.msra.mxu0 %v6922
      %7004 = vmatprep.subr.bf16.mxu0 0
      %7005 = vmatpush1.bf16.msra.mxu0 %v6921
      %7006 = vmatprep.subr.bf16.mxu0 0
      %7007 = vmatpush1.bf16.msra.mxu0 %v6920
      %7008 = vmatprep.subr.bf16.mxu0 0
      %7009 = vmatpush2.bf16.msra.mxu0 0
      %7010 = vmatprep.subr.bf16.mxu0 0
      %7011 = vmatpush2.bf16.msra.mxu0 0
      %7012 = vmatprep.subr.bf16.mxu0 0
      %7013 = vmatpush2.bf16.msra.mxu0 0
      %7014 = vmatprep.subr.bf16.mxu0 0
      %7015 = vmatpush2.bf16.msra.mxu0 0
      %7016 = vmatprep.subr.bf16.mxu0 0
      %7017 = vmatpush2.bf16.msra.mxu0 %v6931
      %7018 = vmatprep.subr.bf16.mxu0 0
      %7019 = vmatpush2.bf16.msra.mxu0 %v6930
      %7020 = vmatprep.subr.bf16.mxu0 0
      %7021 = vmatpush2.bf16.msra.mxu0 %v6929
      %7022 = vmatprep.subr.bf16.mxu0 0
      %7023 = vmatpush2.bf16.msra.mxu0 %v6928
      %7024 = vmatprep.mubr.bf16.mxu0 %v6945
      %7025 = vmatmul.mubr.bf16.gmra.mxu0 %v6840
      %v7026 = vpop.f32.mrf.mxu0
      %v7027 = vadd.f32 0.0, %v7026
      %v7028 = vpop.f32.mrf.mxu0
      %v7029 = vpop.f32.mrf.mxu0
      %v7030 = vadd.f32 0.0, %v7029
      %v7031 = vpop.f32.mrf.mxu0
      %7032 = vmatprep.mubr.bf16.mxu0 %v6948
      %7033 = vmatmul.mubr.bf16.gmra.mxu0 %v6842
      %v7034 = vpop.f32.mrf.mxu0
      %v7035 = vadd.f32 0.0, %v7034
      %v7036 = vpop.f32.mrf.mxu0
      %v7037 = vpop.f32.mrf.mxu0
      %v7038 = vadd.f32 0.0, %v7037
      %v7039 = vpop.f32.mrf.mxu0
      %7040 = vmatprep.mubr.bf16.mxu0 %v6951
      %7041 = vmatmul.mubr.bf16.gmra.mxu0 %v6844
      %v7042 = vpop.f32.mrf.mxu0
      %v7043 = vadd.f32 0.0, %v7042
      %v7044 = vpop.f32.mrf.mxu0
      %v7045 = vpop.f32.mrf.mxu0
      %v7046 = vadd.f32 0.0, %v7045
      %v7047 = vpop.f32.mrf.mxu0
      %7048 = vmatprep.mubr.bf16.mxu0 %v6954
      %7049 = vmatmul.mubr.bf16.gmra.mxu0 %v6846
      %v7050 = vpop.f32.mrf.mxu0
      %v7051 = vadd.f32 0.0, %v7050
      %v7052 = vpop.f32.mrf.mxu0
      %v7053 = vpop.f32.mrf.mxu0
      %v7054 = vadd.f32 0.0, %v7053
      %v7055 = vpop.f32.mrf.mxu0
      %7056 = vmatprep.mubr.bf16.mxu0 %v6957
      %7057 = vmatmul.mubr.bf16.gmra.mxu0 %v6848
      %v7058 = vpop.f32.mrf.mxu0
      %v7059 = vadd.f32 0.0, %v7058
      %v7060 = vpop.f32.mrf.mxu0
      %v7061 = vpop.f32.mrf.mxu0
      %v7062 = vadd.f32 0.0, %v7061
      %v7063 = vpop.f32.mrf.mxu0
      %7064 = vmatprep.mubr.bf16.mxu0 %v6960
      %7065 = vmatmul.mubr.bf16.gmra.mxu0 %v6850
      %v7066 = vpop.f32.mrf.mxu0
      %v7067 = vadd.f32 0.0, %v7066
      %v7068 = vpop.f32.mrf.mxu0
      %v7069 = vpop.f32.mrf.mxu0
      %v7070 = vadd.f32 0.0, %v7069
      %v7071 = vpop.f32.mrf.mxu0
      %7072 = vmatprep.mubr.bf16.mxu0 %v6963
      %7073 = vmatmul.mubr.bf16.gmra.mxu0 %v6852
      %v7074 = vpop.f32.mrf.mxu0
      %v7075 = vadd.f32 0.0, %v7074
      %v7076 = vpop.f32.mrf.mxu0
      %v7077 = vpop.f32.mrf.mxu0
      %v7078 = vadd.f32 0.0, %v7077
      %v7079 = vpop.f32.mrf.mxu0
      %7080 = vmatprep.mubr.bf16.mxu0 %v6966
      %7081 = vmatmul.mubr.bf16.gmra.mxu0 %v6854
      %v7082 = vpop.f32.mrf.mxu0
      %v7083 = vadd.f32 0.0, %v7082
      %v7084 = vpop.f32.mrf.mxu0
      %v7085 = vpop.f32.mrf.mxu0
      %v7086 = vadd.f32 0.0, %v7085
      %v7087 = vpop.f32.mrf.mxu0
      %7088 = vmatprep.mubr.bf16.mxu0 %v6969
      %7089 = vmatmul.mubr.bf16.gmra.mxu0 %v6856
      %v7090 = vpop.f32.mrf.mxu0
      %v7091 = vadd.f32 0.0, %v7090
      %v7092 = vpop.f32.mrf.mxu0
      %v7093 = vpop.f32.mrf.mxu0
      %v7094 = vadd.f32 0.0, %v7093
      %v7095 = vpop.f32.mrf.mxu0
      %7096 = vmatprep.mubr.bf16.mxu0 %v6972
      %7097 = vmatmul.mubr.bf16.gmra.mxu0 %v6858
      %v7098 = vpop.f32.mrf.mxu0
      %v7099 = vadd.f32 0.0, %v7098
      %v7100 = vpop.f32.mrf.mxu0
      %v7101 = vpop.f32.mrf.mxu0
      %v7102 = vadd.f32 0.0, %v7101
      %v7103 = vpop.f32.mrf.mxu0
      %7104 = vmatprep.mubr.bf16.mxu0 %v6975
      %7105 = vmatmul.mubr.bf16.gmra.mxu0 %v6860
      %v7106 = vpop.f32.mrf.mxu0
      %v7107 = vadd.f32 0.0, %v7106
      %v7108 = vpop.f32.mrf.mxu0
      %v7109 = vpop.f32.mrf.mxu0
      %v7110 = vadd.f32 0.0, %v7109
      %v7111 = vpop.f32.mrf.mxu0
      %7112 = vmatprep.mubr.bf16.mxu0 %v6978
      %7113 = vmatmul.mubr.bf16.gmra.mxu0 %v6862
      %v7114 = vpop.f32.mrf.mxu0
      %v7115 = vadd.f32 0.0, %v7114
      %v7116 = vpop.f32.mrf.mxu0
      %v7117 = vpop.f32.mrf.mxu0
      %v7118 = vadd.f32 0.0, %v7117
      %v7119 = vpop.f32.mrf.mxu0
      %7120 = vmatprep.mubr.bf16.mxu0 %v6981
      %7121 = vmatmul.mubr.bf16.gmra.mxu0 %v6864
      %v7122 = vpop.f32.mrf.mxu0
      %v7123 = vadd.f32 0.0, %v7122
      %v7124 = vpop.f32.mrf.mxu0
      %v7125 = vpop.f32.mrf.mxu0
      %v7126 = vadd.f32 0.0, %v7125
      %v7127 = vpop.f32.mrf.mxu0
      %7128 = vmatprep.mubr.bf16.mxu0 %v6984
      %7129 = vmatmul.mubr.bf16.gmra.mxu0 %v6866
      %v7130 = vpop.f32.mrf.mxu0
      %v7131 = vadd.f32 0.0, %v7130
      %v7132 = vpop.f32.mrf.mxu0
      %v7133 = vpop.f32.mrf.mxu0
      %v7134 = vadd.f32 0.0, %v7133
      %v7135 = vpop.f32.mrf.mxu0
      %7136 = vmatprep.mubr.bf16.mxu0 %v6987
      %7137 = vmatmul.mubr.bf16.gmra.mxu0 %v6868
      %v7138 = vpop.f32.mrf.mxu0
      %v7139 = vadd.f32 0.0, %v7138
      %v7140 = vpop.f32.mrf.mxu0
      %v7141 = vpop.f32.mrf.mxu0
      %v7142 = vadd.f32 0.0, %v7141
      %v7143 = vpop.f32.mrf.mxu0
      %7144 = vmatprep.mubr.bf16.mxu0 %v6990
      %7145 = vmatmul.mubr.bf16.gmra.mxu0 %v6870
      %v7146 = vpop.f32.mrf.mxu0
      %v7147 = vadd.f32 0.0, %v7146
      %v7148 = vpop.f32.mrf.mxu0
      %v7149 = vpop.f32.mrf.mxu0
      %v7150 = vadd.f32 0.0, %v7149
      %v7151 = vpop.f32.mrf.mxu0
      %7152 = vdwg.mxu0
      %v7177 = vunpack.c.l.b16 %v6296
      %v7178 = vunpack.c.l.b16 %v6297
      %v7179 = vunpack.c.l.b16 %v6298
      %v7180 = vunpack.c.l.b16 %v6299
      %v7181 = vunpack.c.l.b16 %v6300
      %v7182 = vunpack.c.l.b16 %v6301
      %v7183 = vunpack.c.l.b16 %v6302
      %v7184 = vunpack.c.l.b16 %v6303
      %v7185 = vunpack.c.l.b16 %v6304
      %v7186 = vunpack.c.l.b16 %v6305
      %v7187 = vunpack.c.l.b16 %v6306
      %v7188 = vunpack.c.l.b16 %v6307
      %v7189 = vunpack.c.l.b16 %v6308
      %v7190 = vunpack.c.l.b16 %v6309
      %v7191 = vunpack.c.l.b16 %v6310
      %v7192 = vunpack.c.l.b16 %v6311
      %v7193 = vunpack.c.l.b16 %v6312
      %v7194 = vunpack.c.l.b16 %v6313
      %v7195 = vunpack.c.l.b16 %v6314
      %v7196 = vunpack.c.l.b16 %v6315
      %v7197 = vunpack.c.l.b16 %v6316
      %v7198 = vunpack.c.l.b16 %v6317
      %v7199 = vunpack.c.l.b16 %v6318
      %v7200 = vunpack.c.l.b16 %v6319
      %v7201 = vpack.c.b16 %v7178, %v7177
      %v7202 = vpack.c.b16 %v7180, %v7179
      %v7203 = vpack.c.b16 %v7182, %v7181
      %v7204 = vpack.c.b16 %v7184, %v7183
      %v7205 = vpack.c.b16 %v7186, %v7185
      %v7206 = vpack.c.b16 %v7188, %v7187
      %v7207 = vpack.c.b16 %v7190, %v7189
      %v7208 = vpack.c.b16 %v7192, %v7191
      %v7209 = vpack.c.b16 %v7194, %v7193
      %v7210 = vpack.c.b16 %v7196, %v7195
      %v7211 = vpack.c.b16 %v7198, %v7197
      %v7212 = vpack.c.b16 %v7200, %v7199
      %v7226 = vsel %vm380, %v6839, 0
      %7228 = vmatprep.subr.bf16.mxu0 0
      %7229 = vmatpush1.bf16.msra.mxu0 %v7208
      %7230 = vmatprep.subr.bf16.mxu0 0
      %7231 = vmatpush1.bf16.msra.mxu0 %v7207
      %7232 = vmatprep.subr.bf16.mxu0 0
      %7233 = vmatpush1.bf16.msra.mxu0 %v7206
      %7234 = vmatprep.subr.bf16.mxu0 0
      %7235 = vmatpush1.bf16.msra.mxu0 %v7205
      %7236 = vmatprep.subr.bf16.mxu0 0
      %7237 = vmatpush1.bf16.msra.mxu0 %v7204
      %7238 = vmatprep.subr.bf16.mxu0 0
      %7239 = vmatpush1.bf16.msra.mxu0 %v7203
      %7240 = vmatprep.subr.bf16.mxu0 0
      %7241 = vmatpush1.bf16.msra.mxu0 %v7202
      %7242 = vmatprep.subr.bf16.mxu0 0
      %7243 = vmatpush1.bf16.msra.mxu0 %v7201
      %7244 = vmatprep.subr.bf16.mxu0 0
      %7245 = vmatpush2.bf16.msra.mxu0 0
      %7246 = vmatprep.subr.bf16.mxu0 0
      %7247 = vmatpush2.bf16.msra.mxu0 0
      %7248 = vmatprep.subr.bf16.mxu0 0
      %7249 = vmatpush2.bf16.msra.mxu0 0
      %7250 = vmatprep.subr.bf16.mxu0 0
      %7251 = vmatpush2.bf16.msra.mxu0 0
      %7252 = vmatprep.subr.bf16.mxu0 0
      %7253 = vmatpush2.bf16.msra.mxu0 %v7212
      %7254 = vmatprep.subr.bf16.mxu0 0
      %7255 = vmatpush2.bf16.msra.mxu0 %v7211
      %7256 = vmatprep.subr.bf16.mxu0 0
      %7257 = vmatpush2.bf16.msra.mxu0 %v7210
      %7258 = vmatprep.subr.bf16.mxu0 0
      %7259 = vmatpush2.bf16.msra.mxu0 %v7209
      %7260 = vmatprep.mubr.bf16.mxu0 %v7226
      %7261 = vmatmul.mubr.bf16.gmra.mxu0 %v6838
      %v7262 = vpop.f32.mrf.mxu0
      %v7263 = vadd.f32 %v7027, %v7262
      %v7264 = vpop.f32.mrf.mxu0
      %v7265 = vpop.f32.mrf.mxu0
      %v7266 = vadd.f32 %v7030, %v7265
      %v7267 = vpop.f32.mrf.mxu0
      %7268 = vmatprep.mubr.bf16.mxu0 %v6945
      %7269 = vmatmul.mubr.bf16.gmra.mxu0 %v6840
      %v7270 = vpop.f32.mrf.mxu0
      %v7271 = vadd.f32 %v7035, %v7270
      %v7272 = vpop.f32.mrf.mxu0
      %v7273 = vpop.f32.mrf.mxu0
      %v7274 = vadd.f32 %v7038, %v7273
      %v7275 = vpop.f32.mrf.mxu0
      %7276 = vmatprep.mubr.bf16.mxu0 %v6948
      %7277 = vmatmul.mubr.bf16.gmra.mxu0 %v6842
      %v7278 = vpop.f32.mrf.mxu0
      %v7279 = vadd.f32 %v7043, %v7278
      %v7280 = vpop.f32.mrf.mxu0
      %v7281 = vpop.f32.mrf.mxu0
      %v7282 = vadd.f32 %v7046, %v7281
      %v7283 = vpop.f32.mrf.mxu0
      %7284 = vmatprep.mubr.bf16.mxu0 %v6951
      %7285 = vmatmul.mubr.bf16.gmra.mxu0 %v6844
      %v7286 = vpop.f32.mrf.mxu0
      %v7287 = vadd.f32 %v7051, %v7286
      %v7288 = vpop.f32.mrf.mxu0
      %v7289 = vpop.f32.mrf.mxu0
      %v7290 = vadd.f32 %v7054, %v7289
      %v7291 = vpop.f32.mrf.mxu0
      %7292 = vmatprep.mubr.bf16.mxu0 %v6954
      %7293 = vmatmul.mubr.bf16.gmra.mxu0 %v6846
      %v7294 = vpop.f32.mrf.mxu0
      %v7295 = vadd.f32 %v7059, %v7294
      %v7296 = vpop.f32.mrf.mxu0
      %v7297 = vpop.f32.mrf.mxu0
      %v7298 = vadd.f32 %v7062, %v7297
      %v7299 = vpop.f32.mrf.mxu0
      %7300 = vmatprep.mubr.bf16.mxu0 %v6957
      %7301 = vmatmul.mubr.bf16.gmra.mxu0 %v6848
      %v7302 = vpop.f32.mrf.mxu0
      %v7303 = vadd.f32 %v7067, %v7302
      %v7304 = vpop.f32.mrf.mxu0
      %v7305 = vpop.f32.mrf.mxu0
      %v7306 = vadd.f32 %v7070, %v7305
      %v7307 = vpop.f32.mrf.mxu0
      %7308 = vmatprep.mubr.bf16.mxu0 %v6960
      %7309 = vmatmul.mubr.bf16.gmra.mxu0 %v6850
      %v7310 = vpop.f32.mrf.mxu0
      %v7311 = vadd.f32 %v7075, %v7310
      %v7312 = vpop.f32.mrf.mxu0
      %v7313 = vpop.f32.mrf.mxu0
      %v7314 = vadd.f32 %v7078, %v7313
      %v7315 = vpop.f32.mrf.mxu0
      %7316 = vmatprep.mubr.bf16.mxu0 %v6963
      %7317 = vmatmul.mubr.bf16.gmra.mxu0 %v6852
      %v7318 = vpop.f32.mrf.mxu0
      %v7319 = vadd.f32 %v7083, %v7318
      %v7320 = vpop.f32.mrf.mxu0
      %v7321 = vpop.f32.mrf.mxu0
      %v7322 = vadd.f32 %v7086, %v7321
      %v7323 = vpop.f32.mrf.mxu0
      %7324 = vmatprep.mubr.bf16.mxu0 %v6966
      %7325 = vmatmul.mubr.bf16.gmra.mxu0 %v6854
      %v7326 = vpop.f32.mrf.mxu0
      %v7327 = vadd.f32 %v7091, %v7326
      %v7328 = vpop.f32.mrf.mxu0
      %v7329 = vpop.f32.mrf.mxu0
      %v7330 = vadd.f32 %v7094, %v7329
      %v7331 = vpop.f32.mrf.mxu0
      %7332 = vmatprep.mubr.bf16.mxu0 %v6969
      %7333 = vmatmul.mubr.bf16.gmra.mxu0 %v6856
      %v7334 = vpop.f32.mrf.mxu0
      %v7335 = vadd.f32 %v7099, %v7334
      %v7336 = vpop.f32.mrf.mxu0
      %v7337 = vpop.f32.mrf.mxu0
      %v7338 = vadd.f32 %v7102, %v7337
      %v7339 = vpop.f32.mrf.mxu0
      %7340 = vmatprep.mubr.bf16.mxu0 %v6972
      %7341 = vmatmul.mubr.bf16.gmra.mxu0 %v6858
      %v7342 = vpop.f32.mrf.mxu0
      %v7343 = vadd.f32 %v7107, %v7342
      %v7344 = vpop.f32.mrf.mxu0
      %v7345 = vpop.f32.mrf.mxu0
      %v7346 = vadd.f32 %v7110, %v7345
      %v7347 = vpop.f32.mrf.mxu0
      %7348 = vmatprep.mubr.bf16.mxu0 %v6975
      %7349 = vmatmul.mubr.bf16.gmra.mxu0 %v6860
      %v7350 = vpop.f32.mrf.mxu0
      %v7351 = vadd.f32 %v7115, %v7350
      %v7352 = vpop.f32.mrf.mxu0
      %v7353 = vpop.f32.mrf.mxu0
      %v7354 = vadd.f32 %v7118, %v7353
      %v7355 = vpop.f32.mrf.mxu0
      %7356 = vmatprep.mubr.bf16.mxu0 %v6978
      %7357 = vmatmul.mubr.bf16.gmra.mxu0 %v6862
      %v7358 = vpop.f32.mrf.mxu0
      %v7359 = vadd.f32 %v7123, %v7358
      %v7360 = vpop.f32.mrf.mxu0
      %v7361 = vpop.f32.mrf.mxu0
      %v7362 = vadd.f32 %v7126, %v7361
      %v7363 = vpop.f32.mrf.mxu0
      %7364 = vmatprep.mubr.bf16.mxu0 %v6981
      %7365 = vmatmul.mubr.bf16.gmra.mxu0 %v6864
      %v7366 = vpop.f32.mrf.mxu0
      %v7367 = vadd.f32 %v7131, %v7366
      %v7368 = vpop.f32.mrf.mxu0
      %v7369 = vpop.f32.mrf.mxu0
      %v7370 = vadd.f32 %v7134, %v7369
      %v7371 = vpop.f32.mrf.mxu0
      %7372 = vmatprep.mubr.bf16.mxu0 %v6984
      %7373 = vmatmul.mubr.bf16.gmra.mxu0 %v6866
      %v7374 = vpop.f32.mrf.mxu0
      %v7375 = vadd.f32 %v7139, %v7374
      %v7376 = vpop.f32.mrf.mxu0
      %v7377 = vpop.f32.mrf.mxu0
      %v7378 = vadd.f32 %v7142, %v7377
      %v7379 = vpop.f32.mrf.mxu0
      %7380 = vmatprep.mubr.bf16.mxu0 %v6987
      %7381 = vmatmul.mubr.bf16.gmra.mxu0 %v6868
      %v7382 = vpop.f32.mrf.mxu0
      %v7383 = vadd.f32 %v7147, %v7382
      %v7384 = vpop.f32.mrf.mxu0
      %v7385 = vpop.f32.mrf.mxu0
      %v7386 = vadd.f32 %v7150, %v7385
      %v7387 = vpop.f32.mrf.mxu0
      %7388 = vdwg.mxu0
      %v7389 = vpack.c.bf16 %v6837, %v6836
      %v7390 = vpack.c.bf16 %v6765, %v6763
      %v7415 = vunpack.c.l.b16 %v6344
      %v7416 = vunpack.c.l.b16 %v6345
      %v7417 = vunpack.c.l.b16 %v6346
      %v7418 = vunpack.c.l.b16 %v6347
      %v7419 = vunpack.c.l.b16 %v6348
      %v7420 = vunpack.c.l.b16 %v6349
      %v7421 = vunpack.c.l.b16 %v6350
      %v7422 = vunpack.c.l.b16 %v6351
      %v7423 = vunpack.c.l.b16 %v6352
      %v7424 = vunpack.c.l.b16 %v6353
      %v7425 = vunpack.c.l.b16 %v6354
      %v7426 = vunpack.c.l.b16 %v6355
      %v7427 = vunpack.c.l.b16 %v6356
      %v7428 = vunpack.c.l.b16 %v6357
      %v7429 = vunpack.c.l.b16 %v6358
      %v7430 = vunpack.c.l.b16 %v6359
      %v7431 = vunpack.c.l.b16 %v6360
      %v7432 = vunpack.c.l.b16 %v6361
      %v7433 = vunpack.c.l.b16 %v6362
      %v7434 = vunpack.c.l.b16 %v6363
      %v7435 = vunpack.c.l.b16 %v6364
      %v7436 = vunpack.c.l.b16 %v6365
      %v7437 = vunpack.c.l.b16 %v6366
      %v7438 = vunpack.c.l.b16 %v6367
      %v7439 = vpack.c.b16 %v7416, %v7415
      %v7440 = vpack.c.b16 %v7418, %v7417
      %v7441 = vpack.c.b16 %v7420, %v7419
      %v7442 = vpack.c.b16 %v7422, %v7421
      %v7443 = vpack.c.b16 %v7424, %v7423
      %v7444 = vpack.c.b16 %v7426, %v7425
      %v7445 = vpack.c.b16 %v7428, %v7427
      %v7446 = vpack.c.b16 %v7430, %v7429
      %v7447 = vpack.c.b16 %v7432, %v7431
      %v7448 = vpack.c.b16 %v7434, %v7433
      %v7449 = vpack.c.b16 %v7436, %v7435
      %v7450 = vpack.c.b16 %v7438, %v7437
      %v7464 = vsel %vm380, %v7390, 0
      %7466 = vmatprep.subr.bf16.mxu0 0
      %7467 = vmatpush1.bf16.msra.mxu0 %v7446
      %7468 = vmatprep.subr.bf16.mxu0 0
      %7469 = vmatpush1.bf16.msra.mxu0 %v7445
      %7470 = vmatprep.subr.bf16.mxu0 0
      %7471 = vmatpush1.bf16.msra.mxu0 %v7444
      %7472 = vmatprep.subr.bf16.mxu0 0
      %7473 = vmatpush1.bf16.msra.mxu0 %v7443
      %7474 = vmatprep.subr.bf16.mxu0 0
      %7475 = vmatpush1.bf16.msra.mxu0 %v7442
      %7476 = vmatprep.subr.bf16.mxu0 0
      %7477 = vmatpush1.bf16.msra.mxu0 %v7441
      %7478 = vmatprep.subr.bf16.mxu0 0
      %7479 = vmatpush1.bf16.msra.mxu0 %v7440
      %7480 = vmatprep.subr.bf16.mxu0 0
      %7481 = vmatpush1.bf16.msra.mxu0 %v7439
      %7482 = vmatprep.subr.bf16.mxu0 0
      %7483 = vmatpush2.bf16.msra.mxu0 0
      %7484 = vmatprep.subr.bf16.mxu0 0
      %7485 = vmatpush2.bf16.msra.mxu0 0
      %7486 = vmatprep.subr.bf16.mxu0 0
      %7487 = vmatpush2.bf16.msra.mxu0 0
      %7488 = vmatprep.subr.bf16.mxu0 0
      %7489 = vmatpush2.bf16.msra.mxu0 0
      %7490 = vmatprep.subr.bf16.mxu0 0
      %7491 = vmatpush2.bf16.msra.mxu0 %v7450
      %7492 = vmatprep.subr.bf16.mxu0 0
      %7493 = vmatpush2.bf16.msra.mxu0 %v7449
      %7494 = vmatprep.subr.bf16.mxu0 0
      %7495 = vmatpush2.bf16.msra.mxu0 %v7448
      %7496 = vmatprep.subr.bf16.mxu0 0
      %7497 = vmatpush2.bf16.msra.mxu0 %v7447
      %7498 = vmatprep.mubr.bf16.mxu0 %v6948
      %7499 = vmatmul.mubr.bf16.gmra.mxu0 %v6842
      %v7500 = vpop.f32.mrf.mxu0
      %v7501 = vadd.f32 0.0, %v7500
      %v7502 = vpop.f32.mrf.mxu0
      %v7503 = vpop.f32.mrf.mxu0
      %v7504 = vadd.f32 0.0, %v7503
      %v7505 = vpop.f32.mrf.mxu0
      %7506 = vmatprep.mubr.bf16.mxu0 %v6951
      %7507 = vmatmul.mubr.bf16.gmra.mxu0 %v6844
      %v7508 = vpop.f32.mrf.mxu0
      %v7509 = vadd.f32 0.0, %v7508
      %v7510 = vpop.f32.mrf.mxu0
      %v7511 = vpop.f32.mrf.mxu0
      %v7512 = vadd.f32 0.0, %v7511
      %v7513 = vpop.f32.mrf.mxu0
      %7514 = vmatprep.mubr.bf16.mxu0 %v6954
      %7515 = vmatmul.mubr.bf16.gmra.mxu0 %v6846
      %v7516 = vpop.f32.mrf.mxu0
      %v7517 = vadd.f32 0.0, %v7516
      %v7518 = vpop.f32.mrf.mxu0
      %v7519 = vpop.f32.mrf.mxu0
      %v7520 = vadd.f32 0.0, %v7519
      %v7521 = vpop.f32.mrf.mxu0
      %7522 = vmatprep.mubr.bf16.mxu0 %v6957
      %7523 = vmatmul.mubr.bf16.gmra.mxu0 %v6848
      %v7524 = vpop.f32.mrf.mxu0
      %v7525 = vadd.f32 0.0, %v7524
      %v7526 = vpop.f32.mrf.mxu0
      %v7527 = vpop.f32.mrf.mxu0
      %v7528 = vadd.f32 0.0, %v7527
      %v7529 = vpop.f32.mrf.mxu0
      %7530 = vmatprep.mubr.bf16.mxu0 %v6960
      %7531 = vmatmul.mubr.bf16.gmra.mxu0 %v6850
      %v7532 = vpop.f32.mrf.mxu0
      %v7533 = vadd.f32 0.0, %v7532
      %v7534 = vpop.f32.mrf.mxu0
      %v7535 = vpop.f32.mrf.mxu0
      %v7536 = vadd.f32 0.0, %v7535
      %v7537 = vpop.f32.mrf.mxu0
      %7538 = vmatprep.mubr.bf16.mxu0 %v6963
      %7539 = vmatmul.mubr.bf16.gmra.mxu0 %v6852
      %v7540 = vpop.f32.mrf.mxu0
      %v7541 = vadd.f32 0.0, %v7540
      %v7542 = vpop.f32.mrf.mxu0
      %v7543 = vpop.f32.mrf.mxu0
      %v7544 = vadd.f32 0.0, %v7543
      %v7545 = vpop.f32.mrf.mxu0
      %7546 = vmatprep.mubr.bf16.mxu0 %v6966
      %7547 = vmatmul.mubr.bf16.gmra.mxu0 %v6854
      %v7548 = vpop.f32.mrf.mxu0
      %v7549 = vadd.f32 0.0, %v7548
      %v7550 = vpop.f32.mrf.mxu0
      %v7551 = vpop.f32.mrf.mxu0
      %v7552 = vadd.f32 0.0, %v7551
      %v7553 = vpop.f32.mrf.mxu0
      %7554 = vmatprep.mubr.bf16.mxu0 %v6969
      %7555 = vmatmul.mubr.bf16.gmra.mxu0 %v6856
      %v7556 = vpop.f32.mrf.mxu0
      %v7557 = vadd.f32 0.0, %v7556
      %v7558 = vpop.f32.mrf.mxu0
      %v7559 = vpop.f32.mrf.mxu0
      %v7560 = vadd.f32 0.0, %v7559
      %v7561 = vpop.f32.mrf.mxu0
      %7562 = vmatprep.mubr.bf16.mxu0 %v6972
      %7563 = vmatmul.mubr.bf16.gmra.mxu0 %v6858
      %v7564 = vpop.f32.mrf.mxu0
      %v7565 = vadd.f32 0.0, %v7564
      %v7566 = vpop.f32.mrf.mxu0
      %v7567 = vpop.f32.mrf.mxu0
      %v7568 = vadd.f32 0.0, %v7567
      %v7569 = vpop.f32.mrf.mxu0
      %7570 = vmatprep.mubr.bf16.mxu0 %v6975
      %7571 = vmatmul.mubr.bf16.gmra.mxu0 %v6860
      %v7572 = vpop.f32.mrf.mxu0
      %v7573 = vadd.f32 0.0, %v7572
      %v7574 = vpop.f32.mrf.mxu0
      %v7575 = vpop.f32.mrf.mxu0
      %v7576 = vadd.f32 0.0, %v7575
      %v7577 = vpop.f32.mrf.mxu0
      %7578 = vmatprep.mubr.bf16.mxu0 %v6978
      %7579 = vmatmul.mubr.bf16.gmra.mxu0 %v6862
      %v7580 = vpop.f32.mrf.mxu0
      %v7581 = vadd.f32 0.0, %v7580
      %v7582 = vpop.f32.mrf.mxu0
      %v7583 = vpop.f32.mrf.mxu0
      %v7584 = vadd.f32 0.0, %v7583
      %v7585 = vpop.f32.mrf.mxu0
      %7586 = vmatprep.mubr.bf16.mxu0 %v6981
      %7587 = vmatmul.mubr.bf16.gmra.mxu0 %v6864
      %v7588 = vpop.f32.mrf.mxu0
      %v7589 = vadd.f32 0.0, %v7588
      %v7590 = vpop.f32.mrf.mxu0
      %v7591 = vpop.f32.mrf.mxu0
      %v7592 = vadd.f32 0.0, %v7591
      %v7593 = vpop.f32.mrf.mxu0
      %7594 = vmatprep.mubr.bf16.mxu0 %v6984
      %7595 = vmatmul.mubr.bf16.gmra.mxu0 %v6866
      %v7596 = vpop.f32.mrf.mxu0
      %v7597 = vadd.f32 0.0, %v7596
      %v7598 = vpop.f32.mrf.mxu0
      %v7599 = vpop.f32.mrf.mxu0
      %v7600 = vadd.f32 0.0, %v7599
      %v7601 = vpop.f32.mrf.mxu0
      %7602 = vmatprep.mubr.bf16.mxu0 %v6987
      %7603 = vmatmul.mubr.bf16.gmra.mxu0 %v6868
      %v7604 = vpop.f32.mrf.mxu0
      %v7605 = vadd.f32 0.0, %v7604
      %v7606 = vpop.f32.mrf.mxu0
      %v7607 = vpop.f32.mrf.mxu0
      %v7608 = vadd.f32 0.0, %v7607
      %v7609 = vpop.f32.mrf.mxu0
      %7610 = vmatprep.mubr.bf16.mxu0 %v6990
      %7611 = vmatmul.mubr.bf16.gmra.mxu0 %v6870
      %v7612 = vpop.f32.mrf.mxu0
      %v7613 = vadd.f32 0.0, %v7612
      %v7614 = vpop.f32.mrf.mxu0
      %v7615 = vpop.f32.mrf.mxu0
      %v7616 = vadd.f32 0.0, %v7615
      %v7617 = vpop.f32.mrf.mxu0
      %7618 = vmatprep.mubr.bf16.mxu0 %v7464
      %7619 = vmatmul.mubr.bf16.gmra.mxu0 %v7389
      %v7620 = vpop.f32.mrf.mxu0
      %v7621 = vadd.f32 0.0, %v7620
      %v7622 = vpop.f32.mrf.mxu0
      %v7623 = vpop.f32.mrf.mxu0
      %v7624 = vadd.f32 0.0, %v7623
      %v7625 = vpop.f32.mrf.mxu0
      %7626 = vdwg.mxu0
      %v7627 = vadd.f32 %v7263, %v7501
      %v7628 = vadd.f32 %v7266, %v7504
      %v7629 = vadd.f32 %v7271, %v7509
      %v7630 = vadd.f32 %v7274, %v7512
      %v7631 = vadd.f32 %v7279, %v7517
      %v7632 = vadd.f32 %v7282, %v7520
      %v7633 = vadd.f32 %v7287, %v7525
      %v7634 = vadd.f32 %v7290, %v7528
      %v7635 = vadd.f32 %v7295, %v7533
      %v7636 = vadd.f32 %v7298, %v7536
      %v7637 = vadd.f32 %v7303, %v7541
      %v7638 = vadd.f32 %v7306, %v7544
      %v7639 = vadd.f32 %v7311, %v7549
      %v7640 = vadd.f32 %v7314, %v7552
      %v7641 = vadd.f32 %v7319, %v7557
      %v7642 = vadd.f32 %v7322, %v7560
      %v7643 = vadd.f32 %v7327, %v7565
      %v7644 = vadd.f32 %v7330, %v7568
      %v7645 = vadd.f32 %v7335, %v7573
      %v7646 = vadd.f32 %v7338, %v7576
      %v7647 = vadd.f32 %v7343, %v7581
      %v7648 = vadd.f32 %v7346, %v7584
      %v7649 = vadd.f32 %v7351, %v7589
      %v7650 = vadd.f32 %v7354, %v7592
      %v7651 = vadd.f32 %v7359, %v7597
      %v7652 = vadd.f32 %v7362, %v7600
      %v7653 = vadd.f32 %v7367, %v7605
      %v7654 = vadd.f32 %v7370, %v7608
      %v7655 = vadd.f32 %v7375, %v7613
      %v7656 = vadd.f32 %v7378, %v7616
      %v7657 = vadd.f32 %v7383, %v7621
      %v7658 = vadd.f32 %v7386, %v7624
      %v7660 = vlaneseq
      %v7661 = vshrl.u32 %v7660, 7
      %v7662 = vsub.s32 0, %v7661
      %v7663 = vrot.slane %v6369, %v7662
      %v7665 = vadd.f32 %v7627, %v7663
      %v7666 = vadd.f32 %v7628, %v7663
      %v7667 = vadd.f32 %v7629, %v7663
      %v7668 = vadd.f32 %v7630, %v7663
      %v7669 = vadd.f32 %v7631, %v7663
      %v7670 = vadd.f32 %v7632, %v7663
      %v7671 = vadd.f32 %v7633, %v7663
      %v7672 = vadd.f32 %v7634, %v7663
      %v7673 = vadd.f32 %v7635, %v7663
      %v7674 = vadd.f32 %v7636, %v7663
      %v7675 = vadd.f32 %v7637, %v7663
      %v7676 = vadd.f32 %v7638, %v7663
      %v7677 = vadd.f32 %v7639, %v7663
      %v7678 = vadd.f32 %v7640, %v7663
      %v7679 = vadd.f32 %v7641, %v7663
      %v7680 = vadd.f32 %v7642, %v7663
      %v7681 = vadd.f32 %v7643, %v7663
      %v7682 = vadd.f32 %v7644, %v7663
      %v7683 = vadd.f32 %v7645, %v7663
      %v7684 = vadd.f32 %v7646, %v7663
      %v7685 = vadd.f32 %v7647, %v7663
      %v7686 = vadd.f32 %v7648, %v7663
      %v7687 = vadd.f32 %v7649, %v7663
      %v7688 = vadd.f32 %v7650, %v7663
      %v7689 = vadd.f32 %v7651, %v7663
      %v7690 = vadd.f32 %v7652, %v7663
      %v7691 = vadd.f32 %v7653, %v7663
      %v7692 = vadd.f32 %v7654, %v7663
      %v7693 = vadd.f32 %v7655, %v7663
      %v7694 = vadd.f32 %v7656, %v7663
      %v7695 = vadd.f32 %v7657, %v7663
      %v7696 = vadd.f32 %v7658, %v7663
      %v7697 = vmax.f32 %v7665, 0.0
      %v7698 = vmax.f32 %v7666, 0.0
      %v7699 = vmax.f32 %v7667, 0.0
      %v7700 = vmax.f32 %v7668, 0.0
      %v7701 = vmax.f32 %v7669, 0.0
      %v7702 = vmax.f32 %v7670, 0.0
      %v7703 = vmax.f32 %v7671, 0.0
      %v7704 = vmax.f32 %v7672, 0.0
      %v7705 = vmax.f32 %v7673, 0.0
      %v7706 = vmax.f32 %v7674, 0.0
      %v7707 = vmax.f32 %v7675, 0.0
      %v7708 = vmax.f32 %v7676, 0.0
      %v7709 = vmax.f32 %v7677, 0.0
      %v7710 = vmax.f32 %v7678, 0.0
      %v7711 = vmax.f32 %v7679, 0.0
      %v7712 = vmax.f32 %v7680, 0.0
      %v7713 = vmax.f32 %v7681, 0.0
      %v7714 = vmax.f32 %v7682, 0.0
      %v7715 = vmax.f32 %v7683, 0.0
      %v7716 = vmax.f32 %v7684, 0.0
      %v7717 = vmax.f32 %v7685, 0.0
      %v7718 = vmax.f32 %v7686, 0.0
      %v7719 = vmax.f32 %v7687, 0.0
      %v7720 = vmax.f32 %v7688, 0.0
      %v7721 = vmax.f32 %v7689, 0.0
      %v7722 = vmax.f32 %v7690, 0.0
      %v7723 = vmax.f32 %v7691, 0.0
      %v7724 = vmax.f32 %v7692, 0.0
      %v7725 = vmax.f32 %v7693, 0.0
      %v7726 = vmax.f32 %v7694, 0.0
      %v7727 = vmax.f32 %v7695, 0.0
      %v7728 = vmax.f32 %v7696, 0.0
      %v7729 = vld [vmem:[%s5] sm:$0x1]
      %v7730 = vpack.c.bf16 %v7698, %v7697
      %v7731 = vpack.c.bf16 %v7700, %v7699
      %v7732 = vpack.c.bf16 %v7702, %v7701
      %v7733 = vpack.c.bf16 %v7704, %v7703
      %v7734 = vpack.c.bf16 %v7706, %v7705
      %v7735 = vpack.c.bf16 %v7708, %v7707
      %v7736 = vpack.c.bf16 %v7710, %v7709
      %v7737 = vpack.c.bf16 %v7712, %v7711
      %v7738 = vpack.c.bf16 %v7714, %v7713
      %v7739 = vpack.c.bf16 %v7716, %v7715
      %v7740 = vpack.c.bf16 %v7718, %v7717
      %v7741 = vpack.c.bf16 %v7720, %v7719
      %v7742 = vpack.c.bf16 %v7722, %v7721
      %v7743 = vpack.c.bf16 %v7724, %v7723
      %v7744 = vpack.c.bf16 %v7726, %v7725
      %v7745 = vpack.c.bf16 %v7728, %v7727
      %v7746 = vld [vmem:[#allocation5] sm:$0x1]
      %7748 = vset.pattern.permute.xlu0 0
      %7749 = vperm.xlu0 %7748, %v7746
      %v7750 = vpop.permute.xlu0 %7749
      %v7752 = vlaneseq
      %v7753 = vshrl.u32 %v7752, 7
      %v7754 = vsub.s32 0, %v7753
      %v7755 = vrot.slane %v7750, %v7754
      %v7757 = vsel %vm380, %v7729, 0
      %v7760 = vsel %vm380, %v7730, 0
      %v7763 = vsel %vm380, %v7731, 0
      %v7766 = vsel %vm380, %v7732, 0
      %v7769 = vsel %vm380, %v7733, 0
      %v7772 = vsel %vm380, %v7734, 0
      %v7775 = vsel %vm380, %v7735, 0
      %v7778 = vsel %vm380, %v7736, 0
      %v7781 = vsel %vm380, %v7737, 0
      %v7784 = vsel %vm380, %v7738, 0
      %v7787 = vsel %vm380, %v7739, 0
      %v7790 = vsel %vm380, %v7740, 0
      %v7793 = vsel %vm380, %v7741, 0
      %v7796 = vsel %vm380, %v7742, 0
      %v7799 = vsel %vm380, %v7743, 0
      %v7802 = vsel %vm380, %v7744, 0
      %v7805 = vsel %vm380, %v7745, 0
      %7807 = vmatprep.subr.bf16.mxu0 0
      %7808 = vmatpush1.bf16.xpose.msra.mxu0 %v7781
      %7809 = vmatprep.subr.bf16.mxu0 0
      %7810 = vmatpush1.bf16.xpose.msra.mxu0 %v7778
      %7811 = vmatprep.subr.bf16.mxu0 0
      %7812 = vmatpush1.bf16.xpose.msra.mxu0 %v7775
      %7813 = vmatprep.subr.bf16.mxu0 0
      %7814 = vmatpush1.bf16.xpose.msra.mxu0 %v7772
      %7815 = vmatprep.subr.bf16.mxu0 0
      %7816 = vmatpush1.bf16.xpose.msra.mxu0 %v7769
      %7817 = vmatprep.subr.bf16.mxu0 0
      %7818 = vmatpush1.bf16.xpose.msra.mxu0 %v7766
      %7819 = vmatprep.subr.bf16.mxu0 0
      %7820 = vmatpush1.bf16.xpose.msra.mxu0 %v7763
      %7821 = vmatprep.subr.bf16.mxu0 0
      %7822 = vmatpush1.bf16.xpose.msra.mxu0 %v7760
      %7823 = vmatprep.subr.bf16.mxu0 0
      %7824 = vmatpush2.bf16.xpose.msra.mxu0 %v7805
      %7825 = vmatprep.subr.bf16.mxu0 0
      %7826 = vmatpush2.bf16.xpose.msra.mxu0 %v7802
      %7827 = vmatprep.subr.bf16.mxu0 0
      %7828 = vmatpush2.bf16.xpose.msra.mxu0 %v7799
      %7829 = vmatprep.subr.bf16.mxu0 0
      %7830 = vmatpush2.bf16.xpose.msra.mxu0 %v7796
      %7831 = vmatprep.subr.bf16.mxu0 0
      %7832 = vmatpush2.bf16.xpose.msra.mxu0 %v7793
      %7833 = vmatprep.subr.bf16.mxu0 0
      %7834 = vmatpush2.bf16.xpose.msra.mxu0 %v7790
      %7835 = vmatprep.subr.bf16.mxu0 0
      %7836 = vmatpush2.bf16.xpose.msra.mxu0 %v7787
      %7837 = vmatprep.subr.bf16.mxu0 0
      %7838 = vmatpush2.bf16.xpose.msra.mxu0 %v7784
      %7839 = vmatprep.mubr.bf16.mxu0 0
      %7840 = vmatmul.mubr.bf16.gmra.mxu0 %v7757
      %v7841 = vpop.f32.mrf.mxu0
      %v7842 = vadd.f32 %v7755, %v7841
      %v7843 = vpop.f32.mrf.mxu0
      %v7844 = vadd.f32 %v7755, %v7843
      %v7845 = vpop.f32.mrf.mxu0
      %v7846 = vpop.f32.mrf.mxu0
      %7847 = vdwg.mxu0
      %v7848 = vxor.u32 %v7842, 2147483648
      %v7849 = vxor.u32 %v7844, 2147483648
      %v7850 = vmul.f32 %v7848, 1.442695
      %v7851 = vpow.pop %v7850
      %v7852 = vmul.f32 %v7849, 1.442695
      %v7853 = vpow.pop %v7852
      %v7854 = vadd.f32 %v7851, 1.0
      %v7855 = vadd.f32 %v7853, 1.0
      %v7856 = vrcp.pop %v7854
      %v7857 = vmul.f32 1.0, %v7856
      %v7858 = vrcp.pop %v7855
      %v7859 = vmul.f32 1.0, %v7858
      %v7860 = vld [vmem:[%s318] sm:$0x3]
      %v7862 = vlaneseq
      %v7863 = vshrl.u32 %v7862, 7
      %v7864 = vsub.s32 0, %v7863
      %v7865 = vrot.slane %v7860, %v7864
      %v7866 = vlaneseq
      %v7867 = vshrl.u32 %v7866, 7
      %v7868 = vsub.s32 1, %v7867
      %v7869 = vrot.slane %v7860, %v7868
      %v7872 = vmul.f32 %v7857, %v7865
      %v7873 = vmul.f32 %v7859, %v7869
      %v7876 = vcombine.low %v7872, %v7873
      %v7878 = vunpack.c.l.s4 1966171168
      %v7879 = vunpack.c.0.s8 %v7878
      %v7880 = vlaneseq
      %v7881 = vshrl.u32 %v7880, 7
      %v7882 = vsub.s32 %v7879, %v7881
      %v7883 = vrot.slane %v7876, %v7882
      %v7885 = vunpack.c.l.s4 1966171168
      %v7886 = vunpack.c.0.s8 %v7885
      %v7887 = vlaneseq
      %v7888 = vshrl.u32 %v7887, 7
      %v7889 = vsub.s32 %v7886, %v7888
      %v7890 = vrot.slane %v7883, %v7889
      %v7892 = vlaneseq
      %vm7893 = vcmp.ge.s32.totalorder %v7892, 0
      %vm7894 = vcmp.lt.s32.totalorder %v7892, 256
      %vm7895 = vmand %vm7893, %vm7894
      %7896 = vst.msk [vmem:[%s322] sm:$0x3] %vm7895, %v7890
      %p7897 = scmp.lt.s32.totalorder %s21, 1
      %s7898 = scalar_select %p7897, %s21, 1
      %s7899 = smul.addr %s7898, 2
      %s7900 = scalar_lea.vmem %s8, %s7899
      // Predicated region
      $region53: #{custom_model_forward.1} parent=51 // pred_check
        %p7901 = pneg %p217
      $region54: #{custom_model_forward.1} parent=51 // pred_check_branch
        %7903 = sbr.rel (%p7901) target = $region56
      $region55: #{custom_model_forward.1} parent=51 // pred_region
        _
      $region56: #{custom_model_forward.1} parent=51 // pred_fallthru
        _
    $region52: #{custom_model_forward.1} parent=5 // pred_fallthru
      _
    %p7904 = scmp.le.s32.totalorder 2, %s16
    // Predicated region
    $region57: #{custom_model_forward.1} parent=5 // pred_check
      %p7905 = pneg %p7904
    $region58: #{custom_model_forward.1} parent=5 // pred_check_branch
      %7907 = sbr.rel (%p7905) target = $region60
    $region59: #{custom_model_forward.1} parent=5 // pred_region
      %s7908 = ssub.s32 %s16, 2
      // Predicated region
      $region61: #{custom_model_forward.1} parent=59 // pred_check
        %p7909 = pneg %p223
      $region62: #{custom_model_forward.1} parent=59 // pred_check_branch
        %7911 = sbr.rel (%p7909) target = $region64
      $region63: #{custom_model_forward.1} parent=59 // pred_region
        %p7912 = scmp.lt.s32.totalorder %s22, 1
        %s7913 = scalar_select %p7912, %s22, 1
        %s7914 = smul.addr %s7913, 2
        %s7915 = scalar_lea.vmem %s8, %s7914
      $region64: #{custom_model_forward.1} parent=59 // pred_fallthru
        _
    $region60: #{custom_model_forward.1} parent=5 // pred_fallthru
      _
  $region6: #{custom_model_forward.1} parent=0 // loop_footer
    %s20 = sadd.s32 1, %s16
  $region7: #{custom_model_forward.1} parent=0 // loop_footer_branch
    %15 = sbr.rel target = $region3
  $region8: #{custom_model_forward.1} parent=0 // loop_exit
    _

</llo_original>
